<compile_context>
chip_gen: v5e
topology: v5e:2x2
jax: 0.10.0
libtpu: 0.0.40
codegen_flags: <defaults>
</compile_context>

<pallas_src>
import functools

import jax
import jax.numpy as jnp
from jax import lax
from jax.experimental import pallas as pl
from jax.experimental.pallas import tpu as pltpu

C_IN = 512    # input channels (fixed by the module)
C_RED = 32    # squeeze width  (fixed by the module)


# ---------------------------------------------------------------------------
# Chip / sizing helpers
# ---------------------------------------------------------------------------

def _vmem_capacity_bytes():
    """Physical VMEM of the local chip (64 MiB v7x, 128 MiB v5e/v6e)."""
    try:
        return int(pltpu.get_tpu_info().vmem_capacity_bytes)
    except Exception:
        return 64 << 20  # conservative fallback (v7x-sized)


def _block_target_bytes(vmem_cap):
    """Per-block (single-buffer) target; ~4-5 live buffers must fit with room
    for resident weights and Mosaic internal scratch."""
    if vmem_cap <= (64 << 20):       # v7x: 64 MiB physical
        return 8 << 20
    return 12 << 20                  # v5e / v6e: 128 MiB physical


def _clamp_vmem(working_set, budget):
    lo = min(32 << 20, budget)
    return int(max(min(int(working_set), budget), lo))


def _choose_nb(B, bytes_per_row, target_bytes):
    """NCL single-phase path: divisor of B under the block target, keeping
    >= 2 grid steps when B >= 2 (megacore / pipeline overlap)."""
    cap = max(1, target_bytes // max(1, bytes_per_row))
    if B >= 2:
        cap = min(cap, max(1, B // 2))
    cap = min(cap, B)
    for nb in range(int(cap), 0, -1):
        if B % nb == 0:
            return nb
    return 1


def _choose_nb_flat(B, bytes_per_row, target_bytes):
    """Flattened path: batch rows sit on the sublane axis, so nb must be a
    multiple of 8 or the whole batch (and a divisor of B)."""
    cands = [d for d in range(1, B + 1) if B % d == 0 and (d % 8 == 0 or d == B)]
    fitting = [d for d in cands if d * bytes_per_row <= target_bytes]
    if not fitting:
        return min(cands)
    split = [d for d in fitting if B // d >= 2]      # keep >= 2 steps if possible
    return max(split) if split else max(fitting)


def _choose_tl(L, itemsize, target_bytes, min_steps):
    """Two-phase path lane tile: multiple of 128 dividing L, block under the
    target, preferring >= min_steps L-tiles."""
    if L % 128 != 0:
        return None
    best = None
    for tl in range(128, L + 1, 128):
        if L % tl != 0 or C_IN * tl * itemsize > target_bytes:
            continue
        if L // tl >= min_steps:
            best = tl
    if best is None:
        for tl in range(128, L + 1, 128):
            if L % tl == 0 and C_IN * tl * itemsize <= target_bytes:
                best = tl
    return best


# ---------------------------------------------------------------------------
# Kernels
# ---------------------------------------------------------------------------

def _excite(pooled_f32, w1_ref, b1_ref, w2_ref, b2_ref):
    """fc1 + ReLU + fc2 + sigmoid on the pooled (nb, 512) activations."""
    h = jnp.dot(pooled_f32, w1_ref[...], preferred_element_type=jnp.float32)
    h = jnp.maximum(h + b1_ref[...], 0.0)                      # (nb, 32)
    s = jnp.dot(h, w2_ref[...], preferred_element_type=jnp.float32)
    return jax.nn.sigmoid(s + b2_ref[...])                     # (nb, 512) f32


def _se_kernel_flat(x_ref, a_ref, w1_ref, b1_ref, w2_ref, b2_ref, o_ref, *, inv_l):
    """Lane-dense path: x_ref/o_ref are (nb, 512*L); a_ref is the 0/1
    block-diagonal (512*L, 512) pool/expand matrix."""
    # Pool: per-channel sum via the 0/1 matrix on the MXU (keeps the dense
    # lane layout; no sparse (C, L) relayout, no full-tile f32 upcast).
    pooled = jnp.dot(x_ref[...], a_ref[...],
                     preferred_element_type=jnp.float32) * inv_l     # (nb, 512)
    s = _excite(pooled, w1_ref, b1_ref, w2_ref, b2_ref)              # (nb, 512)
    # Expand: s @ A^T (NT dot) replicates each channel scale over its L lanes,
    # already in x's layout -> no cross-lane relayout before the multiply.
    s_exp = lax.dot_general(
        s.astype(a_ref.dtype), a_ref[...],
        dimension_numbers=(((1,), (1,)), ((), ())),
        preferred_element_type=jnp.float32)                          # (nb, 512*L)
    o_ref[...] = x_ref[...] * s_exp.astype(o_ref.dtype)


def _se_kernel_ncl(x_ref, w1_ref, b1_ref, w2_ref, b2_ref, o_ref, *, inv_l):
    """Single-phase NCL path: x_ref/o_ref are (nb, 512, L)."""
    # Lane-axis (L) reduction with f32 accumulation; no full-tile astype upcast.
    pooled = jnp.sum(x_ref[...], axis=-1, dtype=jnp.float32) * inv_l   # (nb, 512)
    s = _excite(pooled, w1_ref, b1_ref, w2_ref, b2_ref)
    # Note: s is lane-major; the [:, :, None] broadcast implies a small
    # (nb*512-element) lanes->sublanes relayout once per grid step -- negligible
    # at full-L block sizes, avoided entirely in the two-phase path.
    o_ref[...] = x_ref[...] * s.astype(o_ref.dtype)[:, :, None]


def _se_kernel_ncl_two_phase(x_ref, w1_ref, b1_ref, w2_ref, b2_ref, o_ref,
                             acc_ref, scale_ref, *, inv_l):
    """Two-phase L-tiled path: grid (B, 2, L/tl); x_ref/o_ref are (1, 512, tl)."""
    phase = pl.program_id(1)
    lt = pl.program_id(2)
    n_lt = pl.num_programs(2)

    @pl.when(jnp.logical_and(phase == 0, lt == 0))
    def _():
        acc_ref[...] = jnp.zeros_like(acc_ref)

    @pl.when(phase == 0)
    def _():
        acc_ref[...] += jnp.sum(x_ref[...], axis=-1, dtype=jnp.float32)

    @pl.when(jnp.logical_and(phase == 0, lt == n_lt - 1))
    def _():
        s = _excite(acc_ref[...] * inv_l, w1_ref, b1_ref, w2_ref, b2_ref)
        # Stage the scale channel-on-sublane ONCE per batch row so the rescale
        # sweep needs no per-step relayout.
        scale_ref[...] = s[:, :, None]

    @pl.when(phase == 1)
    def _():
        o_ref[...] = x_ref[...] * scale_ref[...].astype(o_ref.dtype)


# ---------------------------------------------------------------------------
# Path drivers
# ---------------------------------------------------------------------------

def _se_flat(x, w1t, b1r, w2t, b2r, *, target, budget):
    B, _, L = x.shape
    itemsize = x.dtype.itemsize
    cl = C_IN * L
    x2 = x.reshape(B, cl)                                   # contiguous -> free view
    # 0/1 block-diagonal pool/expand matrix: A[c*L + l, c] = 1.
    a_mat = jnp.repeat(jnp.eye(C_IN, dtype=x.dtype), L, axis=0)   # (512*L, 512)
    a_bytes = cl * C_IN * itemsize

    per_row = cl * itemsize
    block_target = max(1 << 20, min(target, (budget - 2 * a_bytes) // 6))
    nb = _choose_nb_flat(B, per_row, block_target)
    block = nb * per_row
    # 2x resident A + double-buffered in/out blocks + f32 temporaries + slack.
    ws = 2 * a_bytes + 4 * block + 2 * nb * cl * 4 + (4 << 20)
    vmem_limit = _clamp_vmem(ws, budget)

    out = pl.pallas_call(
        functools.partial(_se_kernel_flat, inv_l=1.0 / L),
        out_shape=jax.ShapeDtypeStruct((B, cl), x.dtype),
        grid_spec=pltpu.PrefetchScalarGridSpec(
            num_scalar_prefetch=0,
            grid=(B // nb,),
            in_specs=[
                pl.BlockSpec((nb, cl), lambda b: (b, 0)),
                pl.BlockSpec((cl, C_IN), lambda b: (0, 0)),     # resident A
                pl.BlockSpec((C_IN, C_RED), lambda b: (0, 0)),
                pl.BlockSpec((1, C_RED), lambda b: (0, 0)),
                pl.BlockSpec((C_RED, C_IN), lambda b: (0, 0)),
                pl.BlockSpec((1, C_IN), lambda b: (0, 0)),
            ],
            out_specs=pl.BlockSpec((nb, cl), lambda b: (b, 0)),
        ),
        compiler_params=pltpu.CompilerParams(
            dimension_semantics=("parallel",),
            vmem_limit_bytes=vmem_limit,
        ),
    )(x2, a_mat, w1t, b1r, w2t, b2r)
    return out.reshape(B, C_IN, L)


def _se_two_phase(x, w1t, b1r, w2t, b2r, *, tl, budget):
    B, _, L = x.shape
    itemsize = x.dtype.itemsize
    n_lt = L // tl
    block = C_IN * tl * itemsize
    vmem_limit = _clamp_vmem(5 * block + (4 << 20), budget)

    return pl.pallas_call(
        functools.partial(_se_kernel_ncl_two_phase, inv_l=1.0 / L),
        out_shape=jax.ShapeDtypeStruct((B, C_IN, L), x.dtype),
        grid_spec=pltpu.PrefetchScalarGridSpec(
            num_scalar_prefetch=0,
            grid=(B, 2, n_lt),
            in_specs=[
                pl.BlockSpec((1, C_IN, tl), lambda b, p, lt: (b, 0, lt)),
                pl.BlockSpec((C_IN, C_RED), lambda b, p, lt: (0, 0)),
                pl.BlockSpec((1, C_RED), lambda b, p, lt: (0, 0)),
                pl.BlockSpec((C_RED, C_IN), lambda b, p, lt: (0, 0)),
                pl.BlockSpec((1, C_IN), lambda b, p, lt: (0, 0)),
            ],
            # During the pooling sweep (p == 0) the output block index is
            # pinned to lt*p == 0, so the only writebacks are the correct
            # rescaled blocks produced during the p == 1 sweep.
            out_specs=pl.BlockSpec((1, C_IN, tl), lambda b, p, lt: (b, 0, lt * p)),
            scratch_shapes=[
                pltpu.VMEM((1, C_IN), jnp.float32),      # pooled-sum accumulator
                pltpu.VMEM((1, C_IN, 1), jnp.float32),   # staged per-channel scale
            ],
        ),
        compiler_params=pltpu.CompilerParams(
            dimension_semantics=("parallel", "arbitrary", "arbitrary"),
            vmem_limit_bytes=vmem_limit,
        ),
    )(x, w1t, b1r, w2t, b2r)


def _se_single(x, w1t, b1r, w2t, b2r, *, target, budget):
    B, _, L = x.shape
    itemsize = x.dtype.itemsize
    per_row = C_IN * L * itemsize
    nb = _choose_nb(B, per_row, min(target, max(budget // 5, 1 << 20)))
    block = nb * per_row
    vmem_limit = _clamp_vmem(5 * block + (4 << 20), budget)

    return pl.pallas_call(
        functools.partial(_se_kernel_ncl, inv_l=1.0 / L),
        out_shape=jax.ShapeDtypeStruct((B, C_IN, L), x.dtype),
        grid_spec=pltpu.PrefetchScalarGridSpec(
            num_scalar_prefetch=0,
            grid=(B // nb,),
            in_specs=[
                pl.BlockSpec((nb, C_IN, L), lambda b: (b, 0, 0)),
                pl.BlockSpec((C_IN, C_RED), lambda b: (0, 0)),
                pl.BlockSpec((1, C_RED), lambda b: (0, 0)),
                pl.BlockSpec((C_RED, C_IN), lambda b: (0, 0)),
                pl.BlockSpec((1, C_IN), lambda b: (0, 0)),
            ],
            out_specs=pl.BlockSpec((nb, C_IN, L), lambda b: (b, 0, 0)),
        ),
        compiler_params=pltpu.CompilerParams(
            dimension_semantics=("parallel",),
            vmem_limit_bytes=vmem_limit,
        ),
    )(x, w1t, b1r, w2t, b2r)


# ---------------------------------------------------------------------------
# Public entry point
# ---------------------------------------------------------------------------

def squeeze_excitation2(x, w1, b1, w2, b2):
    """x: (B, 512, L) NCL.  w1: (32, 512, 1), b1: (32,), w2: (512, 32, 1), b2: (512,)."""
    B, C, L = x.shape
    assert C == C_IN
    itemsize = x.dtype.itemsize

    # 1x1-conv kernels as plain matmul weights (tiny, prepared once).
    w1t = jnp.transpose(w1[:, :, 0], (1, 0)).astype(jnp.float32)   # (512, 32)
    w2t = jnp.transpose(w2[:, :, 0], (1, 0)).astype(jnp.float32)   # (32, 512)
    b1r = b1.reshape(1, C_RED).astype(jnp.float32)
    b2r = b2.reshape(1, C_IN).astype(jnp.float32)

    vmem_cap = _vmem_capacity_bytes()
    budget = max(vmem_cap - (8 << 20), 16 << 20)      # Mosaic-scratch headroom
    target = _block_target_bytes(vmem_cap)

    # ---- Path 1: lane-dense flattened path for small L ----------------------
    pool_mat_bytes = C_IN * L * C_IN * itemsize
    if L < 128 and 2 * pool_mat_bytes <= budget // 2:
        return _se_flat(x, w1t, b1r, w2t, b2r, target=target, budget=budget)
    # TODO(synk): for L < 128 where the (512*L, 512) pool matrix no longer fits
    # the VMEM budget, this falls back to the masked-store NCL paths below.

    # ---- Path 2: two-phase L-tiled path --------------------------------------
    full_block = C_IN * L * itemsize                  # nb = 1 block
    min_steps = 4 if B < 4 else 1
    tl = _choose_tl(L, itemsize, target, min_steps)
    use_two_phase = tl is not None and (
        full_block > target or (B < 4 and L // tl >= 2))
    if use_two_phase:
        return _se_two_phase(x, w1t, b1r, w2t, b2r, tl=tl, budget=budget)
    # TODO(synk): L >= 128 with L % 128 != 0 AND a full-L block above the VMEM
    # budget would need a ragged last L-tile; not implemented (falls through).

    # ---- Path 3: single-phase full-L blocks ----------------------------------
    return _se_single(x, w1t, b1r, w2t, b2r, target=target, budget=budget)


# ---------------------------------------------------------------------------
# Pure-JAX reference (mirrors the PyTorch forward)
# ---------------------------------------------------------------------------

def reference(x_ncl, w1, b1, w2, b2):
    pooled = jnp.mean(x_ncl, axis=2, keepdims=True)                     # (B, 512, 1)
    h = jnp.einsum("oc,bcl->bol", w1[:, :, 0], pooled) + b1[None, :, None]
    h = jnp.maximum(h, 0.0)
    s = jnp.einsum("oc,bcl->bol", w2[:, :, 0], h) + b2[None, :, None]
    s = jax.nn.sigmoid(s)
    return s * x_ncl


if __name__ == "__main__":
    key = jax.random.PRNGKey(0)
    k_x, k_w1, k_b1, k_w2, k_b2, k_x2, k_x3 = jax.random.split(key, 7)

    # Deterministic synthetic parameters (shapes per nn.Conv1d(512,32,1) / (32,512,1)).
    w1 = jax.random.normal(k_w1, (C_RED, C_IN, 1), dtype=jnp.float32) * 0.05
    b1 = jax.random.normal(k_b1, (C_RED,), dtype=jnp.float32) * 0.05
    w2 = jax.random.normal(k_w2, (C_IN, C_RED, 1), dtype=jnp.float32) * 0.05
    b2 = jax.random.normal(k_b2, (C_IN,), dtype=jnp.float32) * 0.05

    # Tolerances leave headroom for MXU f32 multi-pass decomposition of the
    # tiny excitation / pool matmuls vs. the XLA reference.
    tol = dict(atol=1e-4, rtol=1e-4)

    # 1) Module-typical small shape -> lane-dense flattened path.
    x = jax.random.normal(k_x, (2, C_IN, 8), dtype=jnp.float32)
    out = jax.block_until_ready(squeeze_excitation2(x, w1, b1, w2, b2))
    assert out.shape == x.shape
    assert jnp.allclose(out, reference(x, w1, b1, w2, b2), **tol), "flat path mismatch"

    # 2) Small batch, L a multiple of 128 -> two-phase L-tiled path.
    x2 = jax.random.normal(k_x2, (2, C_IN, 512), dtype=jnp.float32)
    out2 = jax.block_until_ready(squeeze_excitation2(x2, w1, b1, w2, b2))
    assert jnp.allclose(out2, reference(x2, w1, b1, w2, b2), **tol), "two-phase mismatch"

    # 3) Enough batch for megacore, moderate L -> single-phase full-L path.
    x3 = jax.random.normal(k_x3, (8, C_IN, 256), dtype=jnp.float32)
    out3 = jax.block_until_ready(squeeze_excitation2(x3, w1, b1, w2, b2))
    assert jnp.allclose(out3, reference(x3, w1, b1, w2, b2), **tol), "single-phase mismatch"

    print("KERNEL_OK")
</pallas_src>

<mosaic_0001>
module attributes {stable_mosaic.version = 11 : i64} {
  func.func @_se_kernel_flat(%arg0: i32, %arg1: memref<2x4096xf32, #tpu.memory_space<vmem>>, %arg2: memref<4096x512xf32, #tpu.memory_space<vmem>>, %arg3: memref<512x32xf32, #tpu.memory_space<vmem>>, %arg4: memref<1x32xf32, #tpu.memory_space<vmem>>, %arg5: memref<32x512xf32, #tpu.memory_space<vmem>>, %arg6: memref<1x512xf32, #tpu.memory_space<vmem>>, %arg7: memref<2x4096xf32, #tpu.memory_space<vmem>>) attributes {dimension_semantics = [#tpu.dimension_semantics<parallel>], iteration_bounds = array<i64: 1>, scalar_prefetch = 0 : i64, scratch_operands = 0 : i64, tpu.core_type = #tpu.core_type<tc>, window_params = [{transform_indices = @transform_0, window_bounds = array<i64: 2, 4096>}, {pipeline_mode = #tpu.pipeline_mode<synchronous>, transform_indices = @transform_1, window_bounds = array<i64: 4096, 512>}, {pipeline_mode = #tpu.pipeline_mode<synchronous>, transform_indices = @transform_2, window_bounds = array<i64: 512, 32>}, {pipeline_mode = #tpu.pipeline_mode<synchronous>, transform_indices = @transform_3, window_bounds = array<i64: 1, 32>}, {pipeline_mode = #tpu.pipeline_mode<synchronous>, transform_indices = @transform_4, window_bounds = array<i64: 32, 512>}, {pipeline_mode = #tpu.pipeline_mode<synchronous>, transform_indices = @transform_5, window_bounds = array<i64: 1, 512>}, {transform_indices = @transform_6, window_bounds = array<i64: 2, 4096>}]} {
    %c0 = arith.constant 0 : index
    %c0_0 = arith.constant 0 : index
    %0 = vector.load %arg1[%c0, %c0_0] : memref<2x4096xf32, #tpu.memory_space<vmem>>, vector<2x4096xf32>
    %c0_1 = arith.constant 0 : index
    %c0_2 = arith.constant 0 : index
    %1 = vector.load %arg2[%c0_1, %c0_2] : memref<4096x512xf32, #tpu.memory_space<vmem>>, vector<4096x512xf32>
    %cst = arith.constant dense<0.000000e+00> : vector<2x512xf32>
    %2 = tpu.matmul %0, %1, %cst {dimension_numbers = #tpu.dot_dimension_numbers<[1], [0], [0], [1], [0, 0, 1, 1], [], []>} : vector<2x4096xf32>, vector<4096x512xf32>, vector<2x512xf32> -> vector<2x512xf32>
    %cst_3 = arith.constant 1.250000e-01 : f32
    %3 = vector.broadcast %cst_3 : f32 to vector<2x512xf32>
    %4 = arith.mulf %2, %3 : vector<2x512xf32>
    %c0_4 = arith.constant 0 : index
    %c0_5 = arith.constant 0 : index
    %5 = vector.load %arg3[%c0_4, %c0_5] : memref<512x32xf32, #tpu.memory_space<vmem>>, vector<512x32xf32>
    %cst_6 = arith.constant dense<0.000000e+00> : vector<2x32xf32>
    %6 = tpu.matmul %4, %5, %cst_6 {dimension_numbers = #tpu.dot_dimension_numbers<[1], [0], [0], [1], [0, 0, 1, 1], [], []>} : vector<2x512xf32>, vector<512x32xf32>, vector<2x32xf32> -> vector<2x32xf32>
    %c0_7 = arith.constant 0 : index
    %c0_8 = arith.constant 0 : index
    %7 = vector.load %arg4[%c0_7, %c0_8] : memref<1x32xf32, #tpu.memory_space<vmem>>, vector<1x32xf32>
    %8 = vector.broadcast %7 : vector<1x32xf32> to vector<2x32xf32>
    %9 = arith.addf %6, %8 : vector<2x32xf32>
    %cst_9 = arith.constant 0.000000e+00 : f32
    %10 = vector.broadcast %cst_9 : f32 to vector<2x32xf32>
    %11 = arith.maximumf %9, %10 : vector<2x32xf32>
    %c0_10 = arith.constant 0 : index
    %c0_11 = arith.constant 0 : index
    %12 = vector.load %arg5[%c0_10, %c0_11] : memref<32x512xf32, #tpu.memory_space<vmem>>, vector<32x512xf32>
    %cst_12 = arith.constant dense<0.000000e+00> : vector<2x512xf32>
    %13 = tpu.matmul %11, %12, %cst_12 {dimension_numbers = #tpu.dot_dimension_numbers<[1], [0], [0], [1], [0, 0, 1, 1], [], []>} : vector<2x32xf32>, vector<32x512xf32>, vector<2x512xf32> -> vector<2x512xf32>
    %c0_13 = arith.constant 0 : index
    %c0_14 = arith.constant 0 : index
    %14 = vector.load %arg6[%c0_13, %c0_14] : memref<1x512xf32, #tpu.memory_space<vmem>>, vector<1x512xf32>
    %15 = vector.broadcast %14 : vector<1x512xf32> to vector<2x512xf32>
    %16 = arith.addf %13, %15 : vector<2x512xf32>
    %17 = arith.negf %16 : vector<2x512xf32>
    %18 = math.exp %17 : vector<2x512xf32>
    %cst_15 = arith.constant 1.000000e+00 : f32
    %19 = vector.broadcast %cst_15 : f32 to vector<2x512xf32>
    %20 = arith.addf %19, %18 : vector<2x512xf32>
    %21 = arith.divf %19, %20 : vector<2x512xf32>
    %c0_16 = arith.constant 0 : index
    %c0_17 = arith.constant 0 : index
    %22 = vector.load %arg2[%c0_16, %c0_17] : memref<4096x512xf32, #tpu.memory_space<vmem>>, vector<4096x512xf32>
    %cst_18 = arith.constant dense<0.000000e+00> : vector<2x4096xf32>
    %23 = tpu.matmul %21, %22, %cst_18 {dimension_numbers = #tpu.dot_dimension_numbers<[1], [1], [0], [0], [0, 0, 1, 0], [], []>} : vector<2x512xf32>, vector<4096x512xf32>, vector<2x4096xf32> -> vector<2x4096xf32>
    %c0_19 = arith.constant 0 : index
    %c0_20 = arith.constant 0 : index
    %24 = vector.load %arg1[%c0_19, %c0_20] : memref<2x4096xf32, #tpu.memory_space<vmem>>, vector<2x4096xf32>
    %25 = arith.mulf %24, %23 : vector<2x4096xf32>
    %c0_21 = arith.constant 0 : index
    %c0_22 = arith.constant 0 : index
    %26 = vector.load %arg7[%c0_21, %c0_22] : memref<2x4096xf32, #tpu.memory_space<vmem>>, vector<2x4096xf32>
    tpu.vector_store %arg7[%c0_21, %c0_22], %25 {strides = array<i32>} : memref<2x4096xf32, #tpu.memory_space<vmem>>, vector<2x4096xf32>,
    return
  }
  func.func @transform_0(%arg0: i32) -> (i32, i32) {
    %c0_i32 = arith.constant 0 : i32
    %c0_i32_0 = arith.constant 0 : i32
    return %arg0, %c0_i32 : i32, i32
  }
  func.func @transform_1(%arg0: i32) -> (i32, i32) {
    %c0_i32 = arith.constant 0 : i32
    %c0_i32_0 = arith.constant 0 : i32
    %c0_i32_1 = arith.constant 0 : i32
    return %c0_i32, %c0_i32_0 : i32, i32
  }
  func.func @transform_2(%arg0: i32) -> (i32, i32) {
    %c0_i32 = arith.constant 0 : i32
    %c0_i32_0 = arith.constant 0 : i32
    %c0_i32_1 = arith.constant 0 : i32
    return %c0_i32, %c0_i32_0 : i32, i32
  }
  func.func @transform_3(%arg0: i32) -> (i32, i32) {
    %c0_i32 = arith.constant 0 : i32
    %c0_i32_0 = arith.constant 0 : i32
    %c0_i32_1 = arith.constant 0 : i32
    return %c0_i32, %c0_i32_0 : i32, i32
  }
  func.func @transform_4(%arg0: i32) -> (i32, i32) {
    %c0_i32 = arith.constant 0 : i32
    %c0_i32_0 = arith.constant 0 : i32
    %c0_i32_1 = arith.constant 0 : i32
    return %c0_i32, %c0_i32_0 : i32, i32
  }
  func.func @transform_5(%arg0: i32) -> (i32, i32) {
    %c0_i32 = arith.constant 0 : i32
    %c0_i32_0 = arith.constant 0 : i32
    %c0_i32_1 = arith.constant 0 : i32
    return %c0_i32, %c0_i32_0 : i32, i32
  }
  func.func @transform_6(%arg0: i32) -> (i32, i32) {
    %c0_i32 = arith.constant 0 : i32
    %c0_i32_0 = arith.constant 0 : i32
    return %arg0, %c0_i32 : i32, i32
  }
}

</mosaic_0001>

<llo_original>
// kernel: tpu_custom_call.1
$region0: #{tpu_custom_call.1}
  #allocation0 [shape = 'u32[]', space=smem, size = 0x4, offset = 0x4, fixed_abs, tag = 'smem constant byte address 0x4 - core index']
  #allocation1 [shape = 'u32[72,128]{1,0:T(1,128)}', space=vmem, size = 0x9000, scoped, tag = 'internal scratch']
  %s0 = inlined_call_operand.hbm [shape: f32[2,4096], index: 0, kind: input, shape index: {}]
  %s1 = inlined_call_operand.hbm [shape: f32[4096,512], index: 1, kind: input, shape index: {}]
  %s2 = inlined_call_operand.vmem [shape: f32[512,32], index: 2, kind: input, shape index: {}]
  %s3 = inlined_call_operand.hbm [shape: f32[1,32], index: 3, kind: input, shape index: {}]
  %s4 = inlined_call_operand.hbm [shape: f32[32,512], index: 4, kind: input, shape index: {}]
  %s5 = inlined_call_operand.hbm [shape: f32[1,512], index: 5, kind: input, shape index: {}]
  %s6 = inlined_call_operand.hbm [shape: f32[2,4096], index: 6, kind: output, shape index: {}]
  %s7 = sld [smem:[#allocation0]]
  $region54: #{tpu_custom_call.1} parent=0
    _
  %s9 = ssub.s32 1, %s7
  %s10 = scalar_select 0, %s9, %s7
  $region1: #{tpu_custom_call.1} parent=0
    #allocation2 [shape = 'u8[32768]{0}', space=vmem, size = 0x8000, scoped, tag = 'input window, operand 0, single buffered']
    #allocation3 [shape = 's32[1]{0}', space=sflag, size = 0x4, scoped, tag = 'scoped memory for tpu_custom_call.1']
    #allocation4 [shape = 's32[1]{0}', space=sflag, size = 0x4, scoped, tag = 'scoped memory for tpu_custom_call.1']
    #allocation5 [shape = 'u8[8388608]{0}', space=vmem, size = 0x800000, scoped, tag = 'input window, operand 1, single buffered']
    #allocation6 [shape = 's32[1]{0}', space=sflag, size = 0x4, scoped, tag = 'scoped memory for tpu_custom_call.1']
    #allocation7 [shape = 'u8[512]{0}', space=vmem, size = 0x400, scoped, tag = 'input window, operand 3, single buffered']
    #allocation8 [shape = 'u8[65536]{0}', space=vmem, size = 0x10000, scoped, tag = 'input window, operand 4, single buffered']
    #allocation9 [shape = 's32[1]{0}', space=sflag, size = 0x4, scoped, tag = 'scoped memory for tpu_custom_call.1']
    #allocation10 [shape = 'u8[2048]{0}', space=vmem, size = 0x800, scoped, tag = 'input window, operand 5, single buffered']
    #allocation11 [shape = 'u8[32768]{0}', space=vmem, size = 0x8000, scoped, tag = 'output window, operand 0, single buffered']
    %11 = vsyncpa [#allocation3], 0
    %12 = vsyncpa [#allocation6], 0
    %13 = vsyncpa [#allocation9], 0
    %14 = vsyncpa [#allocation4], 0
    // Predicated region
    $region2: #{tpu_custom_call.1} parent=1 // pred_check
      _
    $region3: #{tpu_custom_call.1} parent=1 // pred_check_branch
      %16 = sbr.rel (0) target = $region5
    $region4: #{tpu_custom_call.1} parent=1 // pred_region
      %18 = vsyncadd [#allocation3], 0
      %s20 = sshll.u32 %s0, 4
      %s21 = int_to_ptr.hbm [resolvable:$true] %s20
      %s22 = sshll.u32 [#allocation2], 4
      %s23 = int_to_ptr.vmem [resolvable:$true] %s22
      %25 = dma.hbm_to_vmem [thread:$0]  %s21, 1024, %s23, [#allocation3]
    $region5: #{tpu_custom_call.1} parent=1 // pred_fallthru
      _
    // Predicated region
    $region6: #{tpu_custom_call.1} parent=1 // pred_check
      _
    $region7: #{tpu_custom_call.1} parent=1 // pred_check_branch
      %27 = sbr.rel (0) target = $region9
    $region8: #{tpu_custom_call.1} parent=1 // pred_region
      %29 = vsyncadd [#allocation6], 0
      %s30 = sshll.u32 %s1, 4
      %s31 = int_to_ptr.hbm [resolvable:$true] %s30
      %s32 = sshll.u32 [#allocation5], 4
      %s33 = int_to_ptr.vmem [resolvable:$true] %s32
      %38 = dma.hbm_to_vmem [thread:$0]  %s31, 262144, %s33, [#allocation6], 512, 512, 32
    $region9: #{tpu_custom_call.1} parent=1 // pred_fallthru
      _
    // Predicated region
    $region10: #{tpu_custom_call.1} parent=1 // pred_check
      _
    $region11: #{tpu_custom_call.1} parent=1 // pred_check_branch
      %40 = sbr.rel (0) target = $region13
    $region12: #{tpu_custom_call.1} parent=1 // pred_region
      _
    $region13: #{tpu_custom_call.1} parent=1 // pred_fallthru
      _
    // Predicated region
    $region14: #{tpu_custom_call.1} parent=1 // pred_check
      _
    $region15: #{tpu_custom_call.1} parent=1 // pred_check_branch
      %42 = sbr.rel (0) target = $region17
    $region16: #{tpu_custom_call.1} parent=1 // pred_region
      %44 = vsyncadd [#allocation6], 0
      %s46 = sshll.u32 %s3, 4
      %s47 = int_to_ptr.hbm [resolvable:$true] %s46
      %s48 = sshll.u32 [#allocation7], 4
      %s49 = int_to_ptr.vmem [resolvable:$true] %s48
      %51 = dma.hbm_to_vmem [thread:$0]  %s47, 16, %s49, [#allocation6]
    $region17: #{tpu_custom_call.1} parent=1 // pred_fallthru
      _
    // Predicated region
    $region18: #{tpu_custom_call.1} parent=1 // pred_check
      _
    $region19: #{tpu_custom_call.1} parent=1 // pred_check_branch
      %53 = sbr.rel (0) target = $region21
    $region20: #{tpu_custom_call.1} parent=1 // pred_region
      %55 = vsyncadd [#allocation9], 0
      %s56 = sshll.u32 %s4, 4
      %s57 = int_to_ptr.hbm [resolvable:$true] %s56
      %s58 = sshll.u32 [#allocation8], 4
      %s59 = int_to_ptr.vmem [resolvable:$true] %s58
      %64 = dma.hbm_to_vmem [thread:$0]  %s57, 2048, %s59, [#allocation9], 512, 512, 32
    $region21: #{tpu_custom_call.1} parent=1 // pred_fallthru
      _
    // Predicated region
    $region22: #{tpu_custom_call.1} parent=1 // pred_check
      _
    $region23: #{tpu_custom_call.1} parent=1 // pred_check_branch
      %66 = sbr.rel (0) target = $region25
    $region24: #{tpu_custom_call.1} parent=1 // pred_region
      %68 = vsyncadd [#allocation9], 0
      %s70 = sshll.u32 %s5, 4
      %s71 = int_to_ptr.hbm [resolvable:$true] %s70
      %s72 = sshll.u32 [#allocation10], 4
      %s73 = int_to_ptr.vmem [resolvable:$true] %s72
      %75 = dma.hbm_to_vmem [thread:$0]  %s71, 64, %s73, [#allocation9]
    $region25: #{tpu_custom_call.1} parent=1 // pred_fallthru
      _
    // Predicated region
    $region26: #{tpu_custom_call.1} parent=1 // pred_check
      _
    $region27: #{tpu_custom_call.1} parent=1 // pred_check_branch
      %77 = sbr.rel (0) target = $region29
    $region28: #{tpu_custom_call.1} parent=1 // pred_region
      %79 = dma.done [#allocation3], 1024
    $region29: #{tpu_custom_call.1} parent=1 // pred_fallthru
      _
    // Predicated region
    $region30: #{tpu_custom_call.1} parent=1 // pred_check
      _
    $region31: #{tpu_custom_call.1} parent=1 // pred_check_branch
      %81 = sbr.rel (0) target = $region33
    $region32: #{tpu_custom_call.1} parent=1 // pred_region
      %83 = dma.done [#allocation6], 262144
    $region33: #{tpu_custom_call.1} parent=1 // pred_fallthru
      _
    // Predicated region
    $region34: #{tpu_custom_call.1} parent=1 // pred_check
      _
    $region35: #{tpu_custom_call.1} parent=1 // pred_check_branch
      %85 = sbr.rel (0) target = $region37
    $region36: #{tpu_custom_call.1} parent=1 // pred_region
      %87 = dma.done [#allocation6], 16
    $region37: #{tpu_custom_call.1} parent=1 // pred_fallthru
      _
    // Predicated region
    $region38: #{tpu_custom_call.1} parent=1 // pred_check
      _
    $region39: #{tpu_custom_call.1} parent=1 // pred_check_branch
      %89 = sbr.rel (0) target = $region41
    $region40: #{tpu_custom_call.1} parent=1 // pred_region
      %91 = dma.done [#allocation9], 2048
    $region41: #{tpu_custom_call.1} parent=1 // pred_fallthru
      _
    // Predicated region
    $region42: #{tpu_custom_call.1} parent=1 // pred_check
      _
    $region43: #{tpu_custom_call.1} parent=1 // pred_check_branch
      %93 = sbr.rel (0) target = $region45
    $region44: #{tpu_custom_call.1} parent=1 // pred_region
      %95 = dma.done [#allocation9], 64
    $region45: #{tpu_custom_call.1} parent=1 // pred_fallthru
      _
    %v96 = vld [vmem:[#allocation2] sm:$0xff]
    %v97 = vld [vmem:[#allocation2 + $0x8] sm:$0xff]
    %v98 = vld [vmem:[#allocation2 + $0x10] sm:$0xff]
    %v99 = vld [vmem:[#allocation2 + $0x18] sm:$0xff]
    %v100 = vld [vmem:[#allocation2 + $0x20] sm:$0xff]
    %v101 = vld [vmem:[#allocation2 + $0x28] sm:$0xff]
    %v102 = vld [vmem:[#allocation2 + $0x30] sm:$0xff]
    %v103 = vld [vmem:[#allocation2 + $0x38] sm:$0xff]
    %v104 = vld [vmem:[#allocation5] sm:$0xff]
    %v105 = vld [vmem:[#allocation5 + $0x8] sm:$0xff]
    %v106 = vld [vmem:[#allocation5 + $0x10] sm:$0xff]
    %v107 = vld [vmem:[#allocation5 + $0x18] sm:$0xff]
    %v108 = vld [vmem:[#allocation5 + $0x20] sm:$0xff]
    %v109 = vld [vmem:[#allocation5 + $0x28] sm:$0xff]
    %v110 = vld [vmem:[#allocation5 + $0x30] sm:$0xff]
    %v111 = vld [vmem:[#allocation5 + $0x38] sm:$0xff]
    %v112 = vld [vmem:[#allocation5 + $0x40] sm:$0xff]
    %v113 = vld [vmem:[#allocation5 + $0x48] sm:$0xff]
    %v114 = vld [vmem:[#allocation5 + $0x50] sm:$0xff]
    %v115 = vld [vmem:[#allocation5 + $0x58] sm:$0xff]
    %v116 = vld [vmem:[#allocation5 + $0x60] sm:$0xff]
    %v117 = vld [vmem:[#allocation5 + $0x68] sm:$0xff]
    %v118 = vld [vmem:[#allocation5 + $0x70] sm:$0xff]
    %v119 = vld [vmem:[#allocation5 + $0x78] sm:$0xff]
    %v120 = vld [vmem:[#allocation5 + $0x80] sm:$0xff]
    %v121 = vld [vmem:[#allocation5 + $0x88] sm:$0xff]
    %v122 = vld [vmem:[#allocation5 + $0x90] sm:$0xff]
    %v123 = vld [vmem:[#allocation5 + $0x98] sm:$0xff]
    %v124 = vld [vmem:[#allocation5 + $0xa0] sm:$0xff]
    %v125 = vld [vmem:[#allocation5 + $0xa8] sm:$0xff]
    %v126 = vld [vmem:[#allocation5 + $0xb0] sm:$0xff]
    %v127 = vld [vmem:[#allocation5 + $0xb8] sm:$0xff]
    %v128 = vld [vmem:[#allocation5 + $0xc0] sm:$0xff]
    %v129 = vld [vmem:[#allocation5 + $0xc8] sm:$0xff]
    %v130 = vld [vmem:[#allocation5 + $0xd0] sm:$0xff]
    %v131 = vld [vmem:[#allocation5 + $0xd8] sm:$0xff]
    %v132 = vld [vmem:[#allocation5 + $0xe0] sm:$0xff]
    %v133 = vld [vmem:[#allocation5 + $0xe8] sm:$0xff]
    %v134 = vld [vmem:[#allocation5 + $0xf0] sm:$0xff]
    %v135 = vld [vmem:[#allocation5 + $0xf8] sm:$0xff]
    %v136 = vld [vmem:[#allocation5 + $0x100] sm:$0xff]
    %v137 = vld [vmem:[#allocation5 + $0x108] sm:$0xff]
    %v138 = vld [vmem:[#allocation5 + $0x110] sm:$0xff]
    %v139 = vld [vmem:[#allocation5 + $0x118] sm:$0xff]
    %v140 = vld [vmem:[#allocation5 + $0x120] sm:$0xff]
    %v141 = vld [vmem:[#allocation5 + $0x128] sm:$0xff]
    %v142 = vld [vmem:[#allocation5 + $0x130] sm:$0xff]
    %v143 = vld [vmem:[#allocation5 + $0x138] sm:$0xff]
    %v144 = vld [vmem:[#allocation5 + $0x140] sm:$0xff]
    %v145 = vld [vmem:[#allocation5 + $0x148] sm:$0xff]
    %v146 = vld [vmem:[#allocation5 + $0x150] sm:$0xff]
    %v147 = vld [vmem:[#allocation5 + $0x158] sm:$0xff]
    %v148 = vld [vmem:[#allocation5 + $0x160] sm:$0xff]
    %v149 = vld [vmem:[#allocation5 + $0x168] sm:$0xff]
    %v150 = vld [vmem:[#allocation5 + $0x170] sm:$0xff]
    %v151 = vld [vmem:[#allocation5 + $0x178] sm:$0xff]
    %v152 = vld [vmem:[#allocation5 + $0x180] sm:$0xff]
    %v153 = vld [vmem:[#allocation5 + $0x188] sm:$0xff]
    %v154 = vld [vmem:[#allocation5 + $0x190] sm:$0xff]
    %v155 = vld [vmem:[#allocation5 + $0x198] sm:$0xff]
    %v156 = vld [vmem:[#allocation5 + $0x1a0] sm:$0xff]
    %v157 = vld [vmem:[#allocation5 + $0x1a8] sm:$0xff]
    %v158 = vld [vmem:[#allocation5 + $0x1b0] sm:$0xff]
    %v159 = vld [vmem:[#allocation5 + $0x1b8] sm:$0xff]
    %v160 = vld [vmem:[#allocation5 + $0x1c0] sm:$0xff]
    %v161 = vld [vmem:[#allocation5 + $0x1c8] sm:$0xff]
    %v162 = vld [vmem:[#allocation5 + $0x1d0] sm:$0xff]
    %v163 = vld [vmem:[#allocation5 + $0x1d8] sm:$0xff]
    %v164 = vld [vmem:[#allocation5 + $0x1e0] sm:$0xff]
    %v165 = vld [vmem:[#allocation5 + $0x1e8] sm:$0xff]
    %v166 = vld [vmem:[#allocation5 + $0x1f0] sm:$0xff]
    %v167 = vld [vmem:[#allocation5 + $0x1f8] sm:$0xff]
    %v168 = vld [vmem:[#allocation5 + $0x200] sm:$0xff]
    %v169 = vld [vmem:[#allocation5 + $0x208] sm:$0xff]
    %v170 = vld [vmem:[#allocation5 + $0x210] sm:$0xff]
    %v171 = vld [vmem:[#allocation5 + $0x218] sm:$0xff]
    %v172 = vld [vmem:[#allocation5 + $0x220] sm:$0xff]
    %v173 = vld [vmem:[#allocation5 + $0x228] sm:$0xff]
    %v174 = vld [vmem:[#allocation5 + $0x230] sm:$0xff]
    %v175 = vld [vmem:[#allocation5 + $0x238] sm:$0xff]
    %v176 = vld [vmem:[#allocation5 + $0x240] sm:$0xff]
    %v177 = vld [vmem:[#allocation5 + $0x248] sm:$0xff]
    %v178 = vld [vmem:[#allocation5 + $0x250] sm:$0xff]
    %v179 = vld [vmem:[#allocation5 + $0x258] sm:$0xff]
    %v180 = vld [vmem:[#allocation5 + $0x260] sm:$0xff]
    %v181 = vld [vmem:[#allocation5 + $0x268] sm:$0xff]
    %v182 = vld [vmem:[#allocation5 + $0x270] sm:$0xff]
    %v183 = vld [vmem:[#allocation5 + $0x278] sm:$0xff]
    %v184 = vld [vmem:[#allocation5 + $0x280] sm:$0xff]
    %v185 = vld [vmem:[#allocation5 + $0x288] sm:$0xff]
    %v186 = vld [vmem:[#allocation5 + $0x290] sm:$0xff]
    %v187 = vld [vmem:[#allocation5 + $0x298] sm:$0xff]
    %v188 = vld [vmem:[#allocation5 + $0x2a0] sm:$0xff]
    %v189 = vld [vmem:[#allocation5 + $0x2a8] sm:$0xff]
    %v190 = vld [vmem:[#allocation5 + $0x2b0] sm:$0xff]
    %v191 = vld [vmem:[#allocation5 + $0x2b8] sm:$0xff]
    %v192 = vld [vmem:[#allocation5 + $0x2c0] sm:$0xff]
    %v193 = vld [vmem:[#allocation5 + $0x2c8] sm:$0xff]
    %v194 = vld [vmem:[#allocation5 + $0x2d0] sm:$0xff]
    %v195 = vld [vmem:[#allocation5 + $0x2d8] sm:$0xff]
    %v196 = vld [vmem:[#allocation5 + $0x2e0] sm:$0xff]
    %v197 = vld [vmem:[#allocation5 + $0x2e8] sm:$0xff]
    %v198 = vld [vmem:[#allocation5 + $0x2f0] sm:$0xff]
    %v199 = vld [vmem:[#allocation5 + $0x2f8] sm:$0xff]
    %v200 = vld [vmem:[#allocation5 + $0x300] sm:$0xff]
    %v201 = vld [vmem:[#allocation5 + $0x308] sm:$0xff]
    %v202 = vld [vmem:[#allocation5 + $0x310] sm:$0xff]
    %v203 = vld [vmem:[#allocation5 + $0x318] sm:$0xff]
    %v204 = vld [vmem:[#allocation5 + $0x320] sm:$0xff]
    %v205 = vld [vmem:[#allocation5 + $0x328] sm:$0xff]
    %v206 = vld [vmem:[#allocation5 + $0x330] sm:$0xff]
    %v207 = vld [vmem:[#allocation5 + $0x338] sm:$0xff]
    %v208 = vld [vmem:[#allocation5 + $0x340] sm:$0xff]
    %v209 = vld [vmem:[#allocation5 + $0x348] sm:$0xff]
    %v210 = vld [vmem:[#allocation5 + $0x350] sm:$0xff]
    %v211 = vld [vmem:[#allocation5 + $0x358] sm:$0xff]
    %v212 = vld [vmem:[#allocation5 + $0x360] sm:$0xff]
    %v213 = vld [vmem:[#allocation5 + $0x368] sm:$0xff]
    %v214 = vld [vmem:[#allocation5 + $0x370] sm:$0xff]
    %v215 = vld [vmem:[#allocation5 + $0x378] sm:$0xff]
    %v216 = vld [vmem:[#allocation5 + $0x380] sm:$0xff]
    %v217 = vld [vmem:[#allocation5 + $0x388] sm:$0xff]
    %v218 = vld [vmem:[#allocation5 + $0x390] sm:$0xff]
    %v219 = vld [vmem:[#allocation5 + $0x398] sm:$0xff]
    %v220 = vld [vmem:[#allocation5 + $0x3a0] sm:$0xff]
    %v221 = vld [vmem:[#allocation5 + $0x3a8] sm:$0xff]
    %v222 = vld [vmem:[#allocation5 + $0x3b0] sm:$0xff]
    %v223 = vld [vmem:[#allocation5 + $0x3b8] sm:$0xff]
    %v224 = vld [vmem:[#allocation5 + $0x3c0] sm:$0xff]
    %v225 = vld [vmem:[#allocation5 + $0x3c8] sm:$0xff]
    %v226 = vld [vmem:[#allocation5 + $0x3d0] sm:$0xff]
    %v227 = vld [vmem:[#allocation5 + $0x3d8] sm:$0xff]
    %v228 = vld [vmem:[#allocation5 + $0x3e0] sm:$0xff]
    %v229 = vld [vmem:[#allocation5 + $0x3e8] sm:$0xff]
    %v230 = vld [vmem:[#allocation5 + $0x3f0] sm:$0xff]
    %v231 = vld [vmem:[#allocation5 + $0x3f8] sm:$0xff]
    %v232 = vld [vmem:[#allocation5 + $0x400] sm:$0xff]
    %v233 = vld [vmem:[#allocation5 + $0x408] sm:$0xff]
    %v234 = vld [vmem:[#allocation5 + $0x410] sm:$0xff]
    %v235 = vld [vmem:[#allocation5 + $0x418] sm:$0xff]
    %v236 = vld [vmem:[#allocation5 + $0x420] sm:$0xff]
    %v237 = vld [vmem:[#allocation5 + $0x428] sm:$0xff]
    %v238 = vld [vmem:[#allocation5 + $0x430] sm:$0xff]
    %v239 = vld [vmem:[#allocation5 + $0x438] sm:$0xff]
    %v240 = vld [vmem:[#allocation5 + $0x440] sm:$0xff]
    %v241 = vld [vmem:[#allocation5 + $0x448] sm:$0xff]
    %v242 = vld [vmem:[#allocation5 + $0x450] sm:$0xff]
    %v243 = vld [vmem:[#allocation5 + $0x458] sm:$0xff]
    %v244 = vld [vmem:[#allocation5 + $0x460] sm:$0xff]
    %v245 = vld [vmem:[#allocation5 + $0x468] sm:$0xff]
    %v246 = vld [vmem:[#allocation5 + $0x470] sm:$0xff]
    %v247 = vld [vmem:[#allocation5 + $0x478] sm:$0xff]
    %v248 = vld [vmem:[#allocation5 + $0x480] sm:$0xff]
    %v249 = vld [vmem:[#allocation5 + $0x488] sm:$0xff]
    %v250 = vld [vmem:[#allocation5 + $0x490] sm:$0xff]
    %v251 = vld [vmem:[#allocation5 + $0x498] sm:$0xff]
    %v252 = vld [vmem:[#allocation5 + $0x4a0] sm:$0xff]
    %v253 = vld [vmem:[#allocation5 + $0x4a8] sm:$0xff]
    %v254 = vld [vmem:[#allocation5 + $0x4b0] sm:$0xff]
    %v255 = vld [vmem:[#allocation5 + $0x4b8] sm:$0xff]
    %v256 = vld [vmem:[#allocation5 + $0x4c0] sm:$0xff]
    %v257 = vld [vmem:[#allocation5 + $0x4c8] sm:$0xff]
    %v258 = vld [vmem:[#allocation5 + $0x4d0] sm:$0xff]
    %v259 = vld [vmem:[#allocation5 + $0x4d8] sm:$0xff]
    %v260 = vld [vmem:[#allocation5 + $0x4e0] sm:$0xff]
    %v261 = vld [vmem:[#allocation5 + $0x4e8] sm:$0xff]
    %v262 = vld [vmem:[#allocation5 + $0x4f0] sm:$0xff]
    %v263 = vld [vmem:[#allocation5 + $0x4f8] sm:$0xff]
    %v264 = vld [vmem:[#allocation5 + $0x500] sm:$0xff]
    %v265 = vld [vmem:[#allocation5 + $0x508] sm:$0xff]
    %v266 = vld [vmem:[#allocation5 + $0x510] sm:$0xff]
    %v267 = vld [vmem:[#allocation5 + $0x518] sm:$0xff]
    %v268 = vld [vmem:[#allocation5 + $0x520] sm:$0xff]
    %v269 = vld [vmem:[#allocation5 + $0x528] sm:$0xff]
    %v270 = vld [vmem:[#allocation5 + $0x530] sm:$0xff]
    %v271 = vld [vmem:[#allocation5 + $0x538] sm:$0xff]
    %v272 = vld [vmem:[#allocation5 + $0x540] sm:$0xff]
    %v273 = vld [vmem:[#allocation5 + $0x548] sm:$0xff]
    %v274 = vld [vmem:[#allocation5 + $0x550] sm:$0xff]
    %v275 = vld [vmem:[#allocation5 + $0x558] sm:$0xff]
    %v276 = vld [vmem:[#allocation5 + $0x560] sm:$0xff]
    %v277 = vld [vmem:[#allocation5 + $0x568] sm:$0xff]
    %v278 = vld [vmem:[#allocation5 + $0x570] sm:$0xff]
    %v279 = vld [vmem:[#allocation5 + $0x578] sm:$0xff]
    %v280 = vld [vmem:[#allocation5 + $0x580] sm:$0xff]
    %v281 = vld [vmem:[#allocation5 + $0x588] sm:$0xff]
    %v282 = vld [vmem:[#allocation5 + $0x590] sm:$0xff]
    %v283 = vld [vmem:[#allocation5 + $0x598] sm:$0xff]
    %v284 = vld [vmem:[#allocation5 + $0x5a0] sm:$0xff]
    %v285 = vld [vmem:[#allocation5 + $0x5a8] sm:$0xff]
    %v286 = vld [vmem:[#allocation5 + $0x5b0] sm:$0xff]
    %v287 = vld [vmem:[#allocation5 + $0x5b8] sm:$0xff]
    %v288 = vld [vmem:[#allocation5 + $0x5c0] sm:$0xff]
    %v289 = vld [vmem:[#allocation5 + $0x5c8] sm:$0xff]
    %v290 = vld [vmem:[#allocation5 + $0x5d0] sm:$0xff]
    %v291 = vld [vmem:[#allocation5 + $0x5d8] sm:$0xff]
    %v292 = vld [vmem:[#allocation5 + $0x5e0] sm:$0xff]
    %v293 = vld [vmem:[#allocation5 + $0x5e8] sm:$0xff]
    %v294 = vld [vmem:[#allocation5 + $0x5f0] sm:$0xff]
    %v295 = vld [vmem:[#allocation5 + $0x5f8] sm:$0xff]
    %v296 = vld [vmem:[#allocation5 + $0x600] sm:$0xff]
    %v297 = vld [vmem:[#allocation5 + $0x608] sm:$0xff]
    %v298 = vld [vmem:[#allocation5 + $0x610] sm:$0xff]
    %v299 = vld [vmem:[#allocation5 + $0x618] sm:$0xff]
    %v300 = vld [vmem:[#allocation5 + $0x620] sm:$0xff]
    %v301 = vld [vmem:[#allocation5 + $0x628] sm:$0xff]
    %v302 = vld [vmem:[#allocation5 + $0x630] sm:$0xff]
    %v303 = vld [vmem:[#allocation5 + $0x638] sm:$0xff]
    %v304 = vld [vmem:[#allocation5 + $0x640] sm:$0xff]
    %v305 = vld [vmem:[#allocation5 + $0x648] sm:$0xff]
    %v306 = vld [vmem:[#allocation5 + $0x650] sm:$0xff]
    %v307 = vld [vmem:[#allocation5 + $0x658] sm:$0xff]
    %v308 = vld [vmem:[#allocation5 + $0x660] sm:$0xff]
    %v309 = vld [vmem:[#allocation5 + $0x668] sm:$0xff]
    %v310 = vld [vmem:[#allocation5 + $0x670] sm:$0xff]
    %v311 = vld [vmem:[#allocation5 + $0x678] sm:$0xff]
    %v312 = vld [vmem:[#allocation5 + $0x680] sm:$0xff]
    %v313 = vld [vmem:[#allocation5 + $0x688] sm:$0xff]
    %v314 = vld [vmem:[#allocation5 + $0x690] sm:$0xff]
    %v315 = vld [vmem:[#allocation5 + $0x698] sm:$0xff]
    %v316 = vld [vmem:[#allocation5 + $0x6a0] sm:$0xff]
    %v317 = vld [vmem:[#allocation5 + $0x6a8] sm:$0xff]
    %v318 = vld [vmem:[#allocation5 + $0x6b0] sm:$0xff]
    %v319 = vld [vmem:[#allocation5 + $0x6b8] sm:$0xff]
    %v320 = vld [vmem:[#allocation5 + $0x6c0] sm:$0xff]
    %v321 = vld [vmem:[#allocation5 + $0x6c8] sm:$0xff]
    %v322 = vld [vmem:[#allocation5 + $0x6d0] sm:$0xff]
    %v323 = vld [vmem:[#allocation5 + $0x6d8] sm:$0xff]
    %v324 = vld [vmem:[#allocation5 + $0x6e0] sm:$0xff]
    %v325 = vld [vmem:[#allocation5 + $0x6e8] sm:$0xff]
    %v326 = vld [vmem:[#allocation5 + $0x6f0] sm:$0xff]
    %v327 = vld [vmem:[#allocation5 + $0x6f8] sm:$0xff]
    %v328 = vld [vmem:[#allocation5 + $0x700] sm:$0xff]
    %v329 = vld [vmem:[#allocation5 + $0x708] sm:$0xff]
    %v330 = vld [vmem:[#allocation5 + $0x710] sm:$0xff]
    %v331 = vld [vmem:[#allocation5 + $0x718] sm:$0xff]
    %v332 = vld [vmem:[#allocation5 + $0x720] sm:$0xff]
    %v333 = vld [vmem:[#allocation5 + $0x728] sm:$0xff]
    %v334 = vld [vmem:[#allocation5 + $0x730] sm:$0xff]
    %v335 = vld [vmem:[#allocation5 + $0x738] sm:$0xff]
    %v336 = vld [vmem:[#allocation5 + $0x740] sm:$0xff]
    %v337 = vld [vmem:[#allocation5 + $0x748] sm:$0xff]
    %v338 = vld [vmem:[#allocation5 + $0x750] sm:$0xff]
    %v339 = vld [vmem:[#allocation5 + $0x758] sm:$0xff]
    %v340 = vld [vmem:[#allocation5 + $0x760] sm:$0xff]
    %v341 = vld [vmem:[#allocation5 + $0x768] sm:$0xff]
    %v342 = vld [vmem:[#allocation5 + $0x770] sm:$0xff]
    %v343 = vld [vmem:[#allocation5 + $0x778] sm:$0xff]
    %v344 = vld [vmem:[#allocation5 + $0x780] sm:$0xff]
    %v345 = vld [vmem:[#allocation5 + $0x788] sm:$0xff]
    %v346 = vld [vmem:[#allocation5 + $0x790] sm:$0xff]
    %v347 = vld [vmem:[#allocation5 + $0x798] sm:$0xff]
    %v348 = vld [vmem:[#allocation5 + $0x7a0] sm:$0xff]
    %v349 = vld [vmem:[#allocation5 + $0x7a8] sm:$0xff]
    %v350 = vld [vmem:[#allocation5 + $0x7b0] sm:$0xff]
    %v351 = vld [vmem:[#allocation5 + $0x7b8] sm:$0xff]
    %v352 = vld [vmem:[#allocation5 + $0x7c0] sm:$0xff]
    %v353 = vld [vmem:[#allocation5 + $0x7c8] sm:$0xff]
    %v354 = vld [vmem:[#allocation5 + $0x7d0] sm:$0xff]
    %v355 = vld [vmem:[#allocation5 + $0x7d8] sm:$0xff]
    %v356 = vld [vmem:[#allocation5 + $0x7e0] sm:$0xff]
    %v357 = vld [vmem:[#allocation5 + $0x7e8] sm:$0xff]
    %v358 = vld [vmem:[#allocation5 + $0x7f0] sm:$0xff]
    %v359 = vld [vmem:[#allocation5 + $0x7f8] sm:$0xff]
    %v360 = vld [vmem:[#allocation5 + $0x800] sm:$0xff]
    %v361 = vld [vmem:[#allocation5 + $0x808] sm:$0xff]
    %v362 = vld [vmem:[#allocation5 + $0x810] sm:$0xff]
    %v363 = vld [vmem:[#allocation5 + $0x818] sm:$0xff]
    %v364 = vld [vmem:[#allocation5 + $0x820] sm:$0xff]
    %v365 = vld [vmem:[#allocation5 + $0x828] sm:$0xff]
    %v366 = vld [vmem:[#allocation5 + $0x830] sm:$0xff]
    %v367 = vld [vmem:[#allocation5 + $0x838] sm:$0xff]
    %v368 = vld [vmem:[#allocation5 + $0x840] sm:$0xff]
    %v369 = vld [vmem:[#allocation5 + $0x848] sm:$0xff]
    %v370 = vld [vmem:[#allocation5 + $0x850] sm:$0xff]
    %v371 = vld [vmem:[#allocation5 + $0x858] sm:$0xff]
    %v372 = vld [vmem:[#allocation5 + $0x860] sm:$0xff]
    %v373 = vld [vmem:[#allocation5 + $0x868] sm:$0xff]
    %v374 = vld [vmem:[#allocation5 + $0x870] sm:$0xff]
    %v375 = vld [vmem:[#allocation5 + $0x878] sm:$0xff]
    %v376 = vld [vmem:[#allocation5 + $0x880] sm:$0xff]
    %v377 = vld [vmem:[#allocation5 + $0x888] sm:$0xff]
    %v378 = vld [vmem:[#allocation5 + $0x890] sm:$0xff]
    %v379 = vld [vmem:[#allocation5 + $0x898] sm:$0xff]
    %v380 = vld [vmem:[#allocation5 + $0x8a0] sm:$0xff]
    %v381 = vld [vmem:[#allocation5 + $0x8a8] sm:$0xff]
    %v382 = vld [vmem:[#allocation5 + $0x8b0] sm:$0xff]
    %v383 = vld [vmem:[#allocation5 + $0x8b8] sm:$0xff]
    %v384 = vld [vmem:[#allocation5 + $0x8c0] sm:$0xff]
    %v385 = vld [vmem:[#allocation5 + $0x8c8] sm:$0xff]
    %v386 = vld [vmem:[#allocation5 + $0x8d0] sm:$0xff]
    %v387 = vld [vmem:[#allocation5 + $0x8d8] sm:$0xff]
    %v388 = vld [vmem:[#allocation5 + $0x8e0] sm:$0xff]
    %v389 = vld [vmem:[#allocation5 + $0x8e8] sm:$0xff]
    %v390 = vld [vmem:[#allocation5 + $0x8f0] sm:$0xff]
    %v391 = vld [vmem:[#allocation5 + $0x8f8] sm:$0xff]
    %v392 = vld [vmem:[#allocation5 + $0x900] sm:$0xff]
    %v393 = vld [vmem:[#allocation5 + $0x908] sm:$0xff]
    %v394 = vld [vmem:[#allocation5 + $0x910] sm:$0xff]
    %v395 = vld [vmem:[#allocation5 + $0x918] sm:$0xff]
    %v396 = vld [vmem:[#allocation5 + $0x920] sm:$0xff]
    %v397 = vld [vmem:[#allocation5 + $0x928] sm:$0xff]
    %v398 = vld [vmem:[#allocation5 + $0x930] sm:$0xff]
    %v399 = vld [vmem:[#allocation5 + $0x938] sm:$0xff]
    %v400 = vld [vmem:[#allocation5 + $0x940] sm:$0xff]
    %v401 = vld [vmem:[#allocation5 + $0x948] sm:$0xff]
    %v402 = vld [vmem:[#allocation5 + $0x950] sm:$0xff]
    %v403 = vld [vmem:[#allocation5 + $0x958] sm:$0xff]
    %v404 = vld [vmem:[#allocation5 + $0x960] sm:$0xff]
    %v405 = vld [vmem:[#allocation5 + $0x968] sm:$0xff]
    %v406 = vld [vmem:[#allocation5 + $0x970] sm:$0xff]
    %v407 = vld [vmem:[#allocation5 + $0x978] sm:$0xff]
    %v408 = vld [vmem:[#allocation5 + $0x980] sm:$0xff]
    %v409 = vld [vmem:[#allocation5 + $0x988] sm:$0xff]
    %v410 = vld [vmem:[#allocation5 + $0x990] sm:$0xff]
    %v411 = vld [vmem:[#allocation5 + $0x998] sm:$0xff]
    %v412 = vld [vmem:[#allocation5 + $0x9a0] sm:$0xff]
    %v413 = vld [vmem:[#allocation5 + $0x9a8] sm:$0xff]
    %v414 = vld [vmem:[#allocation5 + $0x9b0] sm:$0xff]
    %v415 = vld [vmem:[#allocation5 + $0x9b8] sm:$0xff]
    %v416 = vld [vmem:[#allocation5 + $0x9c0] sm:$0xff]
    %v417 = vld [vmem:[#allocation5 + $0x9c8] sm:$0xff]
    %v418 = vld [vmem:[#allocation5 + $0x9d0] sm:$0xff]
    %v419 = vld [vmem:[#allocation5 + $0x9d8] sm:$0xff]
    %v420 = vld [vmem:[#allocation5 + $0x9e0] sm:$0xff]
    %v421 = vld [vmem:[#allocation5 + $0x9e8] sm:$0xff]
    %v422 = vld [vmem:[#allocation5 + $0x9f0] sm:$0xff]
    %v423 = vld [vmem:[#allocation5 + $0x9f8] sm:$0xff]
    %v424 = vld [vmem:[#allocation5 + $0xa00] sm:$0xff]
    %v425 = vld [vmem:[#allocation5 + $0xa08] sm:$0xff]
    %v426 = vld [vmem:[#allocation5 + $0xa10] sm:$0xff]
    %v427 = vld [vmem:[#allocation5 + $0xa18] sm:$0xff]
    %v428 = vld [vmem:[#allocation5 + $0xa20] sm:$0xff]
    %v429 = vld [vmem:[#allocation5 + $0xa28] sm:$0xff]
    %v430 = vld [vmem:[#allocation5 + $0xa30] sm:$0xff]
    %v431 = vld [vmem:[#allocation5 + $0xa38] sm:$0xff]
    %v432 = vld [vmem:[#allocation5 + $0xa40] sm:$0xff]
    %v433 = vld [vmem:[#allocation5 + $0xa48] sm:$0xff]
    %v434 = vld [vmem:[#allocation5 + $0xa50] sm:$0xff]
    %v435 = vld [vmem:[#allocation5 + $0xa58] sm:$0xff]
    %v436 = vld [vmem:[#allocation5 + $0xa60] sm:$0xff]
    %v437 = vld [vmem:[#allocation5 + $0xa68] sm:$0xff]
    %v438 = vld [vmem:[#allocation5 + $0xa70] sm:$0xff]
    %v439 = vld [vmem:[#allocation5 + $0xa78] sm:$0xff]
    %v440 = vld [vmem:[#allocation5 + $0xa80] sm:$0xff]
    %v441 = vld [vmem:[#allocation5 + $0xa88] sm:$0xff]
    %v442 = vld [vmem:[#allocation5 + $0xa90] sm:$0xff]
    %v443 = vld [vmem:[#allocation5 + $0xa98] sm:$0xff]
    %v444 = vld [vmem:[#allocation5 + $0xaa0] sm:$0xff]
    %v445 = vld [vmem:[#allocation5 + $0xaa8] sm:$0xff]
    %v446 = vld [vmem:[#allocation5 + $0xab0] sm:$0xff]
    %v447 = vld [vmem:[#allocation5 + $0xab8] sm:$0xff]
    %v448 = vld [vmem:[#allocation5 + $0xac0] sm:$0xff]
    %v449 = vld [vmem:[#allocation5 + $0xac8] sm:$0xff]
    %v450 = vld [vmem:[#allocation5 + $0xad0] sm:$0xff]
    %v451 = vld [vmem:[#allocation5 + $0xad8] sm:$0xff]
    %v452 = vld [vmem:[#allocation5 + $0xae0] sm:$0xff]
    %v453 = vld [vmem:[#allocation5 + $0xae8] sm:$0xff]
    %v454 = vld [vmem:[#allocation5 + $0xaf0] sm:$0xff]
    %v455 = vld [vmem:[#allocation5 + $0xaf8] sm:$0xff]
    %v456 = vld [vmem:[#allocation5 + $0xb00] sm:$0xff]
    %v457 = vld [vmem:[#allocation5 + $0xb08] sm:$0xff]
    %v458 = vld [vmem:[#allocation5 + $0xb10] sm:$0xff]
    %v459 = vld [vmem:[#allocation5 + $0xb18] sm:$0xff]
    %v460 = vld [vmem:[#allocation5 + $0xb20] sm:$0xff]
    %v461 = vld [vmem:[#allocation5 + $0xb28] sm:$0xff]
    %v462 = vld [vmem:[#allocation5 + $0xb30] sm:$0xff]
    %v463 = vld [vmem:[#allocation5 + $0xb38] sm:$0xff]
    %v464 = vld [vmem:[#allocation5 + $0xb40] sm:$0xff]
    %v465 = vld [vmem:[#allocation5 + $0xb48] sm:$0xff]
    %v466 = vld [vmem:[#allocation5 + $0xb50] sm:$0xff]
    %v467 = vld [vmem:[#allocation5 + $0xb58] sm:$0xff]
    %v468 = vld [vmem:[#allocation5 + $0xb60] sm:$0xff]
    %v469 = vld [vmem:[#allocation5 + $0xb68] sm:$0xff]
    %v470 = vld [vmem:[#allocation5 + $0xb70] sm:$0xff]
    %v471 = vld [vmem:[#allocation5 + $0xb78] sm:$0xff]
    %v472 = vld [vmem:[#allocation5 + $0xb80] sm:$0xff]
    %v473 = vld [vmem:[#allocation5 + $0xb88] sm:$0xff]
    %v474 = vld [vmem:[#allocation5 + $0xb90] sm:$0xff]
    %v475 = vld [vmem:[#allocation5 + $0xb98] sm:$0xff]
    %v476 = vld [vmem:[#allocation5 + $0xba0] sm:$0xff]
    %v477 = vld [vmem:[#allocation5 + $0xba8] sm:$0xff]
    %v478 = vld [vmem:[#allocation5 + $0xbb0] sm:$0xff]
    %v479 = vld [vmem:[#allocation5 + $0xbb8] sm:$0xff]
    %v480 = vld [vmem:[#allocation5 + $0xbc0] sm:$0xff]
    %v481 = vld [vmem:[#allocation5 + $0xbc8] sm:$0xff]
    %v482 = vld [vmem:[#allocation5 + $0xbd0] sm:$0xff]
    %v483 = vld [vmem:[#allocation5 + $0xbd8] sm:$0xff]
    %v484 = vld [vmem:[#allocation5 + $0xbe0] sm:$0xff]
    %v485 = vld [vmem:[#allocation5 + $0xbe8] sm:$0xff]
    %v486 = vld [vmem:[#allocation5 + $0xbf0] sm:$0xff]
    %v487 = vld [vmem:[#allocation5 + $0xbf8] sm:$0xff]
    %v488 = vld [vmem:[#allocation5 + $0xc00] sm:$0xff]
    %v489 = vld [vmem:[#allocation5 + $0xc08] sm:$0xff]
    %v490 = vld [vmem:[#allocation5 + $0xc10] sm:$0xff]
    %v491 = vld [vmem:[#allocation5 + $0xc18] sm:$0xff]
    %v492 = vld [vmem:[#allocation5 + $0xc20] sm:$0xff]
    %v493 = vld [vmem:[#allocation5 + $0xc28] sm:$0xff]
    %v494 = vld [vmem:[#allocation5 + $0xc30] sm:$0xff]
    %v495 = vld [vmem:[#allocation5 + $0xc38] sm:$0xff]
    %v496 = vld [vmem:[#allocation5 + $0xc40] sm:$0xff]
    %v497 = vld [vmem:[#allocation5 + $0xc48] sm:$0xff]
    %v498 = vld [vmem:[#allocation5 + $0xc50] sm:$0xff]
    %v499 = vld [vmem:[#allocation5 + $0xc58] sm:$0xff]
    %v500 = vld [vmem:[#allocation5 + $0xc60] sm:$0xff]
    %v501 = vld [vmem:[#allocation5 + $0xc68] sm:$0xff]
    %v502 = vld [vmem:[#allocation5 + $0xc70] sm:$0xff]
    %v503 = vld [vmem:[#allocation5 + $0xc78] sm:$0xff]
    %v504 = vld [vmem:[#allocation5 + $0xc80] sm:$0xff]
    %v505 = vld [vmem:[#allocation5 + $0xc88] sm:$0xff]
    %v506 = vld [vmem:[#allocation5 + $0xc90] sm:$0xff]
    %v507 = vld [vmem:[#allocation5 + $0xc98] sm:$0xff]
    %v508 = vld [vmem:[#allocation5 + $0xca0] sm:$0xff]
    %v509 = vld [vmem:[#allocation5 + $0xca8] sm:$0xff]
    %v510 = vld [vmem:[#allocation5 + $0xcb0] sm:$0xff]
    %v511 = vld [vmem:[#allocation5 + $0xcb8] sm:$0xff]
    %v512 = vld [vmem:[#allocation5 + $0xcc0] sm:$0xff]
    %v513 = vld [vmem:[#allocation5 + $0xcc8] sm:$0xff]
    %v514 = vld [vmem:[#allocation5 + $0xcd0] sm:$0xff]
    %v515 = vld [vmem:[#allocation5 + $0xcd8] sm:$0xff]
    %v516 = vld [vmem:[#allocation5 + $0xce0] sm:$0xff]
    %v517 = vld [vmem:[#allocation5 + $0xce8] sm:$0xff]
    %v518 = vld [vmem:[#allocation5 + $0xcf0] sm:$0xff]
    %v519 = vld [vmem:[#allocation5 + $0xcf8] sm:$0xff]
    %v520 = vld [vmem:[#allocation5 + $0xd00] sm:$0xff]
    %v521 = vld [vmem:[#allocation5 + $0xd08] sm:$0xff]
    %v522 = vld [vmem:[#allocation5 + $0xd10] sm:$0xff]
    %v523 = vld [vmem:[#allocation5 + $0xd18] sm:$0xff]
    %v524 = vld [vmem:[#allocation5 + $0xd20] sm:$0xff]
    %v525 = vld [vmem:[#allocation5 + $0xd28] sm:$0xff]
    %v526 = vld [vmem:[#allocation5 + $0xd30] sm:$0xff]
    %v527 = vld [vmem:[#allocation5 + $0xd38] sm:$0xff]
    %v528 = vld [vmem:[#allocation5 + $0xd40] sm:$0xff]
    %v529 = vld [vmem:[#allocation5 + $0xd48] sm:$0xff]
    %v530 = vld [vmem:[#allocation5 + $0xd50] sm:$0xff]
    %v531 = vld [vmem:[#allocation5 + $0xd58] sm:$0xff]
    %v532 = vld [vmem:[#allocation5 + $0xd60] sm:$0xff]
    %v533 = vld [vmem:[#allocation5 + $0xd68] sm:$0xff]
    %v534 = vld [vmem:[#allocation5 + $0xd70] sm:$0xff]
    %v535 = vld [vmem:[#allocation5 + $0xd78] sm:$0xff]
    %v536 = vld [vmem:[#allocation5 + $0xd80] sm:$0xff]
    %v537 = vld [vmem:[#allocation5 + $0xd88] sm:$0xff]
    %v538 = vld [vmem:[#allocation5 + $0xd90] sm:$0xff]
    %v539 = vld [vmem:[#allocation5 + $0xd98] sm:$0xff]
    %v540 = vld [vmem:[#allocation5 + $0xda0] sm:$0xff]
    %v541 = vld [vmem:[#allocation5 + $0xda8] sm:$0xff]
    %v542 = vld [vmem:[#allocation5 + $0xdb0] sm:$0xff]
    %v543 = vld [vmem:[#allocation5 + $0xdb8] sm:$0xff]
    %v544 = vld [vmem:[#allocation5 + $0xdc0] sm:$0xff]
    %v545 = vld [vmem:[#allocation5 + $0xdc8] sm:$0xff]
    %v546 = vld [vmem:[#allocation5 + $0xdd0] sm:$0xff]
    %v547 = vld [vmem:[#allocation5 + $0xdd8] sm:$0xff]
    %v548 = vld [vmem:[#allocation5 + $0xde0] sm:$0xff]
    %v549 = vld [vmem:[#allocation5 + $0xde8] sm:$0xff]
    %v550 = vld [vmem:[#allocation5 + $0xdf0] sm:$0xff]
    %v551 = vld [vmem:[#allocation5 + $0xdf8] sm:$0xff]
    %v552 = vld [vmem:[#allocation5 + $0xe00] sm:$0xff]
    %v553 = vld [vmem:[#allocation5 + $0xe08] sm:$0xff]
    %v554 = vld [vmem:[#allocation5 + $0xe10] sm:$0xff]
    %v555 = vld [vmem:[#allocation5 + $0xe18] sm:$0xff]
    %v556 = vld [vmem:[#allocation5 + $0xe20] sm:$0xff]
    %v557 = vld [vmem:[#allocation5 + $0xe28] sm:$0xff]
    %v558 = vld [vmem:[#allocation5 + $0xe30] sm:$0xff]
    %v559 = vld [vmem:[#allocation5 + $0xe38] sm:$0xff]
    %v560 = vld [vmem:[#allocation5 + $0xe40] sm:$0xff]
    %v561 = vld [vmem:[#allocation5 + $0xe48] sm:$0xff]
    %v562 = vld [vmem:[#allocation5 + $0xe50] sm:$0xff]
    %v563 = vld [vmem:[#allocation5 + $0xe58] sm:$0xff]
    %v564 = vld [vmem:[#allocation5 + $0xe60] sm:$0xff]
    %v565 = vld [vmem:[#allocation5 + $0xe68] sm:$0xff]
    %v566 = vld [vmem:[#allocation5 + $0xe70] sm:$0xff]
    %v567 = vld [vmem:[#allocation5 + $0xe78] sm:$0xff]
    %v568 = vld [vmem:[#allocation5 + $0xe80] sm:$0xff]
    %v569 = vld [vmem:[#allocation5 + $0xe88] sm:$0xff]
    %v570 = vld [vmem:[#allocation5 + $0xe90] sm:$0xff]
    %v571 = vld [vmem:[#allocation5 + $0xe98] sm:$0xff]
    %v572 = vld [vmem:[#allocation5 + $0xea0] sm:$0xff]
    %v573 = vld [vmem:[#allocation5 + $0xea8] sm:$0xff]
    %v574 = vld [vmem:[#allocation5 + $0xeb0] sm:$0xff]
    %v575 = vld [vmem:[#allocation5 + $0xeb8] sm:$0xff]
    %v576 = vld [vmem:[#allocation5 + $0xec0] sm:$0xff]
    %v577 = vld [vmem:[#allocation5 + $0xec8] sm:$0xff]
    %v578 = vld [vmem:[#allocation5 + $0xed0] sm:$0xff]
    %v579 = vld [vmem:[#allocation5 + $0xed8] sm:$0xff]
    %v580 = vld [vmem:[#allocation5 + $0xee0] sm:$0xff]
    %v581 = vld [vmem:[#allocation5 + $0xee8] sm:$0xff]
    %v582 = vld [vmem:[#allocation5 + $0xef0] sm:$0xff]
    %v583 = vld [vmem:[#allocation5 + $0xef8] sm:$0xff]
    %v584 = vld [vmem:[#allocation5 + $0xf00] sm:$0xff]
    %v585 = vld [vmem:[#allocation5 + $0xf08] sm:$0xff]
    %v586 = vld [vmem:[#allocation5 + $0xf10] sm:$0xff]
    %v587 = vld [vmem:[#allocation5 + $0xf18] sm:$0xff]
    %v588 = vld [vmem:[#allocation5 + $0xf20] sm:$0xff]
    %v589 = vld [vmem:[#allocation5 + $0xf28] sm:$0xff]
    %v590 = vld [vmem:[#allocation5 + $0xf30] sm:$0xff]
    %v591 = vld [vmem:[#allocation5 + $0xf38] sm:$0xff]
    %v592 = vld [vmem:[#allocation5 + $0xf40] sm:$0xff]
    %v593 = vld [vmem:[#allocation5 + $0xf48] sm:$0xff]
    %v594 = vld [vmem:[#allocation5 + $0xf50] sm:$0xff]
    %v595 = vld [vmem:[#allocation5 + $0xf58] sm:$0xff]
    %v596 = vld [vmem:[#allocation5 + $0xf60] sm:$0xff]
    %v597 = vld [vmem:[#allocation5 + $0xf68] sm:$0xff]
    %v598 = vld [vmem:[#allocation5 + $0xf70] sm:$0xff]
    %v599 = vld [vmem:[#allocation5 + $0xf78] sm:$0xff]
    %v600 = vld [vmem:[#allocation5 + $0xf80] sm:$0xff]
    %v601 = vld [vmem:[#allocation5 + $0xf88] sm:$0xff]
    %v602 = vld [vmem:[#allocation5 + $0xf90] sm:$0xff]
    %v603 = vld [vmem:[#allocation5 + $0xf98] sm:$0xff]
    %v604 = vld [vmem:[#allocation5 + $0xfa0] sm:$0xff]
    %v605 = vld [vmem:[#allocation5 + $0xfa8] sm:$0xff]
    %v606 = vld [vmem:[#allocation5 + $0xfb0] sm:$0xff]
    %v607 = vld [vmem:[#allocation5 + $0xfb8] sm:$0xff]
    %v608 = vld [vmem:[#allocation5 + $0xfc0] sm:$0xff]
    %v609 = vld [vmem:[#allocation5 + $0xfc8] sm:$0xff]
    %v610 = vld [vmem:[#allocation5 + $0xfd0] sm:$0xff]
    %v611 = vld [vmem:[#allocation5 + $0xfd8] sm:$0xff]
    %v612 = vld [vmem:[#allocation5 + $0xfe0] sm:$0xff]
    %v613 = vld [vmem:[#allocation5 + $0xfe8] sm:$0xff]
    %v614 = vld [vmem:[#allocation5 + $0xff0] sm:$0xff]
    %v615 = vld [vmem:[#allocation5 + $0xff8] sm:$0xff]
    %v616 = vld [vmem:[#allocation5 + $0x1000] sm:$0xff]
    %v617 = vld [vmem:[#allocation5 + $0x1008] sm:$0xff]
    %v618 = vld [vmem:[#allocation5 + $0x1010] sm:$0xff]
    %v619 = vld [vmem:[#allocation5 + $0x1018] sm:$0xff]
    %v620 = vld [vmem:[#allocation5 + $0x1020] sm:$0xff]
    %v621 = vld [vmem:[#allocation5 + $0x1028] sm:$0xff]
    %v622 = vld [vmem:[#allocation5 + $0x1030] sm:$0xff]
    %v623 = vld [vmem:[#allocation5 + $0x1038] sm:$0xff]
    %v624 = vld [vmem:[#allocation5 + $0x1040] sm:$0xff]
    %v625 = vld [vmem:[#allocation5 + $0x1048] sm:$0xff]
    %v626 = vld [vmem:[#allocation5 + $0x1050] sm:$0xff]
    %v627 = vld [vmem:[#allocation5 + $0x1058] sm:$0xff]
    %v628 = vld [vmem:[#allocation5 + $0x1060] sm:$0xff]
    %v629 = vld [vmem:[#allocation5 + $0x1068] sm:$0xff]
    %v630 = vld [vmem:[#allocation5 + $0x1070] sm:$0xff]
    %v631 = vld [vmem:[#allocation5 + $0x1078] sm:$0xff]
    %v632 = vld [vmem:[#allocation5 + $0x1080] sm:$0xff]
    %v633 = vld [vmem:[#allocation5 + $0x1088] sm:$0xff]
    %v634 = vld [vmem:[#allocation5 + $0x1090] sm:$0xff]
    %v635 = vld [vmem:[#allocation5 + $0x1098] sm:$0xff]
    %v636 = vld [vmem:[#allocation5 + $0x10a0] sm:$0xff]
    %v637 = vld [vmem:[#allocation5 + $0x10a8] sm:$0xff]
    %v638 = vld [vmem:[#allocation5 + $0x10b0] sm:$0xff]
    %v639 = vld [vmem:[#allocation5 + $0x10b8] sm:$0xff]
    %v640 = vld [vmem:[#allocation5 + $0x10c0] sm:$0xff]
    %v641 = vld [vmem:[#allocation5 + $0x10c8] sm:$0xff]
    %v642 = vld [vmem:[#allocation5 + $0x10d0] sm:$0xff]
    %v643 = vld [vmem:[#allocation5 + $0x10d8] sm:$0xff]
    %v644 = vld [vmem:[#allocation5 + $0x10e0] sm:$0xff]
    %v645 = vld [vmem:[#allocation5 + $0x10e8] sm:$0xff]
    %v646 = vld [vmem:[#allocation5 + $0x10f0] sm:$0xff]
    %v647 = vld [vmem:[#allocation5 + $0x10f8] sm:$0xff]
    %v648 = vld [vmem:[#allocation5 + $0x1100] sm:$0xff]
    %v649 = vld [vmem:[#allocation5 + $0x1108] sm:$0xff]
    %v650 = vld [vmem:[#allocation5 + $0x1110] sm:$0xff]
    %v651 = vld [vmem:[#allocation5 + $0x1118] sm:$0xff]
    %v652 = vld [vmem:[#allocation5 + $0x1120] sm:$0xff]
    %v653 = vld [vmem:[#allocation5 + $0x1128] sm:$0xff]
    %v654 = vld [vmem:[#allocation5 + $0x1130] sm:$0xff]
    %v655 = vld [vmem:[#allocation5 + $0x1138] sm:$0xff]
    %v656 = vld [vmem:[#allocation5 + $0x1140] sm:$0xff]
    %v657 = vld [vmem:[#allocation5 + $0x1148] sm:$0xff]
    %v658 = vld [vmem:[#allocation5 + $0x1150] sm:$0xff]
    %v659 = vld [vmem:[#allocation5 + $0x1158] sm:$0xff]
    %v660 = vld [vmem:[#allocation5 + $0x1160] sm:$0xff]
    %v661 = vld [vmem:[#allocation5 + $0x1168] sm:$0xff]
    %v662 = vld [vmem:[#allocation5 + $0x1170] sm:$0xff]
    %v663 = vld [vmem:[#allocation5 + $0x1178] sm:$0xff]
    %v664 = vld [vmem:[#allocation5 + $0x1180] sm:$0xff]
    %v665 = vld [vmem:[#allocation5 + $0x1188] sm:$0xff]
    %v666 = vld [vmem:[#allocation5 + $0x1190] sm:$0xff]
    %v667 = vld [vmem:[#allocation5 + $0x1198] sm:$0xff]
    %v668 = vld [vmem:[#allocation5 + $0x11a0] sm:$0xff]
    %v669 = vld [vmem:[#allocation5 + $0x11a8] sm:$0xff]
    %v670 = vld [vmem:[#allocation5 + $0x11b0] sm:$0xff]
    %v671 = vld [vmem:[#allocation5 + $0x11b8] sm:$0xff]
    %v672 = vld [vmem:[#allocation5 + $0x11c0] sm:$0xff]
    %v673 = vld [vmem:[#allocation5 + $0x11c8] sm:$0xff]
    %v674 = vld [vmem:[#allocation5 + $0x11d0] sm:$0xff]
    %v675 = vld [vmem:[#allocation5 + $0x11d8] sm:$0xff]
    %v676 = vld [vmem:[#allocation5 + $0x11e0] sm:$0xff]
    %v677 = vld [vmem:[#allocation5 + $0x11e8] sm:$0xff]
    %v678 = vld [vmem:[#allocation5 + $0x11f0] sm:$0xff]
    %v679 = vld [vmem:[#allocation5 + $0x11f8] sm:$0xff]
    %v680 = vld [vmem:[#allocation5 + $0x1200] sm:$0xff]
    %v681 = vld [vmem:[#allocation5 + $0x1208] sm:$0xff]
    %v682 = vld [vmem:[#allocation5 + $0x1210] sm:$0xff]
    %v683 = vld [vmem:[#allocation5 + $0x1218] sm:$0xff]
    %v684 = vld [vmem:[#allocation5 + $0x1220] sm:$0xff]
    %v685 = vld [vmem:[#allocation5 + $0x1228] sm:$0xff]
    %v686 = vld [vmem:[#allocation5 + $0x1230] sm:$0xff]
    %v687 = vld [vmem:[#allocation5 + $0x1238] sm:$0xff]
    %v688 = vld [vmem:[#allocation5 + $0x1240] sm:$0xff]
    %v689 = vld [vmem:[#allocation5 + $0x1248] sm:$0xff]
    %v690 = vld [vmem:[#allocation5 + $0x1250] sm:$0xff]
    %v691 = vld [vmem:[#allocation5 + $0x1258] sm:$0xff]
    %v692 = vld [vmem:[#allocation5 + $0x1260] sm:$0xff]
    %v693 = vld [vmem:[#allocation5 + $0x1268] sm:$0xff]
    %v694 = vld [vmem:[#allocation5 + $0x1270] sm:$0xff]
    %v695 = vld [vmem:[#allocation5 + $0x1278] sm:$0xff]
    %v696 = vld [vmem:[#allocation5 + $0x1280] sm:$0xff]
    %v697 = vld [vmem:[#allocation5 + $0x1288] sm:$0xff]
    %v698 = vld [vmem:[#allocation5 + $0x1290] sm:$0xff]
    %v699 = vld [vmem:[#allocation5 + $0x1298] sm:$0xff]
    %v700 = vld [vmem:[#allocation5 + $0x12a0] sm:$0xff]
    %v701 = vld [vmem:[#allocation5 + $0x12a8] sm:$0xff]
    %v702 = vld [vmem:[#allocation5 + $0x12b0] sm:$0xff]
    %v703 = vld [vmem:[#allocation5 + $0x12b8] sm:$0xff]
    %v704 = vld [vmem:[#allocation5 + $0x12c0] sm:$0xff]
    %v705 = vld [vmem:[#allocation5 + $0x12c8] sm:$0xff]
    %v706 = vld [vmem:[#allocation5 + $0x12d0] sm:$0xff]
    %v707 = vld [vmem:[#allocation5 + $0x12d8] sm:$0xff]
    %v708 = vld [vmem:[#allocation5 + $0x12e0] sm:$0xff]
    %v709 = vld [vmem:[#allocation5 + $0x12e8] sm:$0xff]
    %v710 = vld [vmem:[#allocation5 + $0x12f0] sm:$0xff]
    %v711 = vld [vmem:[#allocation5 + $0x12f8] sm:$0xff]
    %v712 = vld [vmem:[#allocation5 + $0x1300] sm:$0xff]
    %v713 = vld [vmem:[#allocation5 + $0x1308] sm:$0xff]
    %v714 = vld [vmem:[#allocation5 + $0x1310] sm:$0xff]
    %v715 = vld [vmem:[#allocation5 + $0x1318] sm:$0xff]
    %v716 = vld [vmem:[#allocation5 + $0x1320] sm:$0xff]
    %v717 = vld [vmem:[#allocation5 + $0x1328] sm:$0xff]
    %v718 = vld [vmem:[#allocation5 + $0x1330] sm:$0xff]
    %v719 = vld [vmem:[#allocation5 + $0x1338] sm:$0xff]
    %v720 = vld [vmem:[#allocation5 + $0x1340] sm:$0xff]
    %v721 = vld [vmem:[#allocation5 + $0x1348] sm:$0xff]
    %v722 = vld [vmem:[#allocation5 + $0x1350] sm:$0xff]
    %v723 = vld [vmem:[#allocation5 + $0x1358] sm:$0xff]
    %v724 = vld [vmem:[#allocation5 + $0x1360] sm:$0xff]
    %v725 = vld [vmem:[#allocation5 + $0x1368] sm:$0xff]
    %v726 = vld [vmem:[#allocation5 + $0x1370] sm:$0xff]
    %v727 = vld [vmem:[#allocation5 + $0x1378] sm:$0xff]
    %v728 = vld [vmem:[#allocation5 + $0x1380] sm:$0xff]
    %v729 = vld [vmem:[#allocation5 + $0x1388] sm:$0xff]
    %v730 = vld [vmem:[#allocation5 + $0x1390] sm:$0xff]
    %v731 = vld [vmem:[#allocation5 + $0x1398] sm:$0xff]
    %v732 = vld [vmem:[#allocation5 + $0x13a0] sm:$0xff]
    %v733 = vld [vmem:[#allocation5 + $0x13a8] sm:$0xff]
    %v734 = vld [vmem:[#allocation5 + $0x13b0] sm:$0xff]
    %v735 = vld [vmem:[#allocation5 + $0x13b8] sm:$0xff]
    %v736 = vld [vmem:[#allocation5 + $0x13c0] sm:$0xff]
    %v737 = vld [vmem:[#allocation5 + $0x13c8] sm:$0xff]
    %v738 = vld [vmem:[#allocation5 + $0x13d0] sm:$0xff]
    %v739 = vld [vmem:[#allocation5 + $0x13d8] sm:$0xff]
    %v740 = vld [vmem:[#allocation5 + $0x13e0] sm:$0xff]
    %v741 = vld [vmem:[#allocation5 + $0x13e8] sm:$0xff]
    %v742 = vld [vmem:[#allocation5 + $0x13f0] sm:$0xff]
    %v743 = vld [vmem:[#allocation5 + $0x13f8] sm:$0xff]
    %v744 = vld [vmem:[#allocation5 + $0x1400] sm:$0xff]
    %v745 = vld [vmem:[#allocation5 + $0x1408] sm:$0xff]
    %v746 = vld [vmem:[#allocation5 + $0x1410] sm:$0xff]
    %v747 = vld [vmem:[#allocation5 + $0x1418] sm:$0xff]
    %v748 = vld [vmem:[#allocation5 + $0x1420] sm:$0xff]
    %v749 = vld [vmem:[#allocation5 + $0x1428] sm:$0xff]
    %v750 = vld [vmem:[#allocation5 + $0x1430] sm:$0xff]
    %v751 = vld [vmem:[#allocation5 + $0x1438] sm:$0xff]
    %v752 = vld [vmem:[#allocation5 + $0x1440] sm:$0xff]
    %v753 = vld [vmem:[#allocation5 + $0x1448] sm:$0xff]
    %v754 = vld [vmem:[#allocation5 + $0x1450] sm:$0xff]
    %v755 = vld [vmem:[#allocation5 + $0x1458] sm:$0xff]
    %v756 = vld [vmem:[#allocation5 + $0x1460] sm:$0xff]
    %v757 = vld [vmem:[#allocation5 + $0x1468] sm:$0xff]
    %v758 = vld [vmem:[#allocation5 + $0x1470] sm:$0xff]
    %v759 = vld [vmem:[#allocation5 + $0x1478] sm:$0xff]
    %v760 = vld [vmem:[#allocation5 + $0x1480] sm:$0xff]
    %v761 = vld [vmem:[#allocation5 + $0x1488] sm:$0xff]
    %v762 = vld [vmem:[#allocation5 + $0x1490] sm:$0xff]
    %v763 = vld [vmem:[#allocation5 + $0x1498] sm:$0xff]
    %v764 = vld [vmem:[#allocation5 + $0x14a0] sm:$0xff]
    %v765 = vld [vmem:[#allocation5 + $0x14a8] sm:$0xff]
    %v766 = vld [vmem:[#allocation5 + $0x14b0] sm:$0xff]
    %v767 = vld [vmem:[#allocation5 + $0x14b8] sm:$0xff]
    %v768 = vld [vmem:[#allocation5 + $0x14c0] sm:$0xff]
    %v769 = vld [vmem:[#allocation5 + $0x14c8] sm:$0xff]
    %v770 = vld [vmem:[#allocation5 + $0x14d0] sm:$0xff]
    %v771 = vld [vmem:[#allocation5 + $0x14d8] sm:$0xff]
    %v772 = vld [vmem:[#allocation5 + $0x14e0] sm:$0xff]
    %v773 = vld [vmem:[#allocation5 + $0x14e8] sm:$0xff]
    %v774 = vld [vmem:[#allocation5 + $0x14f0] sm:$0xff]
    %v775 = vld [vmem:[#allocation5 + $0x14f8] sm:$0xff]
    %v776 = vld [vmem:[#allocation5 + $0x1500] sm:$0xff]
    %v777 = vld [vmem:[#allocation5 + $0x1508] sm:$0xff]
    %v778 = vld [vmem:[#allocation5 + $0x1510] sm:$0xff]
    %v779 = vld [vmem:[#allocation5 + $0x1518] sm:$0xff]
    %v780 = vld [vmem:[#allocation5 + $0x1520] sm:$0xff]
    %v781 = vld [vmem:[#allocation5 + $0x1528] sm:$0xff]
    %v782 = vld [vmem:[#allocation5 + $0x1530] sm:$0xff]
    %v783 = vld [vmem:[#allocation5 + $0x1538] sm:$0xff]
    %v784 = vld [vmem:[#allocation5 + $0x1540] sm:$0xff]
    %v785 = vld [vmem:[#allocation5 + $0x1548] sm:$0xff]
    %v786 = vld [vmem:[#allocation5 + $0x1550] sm:$0xff]
    %v787 = vld [vmem:[#allocation5 + $0x1558] sm:$0xff]
    %v788 = vld [vmem:[#allocation5 + $0x1560] sm:$0xff]
    %v789 = vld [vmem:[#allocation5 + $0x1568] sm:$0xff]
    %v790 = vld [vmem:[#allocation5 + $0x1570] sm:$0xff]
    %v791 = vld [vmem:[#allocation5 + $0x1578] sm:$0xff]
    %v792 = vld [vmem:[#allocation5 + $0x1580] sm:$0xff]
    %v793 = vld [vmem:[#allocation5 + $0x1588] sm:$0xff]
    %v794 = vld [vmem:[#allocation5 + $0x1590] sm:$0xff]
    %v795 = vld [vmem:[#allocation5 + $0x1598] sm:$0xff]
    %v796 = vld [vmem:[#allocation5 + $0x15a0] sm:$0xff]
    %v797 = vld [vmem:[#allocation5 + $0x15a8] sm:$0xff]
    %v798 = vld [vmem:[#allocation5 + $0x15b0] sm:$0xff]
    %v799 = vld [vmem:[#allocation5 + $0x15b8] sm:$0xff]
    %v800 = vld [vmem:[#allocation5 + $0x15c0] sm:$0xff]
    %v801 = vld [vmem:[#allocation5 + $0x15c8] sm:$0xff]
    %v802 = vld [vmem:[#allocation5 + $0x15d0] sm:$0xff]
    %v803 = vld [vmem:[#allocation5 + $0x15d8] sm:$0xff]
    %v804 = vld [vmem:[#allocation5 + $0x15e0] sm:$0xff]
    %v805 = vld [vmem:[#allocation5 + $0x15e8] sm:$0xff]
    %v806 = vld [vmem:[#allocation5 + $0x15f0] sm:$0xff]
    %v807 = vld [vmem:[#allocation5 + $0x15f8] sm:$0xff]
    %v808 = vld [vmem:[#allocation5 + $0x1600] sm:$0xff]
    %v809 = vld [vmem:[#allocation5 + $0x1608] sm:$0xff]
    %v810 = vld [vmem:[#allocation5 + $0x1610] sm:$0xff]
    %v811 = vld [vmem:[#allocation5 + $0x1618] sm:$0xff]
    %v812 = vld [vmem:[#allocation5 + $0x1620] sm:$0xff]
    %v813 = vld [vmem:[#allocation5 + $0x1628] sm:$0xff]
    %v814 = vld [vmem:[#allocation5 + $0x1630] sm:$0xff]
    %v815 = vld [vmem:[#allocation5 + $0x1638] sm:$0xff]
    %v816 = vld [vmem:[#allocation5 + $0x1640] sm:$0xff]
    %v817 = vld [vmem:[#allocation5 + $0x1648] sm:$0xff]
    %v818 = vld [vmem:[#allocation5 + $0x1650] sm:$0xff]
    %v819 = vld [vmem:[#allocation5 + $0x1658] sm:$0xff]
    %v820 = vld [vmem:[#allocation5 + $0x1660] sm:$0xff]
    %v821 = vld [vmem:[#allocation5 + $0x1668] sm:$0xff]
    %v822 = vld [vmem:[#allocation5 + $0x1670] sm:$0xff]
    %v823 = vld [vmem:[#allocation5 + $0x1678] sm:$0xff]
    %v824 = vld [vmem:[#allocation5 + $0x1680] sm:$0xff]
    %v825 = vld [vmem:[#allocation5 + $0x1688] sm:$0xff]
    %v826 = vld [vmem:[#allocation5 + $0x1690] sm:$0xff]
    %v827 = vld [vmem:[#allocation5 + $0x1698] sm:$0xff]
    %v828 = vld [vmem:[#allocation5 + $0x16a0] sm:$0xff]
    %v829 = vld [vmem:[#allocation5 + $0x16a8] sm:$0xff]
    %v830 = vld [vmem:[#allocation5 + $0x16b0] sm:$0xff]
    %v831 = vld [vmem:[#allocation5 + $0x16b8] sm:$0xff]
    %v832 = vld [vmem:[#allocation5 + $0x16c0] sm:$0xff]
    %v833 = vld [vmem:[#allocation5 + $0x16c8] sm:$0xff]
    %v834 = vld [vmem:[#allocation5 + $0x16d0] sm:$0xff]
    %v835 = vld [vmem:[#allocation5 + $0x16d8] sm:$0xff]
    %v836 = vld [vmem:[#allocation5 + $0x16e0] sm:$0xff]
    %v837 = vld [vmem:[#allocation5 + $0x16e8] sm:$0xff]
    %v838 = vld [vmem:[#allocation5 + $0x16f0] sm:$0xff]
    %v839 = vld [vmem:[#allocation5 + $0x16f8] sm:$0xff]
    %v840 = vld [vmem:[#allocation5 + $0x1700] sm:$0xff]
    %v841 = vld [vmem:[#allocation5 + $0x1708] sm:$0xff]
    %v842 = vld [vmem:[#allocation5 + $0x1710] sm:$0xff]
    %v843 = vld [vmem:[#allocation5 + $0x1718] sm:$0xff]
    %v844 = vld [vmem:[#allocation5 + $0x1720] sm:$0xff]
    %v845 = vld [vmem:[#allocation5 + $0x1728] sm:$0xff]
    %v846 = vld [vmem:[#allocation5 + $0x1730] sm:$0xff]
    %v847 = vld [vmem:[#allocation5 + $0x1738] sm:$0xff]
    %v848 = vld [vmem:[#allocation5 + $0x1740] sm:$0xff]
    %v849 = vld [vmem:[#allocation5 + $0x1748] sm:$0xff]
    %v850 = vld [vmem:[#allocation5 + $0x1750] sm:$0xff]
    %v851 = vld [vmem:[#allocation5 + $0x1758] sm:$0xff]
    %v852 = vld [vmem:[#allocation5 + $0x1760] sm:$0xff]
    %v853 = vld [vmem:[#allocation5 + $0x1768] sm:$0xff]
    %v854 = vld [vmem:[#allocation5 + $0x1770] sm:$0xff]
    %v855 = vld [vmem:[#allocation5 + $0x1778] sm:$0xff]
    %v856 = vld [vmem:[#allocation5 + $0x1780] sm:$0xff]
    %v857 = vld [vmem:[#allocation5 + $0x1788] sm:$0xff]
    %v858 = vld [vmem:[#allocation5 + $0x1790] sm:$0xff]
    %v859 = vld [vmem:[#allocation5 + $0x1798] sm:$0xff]
    %v860 = vld [vmem:[#allocation5 + $0x17a0] sm:$0xff]
    %v861 = vld [vmem:[#allocation5 + $0x17a8] sm:$0xff]
    %v862 = vld [vmem:[#allocation5 + $0x17b0] sm:$0xff]
    %v863 = vld [vmem:[#allocation5 + $0x17b8] sm:$0xff]
    %v864 = vld [vmem:[#allocation5 + $0x17c0] sm:$0xff]
    %v865 = vld [vmem:[#allocation5 + $0x17c8] sm:$0xff]
    %v866 = vld [vmem:[#allocation5 + $0x17d0] sm:$0xff]
    %v867 = vld [vmem:[#allocation5 + $0x17d8] sm:$0xff]
    %v868 = vld [vmem:[#allocation5 + $0x17e0] sm:$0xff]
    %v869 = vld [vmem:[#allocation5 + $0x17e8] sm:$0xff]
    %v870 = vld [vmem:[#allocation5 + $0x17f0] sm:$0xff]
    %v871 = vld [vmem:[#allocation5 + $0x17f8] sm:$0xff]
    %v872 = vld [vmem:[#allocation5 + $0x1800] sm:$0xff]
    %v873 = vld [vmem:[#allocation5 + $0x1808] sm:$0xff]
    %v874 = vld [vmem:[#allocation5 + $0x1810] sm:$0xff]
    %v875 = vld [vmem:[#allocation5 + $0x1818] sm:$0xff]
    %v876 = vld [vmem:[#allocation5 + $0x1820] sm:$0xff]
    %v877 = vld [vmem:[#allocation5 + $0x1828] sm:$0xff]
    %v878 = vld [vmem:[#allocation5 + $0x1830] sm:$0xff]
    %v879 = vld [vmem:[#allocation5 + $0x1838] sm:$0xff]
    %v880 = vld [vmem:[#allocation5 + $0x1840] sm:$0xff]
    %v881 = vld [vmem:[#allocation5 + $0x1848] sm:$0xff]
    %v882 = vld [vmem:[#allocation5 + $0x1850] sm:$0xff]
    %v883 = vld [vmem:[#allocation5 + $0x1858] sm:$0xff]
    %v884 = vld [vmem:[#allocation5 + $0x1860] sm:$0xff]
    %v885 = vld [vmem:[#allocation5 + $0x1868] sm:$0xff]
    %v886 = vld [vmem:[#allocation5 + $0x1870] sm:$0xff]
    %v887 = vld [vmem:[#allocation5 + $0x1878] sm:$0xff]
    %v888 = vld [vmem:[#allocation5 + $0x1880] sm:$0xff]
    %v889 = vld [vmem:[#allocation5 + $0x1888] sm:$0xff]
    %v890 = vld [vmem:[#allocation5 + $0x1890] sm:$0xff]
    %v891 = vld [vmem:[#allocation5 + $0x1898] sm:$0xff]
    %v892 = vld [vmem:[#allocation5 + $0x18a0] sm:$0xff]
    %v893 = vld [vmem:[#allocation5 + $0x18a8] sm:$0xff]
    %v894 = vld [vmem:[#allocation5 + $0x18b0] sm:$0xff]
    %v895 = vld [vmem:[#allocation5 + $0x18b8] sm:$0xff]
    %v896 = vld [vmem:[#allocation5 + $0x18c0] sm:$0xff]
    %v897 = vld [vmem:[#allocation5 + $0x18c8] sm:$0xff]
    %v898 = vld [vmem:[#allocation5 + $0x18d0] sm:$0xff]
    %v899 = vld [vmem:[#allocation5 + $0x18d8] sm:$0xff]
    %v900 = vld [vmem:[#allocation5 + $0x18e0] sm:$0xff]
    %v901 = vld [vmem:[#allocation5 + $0x18e8] sm:$0xff]
    %v902 = vld [vmem:[#allocation5 + $0x18f0] sm:$0xff]
    %v903 = vld [vmem:[#allocation5 + $0x18f8] sm:$0xff]
    %v904 = vld [vmem:[#allocation5 + $0x1900] sm:$0xff]
    %v905 = vld [vmem:[#allocation5 + $0x1908] sm:$0xff]
    %v906 = vld [vmem:[#allocation5 + $0x1910] sm:$0xff]
    %v907 = vld [vmem:[#allocation5 + $0x1918] sm:$0xff]
    %v908 = vld [vmem:[#allocation5 + $0x1920] sm:$0xff]
    %v909 = vld [vmem:[#allocation5 + $0x1928] sm:$0xff]
    %v910 = vld [vmem:[#allocation5 + $0x1930] sm:$0xff]
    %v911 = vld [vmem:[#allocation5 + $0x1938] sm:$0xff]
    %v912 = vld [vmem:[#allocation5 + $0x1940] sm:$0xff]
    %v913 = vld [vmem:[#allocation5 + $0x1948] sm:$0xff]
    %v914 = vld [vmem:[#allocation5 + $0x1950] sm:$0xff]
    %v915 = vld [vmem:[#allocation5 + $0x1958] sm:$0xff]
    %v916 = vld [vmem:[#allocation5 + $0x1960] sm:$0xff]
    %v917 = vld [vmem:[#allocation5 + $0x1968] sm:$0xff]
    %v918 = vld [vmem:[#allocation5 + $0x1970] sm:$0xff]
    %v919 = vld [vmem:[#allocation5 + $0x1978] sm:$0xff]
    %v920 = vld [vmem:[#allocation5 + $0x1980] sm:$0xff]
    %v921 = vld [vmem:[#allocation5 + $0x1988] sm:$0xff]
    %v922 = vld [vmem:[#allocation5 + $0x1990] sm:$0xff]
    %v923 = vld [vmem:[#allocation5 + $0x1998] sm:$0xff]
    %v924 = vld [vmem:[#allocation5 + $0x19a0] sm:$0xff]
    %v925 = vld [vmem:[#allocation5 + $0x19a8] sm:$0xff]
    %v926 = vld [vmem:[#allocation5 + $0x19b0] sm:$0xff]
    %v927 = vld [vmem:[#allocation5 + $0x19b8] sm:$0xff]
    %v928 = vld [vmem:[#allocation5 + $0x19c0] sm:$0xff]
    %v929 = vld [vmem:[#allocation5 + $0x19c8] sm:$0xff]
    %v930 = vld [vmem:[#allocation5 + $0x19d0] sm:$0xff]
    %v931 = vld [vmem:[#allocation5 + $0x19d8] sm:$0xff]
    %v932 = vld [vmem:[#allocation5 + $0x19e0] sm:$0xff]
    %v933 = vld [vmem:[#allocation5 + $0x19e8] sm:$0xff]
    %v934 = vld [vmem:[#allocation5 + $0x19f0] sm:$0xff]
    %v935 = vld [vmem:[#allocation5 + $0x19f8] sm:$0xff]
    %v936 = vld [vmem:[#allocation5 + $0x1a00] sm:$0xff]
    %v937 = vld [vmem:[#allocation5 + $0x1a08] sm:$0xff]
    %v938 = vld [vmem:[#allocation5 + $0x1a10] sm:$0xff]
    %v939 = vld [vmem:[#allocation5 + $0x1a18] sm:$0xff]
    %v940 = vld [vmem:[#allocation5 + $0x1a20] sm:$0xff]
    %v941 = vld [vmem:[#allocation5 + $0x1a28] sm:$0xff]
    %v942 = vld [vmem:[#allocation5 + $0x1a30] sm:$0xff]
    %v943 = vld [vmem:[#allocation5 + $0x1a38] sm:$0xff]
    %v944 = vld [vmem:[#allocation5 + $0x1a40] sm:$0xff]
    %v945 = vld [vmem:[#allocation5 + $0x1a48] sm:$0xff]
    %v946 = vld [vmem:[#allocation5 + $0x1a50] sm:$0xff]
    %v947 = vld [vmem:[#allocation5 + $0x1a58] sm:$0xff]
    %v948 = vld [vmem:[#allocation5 + $0x1a60] sm:$0xff]
    %v949 = vld [vmem:[#allocation5 + $0x1a68] sm:$0xff]
    %v950 = vld [vmem:[#allocation5 + $0x1a70] sm:$0xff]
    %v951 = vld [vmem:[#allocation5 + $0x1a78] sm:$0xff]
    %v952 = vld [vmem:[#allocation5 + $0x1a80] sm:$0xff]
    %v953 = vld [vmem:[#allocation5 + $0x1a88] sm:$0xff]
    %v954 = vld [vmem:[#allocation5 + $0x1a90] sm:$0xff]
    %v955 = vld [vmem:[#allocation5 + $0x1a98] sm:$0xff]
    %v956 = vld [vmem:[#allocation5 + $0x1aa0] sm:$0xff]
    %v957 = vld [vmem:[#allocation5 + $0x1aa8] sm:$0xff]
    %v958 = vld [vmem:[#allocation5 + $0x1ab0] sm:$0xff]
    %v959 = vld [vmem:[#allocation5 + $0x1ab8] sm:$0xff]
    %v960 = vld [vmem:[#allocation5 + $0x1ac0] sm:$0xff]
    %v961 = vld [vmem:[#allocation5 + $0x1ac8] sm:$0xff]
    %v962 = vld [vmem:[#allocation5 + $0x1ad0] sm:$0xff]
    %v963 = vld [vmem:[#allocation5 + $0x1ad8] sm:$0xff]
    %v964 = vld [vmem:[#allocation5 + $0x1ae0] sm:$0xff]
    %v965 = vld [vmem:[#allocation5 + $0x1ae8] sm:$0xff]
    %v966 = vld [vmem:[#allocation5 + $0x1af0] sm:$0xff]
    %v967 = vld [vmem:[#allocation5 + $0x1af8] sm:$0xff]
    %v968 = vld [vmem:[#allocation5 + $0x1b00] sm:$0xff]
    %v969 = vld [vmem:[#allocation5 + $0x1b08] sm:$0xff]
    %v970 = vld [vmem:[#allocation5 + $0x1b10] sm:$0xff]
    %v971 = vld [vmem:[#allocation5 + $0x1b18] sm:$0xff]
    %v972 = vld [vmem:[#allocation5 + $0x1b20] sm:$0xff]
    %v973 = vld [vmem:[#allocation5 + $0x1b28] sm:$0xff]
    %v974 = vld [vmem:[#allocation5 + $0x1b30] sm:$0xff]
    %v975 = vld [vmem:[#allocation5 + $0x1b38] sm:$0xff]
    %v976 = vld [vmem:[#allocation5 + $0x1b40] sm:$0xff]
    %v977 = vld [vmem:[#allocation5 + $0x1b48] sm:$0xff]
    %v978 = vld [vmem:[#allocation5 + $0x1b50] sm:$0xff]
    %v979 = vld [vmem:[#allocation5 + $0x1b58] sm:$0xff]
    %v980 = vld [vmem:[#allocation5 + $0x1b60] sm:$0xff]
    %v981 = vld [vmem:[#allocation5 + $0x1b68] sm:$0xff]
    %v982 = vld [vmem:[#allocation5 + $0x1b70] sm:$0xff]
    %v983 = vld [vmem:[#allocation5 + $0x1b78] sm:$0xff]
    %v984 = vld [vmem:[#allocation5 + $0x1b80] sm:$0xff]
    %v985 = vld [vmem:[#allocation5 + $0x1b88] sm:$0xff]
    %v986 = vld [vmem:[#allocation5 + $0x1b90] sm:$0xff]
    %v987 = vld [vmem:[#allocation5 + $0x1b98] sm:$0xff]
    %v988 = vld [vmem:[#allocation5 + $0x1ba0] sm:$0xff]
    %v989 = vld [vmem:[#allocation5 + $0x1ba8] sm:$0xff]
    %v990 = vld [vmem:[#allocation5 + $0x1bb0] sm:$0xff]
    %v991 = vld [vmem:[#allocation5 + $0x1bb8] sm:$0xff]
    %v992 = vld [vmem:[#allocation5 + $0x1bc0] sm:$0xff]
    %v993 = vld [vmem:[#allocation5 + $0x1bc8] sm:$0xff]
    %v994 = vld [vmem:[#allocation5 + $0x1bd0] sm:$0xff]
    %v995 = vld [vmem:[#allocation5 + $0x1bd8] sm:$0xff]
    %v996 = vld [vmem:[#allocation5 + $0x1be0] sm:$0xff]
    %v997 = vld [vmem:[#allocation5 + $0x1be8] sm:$0xff]
    %v998 = vld [vmem:[#allocation5 + $0x1bf0] sm:$0xff]
    %v999 = vld [vmem:[#allocation5 + $0x1bf8] sm:$0xff]
    %v1000 = vld [vmem:[#allocation5 + $0x1c00] sm:$0xff]
    %v1001 = vld [vmem:[#allocation5 + $0x1c08] sm:$0xff]
    %v1002 = vld [vmem:[#allocation5 + $0x1c10] sm:$0xff]
    %v1003 = vld [vmem:[#allocation5 + $0x1c18] sm:$0xff]
    %v1004 = vld [vmem:[#allocation5 + $0x1c20] sm:$0xff]
    %v1005 = vld [vmem:[#allocation5 + $0x1c28] sm:$0xff]
    %v1006 = vld [vmem:[#allocation5 + $0x1c30] sm:$0xff]
    %v1007 = vld [vmem:[#allocation5 + $0x1c38] sm:$0xff]
    %v1008 = vld [vmem:[#allocation5 + $0x1c40] sm:$0xff]
    %v1009 = vld [vmem:[#allocation5 + $0x1c48] sm:$0xff]
    %v1010 = vld [vmem:[#allocation5 + $0x1c50] sm:$0xff]
    %v1011 = vld [vmem:[#allocation5 + $0x1c58] sm:$0xff]
    %v1012 = vld [vmem:[#allocation5 + $0x1c60] sm:$0xff]
    %v1013 = vld [vmem:[#allocation5 + $0x1c68] sm:$0xff]
    %v1014 = vld [vmem:[#allocation5 + $0x1c70] sm:$0xff]
    %v1015 = vld [vmem:[#allocation5 + $0x1c78] sm:$0xff]
    %v1016 = vld [vmem:[#allocation5 + $0x1c80] sm:$0xff]
    %v1017 = vld [vmem:[#allocation5 + $0x1c88] sm:$0xff]
    %v1018 = vld [vmem:[#allocation5 + $0x1c90] sm:$0xff]
    %v1019 = vld [vmem:[#allocation5 + $0x1c98] sm:$0xff]
    %v1020 = vld [vmem:[#allocation5 + $0x1ca0] sm:$0xff]
    %v1021 = vld [vmem:[#allocation5 + $0x1ca8] sm:$0xff]
    %v1022 = vld [vmem:[#allocation5 + $0x1cb0] sm:$0xff]
    %v1023 = vld [vmem:[#allocation5 + $0x1cb8] sm:$0xff]
    %v1024 = vld [vmem:[#allocation5 + $0x1cc0] sm:$0xff]
    %v1025 = vld [vmem:[#allocation5 + $0x1cc8] sm:$0xff]
    %v1026 = vld [vmem:[#allocation5 + $0x1cd0] sm:$0xff]
    %v1027 = vld [vmem:[#allocation5 + $0x1cd8] sm:$0xff]
    %v1028 = vld [vmem:[#allocation5 + $0x1ce0] sm:$0xff]
    %v1029 = vld [vmem:[#allocation5 + $0x1ce8] sm:$0xff]
    %v1030 = vld [vmem:[#allocation5 + $0x1cf0] sm:$0xff]
    %v1031 = vld [vmem:[#allocation5 + $0x1cf8] sm:$0xff]
    %v1032 = vld [vmem:[#allocation5 + $0x1d00] sm:$0xff]
    %v1033 = vld [vmem:[#allocation5 + $0x1d08] sm:$0xff]
    %v1034 = vld [vmem:[#allocation5 + $0x1d10] sm:$0xff]
    %v1035 = vld [vmem:[#allocation5 + $0x1d18] sm:$0xff]
    %v1036 = vld [vmem:[#allocation5 + $0x1d20] sm:$0xff]
    %v1037 = vld [vmem:[#allocation5 + $0x1d28] sm:$0xff]
    %v1038 = vld [vmem:[#allocation5 + $0x1d30] sm:$0xff]
    %v1039 = vld [vmem:[#allocation5 + $0x1d38] sm:$0xff]
    %v1040 = vld [vmem:[#allocation5 + $0x1d40] sm:$0xff]
    %v1041 = vld [vmem:[#allocation5 + $0x1d48] sm:$0xff]
    %v1042 = vld [vmem:[#allocation5 + $0x1d50] sm:$0xff]
    %v1043 = vld [vmem:[#allocation5 + $0x1d58] sm:$0xff]
    %v1044 = vld [vmem:[#allocation5 + $0x1d60] sm:$0xff]
    %v1045 = vld [vmem:[#allocation5 + $0x1d68] sm:$0xff]
    %v1046 = vld [vmem:[#allocation5 + $0x1d70] sm:$0xff]
    %v1047 = vld [vmem:[#allocation5 + $0x1d78] sm:$0xff]
    %v1048 = vld [vmem:[#allocation5 + $0x1d80] sm:$0xff]
    %v1049 = vld [vmem:[#allocation5 + $0x1d88] sm:$0xff]
    %v1050 = vld [vmem:[#allocation5 + $0x1d90] sm:$0xff]
    %v1051 = vld [vmem:[#allocation5 + $0x1d98] sm:$0xff]
    %v1052 = vld [vmem:[#allocation5 + $0x1da0] sm:$0xff]
    %v1053 = vld [vmem:[#allocation5 + $0x1da8] sm:$0xff]
    %v1054 = vld [vmem:[#allocation5 + $0x1db0] sm:$0xff]
    %v1055 = vld [vmem:[#allocation5 + $0x1db8] sm:$0xff]
    %v1056 = vld [vmem:[#allocation5 + $0x1dc0] sm:$0xff]
    %v1057 = vld [vmem:[#allocation5 + $0x1dc8] sm:$0xff]
    %v1058 = vld [vmem:[#allocation5 + $0x1dd0] sm:$0xff]
    %v1059 = vld [vmem:[#allocation5 + $0x1dd8] sm:$0xff]
    %v1060 = vld [vmem:[#allocation5 + $0x1de0] sm:$0xff]
    %v1061 = vld [vmem:[#allocation5 + $0x1de8] sm:$0xff]
    %v1062 = vld [vmem:[#allocation5 + $0x1df0] sm:$0xff]
    %v1063 = vld [vmem:[#allocation5 + $0x1df8] sm:$0xff]
    %v1064 = vld [vmem:[#allocation5 + $0x1e00] sm:$0xff]
    %v1065 = vld [vmem:[#allocation5 + $0x1e08] sm:$0xff]
    %v1066 = vld [vmem:[#allocation5 + $0x1e10] sm:$0xff]
    %v1067 = vld [vmem:[#allocation5 + $0x1e18] sm:$0xff]
    %v1068 = vld [vmem:[#allocation5 + $0x1e20] sm:$0xff]
    %v1069 = vld [vmem:[#allocation5 + $0x1e28] sm:$0xff]
    %v1070 = vld [vmem:[#allocation5 + $0x1e30] sm:$0xff]
    %v1071 = vld [vmem:[#allocation5 + $0x1e38] sm:$0xff]
    %v1072 = vld [vmem:[#allocation5 + $0x1e40] sm:$0xff]
    %v1073 = vld [vmem:[#allocation5 + $0x1e48] sm:$0xff]
    %v1074 = vld [vmem:[#allocation5 + $0x1e50] sm:$0xff]
    %v1075 = vld [vmem:[#allocation5 + $0x1e58] sm:$0xff]
    %v1076 = vld [vmem:[#allocation5 + $0x1e60] sm:$0xff]
    %v1077 = vld [vmem:[#allocation5 + $0x1e68] sm:$0xff]
    %v1078 = vld [vmem:[#allocation5 + $0x1e70] sm:$0xff]
    %v1079 = vld [vmem:[#allocation5 + $0x1e78] sm:$0xff]
    %v1080 = vld [vmem:[#allocation5 + $0x1e80] sm:$0xff]
    %v1081 = vld [vmem:[#allocation5 + $0x1e88] sm:$0xff]
    %v1082 = vld [vmem:[#allocation5 + $0x1e90] sm:$0xff]
    %v1083 = vld [vmem:[#allocation5 + $0x1e98] sm:$0xff]
    %v1084 = vld [vmem:[#allocation5 + $0x1ea0] sm:$0xff]
    %v1085 = vld [vmem:[#allocation5 + $0x1ea8] sm:$0xff]
    %v1086 = vld [vmem:[#allocation5 + $0x1eb0] sm:$0xff]
    %v1087 = vld [vmem:[#allocation5 + $0x1eb8] sm:$0xff]
    %v1088 = vld [vmem:[#allocation5 + $0x1ec0] sm:$0xff]
    %v1089 = vld [vmem:[#allocation5 + $0x1ec8] sm:$0xff]
    %v1090 = vld [vmem:[#allocation5 + $0x1ed0] sm:$0xff]
    %v1091 = vld [vmem:[#allocation5 + $0x1ed8] sm:$0xff]
    %v1092 = vld [vmem:[#allocation5 + $0x1ee0] sm:$0xff]
    %v1093 = vld [vmem:[#allocation5 + $0x1ee8] sm:$0xff]
    %v1094 = vld [vmem:[#allocation5 + $0x1ef0] sm:$0xff]
    %v1095 = vld [vmem:[#allocation5 + $0x1ef8] sm:$0xff]
    %v1096 = vld [vmem:[#allocation5 + $0x1f00] sm:$0xff]
    %v1097 = vld [vmem:[#allocation5 + $0x1f08] sm:$0xff]
    %v1098 = vld [vmem:[#allocation5 + $0x1f10] sm:$0xff]
    %v1099 = vld [vmem:[#allocation5 + $0x1f18] sm:$0xff]
    %v1100 = vld [vmem:[#allocation5 + $0x1f20] sm:$0xff]
    %v1101 = vld [vmem:[#allocation5 + $0x1f28] sm:$0xff]
    %v1102 = vld [vmem:[#allocation5 + $0x1f30] sm:$0xff]
    %v1103 = vld [vmem:[#allocation5 + $0x1f38] sm:$0xff]
    %v1104 = vld [vmem:[#allocation5 + $0x1f40] sm:$0xff]
    %v1105 = vld [vmem:[#allocation5 + $0x1f48] sm:$0xff]
    %v1106 = vld [vmem:[#allocation5 + $0x1f50] sm:$0xff]
    %v1107 = vld [vmem:[#allocation5 + $0x1f58] sm:$0xff]
    %v1108 = vld [vmem:[#allocation5 + $0x1f60] sm:$0xff]
    %v1109 = vld [vmem:[#allocation5 + $0x1f68] sm:$0xff]
    %v1110 = vld [vmem:[#allocation5 + $0x1f70] sm:$0xff]
    %v1111 = vld [vmem:[#allocation5 + $0x1f78] sm:$0xff]
    %v1112 = vld [vmem:[#allocation5 + $0x1f80] sm:$0xff]
    %v1113 = vld [vmem:[#allocation5 + $0x1f88] sm:$0xff]
    %v1114 = vld [vmem:[#allocation5 + $0x1f90] sm:$0xff]
    %v1115 = vld [vmem:[#allocation5 + $0x1f98] sm:$0xff]
    %v1116 = vld [vmem:[#allocation5 + $0x1fa0] sm:$0xff]
    %v1117 = vld [vmem:[#allocation5 + $0x1fa8] sm:$0xff]
    %v1118 = vld [vmem:[#allocation5 + $0x1fb0] sm:$0xff]
    %v1119 = vld [vmem:[#allocation5 + $0x1fb8] sm:$0xff]
    %v1120 = vld [vmem:[#allocation5 + $0x1fc0] sm:$0xff]
    %v1121 = vld [vmem:[#allocation5 + $0x1fc8] sm:$0xff]
    %v1122 = vld [vmem:[#allocation5 + $0x1fd0] sm:$0xff]
    %v1123 = vld [vmem:[#allocation5 + $0x1fd8] sm:$0xff]
    %v1124 = vld [vmem:[#allocation5 + $0x1fe0] sm:$0xff]
    %v1125 = vld [vmem:[#allocation5 + $0x1fe8] sm:$0xff]
    %v1126 = vld [vmem:[#allocation5 + $0x1ff0] sm:$0xff]
    %v1127 = vld [vmem:[#allocation5 + $0x1ff8] sm:$0xff]
    %v1128 = vld [vmem:[#allocation5 + $0x2000] sm:$0xff]
    %v1129 = vld [vmem:[#allocation5 + $0x2008] sm:$0xff]
    %v1130 = vld [vmem:[#allocation5 + $0x2010] sm:$0xff]
    %v1131 = vld [vmem:[#allocation5 + $0x2018] sm:$0xff]
    %v1132 = vld [vmem:[#allocation5 + $0x2020] sm:$0xff]
    %v1133 = vld [vmem:[#allocation5 + $0x2028] sm:$0xff]
    %v1134 = vld [vmem:[#allocation5 + $0x2030] sm:$0xff]
    %v1135 = vld [vmem:[#allocation5 + $0x2038] sm:$0xff]
    %v1136 = vld [vmem:[#allocation5 + $0x2040] sm:$0xff]
    %v1137 = vld [vmem:[#allocation5 + $0x2048] sm:$0xff]
    %v1138 = vld [vmem:[#allocation5 + $0x2050] sm:$0xff]
    %v1139 = vld [vmem:[#allocation5 + $0x2058] sm:$0xff]
    %v1140 = vld [vmem:[#allocation5 + $0x2060] sm:$0xff]
    %v1141 = vld [vmem:[#allocation5 + $0x2068] sm:$0xff]
    %v1142 = vld [vmem:[#allocation5 + $0x2070] sm:$0xff]
    %v1143 = vld [vmem:[#allocation5 + $0x2078] sm:$0xff]
    %v1144 = vld [vmem:[#allocation5 + $0x2080] sm:$0xff]
    %v1145 = vld [vmem:[#allocation5 + $0x2088] sm:$0xff]
    %v1146 = vld [vmem:[#allocation5 + $0x2090] sm:$0xff]
    %v1147 = vld [vmem:[#allocation5 + $0x2098] sm:$0xff]
    %v1148 = vld [vmem:[#allocation5 + $0x20a0] sm:$0xff]
    %v1149 = vld [vmem:[#allocation5 + $0x20a8] sm:$0xff]
    %v1150 = vld [vmem:[#allocation5 + $0x20b0] sm:$0xff]
    %v1151 = vld [vmem:[#allocation5 + $0x20b8] sm:$0xff]
    %v1152 = vld [vmem:[#allocation5 + $0x20c0] sm:$0xff]
    %v1153 = vld [vmem:[#allocation5 + $0x20c8] sm:$0xff]
    %v1154 = vld [vmem:[#allocation5 + $0x20d0] sm:$0xff]
    %v1155 = vld [vmem:[#allocation5 + $0x20d8] sm:$0xff]
    %v1156 = vld [vmem:[#allocation5 + $0x20e0] sm:$0xff]
    %v1157 = vld [vmem:[#allocation5 + $0x20e8] sm:$0xff]
    %v1158 = vld [vmem:[#allocation5 + $0x20f0] sm:$0xff]
    %v1159 = vld [vmem:[#allocation5 + $0x20f8] sm:$0xff]
    %v1160 = vld [vmem:[#allocation5 + $0x2100] sm:$0xff]
    %v1161 = vld [vmem:[#allocation5 + $0x2108] sm:$0xff]
    %v1162 = vld [vmem:[#allocation5 + $0x2110] sm:$0xff]
    %v1163 = vld [vmem:[#allocation5 + $0x2118] sm:$0xff]
    %v1164 = vld [vmem:[#allocation5 + $0x2120] sm:$0xff]
    %v1165 = vld [vmem:[#allocation5 + $0x2128] sm:$0xff]
    %v1166 = vld [vmem:[#allocation5 + $0x2130] sm:$0xff]
    %v1167 = vld [vmem:[#allocation5 + $0x2138] sm:$0xff]
    %v1168 = vld [vmem:[#allocation5 + $0x2140] sm:$0xff]
    %v1169 = vld [vmem:[#allocation5 + $0x2148] sm:$0xff]
    %v1170 = vld [vmem:[#allocation5 + $0x2150] sm:$0xff]
    %v1171 = vld [vmem:[#allocation5 + $0x2158] sm:$0xff]
    %v1172 = vld [vmem:[#allocation5 + $0x2160] sm:$0xff]
    %v1173 = vld [vmem:[#allocation5 + $0x2168] sm:$0xff]
    %v1174 = vld [vmem:[#allocation5 + $0x2170] sm:$0xff]
    %v1175 = vld [vmem:[#allocation5 + $0x2178] sm:$0xff]
    %v1176 = vld [vmem:[#allocation5 + $0x2180] sm:$0xff]
    %v1177 = vld [vmem:[#allocation5 + $0x2188] sm:$0xff]
    %v1178 = vld [vmem:[#allocation5 + $0x2190] sm:$0xff]
    %v1179 = vld [vmem:[#allocation5 + $0x2198] sm:$0xff]
    %v1180 = vld [vmem:[#allocation5 + $0x21a0] sm:$0xff]
    %v1181 = vld [vmem:[#allocation5 + $0x21a8] sm:$0xff]
    %v1182 = vld [vmem:[#allocation5 + $0x21b0] sm:$0xff]
    %v1183 = vld [vmem:[#allocation5 + $0x21b8] sm:$0xff]
    %v1184 = vld [vmem:[#allocation5 + $0x21c0] sm:$0xff]
    %v1185 = vld [vmem:[#allocation5 + $0x21c8] sm:$0xff]
    %v1186 = vld [vmem:[#allocation5 + $0x21d0] sm:$0xff]
    %v1187 = vld [vmem:[#allocation5 + $0x21d8] sm:$0xff]
    %v1188 = vld [vmem:[#allocation5 + $0x21e0] sm:$0xff]
    %v1189 = vld [vmem:[#allocation5 + $0x21e8] sm:$0xff]
    %v1190 = vld [vmem:[#allocation5 + $0x21f0] sm:$0xff]
    %v1191 = vld [vmem:[#allocation5 + $0x21f8] sm:$0xff]
    %v1192 = vld [vmem:[#allocation5 + $0x2200] sm:$0xff]
    %v1193 = vld [vmem:[#allocation5 + $0x2208] sm:$0xff]
    %v1194 = vld [vmem:[#allocation5 + $0x2210] sm:$0xff]
    %v1195 = vld [vmem:[#allocation5 + $0x2218] sm:$0xff]
    %v1196 = vld [vmem:[#allocation5 + $0x2220] sm:$0xff]
    %v1197 = vld [vmem:[#allocation5 + $0x2228] sm:$0xff]
    %v1198 = vld [vmem:[#allocation5 + $0x2230] sm:$0xff]
    %v1199 = vld [vmem:[#allocation5 + $0x2238] sm:$0xff]
    %v1200 = vld [vmem:[#allocation5 + $0x2240] sm:$0xff]
    %v1201 = vld [vmem:[#allocation5 + $0x2248] sm:$0xff]
    %v1202 = vld [vmem:[#allocation5 + $0x2250] sm:$0xff]
    %v1203 = vld [vmem:[#allocation5 + $0x2258] sm:$0xff]
    %v1204 = vld [vmem:[#allocation5 + $0x2260] sm:$0xff]
    %v1205 = vld [vmem:[#allocation5 + $0x2268] sm:$0xff]
    %v1206 = vld [vmem:[#allocation5 + $0x2270] sm:$0xff]
    %v1207 = vld [vmem:[#allocation5 + $0x2278] sm:$0xff]
    %v1208 = vld [vmem:[#allocation5 + $0x2280] sm:$0xff]
    %v1209 = vld [vmem:[#allocation5 + $0x2288] sm:$0xff]
    %v1210 = vld [vmem:[#allocation5 + $0x2290] sm:$0xff]
    %v1211 = vld [vmem:[#allocation5 + $0x2298] sm:$0xff]
    %v1212 = vld [vmem:[#allocation5 + $0x22a0] sm:$0xff]
    %v1213 = vld [vmem:[#allocation5 + $0x22a8] sm:$0xff]
    %v1214 = vld [vmem:[#allocation5 + $0x22b0] sm:$0xff]
    %v1215 = vld [vmem:[#allocation5 + $0x22b8] sm:$0xff]
    %v1216 = vld [vmem:[#allocation5 + $0x22c0] sm:$0xff]
    %v1217 = vld [vmem:[#allocation5 + $0x22c8] sm:$0xff]
    %v1218 = vld [vmem:[#allocation5 + $0x22d0] sm:$0xff]
    %v1219 = vld [vmem:[#allocation5 + $0x22d8] sm:$0xff]
    %v1220 = vld [vmem:[#allocation5 + $0x22e0] sm:$0xff]
    %v1221 = vld [vmem:[#allocation5 + $0x22e8] sm:$0xff]
    %v1222 = vld [vmem:[#allocation5 + $0x22f0] sm:$0xff]
    %v1223 = vld [vmem:[#allocation5 + $0x22f8] sm:$0xff]
    %v1224 = vld [vmem:[#allocation5 + $0x2300] sm:$0xff]
    %v1225 = vld [vmem:[#allocation5 + $0x2308] sm:$0xff]
    %v1226 = vld [vmem:[#allocation5 + $0x2310] sm:$0xff]
    %v1227 = vld [vmem:[#allocation5 + $0x2318] sm:$0xff]
    %v1228 = vld [vmem:[#allocation5 + $0x2320] sm:$0xff]
    %v1229 = vld [vmem:[#allocation5 + $0x2328] sm:$0xff]
    %v1230 = vld [vmem:[#allocation5 + $0x2330] sm:$0xff]
    %v1231 = vld [vmem:[#allocation5 + $0x2338] sm:$0xff]
    %v1232 = vld [vmem:[#allocation5 + $0x2340] sm:$0xff]
    %v1233 = vld [vmem:[#allocation5 + $0x2348] sm:$0xff]
    %v1234 = vld [vmem:[#allocation5 + $0x2350] sm:$0xff]
    %v1235 = vld [vmem:[#allocation5 + $0x2358] sm:$0xff]
    %v1236 = vld [vmem:[#allocation5 + $0x2360] sm:$0xff]
    %v1237 = vld [vmem:[#allocation5 + $0x2368] sm:$0xff]
    %v1238 = vld [vmem:[#allocation5 + $0x2370] sm:$0xff]
    %v1239 = vld [vmem:[#allocation5 + $0x2378] sm:$0xff]
    %v1240 = vld [vmem:[#allocation5 + $0x2380] sm:$0xff]
    %v1241 = vld [vmem:[#allocation5 + $0x2388] sm:$0xff]
    %v1242 = vld [vmem:[#allocation5 + $0x2390] sm:$0xff]
    %v1243 = vld [vmem:[#allocation5 + $0x2398] sm:$0xff]
    %v1244 = vld [vmem:[#allocation5 + $0x23a0] sm:$0xff]
    %v1245 = vld [vmem:[#allocation5 + $0x23a8] sm:$0xff]
    %v1246 = vld [vmem:[#allocation5 + $0x23b0] sm:$0xff]
    %v1247 = vld [vmem:[#allocation5 + $0x23b8] sm:$0xff]
    %v1248 = vld [vmem:[#allocation5 + $0x23c0] sm:$0xff]
    %v1249 = vld [vmem:[#allocation5 + $0x23c8] sm:$0xff]
    %v1250 = vld [vmem:[#allocation5 + $0x23d0] sm:$0xff]
    %v1251 = vld [vmem:[#allocation5 + $0x23d8] sm:$0xff]
    %v1252 = vld [vmem:[#allocation5 + $0x23e0] sm:$0xff]
    %v1253 = vld [vmem:[#allocation5 + $0x23e8] sm:$0xff]
    %v1254 = vld [vmem:[#allocation5 + $0x23f0] sm:$0xff]
    %v1255 = vld [vmem:[#allocation5 + $0x23f8] sm:$0xff]
    %v1256 = vld [vmem:[#allocation5 + $0x2400] sm:$0xff]
    %v1257 = vld [vmem:[#allocation5 + $0x2408] sm:$0xff]
    %v1258 = vld [vmem:[#allocation5 + $0x2410] sm:$0xff]
    %v1259 = vld [vmem:[#allocation5 + $0x2418] sm:$0xff]
    %v1260 = vld [vmem:[#allocation5 + $0x2420] sm:$0xff]
    %v1261 = vld [vmem:[#allocation5 + $0x2428] sm:$0xff]
    %v1262 = vld [vmem:[#allocation5 + $0x2430] sm:$0xff]
    %v1263 = vld [vmem:[#allocation5 + $0x2438] sm:$0xff]
    %v1264 = vld [vmem:[#allocation5 + $0x2440] sm:$0xff]
    %v1265 = vld [vmem:[#allocation5 + $0x2448] sm:$0xff]
    %v1266 = vld [vmem:[#allocation5 + $0x2450] sm:$0xff]
    %v1267 = vld [vmem:[#allocation5 + $0x2458] sm:$0xff]
    %v1268 = vld [vmem:[#allocation5 + $0x2460] sm:$0xff]
    %v1269 = vld [vmem:[#allocation5 + $0x2468] sm:$0xff]
    %v1270 = vld [vmem:[#allocation5 + $0x2470] sm:$0xff]
    %v1271 = vld [vmem:[#allocation5 + $0x2478] sm:$0xff]
    %v1272 = vld [vmem:[#allocation5 + $0x2480] sm:$0xff]
    %v1273 = vld [vmem:[#allocation5 + $0x2488] sm:$0xff]
    %v1274 = vld [vmem:[#allocation5 + $0x2490] sm:$0xff]
    %v1275 = vld [vmem:[#allocation5 + $0x2498] sm:$0xff]
    %v1276 = vld [vmem:[#allocation5 + $0x24a0] sm:$0xff]
    %v1277 = vld [vmem:[#allocation5 + $0x24a8] sm:$0xff]
    %v1278 = vld [vmem:[#allocation5 + $0x24b0] sm:$0xff]
    %v1279 = vld [vmem:[#allocation5 + $0x24b8] sm:$0xff]
    %v1280 = vld [vmem:[#allocation5 + $0x24c0] sm:$0xff]
    %v1281 = vld [vmem:[#allocation5 + $0x24c8] sm:$0xff]
    %v1282 = vld [vmem:[#allocation5 + $0x24d0] sm:$0xff]
    %v1283 = vld [vmem:[#allocation5 + $0x24d8] sm:$0xff]
    %v1284 = vld [vmem:[#allocation5 + $0x24e0] sm:$0xff]
    %v1285 = vld [vmem:[#allocation5 + $0x24e8] sm:$0xff]
    %v1286 = vld [vmem:[#allocation5 + $0x24f0] sm:$0xff]
    %v1287 = vld [vmem:[#allocation5 + $0x24f8] sm:$0xff]
    %v1288 = vld [vmem:[#allocation5 + $0x2500] sm:$0xff]
    %v1289 = vld [vmem:[#allocation5 + $0x2508] sm:$0xff]
    %v1290 = vld [vmem:[#allocation5 + $0x2510] sm:$0xff]
    %v1291 = vld [vmem:[#allocation5 + $0x2518] sm:$0xff]
    %v1292 = vld [vmem:[#allocation5 + $0x2520] sm:$0xff]
    %v1293 = vld [vmem:[#allocation5 + $0x2528] sm:$0xff]
    %v1294 = vld [vmem:[#allocation5 + $0x2530] sm:$0xff]
    %v1295 = vld [vmem:[#allocation5 + $0x2538] sm:$0xff]
    %v1296 = vld [vmem:[#allocation5 + $0x2540] sm:$0xff]
    %v1297 = vld [vmem:[#allocation5 + $0x2548] sm:$0xff]
    %v1298 = vld [vmem:[#allocation5 + $0x2550] sm:$0xff]
    %v1299 = vld [vmem:[#allocation5 + $0x2558] sm:$0xff]
    %v1300 = vld [vmem:[#allocation5 + $0x2560] sm:$0xff]
    %v1301 = vld [vmem:[#allocation5 + $0x2568] sm:$0xff]
    %v1302 = vld [vmem:[#allocation5 + $0x2570] sm:$0xff]
    %v1303 = vld [vmem:[#allocation5 + $0x2578] sm:$0xff]
    %v1304 = vld [vmem:[#allocation5 + $0x2580] sm:$0xff]
    %v1305 = vld [vmem:[#allocation5 + $0x2588] sm:$0xff]
    %v1306 = vld [vmem:[#allocation5 + $0x2590] sm:$0xff]
    %v1307 = vld [vmem:[#allocation5 + $0x2598] sm:$0xff]
    %v1308 = vld [vmem:[#allocation5 + $0x25a0] sm:$0xff]
    %v1309 = vld [vmem:[#allocation5 + $0x25a8] sm:$0xff]
    %v1310 = vld [vmem:[#allocation5 + $0x25b0] sm:$0xff]
    %v1311 = vld [vmem:[#allocation5 + $0x25b8] sm:$0xff]
    %v1312 = vld [vmem:[#allocation5 + $0x25c0] sm:$0xff]
    %v1313 = vld [vmem:[#allocation5 + $0x25c8] sm:$0xff]
    %v1314 = vld [vmem:[#allocation5 + $0x25d0] sm:$0xff]
    %v1315 = vld [vmem:[#allocation5 + $0x25d8] sm:$0xff]
    %v1316 = vld [vmem:[#allocation5 + $0x25e0] sm:$0xff]
    %v1317 = vld [vmem:[#allocation5 + $0x25e8] sm:$0xff]
    %v1318 = vld [vmem:[#allocation5 + $0x25f0] sm:$0xff]
    %v1319 = vld [vmem:[#allocation5 + $0x25f8] sm:$0xff]
    %v1320 = vld [vmem:[#allocation5 + $0x2600] sm:$0xff]
    %v1321 = vld [vmem:[#allocation5 + $0x2608] sm:$0xff]
    %v1322 = vld [vmem:[#allocation5 + $0x2610] sm:$0xff]
    %v1323 = vld [vmem:[#allocation5 + $0x2618] sm:$0xff]
    %v1324 = vld [vmem:[#allocation5 + $0x2620] sm:$0xff]
    %v1325 = vld [vmem:[#allocation5 + $0x2628] sm:$0xff]
    %v1326 = vld [vmem:[#allocation5 + $0x2630] sm:$0xff]
    %v1327 = vld [vmem:[#allocation5 + $0x2638] sm:$0xff]
    %v1328 = vld [vmem:[#allocation5 + $0x2640] sm:$0xff]
    %v1329 = vld [vmem:[#allocation5 + $0x2648] sm:$0xff]
    %v1330 = vld [vmem:[#allocation5 + $0x2650] sm:$0xff]
    %v1331 = vld [vmem:[#allocation5 + $0x2658] sm:$0xff]
    %v1332 = vld [vmem:[#allocation5 + $0x2660] sm:$0xff]
    %v1333 = vld [vmem:[#allocation5 + $0x2668] sm:$0xff]
    %v1334 = vld [vmem:[#allocation5 + $0x2670] sm:$0xff]
    %v1335 = vld [vmem:[#allocation5 + $0x2678] sm:$0xff]
    %v1336 = vld [vmem:[#allocation5 + $0x2680] sm:$0xff]
    %v1337 = vld [vmem:[#allocation5 + $0x2688] sm:$0xff]
    %v1338 = vld [vmem:[#allocation5 + $0x2690] sm:$0xff]
    %v1339 = vld [vmem:[#allocation5 + $0x2698] sm:$0xff]
    %v1340 = vld [vmem:[#allocation5 + $0x26a0] sm:$0xff]
    %v1341 = vld [vmem:[#allocation5 + $0x26a8] sm:$0xff]
    %v1342 = vld [vmem:[#allocation5 + $0x26b0] sm:$0xff]
    %v1343 = vld [vmem:[#allocation5 + $0x26b8] sm:$0xff]
    %v1344 = vld [vmem:[#allocation5 + $0x26c0] sm:$0xff]
    %v1345 = vld [vmem:[#allocation5 + $0x26c8] sm:$0xff]
    %v1346 = vld [vmem:[#allocation5 + $0x26d0] sm:$0xff]
    %v1347 = vld [vmem:[#allocation5 + $0x26d8] sm:$0xff]
    %v1348 = vld [vmem:[#allocation5 + $0x26e0] sm:$0xff]
    %v1349 = vld [vmem:[#allocation5 + $0x26e8] sm:$0xff]
    %v1350 = vld [vmem:[#allocation5 + $0x26f0] sm:$0xff]
    %v1351 = vld [vmem:[#allocation5 + $0x26f8] sm:$0xff]
    %v1352 = vld [vmem:[#allocation5 + $0x2700] sm:$0xff]
    %v1353 = vld [vmem:[#allocation5 + $0x2708] sm:$0xff]
    %v1354 = vld [vmem:[#allocation5 + $0x2710] sm:$0xff]
    %v1355 = vld [vmem:[#allocation5 + $0x2718] sm:$0xff]
    %v1356 = vld [vmem:[#allocation5 + $0x2720] sm:$0xff]
    %v1357 = vld [vmem:[#allocation5 + $0x2728] sm:$0xff]
    %v1358 = vld [vmem:[#allocation5 + $0x2730] sm:$0xff]
    %v1359 = vld [vmem:[#allocation5 + $0x2738] sm:$0xff]
    %v1360 = vld [vmem:[#allocation5 + $0x2740] sm:$0xff]
    %v1361 = vld [vmem:[#allocation5 + $0x2748] sm:$0xff]
    %v1362 = vld [vmem:[#allocation5 + $0x2750] sm:$0xff]
    %v1363 = vld [vmem:[#allocation5 + $0x2758] sm:$0xff]
    %v1364 = vld [vmem:[#allocation5 + $0x2760] sm:$0xff]
    %v1365 = vld [vmem:[#allocation5 + $0x2768] sm:$0xff]
    %v1366 = vld [vmem:[#allocation5 + $0x2770] sm:$0xff]
    %v1367 = vld [vmem:[#allocation5 + $0x2778] sm:$0xff]
    %v1368 = vld [vmem:[#allocation5 + $0x2780] sm:$0xff]
    %v1369 = vld [vmem:[#allocation5 + $0x2788] sm:$0xff]
    %v1370 = vld [vmem:[#allocation5 + $0x2790] sm:$0xff]
    %v1371 = vld [vmem:[#allocation5 + $0x2798] sm:$0xff]
    %v1372 = vld [vmem:[#allocation5 + $0x27a0] sm:$0xff]
    %v1373 = vld [vmem:[#allocation5 + $0x27a8] sm:$0xff]
    %v1374 = vld [vmem:[#allocation5 + $0x27b0] sm:$0xff]
    %v1375 = vld [vmem:[#allocation5 + $0x27b8] sm:$0xff]
    %v1376 = vld [vmem:[#allocation5 + $0x27c0] sm:$0xff]
    %v1377 = vld [vmem:[#allocation5 + $0x27c8] sm:$0xff]
    %v1378 = vld [vmem:[#allocation5 + $0x27d0] sm:$0xff]
    %v1379 = vld [vmem:[#allocation5 + $0x27d8] sm:$0xff]
    %v1380 = vld [vmem:[#allocation5 + $0x27e0] sm:$0xff]
    %v1381 = vld [vmem:[#allocation5 + $0x27e8] sm:$0xff]
    %v1382 = vld [vmem:[#allocation5 + $0x27f0] sm:$0xff]
    %v1383 = vld [vmem:[#allocation5 + $0x27f8] sm:$0xff]
    %v1384 = vld [vmem:[#allocation5 + $0x2800] sm:$0xff]
    %v1385 = vld [vmem:[#allocation5 + $0x2808] sm:$0xff]
    %v1386 = vld [vmem:[#allocation5 + $0x2810] sm:$0xff]
    %v1387 = vld [vmem:[#allocation5 + $0x2818] sm:$0xff]
    %v1388 = vld [vmem:[#allocation5 + $0x2820] sm:$0xff]
    %v1389 = vld [vmem:[#allocation5 + $0x2828] sm:$0xff]
    %v1390 = vld [vmem:[#allocation5 + $0x2830] sm:$0xff]
    %v1391 = vld [vmem:[#allocation5 + $0x2838] sm:$0xff]
    %v1392 = vld [vmem:[#allocation5 + $0x2840] sm:$0xff]
    %v1393 = vld [vmem:[#allocation5 + $0x2848] sm:$0xff]
    %v1394 = vld [vmem:[#allocation5 + $0x2850] sm:$0xff]
    %v1395 = vld [vmem:[#allocation5 + $0x2858] sm:$0xff]
    %v1396 = vld [vmem:[#allocation5 + $0x2860] sm:$0xff]
    %v1397 = vld [vmem:[#allocation5 + $0x2868] sm:$0xff]
    %v1398 = vld [vmem:[#allocation5 + $0x2870] sm:$0xff]
    %v1399 = vld [vmem:[#allocation5 + $0x2878] sm:$0xff]
    %v1400 = vld [vmem:[#allocation5 + $0x2880] sm:$0xff]
    %v1401 = vld [vmem:[#allocation5 + $0x2888] sm:$0xff]
    %v1402 = vld [vmem:[#allocation5 + $0x2890] sm:$0xff]
    %v1403 = vld [vmem:[#allocation5 + $0x2898] sm:$0xff]
    %v1404 = vld [vmem:[#allocation5 + $0x28a0] sm:$0xff]
    %v1405 = vld [vmem:[#allocation5 + $0x28a8] sm:$0xff]
    %v1406 = vld [vmem:[#allocation5 + $0x28b0] sm:$0xff]
    %v1407 = vld [vmem:[#allocation5 + $0x28b8] sm:$0xff]
    %v1408 = vld [vmem:[#allocation5 + $0x28c0] sm:$0xff]
    %v1409 = vld [vmem:[#allocation5 + $0x28c8] sm:$0xff]
    %v1410 = vld [vmem:[#allocation5 + $0x28d0] sm:$0xff]
    %v1411 = vld [vmem:[#allocation5 + $0x28d8] sm:$0xff]
    %v1412 = vld [vmem:[#allocation5 + $0x28e0] sm:$0xff]
    %v1413 = vld [vmem:[#allocation5 + $0x28e8] sm:$0xff]
    %v1414 = vld [vmem:[#allocation5 + $0x28f0] sm:$0xff]
    %v1415 = vld [vmem:[#allocation5 + $0x28f8] sm:$0xff]
    %v1416 = vld [vmem:[#allocation5 + $0x2900] sm:$0xff]
    %v1417 = vld [vmem:[#allocation5 + $0x2908] sm:$0xff]
    %v1418 = vld [vmem:[#allocation5 + $0x2910] sm:$0xff]
    %v1419 = vld [vmem:[#allocation5 + $0x2918] sm:$0xff]
    %v1420 = vld [vmem:[#allocation5 + $0x2920] sm:$0xff]
    %v1421 = vld [vmem:[#allocation5 + $0x2928] sm:$0xff]
    %v1422 = vld [vmem:[#allocation5 + $0x2930] sm:$0xff]
    %v1423 = vld [vmem:[#allocation5 + $0x2938] sm:$0xff]
    %v1424 = vld [vmem:[#allocation5 + $0x2940] sm:$0xff]
    %v1425 = vld [vmem:[#allocation5 + $0x2948] sm:$0xff]
    %v1426 = vld [vmem:[#allocation5 + $0x2950] sm:$0xff]
    %v1427 = vld [vmem:[#allocation5 + $0x2958] sm:$0xff]
    %v1428 = vld [vmem:[#allocation5 + $0x2960] sm:$0xff]
    %v1429 = vld [vmem:[#allocation5 + $0x2968] sm:$0xff]
    %v1430 = vld [vmem:[#allocation5 + $0x2970] sm:$0xff]
    %v1431 = vld [vmem:[#allocation5 + $0x2978] sm:$0xff]
    %v1432 = vld [vmem:[#allocation5 + $0x2980] sm:$0xff]
    %v1433 = vld [vmem:[#allocation5 + $0x2988] sm:$0xff]
    %v1434 = vld [vmem:[#allocation5 + $0x2990] sm:$0xff]
    %v1435 = vld [vmem:[#allocation5 + $0x2998] sm:$0xff]
    %v1436 = vld [vmem:[#allocation5 + $0x29a0] sm:$0xff]
    %v1437 = vld [vmem:[#allocation5 + $0x29a8] sm:$0xff]
    %v1438 = vld [vmem:[#allocation5 + $0x29b0] sm:$0xff]
    %v1439 = vld [vmem:[#allocation5 + $0x29b8] sm:$0xff]
    %v1440 = vld [vmem:[#allocation5 + $0x29c0] sm:$0xff]
    %v1441 = vld [vmem:[#allocation5 + $0x29c8] sm:$0xff]
    %v1442 = vld [vmem:[#allocation5 + $0x29d0] sm:$0xff]
    %v1443 = vld [vmem:[#allocation5 + $0x29d8] sm:$0xff]
    %v1444 = vld [vmem:[#allocation5 + $0x29e0] sm:$0xff]
    %v1445 = vld [vmem:[#allocation5 + $0x29e8] sm:$0xff]
    %v1446 = vld [vmem:[#allocation5 + $0x29f0] sm:$0xff]
    %v1447 = vld [vmem:[#allocation5 + $0x29f8] sm:$0xff]
    %v1448 = vld [vmem:[#allocation5 + $0x2a00] sm:$0xff]
    %v1449 = vld [vmem:[#allocation5 + $0x2a08] sm:$0xff]
    %v1450 = vld [vmem:[#allocation5 + $0x2a10] sm:$0xff]
    %v1451 = vld [vmem:[#allocation5 + $0x2a18] sm:$0xff]
    %v1452 = vld [vmem:[#allocation5 + $0x2a20] sm:$0xff]
    %v1453 = vld [vmem:[#allocation5 + $0x2a28] sm:$0xff]
    %v1454 = vld [vmem:[#allocation5 + $0x2a30] sm:$0xff]
    %v1455 = vld [vmem:[#allocation5 + $0x2a38] sm:$0xff]
    %v1456 = vld [vmem:[#allocation5 + $0x2a40] sm:$0xff]
    %v1457 = vld [vmem:[#allocation5 + $0x2a48] sm:$0xff]
    %v1458 = vld [vmem:[#allocation5 + $0x2a50] sm:$0xff]
    %v1459 = vld [vmem:[#allocation5 + $0x2a58] sm:$0xff]
    %v1460 = vld [vmem:[#allocation5 + $0x2a60] sm:$0xff]
    %v1461 = vld [vmem:[#allocation5 + $0x2a68] sm:$0xff]
    %v1462 = vld [vmem:[#allocation5 + $0x2a70] sm:$0xff]
    %v1463 = vld [vmem:[#allocation5 + $0x2a78] sm:$0xff]
    %v1464 = vld [vmem:[#allocation5 + $0x2a80] sm:$0xff]
    %v1465 = vld [vmem:[#allocation5 + $0x2a88] sm:$0xff]
    %v1466 = vld [vmem:[#allocation5 + $0x2a90] sm:$0xff]
    %v1467 = vld [vmem:[#allocation5 + $0x2a98] sm:$0xff]
    %v1468 = vld [vmem:[#allocation5 + $0x2aa0] sm:$0xff]
    %v1469 = vld [vmem:[#allocation5 + $0x2aa8] sm:$0xff]
    %v1470 = vld [vmem:[#allocation5 + $0x2ab0] sm:$0xff]
    %v1471 = vld [vmem:[#allocation5 + $0x2ab8] sm:$0xff]
    %v1472 = vld [vmem:[#allocation5 + $0x2ac0] sm:$0xff]
    %v1473 = vld [vmem:[#allocation5 + $0x2ac8] sm:$0xff]
    %v1474 = vld [vmem:[#allocation5 + $0x2ad0] sm:$0xff]
    %v1475 = vld [vmem:[#allocation5 + $0x2ad8] sm:$0xff]
    %v1476 = vld [vmem:[#allocation5 + $0x2ae0] sm:$0xff]
    %v1477 = vld [vmem:[#allocation5 + $0x2ae8] sm:$0xff]
    %v1478 = vld [vmem:[#allocation5 + $0x2af0] sm:$0xff]
    %v1479 = vld [vmem:[#allocation5 + $0x2af8] sm:$0xff]
    %v1480 = vld [vmem:[#allocation5 + $0x2b00] sm:$0xff]
    %v1481 = vld [vmem:[#allocation5 + $0x2b08] sm:$0xff]
    %v1482 = vld [vmem:[#allocation5 + $0x2b10] sm:$0xff]
    %v1483 = vld [vmem:[#allocation5 + $0x2b18] sm:$0xff]
    %v1484 = vld [vmem:[#allocation5 + $0x2b20] sm:$0xff]
    %v1485 = vld [vmem:[#allocation5 + $0x2b28] sm:$0xff]
    %v1486 = vld [vmem:[#allocation5 + $0x2b30] sm:$0xff]
    %v1487 = vld [vmem:[#allocation5 + $0x2b38] sm:$0xff]
    %v1488 = vld [vmem:[#allocation5 + $0x2b40] sm:$0xff]
    %v1489 = vld [vmem:[#allocation5 + $0x2b48] sm:$0xff]
    %v1490 = vld [vmem:[#allocation5 + $0x2b50] sm:$0xff]
    %v1491 = vld [vmem:[#allocation5 + $0x2b58] sm:$0xff]
    %v1492 = vld [vmem:[#allocation5 + $0x2b60] sm:$0xff]
    %v1493 = vld [vmem:[#allocation5 + $0x2b68] sm:$0xff]
    %v1494 = vld [vmem:[#allocation5 + $0x2b70] sm:$0xff]
    %v1495 = vld [vmem:[#allocation5 + $0x2b78] sm:$0xff]
    %v1496 = vld [vmem:[#allocation5 + $0x2b80] sm:$0xff]
    %v1497 = vld [vmem:[#allocation5 + $0x2b88] sm:$0xff]
    %v1498 = vld [vmem:[#allocation5 + $0x2b90] sm:$0xff]
    %v1499 = vld [vmem:[#allocation5 + $0x2b98] sm:$0xff]
    %v1500 = vld [vmem:[#allocation5 + $0x2ba0] sm:$0xff]
    %v1501 = vld [vmem:[#allocation5 + $0x2ba8] sm:$0xff]
    %v1502 = vld [vmem:[#allocation5 + $0x2bb0] sm:$0xff]
    %v1503 = vld [vmem:[#allocation5 + $0x2bb8] sm:$0xff]
    %v1504 = vld [vmem:[#allocation5 + $0x2bc0] sm:$0xff]
    %v1505 = vld [vmem:[#allocation5 + $0x2bc8] sm:$0xff]
    %v1506 = vld [vmem:[#allocation5 + $0x2bd0] sm:$0xff]
    %v1507 = vld [vmem:[#allocation5 + $0x2bd8] sm:$0xff]
    %v1508 = vld [vmem:[#allocation5 + $0x2be0] sm:$0xff]
    %v1509 = vld [vmem:[#allocation5 + $0x2be8] sm:$0xff]
    %v1510 = vld [vmem:[#allocation5 + $0x2bf0] sm:$0xff]
    %v1511 = vld [vmem:[#allocation5 + $0x2bf8] sm:$0xff]
    %v1512 = vld [vmem:[#allocation5 + $0x2c00] sm:$0xff]
    %v1513 = vld [vmem:[#allocation5 + $0x2c08] sm:$0xff]
    %v1514 = vld [vmem:[#allocation5 + $0x2c10] sm:$0xff]
    %v1515 = vld [vmem:[#allocation5 + $0x2c18] sm:$0xff]
    %v1516 = vld [vmem:[#allocation5 + $0x2c20] sm:$0xff]
    %v1517 = vld [vmem:[#allocation5 + $0x2c28] sm:$0xff]
    %v1518 = vld [vmem:[#allocation5 + $0x2c30] sm:$0xff]
    %v1519 = vld [vmem:[#allocation5 + $0x2c38] sm:$0xff]
    %v1520 = vld [vmem:[#allocation5 + $0x2c40] sm:$0xff]
    %v1521 = vld [vmem:[#allocation5 + $0x2c48] sm:$0xff]
    %v1522 = vld [vmem:[#allocation5 + $0x2c50] sm:$0xff]
    %v1523 = vld [vmem:[#allocation5 + $0x2c58] sm:$0xff]
    %v1524 = vld [vmem:[#allocation5 + $0x2c60] sm:$0xff]
    %v1525 = vld [vmem:[#allocation5 + $0x2c68] sm:$0xff]
    %v1526 = vld [vmem:[#allocation5 + $0x2c70] sm:$0xff]
    %v1527 = vld [vmem:[#allocation5 + $0x2c78] sm:$0xff]
    %v1528 = vld [vmem:[#allocation5 + $0x2c80] sm:$0xff]
    %v1529 = vld [vmem:[#allocation5 + $0x2c88] sm:$0xff]
    %v1530 = vld [vmem:[#allocation5 + $0x2c90] sm:$0xff]
    %v1531 = vld [vmem:[#allocation5 + $0x2c98] sm:$0xff]
    %v1532 = vld [vmem:[#allocation5 + $0x2ca0] sm:$0xff]
    %v1533 = vld [vmem:[#allocation5 + $0x2ca8] sm:$0xff]
    %v1534 = vld [vmem:[#allocation5 + $0x2cb0] sm:$0xff]
    %v1535 = vld [vmem:[#allocation5 + $0x2cb8] sm:$0xff]
    %v1536 = vld [vmem:[#allocation5 + $0x2cc0] sm:$0xff]
    %v1537 = vld [vmem:[#allocation5 + $0x2cc8] sm:$0xff]
    %v1538 = vld [vmem:[#allocation5 + $0x2cd0] sm:$0xff]
    %v1539 = vld [vmem:[#allocation5 + $0x2cd8] sm:$0xff]
    %v1540 = vld [vmem:[#allocation5 + $0x2ce0] sm:$0xff]
    %v1541 = vld [vmem:[#allocation5 + $0x2ce8] sm:$0xff]
    %v1542 = vld [vmem:[#allocation5 + $0x2cf0] sm:$0xff]
    %v1543 = vld [vmem:[#allocation5 + $0x2cf8] sm:$0xff]
    %v1544 = vld [vmem:[#allocation5 + $0x2d00] sm:$0xff]
    %v1545 = vld [vmem:[#allocation5 + $0x2d08] sm:$0xff]
    %v1546 = vld [vmem:[#allocation5 + $0x2d10] sm:$0xff]
    %v1547 = vld [vmem:[#allocation5 + $0x2d18] sm:$0xff]
    %v1548 = vld [vmem:[#allocation5 + $0x2d20] sm:$0xff]
    %v1549 = vld [vmem:[#allocation5 + $0x2d28] sm:$0xff]
    %v1550 = vld [vmem:[#allocation5 + $0x2d30] sm:$0xff]
    %v1551 = vld [vmem:[#allocation5 + $0x2d38] sm:$0xff]
    %v1552 = vld [vmem:[#allocation5 + $0x2d40] sm:$0xff]
    %v1553 = vld [vmem:[#allocation5 + $0x2d48] sm:$0xff]
    %v1554 = vld [vmem:[#allocation5 + $0x2d50] sm:$0xff]
    %v1555 = vld [vmem:[#allocation5 + $0x2d58] sm:$0xff]
    %v1556 = vld [vmem:[#allocation5 + $0x2d60] sm:$0xff]
    %v1557 = vld [vmem:[#allocation5 + $0x2d68] sm:$0xff]
    %v1558 = vld [vmem:[#allocation5 + $0x2d70] sm:$0xff]
    %v1559 = vld [vmem:[#allocation5 + $0x2d78] sm:$0xff]
    %v1560 = vld [vmem:[#allocation5 + $0x2d80] sm:$0xff]
    %v1561 = vld [vmem:[#allocation5 + $0x2d88] sm:$0xff]
    %v1562 = vld [vmem:[#allocation5 + $0x2d90] sm:$0xff]
    %v1563 = vld [vmem:[#allocation5 + $0x2d98] sm:$0xff]
    %v1564 = vld [vmem:[#allocation5 + $0x2da0] sm:$0xff]
    %v1565 = vld [vmem:[#allocation5 + $0x2da8] sm:$0xff]
    %v1566 = vld [vmem:[#allocation5 + $0x2db0] sm:$0xff]
    %v1567 = vld [vmem:[#allocation5 + $0x2db8] sm:$0xff]
    %v1568 = vld [vmem:[#allocation5 + $0x2dc0] sm:$0xff]
    %v1569 = vld [vmem:[#allocation5 + $0x2dc8] sm:$0xff]
    %v1570 = vld [vmem:[#allocation5 + $0x2dd0] sm:$0xff]
    %v1571 = vld [vmem:[#allocation5 + $0x2dd8] sm:$0xff]
    %v1572 = vld [vmem:[#allocation5 + $0x2de0] sm:$0xff]
    %v1573 = vld [vmem:[#allocation5 + $0x2de8] sm:$0xff]
    %v1574 = vld [vmem:[#allocation5 + $0x2df0] sm:$0xff]
    %v1575 = vld [vmem:[#allocation5 + $0x2df8] sm:$0xff]
    %v1576 = vld [vmem:[#allocation5 + $0x2e00] sm:$0xff]
    %v1577 = vld [vmem:[#allocation5 + $0x2e08] sm:$0xff]
    %v1578 = vld [vmem:[#allocation5 + $0x2e10] sm:$0xff]
    %v1579 = vld [vmem:[#allocation5 + $0x2e18] sm:$0xff]
    %v1580 = vld [vmem:[#allocation5 + $0x2e20] sm:$0xff]
    %v1581 = vld [vmem:[#allocation5 + $0x2e28] sm:$0xff]
    %v1582 = vld [vmem:[#allocation5 + $0x2e30] sm:$0xff]
    %v1583 = vld [vmem:[#allocation5 + $0x2e38] sm:$0xff]
    %v1584 = vld [vmem:[#allocation5 + $0x2e40] sm:$0xff]
    %v1585 = vld [vmem:[#allocation5 + $0x2e48] sm:$0xff]
    %v1586 = vld [vmem:[#allocation5 + $0x2e50] sm:$0xff]
    %v1587 = vld [vmem:[#allocation5 + $0x2e58] sm:$0xff]
    %v1588 = vld [vmem:[#allocation5 + $0x2e60] sm:$0xff]
    %v1589 = vld [vmem:[#allocation5 + $0x2e68] sm:$0xff]
    %v1590 = vld [vmem:[#allocation5 + $0x2e70] sm:$0xff]
    %v1591 = vld [vmem:[#allocation5 + $0x2e78] sm:$0xff]
    %v1592 = vld [vmem:[#allocation5 + $0x2e80] sm:$0xff]
    %v1593 = vld [vmem:[#allocation5 + $0x2e88] sm:$0xff]
    %v1594 = vld [vmem:[#allocation5 + $0x2e90] sm:$0xff]
    %v1595 = vld [vmem:[#allocation5 + $0x2e98] sm:$0xff]
    %v1596 = vld [vmem:[#allocation5 + $0x2ea0] sm:$0xff]
    %v1597 = vld [vmem:[#allocation5 + $0x2ea8] sm:$0xff]
    %v1598 = vld [vmem:[#allocation5 + $0x2eb0] sm:$0xff]
    %v1599 = vld [vmem:[#allocation5 + $0x2eb8] sm:$0xff]
    %v1600 = vld [vmem:[#allocation5 + $0x2ec0] sm:$0xff]
    %v1601 = vld [vmem:[#allocation5 + $0x2ec8] sm:$0xff]
    %v1602 = vld [vmem:[#allocation5 + $0x2ed0] sm:$0xff]
    %v1603 = vld [vmem:[#allocation5 + $0x2ed8] sm:$0xff]
    %v1604 = vld [vmem:[#allocation5 + $0x2ee0] sm:$0xff]
    %v1605 = vld [vmem:[#allocation5 + $0x2ee8] sm:$0xff]
    %v1606 = vld [vmem:[#allocation5 + $0x2ef0] sm:$0xff]
    %v1607 = vld [vmem:[#allocation5 + $0x2ef8] sm:$0xff]
    %v1608 = vld [vmem:[#allocation5 + $0x2f00] sm:$0xff]
    %v1609 = vld [vmem:[#allocation5 + $0x2f08] sm:$0xff]
    %v1610 = vld [vmem:[#allocation5 + $0x2f10] sm:$0xff]
    %v1611 = vld [vmem:[#allocation5 + $0x2f18] sm:$0xff]
    %v1612 = vld [vmem:[#allocation5 + $0x2f20] sm:$0xff]
    %v1613 = vld [vmem:[#allocation5 + $0x2f28] sm:$0xff]
    %v1614 = vld [vmem:[#allocation5 + $0x2f30] sm:$0xff]
    %v1615 = vld [vmem:[#allocation5 + $0x2f38] sm:$0xff]
    %v1616 = vld [vmem:[#allocation5 + $0x2f40] sm:$0xff]
    %v1617 = vld [vmem:[#allocation5 + $0x2f48] sm:$0xff]
    %v1618 = vld [vmem:[#allocation5 + $0x2f50] sm:$0xff]
    %v1619 = vld [vmem:[#allocation5 + $0x2f58] sm:$0xff]
    %v1620 = vld [vmem:[#allocation5 + $0x2f60] sm:$0xff]
    %v1621 = vld [vmem:[#allocation5 + $0x2f68] sm:$0xff]
    %v1622 = vld [vmem:[#allocation5 + $0x2f70] sm:$0xff]
    %v1623 = vld [vmem:[#allocation5 + $0x2f78] sm:$0xff]
    %v1624 = vld [vmem:[#allocation5 + $0x2f80] sm:$0xff]
    %v1625 = vld [vmem:[#allocation5 + $0x2f88] sm:$0xff]
    %v1626 = vld [vmem:[#allocation5 + $0x2f90] sm:$0xff]
    %v1627 = vld [vmem:[#allocation5 + $0x2f98] sm:$0xff]
    %v1628 = vld [vmem:[#allocation5 + $0x2fa0] sm:$0xff]
    %v1629 = vld [vmem:[#allocation5 + $0x2fa8] sm:$0xff]
    %v1630 = vld [vmem:[#allocation5 + $0x2fb0] sm:$0xff]
    %v1631 = vld [vmem:[#allocation5 + $0x2fb8] sm:$0xff]
    %v1632 = vld [vmem:[#allocation5 + $0x2fc0] sm:$0xff]
    %v1633 = vld [vmem:[#allocation5 + $0x2fc8] sm:$0xff]
    %v1634 = vld [vmem:[#allocation5 + $0x2fd0] sm:$0xff]
    %v1635 = vld [vmem:[#allocation5 + $0x2fd8] sm:$0xff]
    %v1636 = vld [vmem:[#allocation5 + $0x2fe0] sm:$0xff]
    %v1637 = vld [vmem:[#allocation5 + $0x2fe8] sm:$0xff]
    %v1638 = vld [vmem:[#allocation5 + $0x2ff0] sm:$0xff]
    %v1639 = vld [vmem:[#allocation5 + $0x2ff8] sm:$0xff]
    %v1640 = vld [vmem:[#allocation5 + $0x3000] sm:$0xff]
    %v1641 = vld [vmem:[#allocation5 + $0x3008] sm:$0xff]
    %v1642 = vld [vmem:[#allocation5 + $0x3010] sm:$0xff]
    %v1643 = vld [vmem:[#allocation5 + $0x3018] sm:$0xff]
    %v1644 = vld [vmem:[#allocation5 + $0x3020] sm:$0xff]
    %v1645 = vld [vmem:[#allocation5 + $0x3028] sm:$0xff]
    %v1646 = vld [vmem:[#allocation5 + $0x3030] sm:$0xff]
    %v1647 = vld [vmem:[#allocation5 + $0x3038] sm:$0xff]
    %v1648 = vld [vmem:[#allocation5 + $0x3040] sm:$0xff]
    %v1649 = vld [vmem:[#allocation5 + $0x3048] sm:$0xff]
    %v1650 = vld [vmem:[#allocation5 + $0x3050] sm:$0xff]
    %v1651 = vld [vmem:[#allocation5 + $0x3058] sm:$0xff]
    %v1652 = vld [vmem:[#allocation5 + $0x3060] sm:$0xff]
    %v1653 = vld [vmem:[#allocation5 + $0x3068] sm:$0xff]
    %v1654 = vld [vmem:[#allocation5 + $0x3070] sm:$0xff]
    %v1655 = vld [vmem:[#allocation5 + $0x3078] sm:$0xff]
    %v1656 = vld [vmem:[#allocation5 + $0x3080] sm:$0xff]
    %v1657 = vld [vmem:[#allocation5 + $0x3088] sm:$0xff]
    %v1658 = vld [vmem:[#allocation5 + $0x3090] sm:$0xff]
    %v1659 = vld [vmem:[#allocation5 + $0x3098] sm:$0xff]
    %v1660 = vld [vmem:[#allocation5 + $0x30a0] sm:$0xff]
    %v1661 = vld [vmem:[#allocation5 + $0x30a8] sm:$0xff]
    %v1662 = vld [vmem:[#allocation5 + $0x30b0] sm:$0xff]
    %v1663 = vld [vmem:[#allocation5 + $0x30b8] sm:$0xff]
    %v1664 = vld [vmem:[#allocation5 + $0x30c0] sm:$0xff]
    %v1665 = vld [vmem:[#allocation5 + $0x30c8] sm:$0xff]
    %v1666 = vld [vmem:[#allocation5 + $0x30d0] sm:$0xff]
    %v1667 = vld [vmem:[#allocation5 + $0x30d8] sm:$0xff]
    %v1668 = vld [vmem:[#allocation5 + $0x30e0] sm:$0xff]
    %v1669 = vld [vmem:[#allocation5 + $0x30e8] sm:$0xff]
    %v1670 = vld [vmem:[#allocation5 + $0x30f0] sm:$0xff]
    %v1671 = vld [vmem:[#allocation5 + $0x30f8] sm:$0xff]
    %v1672 = vld [vmem:[#allocation5 + $0x3100] sm:$0xff]
    %v1673 = vld [vmem:[#allocation5 + $0x3108] sm:$0xff]
    %v1674 = vld [vmem:[#allocation5 + $0x3110] sm:$0xff]
    %v1675 = vld [vmem:[#allocation5 + $0x3118] sm:$0xff]
    %v1676 = vld [vmem:[#allocation5 + $0x3120] sm:$0xff]
    %v1677 = vld [vmem:[#allocation5 + $0x3128] sm:$0xff]
    %v1678 = vld [vmem:[#allocation5 + $0x3130] sm:$0xff]
    %v1679 = vld [vmem:[#allocation5 + $0x3138] sm:$0xff]
    %v1680 = vld [vmem:[#allocation5 + $0x3140] sm:$0xff]
    %v1681 = vld [vmem:[#allocation5 + $0x3148] sm:$0xff]
    %v1682 = vld [vmem:[#allocation5 + $0x3150] sm:$0xff]
    %v1683 = vld [vmem:[#allocation5 + $0x3158] sm:$0xff]
    %v1684 = vld [vmem:[#allocation5 + $0x3160] sm:$0xff]
    %v1685 = vld [vmem:[#allocation5 + $0x3168] sm:$0xff]
    %v1686 = vld [vmem:[#allocation5 + $0x3170] sm:$0xff]
    %v1687 = vld [vmem:[#allocation5 + $0x3178] sm:$0xff]
    %v1688 = vld [vmem:[#allocation5 + $0x3180] sm:$0xff]
    %v1689 = vld [vmem:[#allocation5 + $0x3188] sm:$0xff]
    %v1690 = vld [vmem:[#allocation5 + $0x3190] sm:$0xff]
    %v1691 = vld [vmem:[#allocation5 + $0x3198] sm:$0xff]
    %v1692 = vld [vmem:[#allocation5 + $0x31a0] sm:$0xff]
    %v1693 = vld [vmem:[#allocation5 + $0x31a8] sm:$0xff]
    %v1694 = vld [vmem:[#allocation5 + $0x31b0] sm:$0xff]
    %v1695 = vld [vmem:[#allocation5 + $0x31b8] sm:$0xff]
    %v1696 = vld [vmem:[#allocation5 + $0x31c0] sm:$0xff]
    %v1697 = vld [vmem:[#allocation5 + $0x31c8] sm:$0xff]
    %v1698 = vld [vmem:[#allocation5 + $0x31d0] sm:$0xff]
    %v1699 = vld [vmem:[#allocation5 + $0x31d8] sm:$0xff]
    %v1700 = vld [vmem:[#allocation5 + $0x31e0] sm:$0xff]
    %v1701 = vld [vmem:[#allocation5 + $0x31e8] sm:$0xff]
    %v1702 = vld [vmem:[#allocation5 + $0x31f0] sm:$0xff]
    %v1703 = vld [vmem:[#allocation5 + $0x31f8] sm:$0xff]
    %v1704 = vld [vmem:[#allocation5 + $0x3200] sm:$0xff]
    %v1705 = vld [vmem:[#allocation5 + $0x3208] sm:$0xff]
    %v1706 = vld [vmem:[#allocation5 + $0x3210] sm:$0xff]
    %v1707 = vld [vmem:[#allocation5 + $0x3218] sm:$0xff]
    %v1708 = vld [vmem:[#allocation5 + $0x3220] sm:$0xff]
    %v1709 = vld [vmem:[#allocation5 + $0x3228] sm:$0xff]
    %v1710 = vld [vmem:[#allocation5 + $0x3230] sm:$0xff]
    %v1711 = vld [vmem:[#allocation5 + $0x3238] sm:$0xff]
    %v1712 = vld [vmem:[#allocation5 + $0x3240] sm:$0xff]
    %v1713 = vld [vmem:[#allocation5 + $0x3248] sm:$0xff]
    %v1714 = vld [vmem:[#allocation5 + $0x3250] sm:$0xff]
    %v1715 = vld [vmem:[#allocation5 + $0x3258] sm:$0xff]
    %v1716 = vld [vmem:[#allocation5 + $0x3260] sm:$0xff]
    %v1717 = vld [vmem:[#allocation5 + $0x3268] sm:$0xff]
    %v1718 = vld [vmem:[#allocation5 + $0x3270] sm:$0xff]
    %v1719 = vld [vmem:[#allocation5 + $0x3278] sm:$0xff]
    %v1720 = vld [vmem:[#allocation5 + $0x3280] sm:$0xff]
    %v1721 = vld [vmem:[#allocation5 + $0x3288] sm:$0xff]
    %v1722 = vld [vmem:[#allocation5 + $0x3290] sm:$0xff]
    %v1723 = vld [vmem:[#allocation5 + $0x3298] sm:$0xff]
    %v1724 = vld [vmem:[#allocation5 + $0x32a0] sm:$0xff]
    %v1725 = vld [vmem:[#allocation5 + $0x32a8] sm:$0xff]
    %v1726 = vld [vmem:[#allocation5 + $0x32b0] sm:$0xff]
    %v1727 = vld [vmem:[#allocation5 + $0x32b8] sm:$0xff]
    %v1728 = vld [vmem:[#allocation5 + $0x32c0] sm:$0xff]
    %v1729 = vld [vmem:[#allocation5 + $0x32c8] sm:$0xff]
    %v1730 = vld [vmem:[#allocation5 + $0x32d0] sm:$0xff]
    %v1731 = vld [vmem:[#allocation5 + $0x32d8] sm:$0xff]
    %v1732 = vld [vmem:[#allocation5 + $0x32e0] sm:$0xff]
    %v1733 = vld [vmem:[#allocation5 + $0x32e8] sm:$0xff]
    %v1734 = vld [vmem:[#allocation5 + $0x32f0] sm:$0xff]
    %v1735 = vld [vmem:[#allocation5 + $0x32f8] sm:$0xff]
    %v1736 = vld [vmem:[#allocation5 + $0x3300] sm:$0xff]
    %v1737 = vld [vmem:[#allocation5 + $0x3308] sm:$0xff]
    %v1738 = vld [vmem:[#allocation5 + $0x3310] sm:$0xff]
    %v1739 = vld [vmem:[#allocation5 + $0x3318] sm:$0xff]
    %v1740 = vld [vmem:[#allocation5 + $0x3320] sm:$0xff]
    %v1741 = vld [vmem:[#allocation5 + $0x3328] sm:$0xff]
    %v1742 = vld [vmem:[#allocation5 + $0x3330] sm:$0xff]
    %v1743 = vld [vmem:[#allocation5 + $0x3338] sm:$0xff]
    %v1744 = vld [vmem:[#allocation5 + $0x3340] sm:$0xff]
    %v1745 = vld [vmem:[#allocation5 + $0x3348] sm:$0xff]
    %v1746 = vld [vmem:[#allocation5 + $0x3350] sm:$0xff]
    %v1747 = vld [vmem:[#allocation5 + $0x3358] sm:$0xff]
    %v1748 = vld [vmem:[#allocation5 + $0x3360] sm:$0xff]
    %v1749 = vld [vmem:[#allocation5 + $0x3368] sm:$0xff]
    %v1750 = vld [vmem:[#allocation5 + $0x3370] sm:$0xff]
    %v1751 = vld [vmem:[#allocation5 + $0x3378] sm:$0xff]
    %v1752 = vld [vmem:[#allocation5 + $0x3380] sm:$0xff]
    %v1753 = vld [vmem:[#allocation5 + $0x3388] sm:$0xff]
    %v1754 = vld [vmem:[#allocation5 + $0x3390] sm:$0xff]
    %v1755 = vld [vmem:[#allocation5 + $0x3398] sm:$0xff]
    %v1756 = vld [vmem:[#allocation5 + $0x33a0] sm:$0xff]
    %v1757 = vld [vmem:[#allocation5 + $0x33a8] sm:$0xff]
    %v1758 = vld [vmem:[#allocation5 + $0x33b0] sm:$0xff]
    %v1759 = vld [vmem:[#allocation5 + $0x33b8] sm:$0xff]
    %v1760 = vld [vmem:[#allocation5 + $0x33c0] sm:$0xff]
    %v1761 = vld [vmem:[#allocation5 + $0x33c8] sm:$0xff]
    %v1762 = vld [vmem:[#allocation5 + $0x33d0] sm:$0xff]
    %v1763 = vld [vmem:[#allocation5 + $0x33d8] sm:$0xff]
    %v1764 = vld [vmem:[#allocation5 + $0x33e0] sm:$0xff]
    %v1765 = vld [vmem:[#allocation5 + $0x33e8] sm:$0xff]
    %v1766 = vld [vmem:[#allocation5 + $0x33f0] sm:$0xff]
    %v1767 = vld [vmem:[#allocation5 + $0x33f8] sm:$0xff]
    %v1768 = vld [vmem:[#allocation5 + $0x3400] sm:$0xff]
    %v1769 = vld [vmem:[#allocation5 + $0x3408] sm:$0xff]
    %v1770 = vld [vmem:[#allocation5 + $0x3410] sm:$0xff]
    %v1771 = vld [vmem:[#allocation5 + $0x3418] sm:$0xff]
    %v1772 = vld [vmem:[#allocation5 + $0x3420] sm:$0xff]
    %v1773 = vld [vmem:[#allocation5 + $0x3428] sm:$0xff]
    %v1774 = vld [vmem:[#allocation5 + $0x3430] sm:$0xff]
    %v1775 = vld [vmem:[#allocation5 + $0x3438] sm:$0xff]
    %v1776 = vld [vmem:[#allocation5 + $0x3440] sm:$0xff]
    %v1777 = vld [vmem:[#allocation5 + $0x3448] sm:$0xff]
    %v1778 = vld [vmem:[#allocation5 + $0x3450] sm:$0xff]
    %v1779 = vld [vmem:[#allocation5 + $0x3458] sm:$0xff]
    %v1780 = vld [vmem:[#allocation5 + $0x3460] sm:$0xff]
    %v1781 = vld [vmem:[#allocation5 + $0x3468] sm:$0xff]
    %v1782 = vld [vmem:[#allocation5 + $0x3470] sm:$0xff]
    %v1783 = vld [vmem:[#allocation5 + $0x3478] sm:$0xff]
    %v1784 = vld [vmem:[#allocation5 + $0x3480] sm:$0xff]
    %v1785 = vld [vmem:[#allocation5 + $0x3488] sm:$0xff]
    %v1786 = vld [vmem:[#allocation5 + $0x3490] sm:$0xff]
    %v1787 = vld [vmem:[#allocation5 + $0x3498] sm:$0xff]
    %v1788 = vld [vmem:[#allocation5 + $0x34a0] sm:$0xff]
    %v1789 = vld [vmem:[#allocation5 + $0x34a8] sm:$0xff]
    %v1790 = vld [vmem:[#allocation5 + $0x34b0] sm:$0xff]
    %v1791 = vld [vmem:[#allocation5 + $0x34b8] sm:$0xff]
    %v1792 = vld [vmem:[#allocation5 + $0x34c0] sm:$0xff]
    %v1793 = vld [vmem:[#allocation5 + $0x34c8] sm:$0xff]
    %v1794 = vld [vmem:[#allocation5 + $0x34d0] sm:$0xff]
    %v1795 = vld [vmem:[#allocation5 + $0x34d8] sm:$0xff]
    %v1796 = vld [vmem:[#allocation5 + $0x34e0] sm:$0xff]
    %v1797 = vld [vmem:[#allocation5 + $0x34e8] sm:$0xff]
    %v1798 = vld [vmem:[#allocation5 + $0x34f0] sm:$0xff]
    %v1799 = vld [vmem:[#allocation5 + $0x34f8] sm:$0xff]
    %v1800 = vld [vmem:[#allocation5 + $0x3500] sm:$0xff]
    %v1801 = vld [vmem:[#allocation5 + $0x3508] sm:$0xff]
    %v1802 = vld [vmem:[#allocation5 + $0x3510] sm:$0xff]
    %v1803 = vld [vmem:[#allocation5 + $0x3518] sm:$0xff]
    %v1804 = vld [vmem:[#allocation5 + $0x3520] sm:$0xff]
    %v1805 = vld [vmem:[#allocation5 + $0x3528] sm:$0xff]
    %v1806 = vld [vmem:[#allocation5 + $0x3530] sm:$0xff]
    %v1807 = vld [vmem:[#allocation5 + $0x3538] sm:$0xff]
    %v1808 = vld [vmem:[#allocation5 + $0x3540] sm:$0xff]
    %v1809 = vld [vmem:[#allocation5 + $0x3548] sm:$0xff]
    %v1810 = vld [vmem:[#allocation5 + $0x3550] sm:$0xff]
    %v1811 = vld [vmem:[#allocation5 + $0x3558] sm:$0xff]
    %v1812 = vld [vmem:[#allocation5 + $0x3560] sm:$0xff]
    %v1813 = vld [vmem:[#allocation5 + $0x3568] sm:$0xff]
    %v1814 = vld [vmem:[#allocation5 + $0x3570] sm:$0xff]
    %v1815 = vld [vmem:[#allocation5 + $0x3578] sm:$0xff]
    %v1816 = vld [vmem:[#allocation5 + $0x3580] sm:$0xff]
    %v1817 = vld [vmem:[#allocation5 + $0x3588] sm:$0xff]
    %v1818 = vld [vmem:[#allocation5 + $0x3590] sm:$0xff]
    %v1819 = vld [vmem:[#allocation5 + $0x3598] sm:$0xff]
    %v1820 = vld [vmem:[#allocation5 + $0x35a0] sm:$0xff]
    %v1821 = vld [vmem:[#allocation5 + $0x35a8] sm:$0xff]
    %v1822 = vld [vmem:[#allocation5 + $0x35b0] sm:$0xff]
    %v1823 = vld [vmem:[#allocation5 + $0x35b8] sm:$0xff]
    %v1824 = vld [vmem:[#allocation5 + $0x35c0] sm:$0xff]
    %v1825 = vld [vmem:[#allocation5 + $0x35c8] sm:$0xff]
    %v1826 = vld [vmem:[#allocation5 + $0x35d0] sm:$0xff]
    %v1827 = vld [vmem:[#allocation5 + $0x35d8] sm:$0xff]
    %v1828 = vld [vmem:[#allocation5 + $0x35e0] sm:$0xff]
    %v1829 = vld [vmem:[#allocation5 + $0x35e8] sm:$0xff]
    %v1830 = vld [vmem:[#allocation5 + $0x35f0] sm:$0xff]
    %v1831 = vld [vmem:[#allocation5 + $0x35f8] sm:$0xff]
    %v1832 = vld [vmem:[#allocation5 + $0x3600] sm:$0xff]
    %v1833 = vld [vmem:[#allocation5 + $0x3608] sm:$0xff]
    %v1834 = vld [vmem:[#allocation5 + $0x3610] sm:$0xff]
    %v1835 = vld [vmem:[#allocation5 + $0x3618] sm:$0xff]
    %v1836 = vld [vmem:[#allocation5 + $0x3620] sm:$0xff]
    %v1837 = vld [vmem:[#allocation5 + $0x3628] sm:$0xff]
    %v1838 = vld [vmem:[#allocation5 + $0x3630] sm:$0xff]
    %v1839 = vld [vmem:[#allocation5 + $0x3638] sm:$0xff]
    %v1840 = vld [vmem:[#allocation5 + $0x3640] sm:$0xff]
    %v1841 = vld [vmem:[#allocation5 + $0x3648] sm:$0xff]
    %v1842 = vld [vmem:[#allocation5 + $0x3650] sm:$0xff]
    %v1843 = vld [vmem:[#allocation5 + $0x3658] sm:$0xff]
    %v1844 = vld [vmem:[#allocation5 + $0x3660] sm:$0xff]
    %v1845 = vld [vmem:[#allocation5 + $0x3668] sm:$0xff]
    %v1846 = vld [vmem:[#allocation5 + $0x3670] sm:$0xff]
    %v1847 = vld [vmem:[#allocation5 + $0x3678] sm:$0xff]
    %v1848 = vld [vmem:[#allocation5 + $0x3680] sm:$0xff]
    %v1849 = vld [vmem:[#allocation5 + $0x3688] sm:$0xff]
    %v1850 = vld [vmem:[#allocation5 + $0x3690] sm:$0xff]
    %v1851 = vld [vmem:[#allocation5 + $0x3698] sm:$0xff]
    %v1852 = vld [vmem:[#allocation5 + $0x36a0] sm:$0xff]
    %v1853 = vld [vmem:[#allocation5 + $0x36a8] sm:$0xff]
    %v1854 = vld [vmem:[#allocation5 + $0x36b0] sm:$0xff]
    %v1855 = vld [vmem:[#allocation5 + $0x36b8] sm:$0xff]
    %v1856 = vld [vmem:[#allocation5 + $0x36c0] sm:$0xff]
    %v1857 = vld [vmem:[#allocation5 + $0x36c8] sm:$0xff]
    %v1858 = vld [vmem:[#allocation5 + $0x36d0] sm:$0xff]
    %v1859 = vld [vmem:[#allocation5 + $0x36d8] sm:$0xff]
    %v1860 = vld [vmem:[#allocation5 + $0x36e0] sm:$0xff]
    %v1861 = vld [vmem:[#allocation5 + $0x36e8] sm:$0xff]
    %v1862 = vld [vmem:[#allocation5 + $0x36f0] sm:$0xff]
    %v1863 = vld [vmem:[#allocation5 + $0x36f8] sm:$0xff]
    %v1864 = vld [vmem:[#allocation5 + $0x3700] sm:$0xff]
    %v1865 = vld [vmem:[#allocation5 + $0x3708] sm:$0xff]
    %v1866 = vld [vmem:[#allocation5 + $0x3710] sm:$0xff]
    %v1867 = vld [vmem:[#allocation5 + $0x3718] sm:$0xff]
    %v1868 = vld [vmem:[#allocation5 + $0x3720] sm:$0xff]
    %v1869 = vld [vmem:[#allocation5 + $0x3728] sm:$0xff]
    %v1870 = vld [vmem:[#allocation5 + $0x3730] sm:$0xff]
    %v1871 = vld [vmem:[#allocation5 + $0x3738] sm:$0xff]
    %v1872 = vld [vmem:[#allocation5 + $0x3740] sm:$0xff]
    %v1873 = vld [vmem:[#allocation5 + $0x3748] sm:$0xff]
    %v1874 = vld [vmem:[#allocation5 + $0x3750] sm:$0xff]
    %v1875 = vld [vmem:[#allocation5 + $0x3758] sm:$0xff]
    %v1876 = vld [vmem:[#allocation5 + $0x3760] sm:$0xff]
    %v1877 = vld [vmem:[#allocation5 + $0x3768] sm:$0xff]
    %v1878 = vld [vmem:[#allocation5 + $0x3770] sm:$0xff]
    %v1879 = vld [vmem:[#allocation5 + $0x3778] sm:$0xff]
    %v1880 = vld [vmem:[#allocation5 + $0x3780] sm:$0xff]
    %v1881 = vld [vmem:[#allocation5 + $0x3788] sm:$0xff]
    %v1882 = vld [vmem:[#allocation5 + $0x3790] sm:$0xff]
    %v1883 = vld [vmem:[#allocation5 + $0x3798] sm:$0xff]
    %v1884 = vld [vmem:[#allocation5 + $0x37a0] sm:$0xff]
    %v1885 = vld [vmem:[#allocation5 + $0x37a8] sm:$0xff]
    %v1886 = vld [vmem:[#allocation5 + $0x37b0] sm:$0xff]
    %v1887 = vld [vmem:[#allocation5 + $0x37b8] sm:$0xff]
    %v1888 = vld [vmem:[#allocation5 + $0x37c0] sm:$0xff]
    %v1889 = vld [vmem:[#allocation5 + $0x37c8] sm:$0xff]
    %v1890 = vld [vmem:[#allocation5 + $0x37d0] sm:$0xff]
    %v1891 = vld [vmem:[#allocation5 + $0x37d8] sm:$0xff]
    %v1892 = vld [vmem:[#allocation5 + $0x37e0] sm:$0xff]
    %v1893 = vld [vmem:[#allocation5 + $0x37e8] sm:$0xff]
    %v1894 = vld [vmem:[#allocation5 + $0x37f0] sm:$0xff]
    %v1895 = vld [vmem:[#allocation5 + $0x37f8] sm:$0xff]
    %v1896 = vld [vmem:[#allocation5 + $0x3800] sm:$0xff]
    %v1897 = vld [vmem:[#allocation5 + $0x3808] sm:$0xff]
    %v1898 = vld [vmem:[#allocation5 + $0x3810] sm:$0xff]
    %v1899 = vld [vmem:[#allocation5 + $0x3818] sm:$0xff]
    %v1900 = vld [vmem:[#allocation5 + $0x3820] sm:$0xff]
    %v1901 = vld [vmem:[#allocation5 + $0x3828] sm:$0xff]
    %v1902 = vld [vmem:[#allocation5 + $0x3830] sm:$0xff]
    %v1903 = vld [vmem:[#allocation5 + $0x3838] sm:$0xff]
    %v1904 = vld [vmem:[#allocation5 + $0x3840] sm:$0xff]
    %v1905 = vld [vmem:[#allocation5 + $0x3848] sm:$0xff]
    %v1906 = vld [vmem:[#allocation5 + $0x3850] sm:$0xff]
    %v1907 = vld [vmem:[#allocation5 + $0x3858] sm:$0xff]
    %v1908 = vld [vmem:[#allocation5 + $0x3860] sm:$0xff]
    %v1909 = vld [vmem:[#allocation5 + $0x3868] sm:$0xff]
    %v1910 = vld [vmem:[#allocation5 + $0x3870] sm:$0xff]
    %v1911 = vld [vmem:[#allocation5 + $0x3878] sm:$0xff]
    %v1912 = vld [vmem:[#allocation5 + $0x3880] sm:$0xff]
    %v1913 = vld [vmem:[#allocation5 + $0x3888] sm:$0xff]
    %v1914 = vld [vmem:[#allocation5 + $0x3890] sm:$0xff]
    %v1915 = vld [vmem:[#allocation5 + $0x3898] sm:$0xff]
    %v1916 = vld [vmem:[#allocation5 + $0x38a0] sm:$0xff]
    %v1917 = vld [vmem:[#allocation5 + $0x38a8] sm:$0xff]
    %v1918 = vld [vmem:[#allocation5 + $0x38b0] sm:$0xff]
    %v1919 = vld [vmem:[#allocation5 + $0x38b8] sm:$0xff]
    %v1920 = vld [vmem:[#allocation5 + $0x38c0] sm:$0xff]
    %v1921 = vld [vmem:[#allocation5 + $0x38c8] sm:$0xff]
    %v1922 = vld [vmem:[#allocation5 + $0x38d0] sm:$0xff]
    %v1923 = vld [vmem:[#allocation5 + $0x38d8] sm:$0xff]
    %v1924 = vld [vmem:[#allocation5 + $0x38e0] sm:$0xff]
    %v1925 = vld [vmem:[#allocation5 + $0x38e8] sm:$0xff]
    %v1926 = vld [vmem:[#allocation5 + $0x38f0] sm:$0xff]
    %v1927 = vld [vmem:[#allocation5 + $0x38f8] sm:$0xff]
    %v1928 = vld [vmem:[#allocation5 + $0x3900] sm:$0xff]
    %v1929 = vld [vmem:[#allocation5 + $0x3908] sm:$0xff]
    %v1930 = vld [vmem:[#allocation5 + $0x3910] sm:$0xff]
    %v1931 = vld [vmem:[#allocation5 + $0x3918] sm:$0xff]
    %v1932 = vld [vmem:[#allocation5 + $0x3920] sm:$0xff]
    %v1933 = vld [vmem:[#allocation5 + $0x3928] sm:$0xff]
    %v1934 = vld [vmem:[#allocation5 + $0x3930] sm:$0xff]
    %v1935 = vld [vmem:[#allocation5 + $0x3938] sm:$0xff]
    %v1936 = vld [vmem:[#allocation5 + $0x3940] sm:$0xff]
    %v1937 = vld [vmem:[#allocation5 + $0x3948] sm:$0xff]
    %v1938 = vld [vmem:[#allocation5 + $0x3950] sm:$0xff]
    %v1939 = vld [vmem:[#allocation5 + $0x3958] sm:$0xff]
    %v1940 = vld [vmem:[#allocation5 + $0x3960] sm:$0xff]
    %v1941 = vld [vmem:[#allocation5 + $0x3968] sm:$0xff]
    %v1942 = vld [vmem:[#allocation5 + $0x3970] sm:$0xff]
    %v1943 = vld [vmem:[#allocation5 + $0x3978] sm:$0xff]
    %v1944 = vld [vmem:[#allocation5 + $0x3980] sm:$0xff]
    %v1945 = vld [vmem:[#allocation5 + $0x3988] sm:$0xff]
    %v1946 = vld [vmem:[#allocation5 + $0x3990] sm:$0xff]
    %v1947 = vld [vmem:[#allocation5 + $0x3998] sm:$0xff]
    %v1948 = vld [vmem:[#allocation5 + $0x39a0] sm:$0xff]
    %v1949 = vld [vmem:[#allocation5 + $0x39a8] sm:$0xff]
    %v1950 = vld [vmem:[#allocation5 + $0x39b0] sm:$0xff]
    %v1951 = vld [vmem:[#allocation5 + $0x39b8] sm:$0xff]
    %v1952 = vld [vmem:[#allocation5 + $0x39c0] sm:$0xff]
    %v1953 = vld [vmem:[#allocation5 + $0x39c8] sm:$0xff]
    %v1954 = vld [vmem:[#allocation5 + $0x39d0] sm:$0xff]
    %v1955 = vld [vmem:[#allocation5 + $0x39d8] sm:$0xff]
    %v1956 = vld [vmem:[#allocation5 + $0x39e0] sm:$0xff]
    %v1957 = vld [vmem:[#allocation5 + $0x39e8] sm:$0xff]
    %v1958 = vld [vmem:[#allocation5 + $0x39f0] sm:$0xff]
    %v1959 = vld [vmem:[#allocation5 + $0x39f8] sm:$0xff]
    %v1960 = vld [vmem:[#allocation5 + $0x3a00] sm:$0xff]
    %v1961 = vld [vmem:[#allocation5 + $0x3a08] sm:$0xff]
    %v1962 = vld [vmem:[#allocation5 + $0x3a10] sm:$0xff]
    %v1963 = vld [vmem:[#allocation5 + $0x3a18] sm:$0xff]
    %v1964 = vld [vmem:[#allocation5 + $0x3a20] sm:$0xff]
    %v1965 = vld [vmem:[#allocation5 + $0x3a28] sm:$0xff]
    %v1966 = vld [vmem:[#allocation5 + $0x3a30] sm:$0xff]
    %v1967 = vld [vmem:[#allocation5 + $0x3a38] sm:$0xff]
    %v1968 = vld [vmem:[#allocation5 + $0x3a40] sm:$0xff]
    %v1969 = vld [vmem:[#allocation5 + $0x3a48] sm:$0xff]
    %v1970 = vld [vmem:[#allocation5 + $0x3a50] sm:$0xff]
    %v1971 = vld [vmem:[#allocation5 + $0x3a58] sm:$0xff]
    %v1972 = vld [vmem:[#allocation5 + $0x3a60] sm:$0xff]
    %v1973 = vld [vmem:[#allocation5 + $0x3a68] sm:$0xff]
    %v1974 = vld [vmem:[#allocation5 + $0x3a70] sm:$0xff]
    %v1975 = vld [vmem:[#allocation5 + $0x3a78] sm:$0xff]
    %v1976 = vld [vmem:[#allocation5 + $0x3a80] sm:$0xff]
    %v1977 = vld [vmem:[#allocation5 + $0x3a88] sm:$0xff]
    %v1978 = vld [vmem:[#allocation5 + $0x3a90] sm:$0xff]
    %v1979 = vld [vmem:[#allocation5 + $0x3a98] sm:$0xff]
    %v1980 = vld [vmem:[#allocation5 + $0x3aa0] sm:$0xff]
    %v1981 = vld [vmem:[#allocation5 + $0x3aa8] sm:$0xff]
    %v1982 = vld [vmem:[#allocation5 + $0x3ab0] sm:$0xff]
    %v1983 = vld [vmem:[#allocation5 + $0x3ab8] sm:$0xff]
    %v1984 = vld [vmem:[#allocation5 + $0x3ac0] sm:$0xff]
    %v1985 = vld [vmem:[#allocation5 + $0x3ac8] sm:$0xff]
    %v1986 = vld [vmem:[#allocation5 + $0x3ad0] sm:$0xff]
    %v1987 = vld [vmem:[#allocation5 + $0x3ad8] sm:$0xff]
    %v1988 = vld [vmem:[#allocation5 + $0x3ae0] sm:$0xff]
    %v1989 = vld [vmem:[#allocation5 + $0x3ae8] sm:$0xff]
    %v1990 = vld [vmem:[#allocation5 + $0x3af0] sm:$0xff]
    %v1991 = vld [vmem:[#allocation5 + $0x3af8] sm:$0xff]
    %v1992 = vld [vmem:[#allocation5 + $0x3b00] sm:$0xff]
    %v1993 = vld [vmem:[#allocation5 + $0x3b08] sm:$0xff]
    %v1994 = vld [vmem:[#allocation5 + $0x3b10] sm:$0xff]
    %v1995 = vld [vmem:[#allocation5 + $0x3b18] sm:$0xff]
    %v1996 = vld [vmem:[#allocation5 + $0x3b20] sm:$0xff]
    %v1997 = vld [vmem:[#allocation5 + $0x3b28] sm:$0xff]
    %v1998 = vld [vmem:[#allocation5 + $0x3b30] sm:$0xff]
    %v1999 = vld [vmem:[#allocation5 + $0x3b38] sm:$0xff]
    %v2000 = vld [vmem:[#allocation5 + $0x3b40] sm:$0xff]
    %v2001 = vld [vmem:[#allocation5 + $0x3b48] sm:$0xff]
    %v2002 = vld [vmem:[#allocation5 + $0x3b50] sm:$0xff]
    %v2003 = vld [vmem:[#allocation5 + $0x3b58] sm:$0xff]
    %v2004 = vld [vmem:[#allocation5 + $0x3b60] sm:$0xff]
    %v2005 = vld [vmem:[#allocation5 + $0x3b68] sm:$0xff]
    %v2006 = vld [vmem:[#allocation5 + $0x3b70] sm:$0xff]
    %v2007 = vld [vmem:[#allocation5 + $0x3b78] sm:$0xff]
    %v2008 = vld [vmem:[#allocation5 + $0x3b80] sm:$0xff]
    %v2009 = vld [vmem:[#allocation5 + $0x3b88] sm:$0xff]
    %v2010 = vld [vmem:[#allocation5 + $0x3b90] sm:$0xff]
    %v2011 = vld [vmem:[#allocation5 + $0x3b98] sm:$0xff]
    %v2012 = vld [vmem:[#allocation5 + $0x3ba0] sm:$0xff]
    %v2013 = vld [vmem:[#allocation5 + $0x3ba8] sm:$0xff]
    %v2014 = vld [vmem:[#allocation5 + $0x3bb0] sm:$0xff]
    %v2015 = vld [vmem:[#allocation5 + $0x3bb8] sm:$0xff]
    %v2016 = vld [vmem:[#allocation5 + $0x3bc0] sm:$0xff]
    %v2017 = vld [vmem:[#allocation5 + $0x3bc8] sm:$0xff]
    %v2018 = vld [vmem:[#allocation5 + $0x3bd0] sm:$0xff]
    %v2019 = vld [vmem:[#allocation5 + $0x3bd8] sm:$0xff]
    %v2020 = vld [vmem:[#allocation5 + $0x3be0] sm:$0xff]
    %v2021 = vld [vmem:[#allocation5 + $0x3be8] sm:$0xff]
    %v2022 = vld [vmem:[#allocation5 + $0x3bf0] sm:$0xff]
    %v2023 = vld [vmem:[#allocation5 + $0x3bf8] sm:$0xff]
    %v2024 = vld [vmem:[#allocation5 + $0x3c00] sm:$0xff]
    %v2025 = vld [vmem:[#allocation5 + $0x3c08] sm:$0xff]
    %v2026 = vld [vmem:[#allocation5 + $0x3c10] sm:$0xff]
    %v2027 = vld [vmem:[#allocation5 + $0x3c18] sm:$0xff]
    %v2028 = vld [vmem:[#allocation5 + $0x3c20] sm:$0xff]
    %v2029 = vld [vmem:[#allocation5 + $0x3c28] sm:$0xff]
    %v2030 = vld [vmem:[#allocation5 + $0x3c30] sm:$0xff]
    %v2031 = vld [vmem:[#allocation5 + $0x3c38] sm:$0xff]
    %v2032 = vld [vmem:[#allocation5 + $0x3c40] sm:$0xff]
    %v2033 = vld [vmem:[#allocation5 + $0x3c48] sm:$0xff]
    %v2034 = vld [vmem:[#allocation5 + $0x3c50] sm:$0xff]
    %v2035 = vld [vmem:[#allocation5 + $0x3c58] sm:$0xff]
    %v2036 = vld [vmem:[#allocation5 + $0x3c60] sm:$0xff]
    %v2037 = vld [vmem:[#allocation5 + $0x3c68] sm:$0xff]
    %v2038 = vld [vmem:[#allocation5 + $0x3c70] sm:$0xff]
    %v2039 = vld [vmem:[#allocation5 + $0x3c78] sm:$0xff]
    %v2040 = vld [vmem:[#allocation5 + $0x3c80] sm:$0xff]
    %v2041 = vld [vmem:[#allocation5 + $0x3c88] sm:$0xff]
    %v2042 = vld [vmem:[#allocation5 + $0x3c90] sm:$0xff]
    %v2043 = vld [vmem:[#allocation5 + $0x3c98] sm:$0xff]
    %v2044 = vld [vmem:[#allocation5 + $0x3ca0] sm:$0xff]
    %v2045 = vld [vmem:[#allocation5 + $0x3ca8] sm:$0xff]
    %v2046 = vld [vmem:[#allocation5 + $0x3cb0] sm:$0xff]
    %v2047 = vld [vmem:[#allocation5 + $0x3cb8] sm:$0xff]
    %v2048 = vld [vmem:[#allocation5 + $0x3cc0] sm:$0xff]
    %v2049 = vld [vmem:[#allocation5 + $0x3cc8] sm:$0xff]
    %v2050 = vld [vmem:[#allocation5 + $0x3cd0] sm:$0xff]
    %v2051 = vld [vmem:[#allocation5 + $0x3cd8] sm:$0xff]
    %v2052 = vld [vmem:[#allocation5 + $0x3ce0] sm:$0xff]
    %v2053 = vld [vmem:[#allocation5 + $0x3ce8] sm:$0xff]
    %v2054 = vld [vmem:[#allocation5 + $0x3cf0] sm:$0xff]
    %v2055 = vld [vmem:[#allocation5 + $0x3cf8] sm:$0xff]
    %v2056 = vld [vmem:[#allocation5 + $0x3d00] sm:$0xff]
    %v2057 = vld [vmem:[#allocation5 + $0x3d08] sm:$0xff]
    %v2058 = vld [vmem:[#allocation5 + $0x3d10] sm:$0xff]
    %v2059 = vld [vmem:[#allocation5 + $0x3d18] sm:$0xff]
    %v2060 = vld [vmem:[#allocation5 + $0x3d20] sm:$0xff]
    %v2061 = vld [vmem:[#allocation5 + $0x3d28] sm:$0xff]
    %v2062 = vld [vmem:[#allocation5 + $0x3d30] sm:$0xff]
    %v2063 = vld [vmem:[#allocation5 + $0x3d38] sm:$0xff]
    %v2064 = vld [vmem:[#allocation5 + $0x3d40] sm:$0xff]
    %v2065 = vld [vmem:[#allocation5 + $0x3d48] sm:$0xff]
    %v2066 = vld [vmem:[#allocation5 + $0x3d50] sm:$0xff]
    %v2067 = vld [vmem:[#allocation5 + $0x3d58] sm:$0xff]
    %v2068 = vld [vmem:[#allocation5 + $0x3d60] sm:$0xff]
    %v2069 = vld [vmem:[#allocation5 + $0x3d68] sm:$0xff]
    %v2070 = vld [vmem:[#allocation5 + $0x3d70] sm:$0xff]
    %v2071 = vld [vmem:[#allocation5 + $0x3d78] sm:$0xff]
    %v2072 = vld [vmem:[#allocation5 + $0x3d80] sm:$0xff]
    %v2073 = vld [vmem:[#allocation5 + $0x3d88] sm:$0xff]
    %v2074 = vld [vmem:[#allocation5 + $0x3d90] sm:$0xff]
    %v2075 = vld [vmem:[#allocation5 + $0x3d98] sm:$0xff]
    %v2076 = vld [vmem:[#allocation5 + $0x3da0] sm:$0xff]
    %v2077 = vld [vmem:[#allocation5 + $0x3da8] sm:$0xff]
    %v2078 = vld [vmem:[#allocation5 + $0x3db0] sm:$0xff]
    %v2079 = vld [vmem:[#allocation5 + $0x3db8] sm:$0xff]
    %v2080 = vld [vmem:[#allocation5 + $0x3dc0] sm:$0xff]
    %v2081 = vld [vmem:[#allocation5 + $0x3dc8] sm:$0xff]
    %v2082 = vld [vmem:[#allocation5 + $0x3dd0] sm:$0xff]
    %v2083 = vld [vmem:[#allocation5 + $0x3dd8] sm:$0xff]
    %v2084 = vld [vmem:[#allocation5 + $0x3de0] sm:$0xff]
    %v2085 = vld [vmem:[#allocation5 + $0x3de8] sm:$0xff]
    %v2086 = vld [vmem:[#allocation5 + $0x3df0] sm:$0xff]
    %v2087 = vld [vmem:[#allocation5 + $0x3df8] sm:$0xff]
    %v2088 = vld [vmem:[#allocation5 + $0x3e00] sm:$0xff]
    %v2089 = vld [vmem:[#allocation5 + $0x3e08] sm:$0xff]
    %v2090 = vld [vmem:[#allocation5 + $0x3e10] sm:$0xff]
    %v2091 = vld [vmem:[#allocation5 + $0x3e18] sm:$0xff]
    %v2092 = vld [vmem:[#allocation5 + $0x3e20] sm:$0xff]
    %v2093 = vld [vmem:[#allocation5 + $0x3e28] sm:$0xff]
    %v2094 = vld [vmem:[#allocation5 + $0x3e30] sm:$0xff]
    %v2095 = vld [vmem:[#allocation5 + $0x3e38] sm:$0xff]
    %v2096 = vld [vmem:[#allocation5 + $0x3e40] sm:$0xff]
    %v2097 = vld [vmem:[#allocation5 + $0x3e48] sm:$0xff]
    %v2098 = vld [vmem:[#allocation5 + $0x3e50] sm:$0xff]
    %v2099 = vld [vmem:[#allocation5 + $0x3e58] sm:$0xff]
    %v2100 = vld [vmem:[#allocation5 + $0x3e60] sm:$0xff]
    %v2101 = vld [vmem:[#allocation5 + $0x3e68] sm:$0xff]
    %v2102 = vld [vmem:[#allocation5 + $0x3e70] sm:$0xff]
    %v2103 = vld [vmem:[#allocation5 + $0x3e78] sm:$0xff]
    %v2104 = vld [vmem:[#allocation5 + $0x3e80] sm:$0xff]
    %v2105 = vld [vmem:[#allocation5 + $0x3e88] sm:$0xff]
    %v2106 = vld [vmem:[#allocation5 + $0x3e90] sm:$0xff]
    %v2107 = vld [vmem:[#allocation5 + $0x3e98] sm:$0xff]
    %v2108 = vld [vmem:[#allocation5 + $0x3ea0] sm:$0xff]
    %v2109 = vld [vmem:[#allocation5 + $0x3ea8] sm:$0xff]
    %v2110 = vld [vmem:[#allocation5 + $0x3eb0] sm:$0xff]
    %v2111 = vld [vmem:[#allocation5 + $0x3eb8] sm:$0xff]
    %v2112 = vld [vmem:[#allocation5 + $0x3ec0] sm:$0xff]
    %v2113 = vld [vmem:[#allocation5 + $0x3ec8] sm:$0xff]
    %v2114 = vld [vmem:[#allocation5 + $0x3ed0] sm:$0xff]
    %v2115 = vld [vmem:[#allocation5 + $0x3ed8] sm:$0xff]
    %v2116 = vld [vmem:[#allocation5 + $0x3ee0] sm:$0xff]
    %v2117 = vld [vmem:[#allocation5 + $0x3ee8] sm:$0xff]
    %v2118 = vld [vmem:[#allocation5 + $0x3ef0] sm:$0xff]
    %v2119 = vld [vmem:[#allocation5 + $0x3ef8] sm:$0xff]
    %v2120 = vld [vmem:[#allocation5 + $0x3f00] sm:$0xff]
    %v2121 = vld [vmem:[#allocation5 + $0x3f08] sm:$0xff]
    %v2122 = vld [vmem:[#allocation5 + $0x3f10] sm:$0xff]
    %v2123 = vld [vmem:[#allocation5 + $0x3f18] sm:$0xff]
    %v2124 = vld [vmem:[#allocation5 + $0x3f20] sm:$0xff]
    %v2125 = vld [vmem:[#allocation5 + $0x3f28] sm:$0xff]
    %v2126 = vld [vmem:[#allocation5 + $0x3f30] sm:$0xff]
    %v2127 = vld [vmem:[#allocation5 + $0x3f38] sm:$0xff]
    %v2128 = vld [vmem:[#allocation5 + $0x3f40] sm:$0xff]
    %v2129 = vld [vmem:[#allocation5 + $0x3f48] sm:$0xff]
    %v2130 = vld [vmem:[#allocation5 + $0x3f50] sm:$0xff]
    %v2131 = vld [vmem:[#allocation5 + $0x3f58] sm:$0xff]
    %v2132 = vld [vmem:[#allocation5 + $0x3f60] sm:$0xff]
    %v2133 = vld [vmem:[#allocation5 + $0x3f68] sm:$0xff]
    %v2134 = vld [vmem:[#allocation5 + $0x3f70] sm:$0xff]
    %v2135 = vld [vmem:[#allocation5 + $0x3f78] sm:$0xff]
    %v2136 = vld [vmem:[#allocation5 + $0x3f80] sm:$0xff]
    %v2137 = vld [vmem:[#allocation5 + $0x3f88] sm:$0xff]
    %v2138 = vld [vmem:[#allocation5 + $0x3f90] sm:$0xff]
    %v2139 = vld [vmem:[#allocation5 + $0x3f98] sm:$0xff]
    %v2140 = vld [vmem:[#allocation5 + $0x3fa0] sm:$0xff]
    %v2141 = vld [vmem:[#allocation5 + $0x3fa8] sm:$0xff]
    %v2142 = vld [vmem:[#allocation5 + $0x3fb0] sm:$0xff]
    %v2143 = vld [vmem:[#allocation5 + $0x3fb8] sm:$0xff]
    %v2144 = vld [vmem:[#allocation5 + $0x3fc0] sm:$0xff]
    %v2145 = vld [vmem:[#allocation5 + $0x3fc8] sm:$0xff]
    %v2146 = vld [vmem:[#allocation5 + $0x3fd0] sm:$0xff]
    %v2147 = vld [vmem:[#allocation5 + $0x3fd8] sm:$0xff]
    %v2148 = vld [vmem:[#allocation5 + $0x3fe0] sm:$0xff]
    %v2149 = vld [vmem:[#allocation5 + $0x3fe8] sm:$0xff]
    %v2150 = vld [vmem:[#allocation5 + $0x3ff0] sm:$0xff]
    %v2151 = vld [vmem:[#allocation5 + $0x3ff8] sm:$0xff]
    %2160 = vst [vmem:[#allocation1] ss:$4 sm:$0xff] %v96
    %s2161 = scalar_lea.vmem [#allocation1], 32
    %2162 = vst [vmem:[%s2161] ss:$4 sm:$0xff] %v97
    %v2163 = vld.sshfl [vmem:[#allocation1] sm:$0xff pattern:$0x73625140]
    %v2164 = vld.sshfl [vmem:[#allocation1 + $0x8] sm:$0xff pattern:$0x73625140]
    %v2165 = vld.sshfl [vmem:[#allocation1 + $0x10] sm:$0xff pattern:$0x73625140]
    %v2166 = vld.sshfl [vmem:[#allocation1 + $0x18] sm:$0xff pattern:$0x73625140]
    %v2167 = vld.sshfl [vmem:[#allocation1 + $0x20] sm:$0xff pattern:$0x73625140]
    %v2168 = vld.sshfl [vmem:[#allocation1 + $0x28] sm:$0xff pattern:$0x73625140]
    %v2169 = vld.sshfl [vmem:[#allocation1 + $0x30] sm:$0xff pattern:$0x73625140]
    %v2170 = vld.sshfl [vmem:[#allocation1 + $0x38] sm:$0xff pattern:$0x73625140]
    %2171 = vst [vmem:[#allocation1] ss:$4 sm:$0xff] %v98
    %2172 = vst [vmem:[%s2161] ss:$4 sm:$0xff] %v99
    %v2173 = vld.sshfl [vmem:[#allocation1] sm:$0xff pattern:$0x73625140]
    %v2174 = vld.sshfl [vmem:[#allocation1 + $0x8] sm:$0xff pattern:$0x73625140]
    %v2175 = vld.sshfl [vmem:[#allocation1 + $0x10] sm:$0xff pattern:$0x73625140]
    %v2176 = vld.sshfl [vmem:[#allocation1 + $0x18] sm:$0xff pattern:$0x73625140]
    %v2177 = vld.sshfl [vmem:[#allocation1 + $0x20] sm:$0xff pattern:$0x73625140]
    %v2178 = vld.sshfl [vmem:[#allocation1 + $0x28] sm:$0xff pattern:$0x73625140]
    %v2179 = vld.sshfl [vmem:[#allocation1 + $0x30] sm:$0xff pattern:$0x73625140]
    %v2180 = vld.sshfl [vmem:[#allocation1 + $0x38] sm:$0xff pattern:$0x73625140]
    %2181 = vst [vmem:[#allocation1] ss:$4 sm:$0xff] %v100
    %2182 = vst [vmem:[%s2161] ss:$4 sm:$0xff] %v101
    %v2183 = vld.sshfl [vmem:[#allocation1] sm:$0xff pattern:$0x73625140]
    %v2184 = vld.sshfl [vmem:[#allocation1 + $0x8] sm:$0xff pattern:$0x73625140]
    %v2185 = vld.sshfl [vmem:[#allocation1 + $0x10] sm:$0xff pattern:$0x73625140]
    %v2186 = vld.sshfl [vmem:[#allocation1 + $0x18] sm:$0xff pattern:$0x73625140]
    %v2187 = vld.sshfl [vmem:[#allocation1 + $0x20] sm:$0xff pattern:$0x73625140]
    %v2188 = vld.sshfl [vmem:[#allocation1 + $0x28] sm:$0xff pattern:$0x73625140]
    %v2189 = vld.sshfl [vmem:[#allocation1 + $0x30] sm:$0xff pattern:$0x73625140]
    %v2190 = vld.sshfl [vmem:[#allocation1 + $0x38] sm:$0xff pattern:$0x73625140]
    %2191 = vst [vmem:[#allocation1] ss:$4 sm:$0xff] %v102
    %2192 = vst [vmem:[%s2161] ss:$4 sm:$0xff] %v103
    %v2193 = vld.sshfl [vmem:[#allocation1] sm:$0xff pattern:$0x73625140]
    %v2194 = vld.sshfl [vmem:[#allocation1 + $0x8] sm:$0xff pattern:$0x73625140]
    %v2195 = vld.sshfl [vmem:[#allocation1 + $0x10] sm:$0xff pattern:$0x73625140]
    %v2196 = vld.sshfl [vmem:[#allocation1 + $0x18] sm:$0xff pattern:$0x73625140]
    %v2197 = vld.sshfl [vmem:[#allocation1 + $0x20] sm:$0xff pattern:$0x73625140]
    %v2198 = vld.sshfl [vmem:[#allocation1 + $0x28] sm:$0xff pattern:$0x73625140]
    %v2199 = vld.sshfl [vmem:[#allocation1 + $0x30] sm:$0xff pattern:$0x73625140]
    %v2200 = vld.sshfl [vmem:[#allocation1 + $0x38] sm:$0xff pattern:$0x73625140]
    %2233 = vmatpush.msra.mxu0 %v164
    %2234 = vmatpush.msra.mxu0 %v160
    %2235 = vmatpush.msra.mxu0 %v156
    %2236 = vmatpush.msra.mxu0 %v152
    %2237 = vmatpush.msra.mxu0 %v148
    %2238 = vmatpush.msra.mxu0 %v144
    %2239 = vmatpush.msra.mxu0 %v140
    %2240 = vmatpush.msra.mxu0 %v136
    %2241 = vmatpush.msra.mxu0 %v132
    %2242 = vmatpush.msra.mxu0 %v128
    %2243 = vmatpush.msra.mxu0 %v124
    %2244 = vmatpush.msra.mxu0 %v120
    %2245 = vmatpush.msra.mxu0 %v116
    %2246 = vmatpush.msra.mxu0 %v112
    %2247 = vmatpush.msra.mxu0 %v108
    %2248 = vmatpush.msra.mxu0 %v104
    %2249 = vmatmul.f32.gmra.mxu0 %v2163
    %v2250 = vpop.f32.mrf.mxu0
    %v2251 = vadd.f32 0.0, %v2250
    %2252 = vdwg.mxu0
    %2253 = vmatpush.msra.mxu0 %v228
    %2254 = vmatpush.msra.mxu0 %v224
    %2255 = vmatpush.msra.mxu0 %v220
    %2256 = vmatpush.msra.mxu0 %v216
    %2257 = vmatpush.msra.mxu0 %v212
    %2258 = vmatpush.msra.mxu0 %v208
    %2259 = vmatpush.msra.mxu0 %v204
    %2260 = vmatpush.msra.mxu0 %v200
    %2261 = vmatpush.msra.mxu0 %v196
    %2262 = vmatpush.msra.mxu0 %v192
    %2263 = vmatpush.msra.mxu0 %v188
    %2264 = vmatpush.msra.mxu0 %v184
    %2265 = vmatpush.msra.mxu0 %v180
    %2266 = vmatpush.msra.mxu0 %v176
    %2267 = vmatpush.msra.mxu0 %v172
    %2268 = vmatpush.msra.mxu0 %v168
    %2269 = vmatmul.f32.gmra.mxu0 %v2164
    %v2270 = vpop.f32.mrf.mxu0
    %v2271 = vadd.f32 %v2251, %v2270
    %2272 = vdwg.mxu0
    %2273 = vmatpush.msra.mxu0 %v292
    %2274 = vmatpush.msra.mxu0 %v288
    %2275 = vmatpush.msra.mxu0 %v284
    %2276 = vmatpush.msra.mxu0 %v280
    %2277 = vmatpush.msra.mxu0 %v276
    %2278 = vmatpush.msra.mxu0 %v272
    %2279 = vmatpush.msra.mxu0 %v268
    %2280 = vmatpush.msra.mxu0 %v264
    %2281 = vmatpush.msra.mxu0 %v260
    %2282 = vmatpush.msra.mxu0 %v256
    %2283 = vmatpush.msra.mxu0 %v252
    %2284 = vmatpush.msra.mxu0 %v248
    %2285 = vmatpush.msra.mxu0 %v244
    %2286 = vmatpush.msra.mxu0 %v240
    %2287 = vmatpush.msra.mxu0 %v236
    %2288 = vmatpush.msra.mxu0 %v232
    %2289 = vmatmul.f32.gmra.mxu0 %v2165
    %v2290 = vpop.f32.mrf.mxu0
    %v2291 = vadd.f32 %v2271, %v2290
    %2292 = vdwg.mxu0
    %2293 = vmatpush.msra.mxu0 %v356
    %2294 = vmatpush.msra.mxu0 %v352
    %2295 = vmatpush.msra.mxu0 %v348
    %2296 = vmatpush.msra.mxu0 %v344
    %2297 = vmatpush.msra.mxu0 %v340
    %2298 = vmatpush.msra.mxu0 %v336
    %2299 = vmatpush.msra.mxu0 %v332
    %2300 = vmatpush.msra.mxu0 %v328
    %2301 = vmatpush.msra.mxu0 %v324
    %2302 = vmatpush.msra.mxu0 %v320
    %2303 = vmatpush.msra.mxu0 %v316
    %2304 = vmatpush.msra.mxu0 %v312
    %2305 = vmatpush.msra.mxu0 %v308
    %2306 = vmatpush.msra.mxu0 %v304
    %2307 = vmatpush.msra.mxu0 %v300
    %2308 = vmatpush.msra.mxu0 %v296
    %2309 = vmatmul.f32.gmra.mxu0 %v2166
    %v2310 = vpop.f32.mrf.mxu0
    %v2311 = vadd.f32 %v2291, %v2310
    %2312 = vdwg.mxu0
    %2313 = vmatpush.msra.mxu0 %v420
    %2314 = vmatpush.msra.mxu0 %v416
    %2315 = vmatpush.msra.mxu0 %v412
    %2316 = vmatpush.msra.mxu0 %v408
    %2317 = vmatpush.msra.mxu0 %v404
    %2318 = vmatpush.msra.mxu0 %v400
    %2319 = vmatpush.msra.mxu0 %v396
    %2320 = vmatpush.msra.mxu0 %v392
    %2321 = vmatpush.msra.mxu0 %v388
    %2322 = vmatpush.msra.mxu0 %v384
    %2323 = vmatpush.msra.mxu0 %v380
    %2324 = vmatpush.msra.mxu0 %v376
    %2325 = vmatpush.msra.mxu0 %v372
    %2326 = vmatpush.msra.mxu0 %v368
    %2327 = vmatpush.msra.mxu0 %v364
    %2328 = vmatpush.msra.mxu0 %v360
    %2329 = vmatmul.f32.gmra.mxu0 %v2167
    %v2330 = vpop.f32.mrf.mxu0
    %v2331 = vadd.f32 %v2311, %v2330
    %2332 = vdwg.mxu0
    %2333 = vmatpush.msra.mxu0 %v484
    %2334 = vmatpush.msra.mxu0 %v480
    %2335 = vmatpush.msra.mxu0 %v476
    %2336 = vmatpush.msra.mxu0 %v472
    %2337 = vmatpush.msra.mxu0 %v468
    %2338 = vmatpush.msra.mxu0 %v464
    %2339 = vmatpush.msra.mxu0 %v460
    %2340 = vmatpush.msra.mxu0 %v456
    %2341 = vmatpush.msra.mxu0 %v452
    %2342 = vmatpush.msra.mxu0 %v448
    %2343 = vmatpush.msra.mxu0 %v444
    %2344 = vmatpush.msra.mxu0 %v440
    %2345 = vmatpush.msra.mxu0 %v436
    %2346 = vmatpush.msra.mxu0 %v432
    %2347 = vmatpush.msra.mxu0 %v428
    %2348 = vmatpush.msra.mxu0 %v424
    %2349 = vmatmul.f32.gmra.mxu0 %v2168
    %v2350 = vpop.f32.mrf.mxu0
    %v2351 = vadd.f32 %v2331, %v2350
    %2352 = vdwg.mxu0
    %2353 = vmatpush.msra.mxu0 %v548
    %2354 = vmatpush.msra.mxu0 %v544
    %2355 = vmatpush.msra.mxu0 %v540
    %2356 = vmatpush.msra.mxu0 %v536
    %2357 = vmatpush.msra.mxu0 %v532
    %2358 = vmatpush.msra.mxu0 %v528
    %2359 = vmatpush.msra.mxu0 %v524
    %2360 = vmatpush.msra.mxu0 %v520
    %2361 = vmatpush.msra.mxu0 %v516
    %2362 = vmatpush.msra.mxu0 %v512
    %2363 = vmatpush.msra.mxu0 %v508
    %2364 = vmatpush.msra.mxu0 %v504
    %2365 = vmatpush.msra.mxu0 %v500
    %2366 = vmatpush.msra.mxu0 %v496
    %2367 = vmatpush.msra.mxu0 %v492
    %2368 = vmatpush.msra.mxu0 %v488
    %2369 = vmatmul.f32.gmra.mxu0 %v2169
    %v2370 = vpop.f32.mrf.mxu0
    %v2371 = vadd.f32 %v2351, %v2370
    %2372 = vdwg.mxu0
    %2373 = vmatpush.msra.mxu0 %v612
    %2374 = vmatpush.msra.mxu0 %v608
    %2375 = vmatpush.msra.mxu0 %v604
    %2376 = vmatpush.msra.mxu0 %v600
    %2377 = vmatpush.msra.mxu0 %v596
    %2378 = vmatpush.msra.mxu0 %v592
    %2379 = vmatpush.msra.mxu0 %v588
    %2380 = vmatpush.msra.mxu0 %v584
    %2381 = vmatpush.msra.mxu0 %v580
    %2382 = vmatpush.msra.mxu0 %v576
    %2383 = vmatpush.msra.mxu0 %v572
    %2384 = vmatpush.msra.mxu0 %v568
    %2385 = vmatpush.msra.mxu0 %v564
    %2386 = vmatpush.msra.mxu0 %v560
    %2387 = vmatpush.msra.mxu0 %v556
    %2388 = vmatpush.msra.mxu0 %v552
    %2389 = vmatmul.f32.gmra.mxu0 %v2170
    %v2390 = vpop.f32.mrf.mxu0
    %v2391 = vadd.f32 %v2371, %v2390
    %2392 = vdwg.mxu0
    %2393 = vmatpush.msra.mxu0 %v676
    %2394 = vmatpush.msra.mxu0 %v672
    %2395 = vmatpush.msra.mxu0 %v668
    %2396 = vmatpush.msra.mxu0 %v664
    %2397 = vmatpush.msra.mxu0 %v660
    %2398 = vmatpush.msra.mxu0 %v656
    %2399 = vmatpush.msra.mxu0 %v652
    %2400 = vmatpush.msra.mxu0 %v648
    %2401 = vmatpush.msra.mxu0 %v644
    %2402 = vmatpush.msra.mxu0 %v640
    %2403 = vmatpush.msra.mxu0 %v636
    %2404 = vmatpush.msra.mxu0 %v632
    %2405 = vmatpush.msra.mxu0 %v628
    %2406 = vmatpush.msra.mxu0 %v624
    %2407 = vmatpush.msra.mxu0 %v620
    %2408 = vmatpush.msra.mxu0 %v616
    %2409 = vmatmul.f32.gmra.mxu0 %v2173
    %v2410 = vpop.f32.mrf.mxu0
    %v2411 = vadd.f32 %v2391, %v2410
    %2412 = vdwg.mxu0
    %2413 = vmatpush.msra.mxu0 %v740
    %2414 = vmatpush.msra.mxu0 %v736
    %2415 = vmatpush.msra.mxu0 %v732
    %2416 = vmatpush.msra.mxu0 %v728
    %2417 = vmatpush.msra.mxu0 %v724
    %2418 = vmatpush.msra.mxu0 %v720
    %2419 = vmatpush.msra.mxu0 %v716
    %2420 = vmatpush.msra.mxu0 %v712
    %2421 = vmatpush.msra.mxu0 %v708
    %2422 = vmatpush.msra.mxu0 %v704
    %2423 = vmatpush.msra.mxu0 %v700
    %2424 = vmatpush.msra.mxu0 %v696
    %2425 = vmatpush.msra.mxu0 %v692
    %2426 = vmatpush.msra.mxu0 %v688
    %2427 = vmatpush.msra.mxu0 %v684
    %2428 = vmatpush.msra.mxu0 %v680
    %2429 = vmatmul.f32.gmra.mxu0 %v2174
    %v2430 = vpop.f32.mrf.mxu0
    %v2431 = vadd.f32 %v2411, %v2430
    %2432 = vdwg.mxu0
    %2433 = vmatpush.msra.mxu0 %v804
    %2434 = vmatpush.msra.mxu0 %v800
    %2435 = vmatpush.msra.mxu0 %v796
    %2436 = vmatpush.msra.mxu0 %v792
    %2437 = vmatpush.msra.mxu0 %v788
    %2438 = vmatpush.msra.mxu0 %v784
    %2439 = vmatpush.msra.mxu0 %v780
    %2440 = vmatpush.msra.mxu0 %v776
    %2441 = vmatpush.msra.mxu0 %v772
    %2442 = vmatpush.msra.mxu0 %v768
    %2443 = vmatpush.msra.mxu0 %v764
    %2444 = vmatpush.msra.mxu0 %v760
    %2445 = vmatpush.msra.mxu0 %v756
    %2446 = vmatpush.msra.mxu0 %v752
    %2447 = vmatpush.msra.mxu0 %v748
    %2448 = vmatpush.msra.mxu0 %v744
    %2449 = vmatmul.f32.gmra.mxu0 %v2175
    %v2450 = vpop.f32.mrf.mxu0
    %v2451 = vadd.f32 %v2431, %v2450
    %2452 = vdwg.mxu0
    %2453 = vmatpush.msra.mxu0 %v868
    %2454 = vmatpush.msra.mxu0 %v864
    %2455 = vmatpush.msra.mxu0 %v860
    %2456 = vmatpush.msra.mxu0 %v856
    %2457 = vmatpush.msra.mxu0 %v852
    %2458 = vmatpush.msra.mxu0 %v848
    %2459 = vmatpush.msra.mxu0 %v844
    %2460 = vmatpush.msra.mxu0 %v840
    %2461 = vmatpush.msra.mxu0 %v836
    %2462 = vmatpush.msra.mxu0 %v832
    %2463 = vmatpush.msra.mxu0 %v828
    %2464 = vmatpush.msra.mxu0 %v824
    %2465 = vmatpush.msra.mxu0 %v820
    %2466 = vmatpush.msra.mxu0 %v816
    %2467 = vmatpush.msra.mxu0 %v812
    %2468 = vmatpush.msra.mxu0 %v808
    %2469 = vmatmul.f32.gmra.mxu0 %v2176
    %v2470 = vpop.f32.mrf.mxu0
    %v2471 = vadd.f32 %v2451, %v2470
    %2472 = vdwg.mxu0
    %2473 = vmatpush.msra.mxu0 %v932
    %2474 = vmatpush.msra.mxu0 %v928
    %2475 = vmatpush.msra.mxu0 %v924
    %2476 = vmatpush.msra.mxu0 %v920
    %2477 = vmatpush.msra.mxu0 %v916
    %2478 = vmatpush.msra.mxu0 %v912
    %2479 = vmatpush.msra.mxu0 %v908
    %2480 = vmatpush.msra.mxu0 %v904
    %2481 = vmatpush.msra.mxu0 %v900
    %2482 = vmatpush.msra.mxu0 %v896
    %2483 = vmatpush.msra.mxu0 %v892
    %2484 = vmatpush.msra.mxu0 %v888
    %2485 = vmatpush.msra.mxu0 %v884
    %2486 = vmatpush.msra.mxu0 %v880
    %2487 = vmatpush.msra.mxu0 %v876
    %2488 = vmatpush.msra.mxu0 %v872
    %2489 = vmatmul.f32.gmra.mxu0 %v2177
    %v2490 = vpop.f32.mrf.mxu0
    %v2491 = vadd.f32 %v2471, %v2490
    %2492 = vdwg.mxu0
    %2493 = vmatpush.msra.mxu0 %v996
    %2494 = vmatpush.msra.mxu0 %v992
    %2495 = vmatpush.msra.mxu0 %v988
    %2496 = vmatpush.msra.mxu0 %v984
    %2497 = vmatpush.msra.mxu0 %v980
    %2498 = vmatpush.msra.mxu0 %v976
    %2499 = vmatpush.msra.mxu0 %v972
    %2500 = vmatpush.msra.mxu0 %v968
    %2501 = vmatpush.msra.mxu0 %v964
    %2502 = vmatpush.msra.mxu0 %v960
    %2503 = vmatpush.msra.mxu0 %v956
    %2504 = vmatpush.msra.mxu0 %v952
    %2505 = vmatpush.msra.mxu0 %v948
    %2506 = vmatpush.msra.mxu0 %v944
    %2507 = vmatpush.msra.mxu0 %v940
    %2508 = vmatpush.msra.mxu0 %v936
    %2509 = vmatmul.f32.gmra.mxu0 %v2178
    %v2510 = vpop.f32.mrf.mxu0
    %v2511 = vadd.f32 %v2491, %v2510
    %2512 = vdwg.mxu0
    %2513 = vmatpush.msra.mxu0 %v1060
    %2514 = vmatpush.msra.mxu0 %v1056
    %2515 = vmatpush.msra.mxu0 %v1052
    %2516 = vmatpush.msra.mxu0 %v1048
    %2517 = vmatpush.msra.mxu0 %v1044
    %2518 = vmatpush.msra.mxu0 %v1040
    %2519 = vmatpush.msra.mxu0 %v1036
    %2520 = vmatpush.msra.mxu0 %v1032
    %2521 = vmatpush.msra.mxu0 %v1028
    %2522 = vmatpush.msra.mxu0 %v1024
    %2523 = vmatpush.msra.mxu0 %v1020
    %2524 = vmatpush.msra.mxu0 %v1016
    %2525 = vmatpush.msra.mxu0 %v1012
    %2526 = vmatpush.msra.mxu0 %v1008
    %2527 = vmatpush.msra.mxu0 %v1004
    %2528 = vmatpush.msra.mxu0 %v1000
    %2529 = vmatmul.f32.gmra.mxu0 %v2179
    %v2530 = vpop.f32.mrf.mxu0
    %v2531 = vadd.f32 %v2511, %v2530
    %2532 = vdwg.mxu0
    %2533 = vmatpush.msra.mxu0 %v1124
    %2534 = vmatpush.msra.mxu0 %v1120
    %2535 = vmatpush.msra.mxu0 %v1116
    %2536 = vmatpush.msra.mxu0 %v1112
    %2537 = vmatpush.msra.mxu0 %v1108
    %2538 = vmatpush.msra.mxu0 %v1104
    %2539 = vmatpush.msra.mxu0 %v1100
    %2540 = vmatpush.msra.mxu0 %v1096
    %2541 = vmatpush.msra.mxu0 %v1092
    %2542 = vmatpush.msra.mxu0 %v1088
    %2543 = vmatpush.msra.mxu0 %v1084
    %2544 = vmatpush.msra.mxu0 %v1080
    %2545 = vmatpush.msra.mxu0 %v1076
    %2546 = vmatpush.msra.mxu0 %v1072
    %2547 = vmatpush.msra.mxu0 %v1068
    %2548 = vmatpush.msra.mxu0 %v1064
    %2549 = vmatmul.f32.gmra.mxu0 %v2180
    %v2550 = vpop.f32.mrf.mxu0
    %v2551 = vadd.f32 %v2531, %v2550
    %2552 = vdwg.mxu0
    %2553 = vmatpush.msra.mxu0 %v1188
    %2554 = vmatpush.msra.mxu0 %v1184
    %2555 = vmatpush.msra.mxu0 %v1180
    %2556 = vmatpush.msra.mxu0 %v1176
    %2557 = vmatpush.msra.mxu0 %v1172
    %2558 = vmatpush.msra.mxu0 %v1168
    %2559 = vmatpush.msra.mxu0 %v1164
    %2560 = vmatpush.msra.mxu0 %v1160
    %2561 = vmatpush.msra.mxu0 %v1156
    %2562 = vmatpush.msra.mxu0 %v1152
    %2563 = vmatpush.msra.mxu0 %v1148
    %2564 = vmatpush.msra.mxu0 %v1144
    %2565 = vmatpush.msra.mxu0 %v1140
    %2566 = vmatpush.msra.mxu0 %v1136
    %2567 = vmatpush.msra.mxu0 %v1132
    %2568 = vmatpush.msra.mxu0 %v1128
    %2569 = vmatmul.f32.gmra.mxu0 %v2183
    %v2570 = vpop.f32.mrf.mxu0
    %v2571 = vadd.f32 %v2551, %v2570
    %2572 = vdwg.mxu0
    %2573 = vmatpush.msra.mxu0 %v1252
    %2574 = vmatpush.msra.mxu0 %v1248
    %2575 = vmatpush.msra.mxu0 %v1244
    %2576 = vmatpush.msra.mxu0 %v1240
    %2577 = vmatpush.msra.mxu0 %v1236
    %2578 = vmatpush.msra.mxu0 %v1232
    %2579 = vmatpush.msra.mxu0 %v1228
    %2580 = vmatpush.msra.mxu0 %v1224
    %2581 = vmatpush.msra.mxu0 %v1220
    %2582 = vmatpush.msra.mxu0 %v1216
    %2583 = vmatpush.msra.mxu0 %v1212
    %2584 = vmatpush.msra.mxu0 %v1208
    %2585 = vmatpush.msra.mxu0 %v1204
    %2586 = vmatpush.msra.mxu0 %v1200
    %2587 = vmatpush.msra.mxu0 %v1196
    %2588 = vmatpush.msra.mxu0 %v1192
    %2589 = vmatmul.f32.gmra.mxu0 %v2184
    %v2590 = vpop.f32.mrf.mxu0
    %v2591 = vadd.f32 %v2571, %v2590
    %2592 = vdwg.mxu0
    %2593 = vmatpush.msra.mxu0 %v1316
    %2594 = vmatpush.msra.mxu0 %v1312
    %2595 = vmatpush.msra.mxu0 %v1308
    %2596 = vmatpush.msra.mxu0 %v1304
    %2597 = vmatpush.msra.mxu0 %v1300
    %2598 = vmatpush.msra.mxu0 %v1296
    %2599 = vmatpush.msra.mxu0 %v1292
    %2600 = vmatpush.msra.mxu0 %v1288
    %2601 = vmatpush.msra.mxu0 %v1284
    %2602 = vmatpush.msra.mxu0 %v1280
    %2603 = vmatpush.msra.mxu0 %v1276
    %2604 = vmatpush.msra.mxu0 %v1272
    %2605 = vmatpush.msra.mxu0 %v1268
    %2606 = vmatpush.msra.mxu0 %v1264
    %2607 = vmatpush.msra.mxu0 %v1260
    %2608 = vmatpush.msra.mxu0 %v1256
    %2609 = vmatmul.f32.gmra.mxu0 %v2185
    %v2610 = vpop.f32.mrf.mxu0
    %v2611 = vadd.f32 %v2591, %v2610
    %2612 = vdwg.mxu0
    %2613 = vmatpush.msra.mxu0 %v1380
    %2614 = vmatpush.msra.mxu0 %v1376
    %2615 = vmatpush.msra.mxu0 %v1372
    %2616 = vmatpush.msra.mxu0 %v1368
    %2617 = vmatpush.msra.mxu0 %v1364
    %2618 = vmatpush.msra.mxu0 %v1360
    %2619 = vmatpush.msra.mxu0 %v1356
    %2620 = vmatpush.msra.mxu0 %v1352
    %2621 = vmatpush.msra.mxu0 %v1348
    %2622 = vmatpush.msra.mxu0 %v1344
    %2623 = vmatpush.msra.mxu0 %v1340
    %2624 = vmatpush.msra.mxu0 %v1336
    %2625 = vmatpush.msra.mxu0 %v1332
    %2626 = vmatpush.msra.mxu0 %v1328
    %2627 = vmatpush.msra.mxu0 %v1324
    %2628 = vmatpush.msra.mxu0 %v1320
    %2629 = vmatmul.f32.gmra.mxu0 %v2186
    %v2630 = vpop.f32.mrf.mxu0
    %v2631 = vadd.f32 %v2611, %v2630
    %2632 = vdwg.mxu0
    %2633 = vmatpush.msra.mxu0 %v1444
    %2634 = vmatpush.msra.mxu0 %v1440
    %2635 = vmatpush.msra.mxu0 %v1436
    %2636 = vmatpush.msra.mxu0 %v1432
    %2637 = vmatpush.msra.mxu0 %v1428
    %2638 = vmatpush.msra.mxu0 %v1424
    %2639 = vmatpush.msra.mxu0 %v1420
    %2640 = vmatpush.msra.mxu0 %v1416
    %2641 = vmatpush.msra.mxu0 %v1412
    %2642 = vmatpush.msra.mxu0 %v1408
    %2643 = vmatpush.msra.mxu0 %v1404
    %2644 = vmatpush.msra.mxu0 %v1400
    %2645 = vmatpush.msra.mxu0 %v1396
    %2646 = vmatpush.msra.mxu0 %v1392
    %2647 = vmatpush.msra.mxu0 %v1388
    %2648 = vmatpush.msra.mxu0 %v1384
    %2649 = vmatmul.f32.gmra.mxu0 %v2187
    %v2650 = vpop.f32.mrf.mxu0
    %v2651 = vadd.f32 %v2631, %v2650
    %2652 = vdwg.mxu0
    %2653 = vmatpush.msra.mxu0 %v1508
    %2654 = vmatpush.msra.mxu0 %v1504
    %2655 = vmatpush.msra.mxu0 %v1500
    %2656 = vmatpush.msra.mxu0 %v1496
    %2657 = vmatpush.msra.mxu0 %v1492
    %2658 = vmatpush.msra.mxu0 %v1488
    %2659 = vmatpush.msra.mxu0 %v1484
    %2660 = vmatpush.msra.mxu0 %v1480
    %2661 = vmatpush.msra.mxu0 %v1476
    %2662 = vmatpush.msra.mxu0 %v1472
    %2663 = vmatpush.msra.mxu0 %v1468
    %2664 = vmatpush.msra.mxu0 %v1464
    %2665 = vmatpush.msra.mxu0 %v1460
    %2666 = vmatpush.msra.mxu0 %v1456
    %2667 = vmatpush.msra.mxu0 %v1452
    %2668 = vmatpush.msra.mxu0 %v1448
    %2669 = vmatmul.f32.gmra.mxu0 %v2188
    %v2670 = vpop.f32.mrf.mxu0
    %v2671 = vadd.f32 %v2651, %v2670
    %2672 = vdwg.mxu0
    %2673 = vmatpush.msra.mxu0 %v1572
    %2674 = vmatpush.msra.mxu0 %v1568
    %2675 = vmatpush.msra.mxu0 %v1564
    %2676 = vmatpush.msra.mxu0 %v1560
    %2677 = vmatpush.msra.mxu0 %v1556
    %2678 = vmatpush.msra.mxu0 %v1552
    %2679 = vmatpush.msra.mxu0 %v1548
    %2680 = vmatpush.msra.mxu0 %v1544
    %2681 = vmatpush.msra.mxu0 %v1540
    %2682 = vmatpush.msra.mxu0 %v1536
    %2683 = vmatpush.msra.mxu0 %v1532
    %2684 = vmatpush.msra.mxu0 %v1528
    %2685 = vmatpush.msra.mxu0 %v1524
    %2686 = vmatpush.msra.mxu0 %v1520
    %2687 = vmatpush.msra.mxu0 %v1516
    %2688 = vmatpush.msra.mxu0 %v1512
    %2689 = vmatmul.f32.gmra.mxu0 %v2189
    %v2690 = vpop.f32.mrf.mxu0
    %v2691 = vadd.f32 %v2671, %v2690
    %2692 = vdwg.mxu0
    %2693 = vmatpush.msra.mxu0 %v1636
    %2694 = vmatpush.msra.mxu0 %v1632
    %2695 = vmatpush.msra.mxu0 %v1628
    %2696 = vmatpush.msra.mxu0 %v1624
    %2697 = vmatpush.msra.mxu0 %v1620
    %2698 = vmatpush.msra.mxu0 %v1616
    %2699 = vmatpush.msra.mxu0 %v1612
    %2700 = vmatpush.msra.mxu0 %v1608
    %2701 = vmatpush.msra.mxu0 %v1604
    %2702 = vmatpush.msra.mxu0 %v1600
    %2703 = vmatpush.msra.mxu0 %v1596
    %2704 = vmatpush.msra.mxu0 %v1592
    %2705 = vmatpush.msra.mxu0 %v1588
    %2706 = vmatpush.msra.mxu0 %v1584
    %2707 = vmatpush.msra.mxu0 %v1580
    %2708 = vmatpush.msra.mxu0 %v1576
    %2709 = vmatmul.f32.gmra.mxu0 %v2190
    %v2710 = vpop.f32.mrf.mxu0
    %v2711 = vadd.f32 %v2691, %v2710
    %2712 = vdwg.mxu0
    %2713 = vmatpush.msra.mxu0 %v1700
    %2714 = vmatpush.msra.mxu0 %v1696
    %2715 = vmatpush.msra.mxu0 %v1692
    %2716 = vmatpush.msra.mxu0 %v1688
    %2717 = vmatpush.msra.mxu0 %v1684
    %2718 = vmatpush.msra.mxu0 %v1680
    %2719 = vmatpush.msra.mxu0 %v1676
    %2720 = vmatpush.msra.mxu0 %v1672
    %2721 = vmatpush.msra.mxu0 %v1668
    %2722 = vmatpush.msra.mxu0 %v1664
    %2723 = vmatpush.msra.mxu0 %v1660
    %2724 = vmatpush.msra.mxu0 %v1656
    %2725 = vmatpush.msra.mxu0 %v1652
    %2726 = vmatpush.msra.mxu0 %v1648
    %2727 = vmatpush.msra.mxu0 %v1644
    %2728 = vmatpush.msra.mxu0 %v1640
    %2729 = vmatmul.f32.gmra.mxu0 %v2193
    %v2730 = vpop.f32.mrf.mxu0
    %v2731 = vadd.f32 %v2711, %v2730
    %2732 = vdwg.mxu0
    %2733 = vmatpush.msra.mxu0 %v1764
    %2734 = vmatpush.msra.mxu0 %v1760
    %2735 = vmatpush.msra.mxu0 %v1756
    %2736 = vmatpush.msra.mxu0 %v1752
    %2737 = vmatpush.msra.mxu0 %v1748
    %2738 = vmatpush.msra.mxu0 %v1744
    %2739 = vmatpush.msra.mxu0 %v1740
    %2740 = vmatpush.msra.mxu0 %v1736
    %2741 = vmatpush.msra.mxu0 %v1732
    %2742 = vmatpush.msra.mxu0 %v1728
    %2743 = vmatpush.msra.mxu0 %v1724
    %2744 = vmatpush.msra.mxu0 %v1720
    %2745 = vmatpush.msra.mxu0 %v1716
    %2746 = vmatpush.msra.mxu0 %v1712
    %2747 = vmatpush.msra.mxu0 %v1708
    %2748 = vmatpush.msra.mxu0 %v1704
    %2749 = vmatmul.f32.gmra.mxu0 %v2194
    %v2750 = vpop.f32.mrf.mxu0
    %v2751 = vadd.f32 %v2731, %v2750
    %2752 = vdwg.mxu0
    %2753 = vmatpush.msra.mxu0 %v1828
    %2754 = vmatpush.msra.mxu0 %v1824
    %2755 = vmatpush.msra.mxu0 %v1820
    %2756 = vmatpush.msra.mxu0 %v1816
    %2757 = vmatpush.msra.mxu0 %v1812
    %2758 = vmatpush.msra.mxu0 %v1808
    %2759 = vmatpush.msra.mxu0 %v1804
    %2760 = vmatpush.msra.mxu0 %v1800
    %2761 = vmatpush.msra.mxu0 %v1796
    %2762 = vmatpush.msra.mxu0 %v1792
    %2763 = vmatpush.msra.mxu0 %v1788
    %2764 = vmatpush.msra.mxu0 %v1784
    %2765 = vmatpush.msra.mxu0 %v1780
    %2766 = vmatpush.msra.mxu0 %v1776
    %2767 = vmatpush.msra.mxu0 %v1772
    %2768 = vmatpush.msra.mxu0 %v1768
    %2769 = vmatmul.f32.gmra.mxu0 %v2195
    %v2770 = vpop.f32.mrf.mxu0
    %v2771 = vadd.f32 %v2751, %v2770
    %2772 = vdwg.mxu0
    %2773 = vmatpush.msra.mxu0 %v1892
    %2774 = vmatpush.msra.mxu0 %v1888
    %2775 = vmatpush.msra.mxu0 %v1884
    %2776 = vmatpush.msra.mxu0 %v1880
    %2777 = vmatpush.msra.mxu0 %v1876
    %2778 = vmatpush.msra.mxu0 %v1872
    %2779 = vmatpush.msra.mxu0 %v1868
    %2780 = vmatpush.msra.mxu0 %v1864
    %2781 = vmatpush.msra.mxu0 %v1860
    %2782 = vmatpush.msra.mxu0 %v1856
    %2783 = vmatpush.msra.mxu0 %v1852
    %2784 = vmatpush.msra.mxu0 %v1848
    %2785 = vmatpush.msra.mxu0 %v1844
    %2786 = vmatpush.msra.mxu0 %v1840
    %2787 = vmatpush.msra.mxu0 %v1836
    %2788 = vmatpush.msra.mxu0 %v1832
    %2789 = vmatmul.f32.gmra.mxu0 %v2196
    %v2790 = vpop.f32.mrf.mxu0
    %v2791 = vadd.f32 %v2771, %v2790
    %2792 = vdwg.mxu0
    %2793 = vmatpush.msra.mxu0 %v1956
    %2794 = vmatpush.msra.mxu0 %v1952
    %2795 = vmatpush.msra.mxu0 %v1948
    %2796 = vmatpush.msra.mxu0 %v1944
    %2797 = vmatpush.msra.mxu0 %v1940
    %2798 = vmatpush.msra.mxu0 %v1936
    %2799 = vmatpush.msra.mxu0 %v1932
    %2800 = vmatpush.msra.mxu0 %v1928
    %2801 = vmatpush.msra.mxu0 %v1924
    %2802 = vmatpush.msra.mxu0 %v1920
    %2803 = vmatpush.msra.mxu0 %v1916
    %2804 = vmatpush.msra.mxu0 %v1912
    %2805 = vmatpush.msra.mxu0 %v1908
    %2806 = vmatpush.msra.mxu0 %v1904
    %2807 = vmatpush.msra.mxu0 %v1900
    %2808 = vmatpush.msra.mxu0 %v1896
    %2809 = vmatmul.f32.gmra.mxu0 %v2197
    %v2810 = vpop.f32.mrf.mxu0
    %v2811 = vadd.f32 %v2791, %v2810
    %2812 = vdwg.mxu0
    %2813 = vmatpush.msra.mxu0 %v2020
    %2814 = vmatpush.msra.mxu0 %v2016
    %2815 = vmatpush.msra.mxu0 %v2012
    %2816 = vmatpush.msra.mxu0 %v2008
    %2817 = vmatpush.msra.mxu0 %v2004
    %2818 = vmatpush.msra.mxu0 %v2000
    %2819 = vmatpush.msra.mxu0 %v1996
    %2820 = vmatpush.msra.mxu0 %v1992
    %2821 = vmatpush.msra.mxu0 %v1988
    %2822 = vmatpush.msra.mxu0 %v1984
    %2823 = vmatpush.msra.mxu0 %v1980
    %2824 = vmatpush.msra.mxu0 %v1976
    %2825 = vmatpush.msra.mxu0 %v1972
    %2826 = vmatpush.msra.mxu0 %v1968
    %2827 = vmatpush.msra.mxu0 %v1964
    %2828 = vmatpush.msra.mxu0 %v1960
    %2829 = vmatmul.f32.gmra.mxu0 %v2198
    %v2830 = vpop.f32.mrf.mxu0
    %v2831 = vadd.f32 %v2811, %v2830
    %2832 = vdwg.mxu0
    %2833 = vmatpush.msra.mxu0 %v2084
    %2834 = vmatpush.msra.mxu0 %v2080
    %2835 = vmatpush.msra.mxu0 %v2076
    %2836 = vmatpush.msra.mxu0 %v2072
    %2837 = vmatpush.msra.mxu0 %v2068
    %2838 = vmatpush.msra.mxu0 %v2064
    %2839 = vmatpush.msra.mxu0 %v2060
    %2840 = vmatpush.msra.mxu0 %v2056
    %2841 = vmatpush.msra.mxu0 %v2052
    %2842 = vmatpush.msra.mxu0 %v2048
    %2843 = vmatpush.msra.mxu0 %v2044
    %2844 = vmatpush.msra.mxu0 %v2040
    %2845 = vmatpush.msra.mxu0 %v2036
    %2846 = vmatpush.msra.mxu0 %v2032
    %2847 = vmatpush.msra.mxu0 %v2028
    %2848 = vmatpush.msra.mxu0 %v2024
    %2849 = vmatmul.f32.gmra.mxu0 %v2199
    %v2850 = vpop.f32.mrf.mxu0
    %v2851 = vadd.f32 %v2831, %v2850
    %2852 = vdwg.mxu0
    %2853 = vmatpush.msra.mxu0 %v2148
    %2854 = vmatpush.msra.mxu0 %v2144
    %2855 = vmatpush.msra.mxu0 %v2140
    %2856 = vmatpush.msra.mxu0 %v2136
    %2857 = vmatpush.msra.mxu0 %v2132
    %2858 = vmatpush.msra.mxu0 %v2128
    %2859 = vmatpush.msra.mxu0 %v2124
    %2860 = vmatpush.msra.mxu0 %v2120
    %2861 = vmatpush.msra.mxu0 %v2116
    %2862 = vmatpush.msra.mxu0 %v2112
    %2863 = vmatpush.msra.mxu0 %v2108
    %2864 = vmatpush.msra.mxu0 %v2104
    %2865 = vmatpush.msra.mxu0 %v2100
    %2866 = vmatpush.msra.mxu0 %v2096
    %2867 = vmatpush.msra.mxu0 %v2092
    %2868 = vmatpush.msra.mxu0 %v2088
    %2869 = vmatmul.f32.gmra.mxu0 %v2200
    %v2870 = vpop.f32.mrf.mxu0
    %v2871 = vadd.f32 %v2851, %v2870
    %2872 = vdwg.mxu0
    %2873 = vmatpush.msra.mxu0 %v165
    %2874 = vmatpush.msra.mxu0 %v161
    %2875 = vmatpush.msra.mxu0 %v157
    %2876 = vmatpush.msra.mxu0 %v153
    %2877 = vmatpush.msra.mxu0 %v149
    %2878 = vmatpush.msra.mxu0 %v145
    %2879 = vmatpush.msra.mxu0 %v141
    %2880 = vmatpush.msra.mxu0 %v137
    %2881 = vmatpush.msra.mxu0 %v133
    %2882 = vmatpush.msra.mxu0 %v129
    %2883 = vmatpush.msra.mxu0 %v125
    %2884 = vmatpush.msra.mxu0 %v121
    %2885 = vmatpush.msra.mxu0 %v117
    %2886 = vmatpush.msra.mxu0 %v113
    %2887 = vmatpush.msra.mxu0 %v109
    %2888 = vmatpush.msra.mxu0 %v105
    %2889 = vmatmul.f32.gmra.mxu0 %v2163
    %v2890 = vpop.f32.mrf.mxu0
    %v2891 = vadd.f32 0.0, %v2890
    %2892 = vdwg.mxu0
    %2893 = vmatpush.msra.mxu0 %v229
    %2894 = vmatpush.msra.mxu0 %v225
    %2895 = vmatpush.msra.mxu0 %v221
    %2896 = vmatpush.msra.mxu0 %v217
    %2897 = vmatpush.msra.mxu0 %v213
    %2898 = vmatpush.msra.mxu0 %v209
    %2899 = vmatpush.msra.mxu0 %v205
    %2900 = vmatpush.msra.mxu0 %v201
    %2901 = vmatpush.msra.mxu0 %v197
    %2902 = vmatpush.msra.mxu0 %v193
    %2903 = vmatpush.msra.mxu0 %v189
    %2904 = vmatpush.msra.mxu0 %v185
    %2905 = vmatpush.msra.mxu0 %v181
    %2906 = vmatpush.msra.mxu0 %v177
    %2907 = vmatpush.msra.mxu0 %v173
    %2908 = vmatpush.msra.mxu0 %v169
    %2909 = vmatmul.f32.gmra.mxu0 %v2164
    %v2910 = vpop.f32.mrf.mxu0
    %v2911 = vadd.f32 %v2891, %v2910
    %2912 = vdwg.mxu0
    %2913 = vmatpush.msra.mxu0 %v293
    %2914 = vmatpush.msra.mxu0 %v289
    %2915 = vmatpush.msra.mxu0 %v285
    %2916 = vmatpush.msra.mxu0 %v281
    %2917 = vmatpush.msra.mxu0 %v277
    %2918 = vmatpush.msra.mxu0 %v273
    %2919 = vmatpush.msra.mxu0 %v269
    %2920 = vmatpush.msra.mxu0 %v265
    %2921 = vmatpush.msra.mxu0 %v261
    %2922 = vmatpush.msra.mxu0 %v257
    %2923 = vmatpush.msra.mxu0 %v253
    %2924 = vmatpush.msra.mxu0 %v249
    %2925 = vmatpush.msra.mxu0 %v245
    %2926 = vmatpush.msra.mxu0 %v241
    %2927 = vmatpush.msra.mxu0 %v237
    %2928 = vmatpush.msra.mxu0 %v233
    %2929 = vmatmul.f32.gmra.mxu0 %v2165
    %v2930 = vpop.f32.mrf.mxu0
    %v2931 = vadd.f32 %v2911, %v2930
    %2932 = vdwg.mxu0
    %2933 = vmatpush.msra.mxu0 %v357
    %2934 = vmatpush.msra.mxu0 %v353
    %2935 = vmatpush.msra.mxu0 %v349
    %2936 = vmatpush.msra.mxu0 %v345
    %2937 = vmatpush.msra.mxu0 %v341
    %2938 = vmatpush.msra.mxu0 %v337
    %2939 = vmatpush.msra.mxu0 %v333
    %2940 = vmatpush.msra.mxu0 %v329
    %2941 = vmatpush.msra.mxu0 %v325
    %2942 = vmatpush.msra.mxu0 %v321
    %2943 = vmatpush.msra.mxu0 %v317
    %2944 = vmatpush.msra.mxu0 %v313
    %2945 = vmatpush.msra.mxu0 %v309
    %2946 = vmatpush.msra.mxu0 %v305
    %2947 = vmatpush.msra.mxu0 %v301
    %2948 = vmatpush.msra.mxu0 %v297
    %2949 = vmatmul.f32.gmra.mxu0 %v2166
    %v2950 = vpop.f32.mrf.mxu0
    %v2951 = vadd.f32 %v2931, %v2950
    %2952 = vdwg.mxu0
    %2953 = vmatpush.msra.mxu0 %v421
    %2954 = vmatpush.msra.mxu0 %v417
    %2955 = vmatpush.msra.mxu0 %v413
    %2956 = vmatpush.msra.mxu0 %v409
    %2957 = vmatpush.msra.mxu0 %v405
    %2958 = vmatpush.msra.mxu0 %v401
    %2959 = vmatpush.msra.mxu0 %v397
    %2960 = vmatpush.msra.mxu0 %v393
    %2961 = vmatpush.msra.mxu0 %v389
    %2962 = vmatpush.msra.mxu0 %v385
    %2963 = vmatpush.msra.mxu0 %v381
    %2964 = vmatpush.msra.mxu0 %v377
    %2965 = vmatpush.msra.mxu0 %v373
    %2966 = vmatpush.msra.mxu0 %v369
    %2967 = vmatpush.msra.mxu0 %v365
    %2968 = vmatpush.msra.mxu0 %v361
    %2969 = vmatmul.f32.gmra.mxu0 %v2167
    %v2970 = vpop.f32.mrf.mxu0
    %v2971 = vadd.f32 %v2951, %v2970
    %2972 = vdwg.mxu0
    %2973 = vmatpush.msra.mxu0 %v485
    %2974 = vmatpush.msra.mxu0 %v481
    %2975 = vmatpush.msra.mxu0 %v477
    %2976 = vmatpush.msra.mxu0 %v473
    %2977 = vmatpush.msra.mxu0 %v469
    %2978 = vmatpush.msra.mxu0 %v465
    %2979 = vmatpush.msra.mxu0 %v461
    %2980 = vmatpush.msra.mxu0 %v457
    %2981 = vmatpush.msra.mxu0 %v453
    %2982 = vmatpush.msra.mxu0 %v449
    %2983 = vmatpush.msra.mxu0 %v445
    %2984 = vmatpush.msra.mxu0 %v441
    %2985 = vmatpush.msra.mxu0 %v437
    %2986 = vmatpush.msra.mxu0 %v433
    %2987 = vmatpush.msra.mxu0 %v429
    %2988 = vmatpush.msra.mxu0 %v425
    %2989 = vmatmul.f32.gmra.mxu0 %v2168
    %v2990 = vpop.f32.mrf.mxu0
    %v2991 = vadd.f32 %v2971, %v2990
    %2992 = vdwg.mxu0
    %2993 = vmatpush.msra.mxu0 %v549
    %2994 = vmatpush.msra.mxu0 %v545
    %2995 = vmatpush.msra.mxu0 %v541
    %2996 = vmatpush.msra.mxu0 %v537
    %2997 = vmatpush.msra.mxu0 %v533
    %2998 = vmatpush.msra.mxu0 %v529
    %2999 = vmatpush.msra.mxu0 %v525
    %3000 = vmatpush.msra.mxu0 %v521
    %3001 = vmatpush.msra.mxu0 %v517
    %3002 = vmatpush.msra.mxu0 %v513
    %3003 = vmatpush.msra.mxu0 %v509
    %3004 = vmatpush.msra.mxu0 %v505
    %3005 = vmatpush.msra.mxu0 %v501
    %3006 = vmatpush.msra.mxu0 %v497
    %3007 = vmatpush.msra.mxu0 %v493
    %3008 = vmatpush.msra.mxu0 %v489
    %3009 = vmatmul.f32.gmra.mxu0 %v2169
    %v3010 = vpop.f32.mrf.mxu0
    %v3011 = vadd.f32 %v2991, %v3010
    %3012 = vdwg.mxu0
    %3013 = vmatpush.msra.mxu0 %v613
    %3014 = vmatpush.msra.mxu0 %v609
    %3015 = vmatpush.msra.mxu0 %v605
    %3016 = vmatpush.msra.mxu0 %v601
    %3017 = vmatpush.msra.mxu0 %v597
    %3018 = vmatpush.msra.mxu0 %v593
    %3019 = vmatpush.msra.mxu0 %v589
    %3020 = vmatpush.msra.mxu0 %v585
    %3021 = vmatpush.msra.mxu0 %v581
    %3022 = vmatpush.msra.mxu0 %v577
    %3023 = vmatpush.msra.mxu0 %v573
    %3024 = vmatpush.msra.mxu0 %v569
    %3025 = vmatpush.msra.mxu0 %v565
    %3026 = vmatpush.msra.mxu0 %v561
    %3027 = vmatpush.msra.mxu0 %v557
    %3028 = vmatpush.msra.mxu0 %v553
    %3029 = vmatmul.f32.gmra.mxu0 %v2170
    %v3030 = vpop.f32.mrf.mxu0
    %v3031 = vadd.f32 %v3011, %v3030
    %3032 = vdwg.mxu0
    %3033 = vmatpush.msra.mxu0 %v677
    %3034 = vmatpush.msra.mxu0 %v673
    %3035 = vmatpush.msra.mxu0 %v669
    %3036 = vmatpush.msra.mxu0 %v665
    %3037 = vmatpush.msra.mxu0 %v661
    %3038 = vmatpush.msra.mxu0 %v657
    %3039 = vmatpush.msra.mxu0 %v653
    %3040 = vmatpush.msra.mxu0 %v649
    %3041 = vmatpush.msra.mxu0 %v645
    %3042 = vmatpush.msra.mxu0 %v641
    %3043 = vmatpush.msra.mxu0 %v637
    %3044 = vmatpush.msra.mxu0 %v633
    %3045 = vmatpush.msra.mxu0 %v629
    %3046 = vmatpush.msra.mxu0 %v625
    %3047 = vmatpush.msra.mxu0 %v621
    %3048 = vmatpush.msra.mxu0 %v617
    %3049 = vmatmul.f32.gmra.mxu0 %v2173
    %v3050 = vpop.f32.mrf.mxu0
    %v3051 = vadd.f32 %v3031, %v3050
    %3052 = vdwg.mxu0
    %3053 = vmatpush.msra.mxu0 %v741
    %3054 = vmatpush.msra.mxu0 %v737
    %3055 = vmatpush.msra.mxu0 %v733
    %3056 = vmatpush.msra.mxu0 %v729
    %3057 = vmatpush.msra.mxu0 %v725
    %3058 = vmatpush.msra.mxu0 %v721
    %3059 = vmatpush.msra.mxu0 %v717
    %3060 = vmatpush.msra.mxu0 %v713
    %3061 = vmatpush.msra.mxu0 %v709
    %3062 = vmatpush.msra.mxu0 %v705
    %3063 = vmatpush.msra.mxu0 %v701
    %3064 = vmatpush.msra.mxu0 %v697
    %3065 = vmatpush.msra.mxu0 %v693
    %3066 = vmatpush.msra.mxu0 %v689
    %3067 = vmatpush.msra.mxu0 %v685
    %3068 = vmatpush.msra.mxu0 %v681
    %3069 = vmatmul.f32.gmra.mxu0 %v2174
    %v3070 = vpop.f32.mrf.mxu0
    %v3071 = vadd.f32 %v3051, %v3070
    %3072 = vdwg.mxu0
    %3073 = vmatpush.msra.mxu0 %v805
    %3074 = vmatpush.msra.mxu0 %v801
    %3075 = vmatpush.msra.mxu0 %v797
    %3076 = vmatpush.msra.mxu0 %v793
    %3077 = vmatpush.msra.mxu0 %v789
    %3078 = vmatpush.msra.mxu0 %v785
    %3079 = vmatpush.msra.mxu0 %v781
    %3080 = vmatpush.msra.mxu0 %v777
    %3081 = vmatpush.msra.mxu0 %v773
    %3082 = vmatpush.msra.mxu0 %v769
    %3083 = vmatpush.msra.mxu0 %v765
    %3084 = vmatpush.msra.mxu0 %v761
    %3085 = vmatpush.msra.mxu0 %v757
    %3086 = vmatpush.msra.mxu0 %v753
    %3087 = vmatpush.msra.mxu0 %v749
    %3088 = vmatpush.msra.mxu0 %v745
    %3089 = vmatmul.f32.gmra.mxu0 %v2175
    %v3090 = vpop.f32.mrf.mxu0
    %v3091 = vadd.f32 %v3071, %v3090
    %3092 = vdwg.mxu0
    %3093 = vmatpush.msra.mxu0 %v869
    %3094 = vmatpush.msra.mxu0 %v865
    %3095 = vmatpush.msra.mxu0 %v861
    %3096 = vmatpush.msra.mxu0 %v857
    %3097 = vmatpush.msra.mxu0 %v853
    %3098 = vmatpush.msra.mxu0 %v849
    %3099 = vmatpush.msra.mxu0 %v845
    %3100 = vmatpush.msra.mxu0 %v841
    %3101 = vmatpush.msra.mxu0 %v837
    %3102 = vmatpush.msra.mxu0 %v833
    %3103 = vmatpush.msra.mxu0 %v829
    %3104 = vmatpush.msra.mxu0 %v825
    %3105 = vmatpush.msra.mxu0 %v821
    %3106 = vmatpush.msra.mxu0 %v817
    %3107 = vmatpush.msra.mxu0 %v813
    %3108 = vmatpush.msra.mxu0 %v809
    %3109 = vmatmul.f32.gmra.mxu0 %v2176
    %v3110 = vpop.f32.mrf.mxu0
    %v3111 = vadd.f32 %v3091, %v3110
    %3112 = vdwg.mxu0
    %3113 = vmatpush.msra.mxu0 %v933
    %3114 = vmatpush.msra.mxu0 %v929
    %3115 = vmatpush.msra.mxu0 %v925
    %3116 = vmatpush.msra.mxu0 %v921
    %3117 = vmatpush.msra.mxu0 %v917
    %3118 = vmatpush.msra.mxu0 %v913
    %3119 = vmatpush.msra.mxu0 %v909
    %3120 = vmatpush.msra.mxu0 %v905
    %3121 = vmatpush.msra.mxu0 %v901
    %3122 = vmatpush.msra.mxu0 %v897
    %3123 = vmatpush.msra.mxu0 %v893
    %3124 = vmatpush.msra.mxu0 %v889
    %3125 = vmatpush.msra.mxu0 %v885
    %3126 = vmatpush.msra.mxu0 %v881
    %3127 = vmatpush.msra.mxu0 %v877
    %3128 = vmatpush.msra.mxu0 %v873
    %3129 = vmatmul.f32.gmra.mxu0 %v2177
    %v3130 = vpop.f32.mrf.mxu0
    %v3131 = vadd.f32 %v3111, %v3130
    %3132 = vdwg.mxu0
    %3133 = vmatpush.msra.mxu0 %v997
    %3134 = vmatpush.msra.mxu0 %v993
    %3135 = vmatpush.msra.mxu0 %v989
    %3136 = vmatpush.msra.mxu0 %v985
    %3137 = vmatpush.msra.mxu0 %v981
    %3138 = vmatpush.msra.mxu0 %v977
    %3139 = vmatpush.msra.mxu0 %v973
    %3140 = vmatpush.msra.mxu0 %v969
    %3141 = vmatpush.msra.mxu0 %v965
    %3142 = vmatpush.msra.mxu0 %v961
    %3143 = vmatpush.msra.mxu0 %v957
    %3144 = vmatpush.msra.mxu0 %v953
    %3145 = vmatpush.msra.mxu0 %v949
    %3146 = vmatpush.msra.mxu0 %v945
    %3147 = vmatpush.msra.mxu0 %v941
    %3148 = vmatpush.msra.mxu0 %v937
    %3149 = vmatmul.f32.gmra.mxu0 %v2178
    %v3150 = vpop.f32.mrf.mxu0
    %v3151 = vadd.f32 %v3131, %v3150
    %3152 = vdwg.mxu0
    %3153 = vmatpush.msra.mxu0 %v1061
    %3154 = vmatpush.msra.mxu0 %v1057
    %3155 = vmatpush.msra.mxu0 %v1053
    %3156 = vmatpush.msra.mxu0 %v1049
    %3157 = vmatpush.msra.mxu0 %v1045
    %3158 = vmatpush.msra.mxu0 %v1041
    %3159 = vmatpush.msra.mxu0 %v1037
    %3160 = vmatpush.msra.mxu0 %v1033
    %3161 = vmatpush.msra.mxu0 %v1029
    %3162 = vmatpush.msra.mxu0 %v1025
    %3163 = vmatpush.msra.mxu0 %v1021
    %3164 = vmatpush.msra.mxu0 %v1017
    %3165 = vmatpush.msra.mxu0 %v1013
    %3166 = vmatpush.msra.mxu0 %v1009
    %3167 = vmatpush.msra.mxu0 %v1005
    %3168 = vmatpush.msra.mxu0 %v1001
    %3169 = vmatmul.f32.gmra.mxu0 %v2179
    %v3170 = vpop.f32.mrf.mxu0
    %v3171 = vadd.f32 %v3151, %v3170
    %3172 = vdwg.mxu0
    %3173 = vmatpush.msra.mxu0 %v1125
    %3174 = vmatpush.msra.mxu0 %v1121
    %3175 = vmatpush.msra.mxu0 %v1117
    %3176 = vmatpush.msra.mxu0 %v1113
    %3177 = vmatpush.msra.mxu0 %v1109
    %3178 = vmatpush.msra.mxu0 %v1105
    %3179 = vmatpush.msra.mxu0 %v1101
    %3180 = vmatpush.msra.mxu0 %v1097
    %3181 = vmatpush.msra.mxu0 %v1093
    %3182 = vmatpush.msra.mxu0 %v1089
    %3183 = vmatpush.msra.mxu0 %v1085
    %3184 = vmatpush.msra.mxu0 %v1081
    %3185 = vmatpush.msra.mxu0 %v1077
    %3186 = vmatpush.msra.mxu0 %v1073
    %3187 = vmatpush.msra.mxu0 %v1069
    %3188 = vmatpush.msra.mxu0 %v1065
    %3189 = vmatmul.f32.gmra.mxu0 %v2180
    %v3190 = vpop.f32.mrf.mxu0
    %v3191 = vadd.f32 %v3171, %v3190
    %3192 = vdwg.mxu0
    %3193 = vmatpush.msra.mxu0 %v1189
    %3194 = vmatpush.msra.mxu0 %v1185
    %3195 = vmatpush.msra.mxu0 %v1181
    %3196 = vmatpush.msra.mxu0 %v1177
    %3197 = vmatpush.msra.mxu0 %v1173
    %3198 = vmatpush.msra.mxu0 %v1169
    %3199 = vmatpush.msra.mxu0 %v1165
    %3200 = vmatpush.msra.mxu0 %v1161
    %3201 = vmatpush.msra.mxu0 %v1157
    %3202 = vmatpush.msra.mxu0 %v1153
    %3203 = vmatpush.msra.mxu0 %v1149
    %3204 = vmatpush.msra.mxu0 %v1145
    %3205 = vmatpush.msra.mxu0 %v1141
    %3206 = vmatpush.msra.mxu0 %v1137
    %3207 = vmatpush.msra.mxu0 %v1133
    %3208 = vmatpush.msra.mxu0 %v1129
    %3209 = vmatmul.f32.gmra.mxu0 %v2183
    %v3210 = vpop.f32.mrf.mxu0
    %v3211 = vadd.f32 %v3191, %v3210
    %3212 = vdwg.mxu0
    %3213 = vmatpush.msra.mxu0 %v1253
    %3214 = vmatpush.msra.mxu0 %v1249
    %3215 = vmatpush.msra.mxu0 %v1245
    %3216 = vmatpush.msra.mxu0 %v1241
    %3217 = vmatpush.msra.mxu0 %v1237
    %3218 = vmatpush.msra.mxu0 %v1233
    %3219 = vmatpush.msra.mxu0 %v1229
    %3220 = vmatpush.msra.mxu0 %v1225
    %3221 = vmatpush.msra.mxu0 %v1221
    %3222 = vmatpush.msra.mxu0 %v1217
    %3223 = vmatpush.msra.mxu0 %v1213
    %3224 = vmatpush.msra.mxu0 %v1209
    %3225 = vmatpush.msra.mxu0 %v1205
    %3226 = vmatpush.msra.mxu0 %v1201
    %3227 = vmatpush.msra.mxu0 %v1197
    %3228 = vmatpush.msra.mxu0 %v1193
    %3229 = vmatmul.f32.gmra.mxu0 %v2184
    %v3230 = vpop.f32.mrf.mxu0
    %v3231 = vadd.f32 %v3211, %v3230
    %3232 = vdwg.mxu0
    %3233 = vmatpush.msra.mxu0 %v1317
    %3234 = vmatpush.msra.mxu0 %v1313
    %3235 = vmatpush.msra.mxu0 %v1309
    %3236 = vmatpush.msra.mxu0 %v1305
    %3237 = vmatpush.msra.mxu0 %v1301
    %3238 = vmatpush.msra.mxu0 %v1297
    %3239 = vmatpush.msra.mxu0 %v1293
    %3240 = vmatpush.msra.mxu0 %v1289
    %3241 = vmatpush.msra.mxu0 %v1285
    %3242 = vmatpush.msra.mxu0 %v1281
    %3243 = vmatpush.msra.mxu0 %v1277
    %3244 = vmatpush.msra.mxu0 %v1273
    %3245 = vmatpush.msra.mxu0 %v1269
    %3246 = vmatpush.msra.mxu0 %v1265
    %3247 = vmatpush.msra.mxu0 %v1261
    %3248 = vmatpush.msra.mxu0 %v1257
    %3249 = vmatmul.f32.gmra.mxu0 %v2185
    %v3250 = vpop.f32.mrf.mxu0
    %v3251 = vadd.f32 %v3231, %v3250
    %3252 = vdwg.mxu0
    %3253 = vmatpush.msra.mxu0 %v1381
    %3254 = vmatpush.msra.mxu0 %v1377
    %3255 = vmatpush.msra.mxu0 %v1373
    %3256 = vmatpush.msra.mxu0 %v1369
    %3257 = vmatpush.msra.mxu0 %v1365
    %3258 = vmatpush.msra.mxu0 %v1361
    %3259 = vmatpush.msra.mxu0 %v1357
    %3260 = vmatpush.msra.mxu0 %v1353
    %3261 = vmatpush.msra.mxu0 %v1349
    %3262 = vmatpush.msra.mxu0 %v1345
    %3263 = vmatpush.msra.mxu0 %v1341
    %3264 = vmatpush.msra.mxu0 %v1337
    %3265 = vmatpush.msra.mxu0 %v1333
    %3266 = vmatpush.msra.mxu0 %v1329
    %3267 = vmatpush.msra.mxu0 %v1325
    %3268 = vmatpush.msra.mxu0 %v1321
    %3269 = vmatmul.f32.gmra.mxu0 %v2186
    %v3270 = vpop.f32.mrf.mxu0
    %v3271 = vadd.f32 %v3251, %v3270
    %3272 = vdwg.mxu0
    %3273 = vmatpush.msra.mxu0 %v1445
    %3274 = vmatpush.msra.mxu0 %v1441
    %3275 = vmatpush.msra.mxu0 %v1437
    %3276 = vmatpush.msra.mxu0 %v1433
    %3277 = vmatpush.msra.mxu0 %v1429
    %3278 = vmatpush.msra.mxu0 %v1425
    %3279 = vmatpush.msra.mxu0 %v1421
    %3280 = vmatpush.msra.mxu0 %v1417
    %3281 = vmatpush.msra.mxu0 %v1413
    %3282 = vmatpush.msra.mxu0 %v1409
    %3283 = vmatpush.msra.mxu0 %v1405
    %3284 = vmatpush.msra.mxu0 %v1401
    %3285 = vmatpush.msra.mxu0 %v1397
    %3286 = vmatpush.msra.mxu0 %v1393
    %3287 = vmatpush.msra.mxu0 %v1389
    %3288 = vmatpush.msra.mxu0 %v1385
    %3289 = vmatmul.f32.gmra.mxu0 %v2187
    %v3290 = vpop.f32.mrf.mxu0
    %v3291 = vadd.f32 %v3271, %v3290
    %3292 = vdwg.mxu0
    %3293 = vmatpush.msra.mxu0 %v1509
    %3294 = vmatpush.msra.mxu0 %v1505
    %3295 = vmatpush.msra.mxu0 %v1501
    %3296 = vmatpush.msra.mxu0 %v1497
    %3297 = vmatpush.msra.mxu0 %v1493
    %3298 = vmatpush.msra.mxu0 %v1489
    %3299 = vmatpush.msra.mxu0 %v1485
    %3300 = vmatpush.msra.mxu0 %v1481
    %3301 = vmatpush.msra.mxu0 %v1477
    %3302 = vmatpush.msra.mxu0 %v1473
    %3303 = vmatpush.msra.mxu0 %v1469
    %3304 = vmatpush.msra.mxu0 %v1465
    %3305 = vmatpush.msra.mxu0 %v1461
    %3306 = vmatpush.msra.mxu0 %v1457
    %3307 = vmatpush.msra.mxu0 %v1453
    %3308 = vmatpush.msra.mxu0 %v1449
    %3309 = vmatmul.f32.gmra.mxu0 %v2188
    %v3310 = vpop.f32.mrf.mxu0
    %v3311 = vadd.f32 %v3291, %v3310
    %3312 = vdwg.mxu0
    %3313 = vmatpush.msra.mxu0 %v1573
    %3314 = vmatpush.msra.mxu0 %v1569
    %3315 = vmatpush.msra.mxu0 %v1565
    %3316 = vmatpush.msra.mxu0 %v1561
    %3317 = vmatpush.msra.mxu0 %v1557
    %3318 = vmatpush.msra.mxu0 %v1553
    %3319 = vmatpush.msra.mxu0 %v1549
    %3320 = vmatpush.msra.mxu0 %v1545
    %3321 = vmatpush.msra.mxu0 %v1541
    %3322 = vmatpush.msra.mxu0 %v1537
    %3323 = vmatpush.msra.mxu0 %v1533
    %3324 = vmatpush.msra.mxu0 %v1529
    %3325 = vmatpush.msra.mxu0 %v1525
    %3326 = vmatpush.msra.mxu0 %v1521
    %3327 = vmatpush.msra.mxu0 %v1517
    %3328 = vmatpush.msra.mxu0 %v1513
    %3329 = vmatmul.f32.gmra.mxu0 %v2189
    %v3330 = vpop.f32.mrf.mxu0
    %v3331 = vadd.f32 %v3311, %v3330
    %3332 = vdwg.mxu0
    %3333 = vmatpush.msra.mxu0 %v1637
    %3334 = vmatpush.msra.mxu0 %v1633
    %3335 = vmatpush.msra.mxu0 %v1629
    %3336 = vmatpush.msra.mxu0 %v1625
    %3337 = vmatpush.msra.mxu0 %v1621
    %3338 = vmatpush.msra.mxu0 %v1617
    %3339 = vmatpush.msra.mxu0 %v1613
    %3340 = vmatpush.msra.mxu0 %v1609
    %3341 = vmatpush.msra.mxu0 %v1605
    %3342 = vmatpush.msra.mxu0 %v1601
    %3343 = vmatpush.msra.mxu0 %v1597
    %3344 = vmatpush.msra.mxu0 %v1593
    %3345 = vmatpush.msra.mxu0 %v1589
    %3346 = vmatpush.msra.mxu0 %v1585
    %3347 = vmatpush.msra.mxu0 %v1581
    %3348 = vmatpush.msra.mxu0 %v1577
    %3349 = vmatmul.f32.gmra.mxu0 %v2190
    %v3350 = vpop.f32.mrf.mxu0
    %v3351 = vadd.f32 %v3331, %v3350
    %3352 = vdwg.mxu0
    %3353 = vmatpush.msra.mxu0 %v1701
    %3354 = vmatpush.msra.mxu0 %v1697
    %3355 = vmatpush.msra.mxu0 %v1693
    %3356 = vmatpush.msra.mxu0 %v1689
    %3357 = vmatpush.msra.mxu0 %v1685
    %3358 = vmatpush.msra.mxu0 %v1681
    %3359 = vmatpush.msra.mxu0 %v1677
    %3360 = vmatpush.msra.mxu0 %v1673
    %3361 = vmatpush.msra.mxu0 %v1669
    %3362 = vmatpush.msra.mxu0 %v1665
    %3363 = vmatpush.msra.mxu0 %v1661
    %3364 = vmatpush.msra.mxu0 %v1657
    %3365 = vmatpush.msra.mxu0 %v1653
    %3366 = vmatpush.msra.mxu0 %v1649
    %3367 = vmatpush.msra.mxu0 %v1645
    %3368 = vmatpush.msra.mxu0 %v1641
    %3369 = vmatmul.f32.gmra.mxu0 %v2193
    %v3370 = vpop.f32.mrf.mxu0
    %v3371 = vadd.f32 %v3351, %v3370
    %3372 = vdwg.mxu0
    %3373 = vmatpush.msra.mxu0 %v1765
    %3374 = vmatpush.msra.mxu0 %v1761
    %3375 = vmatpush.msra.mxu0 %v1757
    %3376 = vmatpush.msra.mxu0 %v1753
    %3377 = vmatpush.msra.mxu0 %v1749
    %3378 = vmatpush.msra.mxu0 %v1745
    %3379 = vmatpush.msra.mxu0 %v1741
    %3380 = vmatpush.msra.mxu0 %v1737
    %3381 = vmatpush.msra.mxu0 %v1733
    %3382 = vmatpush.msra.mxu0 %v1729
    %3383 = vmatpush.msra.mxu0 %v1725
    %3384 = vmatpush.msra.mxu0 %v1721
    %3385 = vmatpush.msra.mxu0 %v1717
    %3386 = vmatpush.msra.mxu0 %v1713
    %3387 = vmatpush.msra.mxu0 %v1709
    %3388 = vmatpush.msra.mxu0 %v1705
    %3389 = vmatmul.f32.gmra.mxu0 %v2194
    %v3390 = vpop.f32.mrf.mxu0
    %v3391 = vadd.f32 %v3371, %v3390
    %3392 = vdwg.mxu0
    %3393 = vmatpush.msra.mxu0 %v1829
    %3394 = vmatpush.msra.mxu0 %v1825
    %3395 = vmatpush.msra.mxu0 %v1821
    %3396 = vmatpush.msra.mxu0 %v1817
    %3397 = vmatpush.msra.mxu0 %v1813
    %3398 = vmatpush.msra.mxu0 %v1809
    %3399 = vmatpush.msra.mxu0 %v1805
    %3400 = vmatpush.msra.mxu0 %v1801
    %3401 = vmatpush.msra.mxu0 %v1797
    %3402 = vmatpush.msra.mxu0 %v1793
    %3403 = vmatpush.msra.mxu0 %v1789
    %3404 = vmatpush.msra.mxu0 %v1785
    %3405 = vmatpush.msra.mxu0 %v1781
    %3406 = vmatpush.msra.mxu0 %v1777
    %3407 = vmatpush.msra.mxu0 %v1773
    %3408 = vmatpush.msra.mxu0 %v1769
    %3409 = vmatmul.f32.gmra.mxu0 %v2195
    %v3410 = vpop.f32.mrf.mxu0
    %v3411 = vadd.f32 %v3391, %v3410
    %3412 = vdwg.mxu0
    %3413 = vmatpush.msra.mxu0 %v1893
    %3414 = vmatpush.msra.mxu0 %v1889
    %3415 = vmatpush.msra.mxu0 %v1885
    %3416 = vmatpush.msra.mxu0 %v1881
    %3417 = vmatpush.msra.mxu0 %v1877
    %3418 = vmatpush.msra.mxu0 %v1873
    %3419 = vmatpush.msra.mxu0 %v1869
    %3420 = vmatpush.msra.mxu0 %v1865
    %3421 = vmatpush.msra.mxu0 %v1861
    %3422 = vmatpush.msra.mxu0 %v1857
    %3423 = vmatpush.msra.mxu0 %v1853
    %3424 = vmatpush.msra.mxu0 %v1849
    %3425 = vmatpush.msra.mxu0 %v1845
    %3426 = vmatpush.msra.mxu0 %v1841
    %3427 = vmatpush.msra.mxu0 %v1837
    %3428 = vmatpush.msra.mxu0 %v1833
    %3429 = vmatmul.f32.gmra.mxu0 %v2196
    %v3430 = vpop.f32.mrf.mxu0
    %v3431 = vadd.f32 %v3411, %v3430
    %3432 = vdwg.mxu0
    %3433 = vmatpush.msra.mxu0 %v1957
    %3434 = vmatpush.msra.mxu0 %v1953
    %3435 = vmatpush.msra.mxu0 %v1949
    %3436 = vmatpush.msra.mxu0 %v1945
    %3437 = vmatpush.msra.mxu0 %v1941
    %3438 = vmatpush.msra.mxu0 %v1937
    %3439 = vmatpush.msra.mxu0 %v1933
    %3440 = vmatpush.msra.mxu0 %v1929
    %3441 = vmatpush.msra.mxu0 %v1925
    %3442 = vmatpush.msra.mxu0 %v1921
    %3443 = vmatpush.msra.mxu0 %v1917
    %3444 = vmatpush.msra.mxu0 %v1913
    %3445 = vmatpush.msra.mxu0 %v1909
    %3446 = vmatpush.msra.mxu0 %v1905
    %3447 = vmatpush.msra.mxu0 %v1901
    %3448 = vmatpush.msra.mxu0 %v1897
    %3449 = vmatmul.f32.gmra.mxu0 %v2197
    %v3450 = vpop.f32.mrf.mxu0
    %v3451 = vadd.f32 %v3431, %v3450
    %3452 = vdwg.mxu0
    %3453 = vmatpush.msra.mxu0 %v2021
    %3454 = vmatpush.msra.mxu0 %v2017
    %3455 = vmatpush.msra.mxu0 %v2013
    %3456 = vmatpush.msra.mxu0 %v2009
    %3457 = vmatpush.msra.mxu0 %v2005
    %3458 = vmatpush.msra.mxu0 %v2001
    %3459 = vmatpush.msra.mxu0 %v1997
    %3460 = vmatpush.msra.mxu0 %v1993
    %3461 = vmatpush.msra.mxu0 %v1989
    %3462 = vmatpush.msra.mxu0 %v1985
    %3463 = vmatpush.msra.mxu0 %v1981
    %3464 = vmatpush.msra.mxu0 %v1977
    %3465 = vmatpush.msra.mxu0 %v1973
    %3466 = vmatpush.msra.mxu0 %v1969
    %3467 = vmatpush.msra.mxu0 %v1965
    %3468 = vmatpush.msra.mxu0 %v1961
    %3469 = vmatmul.f32.gmra.mxu0 %v2198
    %v3470 = vpop.f32.mrf.mxu0
    %v3471 = vadd.f32 %v3451, %v3470
    %3472 = vdwg.mxu0
    %3473 = vmatpush.msra.mxu0 %v2085
    %3474 = vmatpush.msra.mxu0 %v2081
    %3475 = vmatpush.msra.mxu0 %v2077
    %3476 = vmatpush.msra.mxu0 %v2073
    %3477 = vmatpush.msra.mxu0 %v2069
    %3478 = vmatpush.msra.mxu0 %v2065
    %3479 = vmatpush.msra.mxu0 %v2061
    %3480 = vmatpush.msra.mxu0 %v2057
    %3481 = vmatpush.msra.mxu0 %v2053
    %3482 = vmatpush.msra.mxu0 %v2049
    %3483 = vmatpush.msra.mxu0 %v2045
    %3484 = vmatpush.msra.mxu0 %v2041
    %3485 = vmatpush.msra.mxu0 %v2037
    %3486 = vmatpush.msra.mxu0 %v2033
    %3487 = vmatpush.msra.mxu0 %v2029
    %3488 = vmatpush.msra.mxu0 %v2025
    %3489 = vmatmul.f32.gmra.mxu0 %v2199
    %v3490 = vpop.f32.mrf.mxu0
    %v3491 = vadd.f32 %v3471, %v3490
    %3492 = vdwg.mxu0
    %3493 = vmatpush.msra.mxu0 %v2149
    %3494 = vmatpush.msra.mxu0 %v2145
    %3495 = vmatpush.msra.mxu0 %v2141
    %3496 = vmatpush.msra.mxu0 %v2137
    %3497 = vmatpush.msra.mxu0 %v2133
    %3498 = vmatpush.msra.mxu0 %v2129
    %3499 = vmatpush.msra.mxu0 %v2125
    %3500 = vmatpush.msra.mxu0 %v2121
    %3501 = vmatpush.msra.mxu0 %v2117
    %3502 = vmatpush.msra.mxu0 %v2113
    %3503 = vmatpush.msra.mxu0 %v2109
    %3504 = vmatpush.msra.mxu0 %v2105
    %3505 = vmatpush.msra.mxu0 %v2101
    %3506 = vmatpush.msra.mxu0 %v2097
    %3507 = vmatpush.msra.mxu0 %v2093
    %3508 = vmatpush.msra.mxu0 %v2089
    %3509 = vmatmul.f32.gmra.mxu0 %v2200
    %v3510 = vpop.f32.mrf.mxu0
    %v3511 = vadd.f32 %v3491, %v3510
    %3512 = vdwg.mxu0
    %3513 = vmatpush.msra.mxu0 %v166
    %3514 = vmatpush.msra.mxu0 %v162
    %3515 = vmatpush.msra.mxu0 %v158
    %3516 = vmatpush.msra.mxu0 %v154
    %3517 = vmatpush.msra.mxu0 %v150
    %3518 = vmatpush.msra.mxu0 %v146
    %3519 = vmatpush.msra.mxu0 %v142
    %3520 = vmatpush.msra.mxu0 %v138
    %3521 = vmatpush.msra.mxu0 %v134
    %3522 = vmatpush.msra.mxu0 %v130
    %3523 = vmatpush.msra.mxu0 %v126
    %3524 = vmatpush.msra.mxu0 %v122
    %3525 = vmatpush.msra.mxu0 %v118
    %3526 = vmatpush.msra.mxu0 %v114
    %3527 = vmatpush.msra.mxu0 %v110
    %3528 = vmatpush.msra.mxu0 %v106
    %3529 = vmatmul.f32.gmra.mxu0 %v2163
    %v3530 = vpop.f32.mrf.mxu0
    %v3531 = vadd.f32 0.0, %v3530
    %3532 = vdwg.mxu0
    %3533 = vmatpush.msra.mxu0 %v230
    %3534 = vmatpush.msra.mxu0 %v226
    %3535 = vmatpush.msra.mxu0 %v222
    %3536 = vmatpush.msra.mxu0 %v218
    %3537 = vmatpush.msra.mxu0 %v214
    %3538 = vmatpush.msra.mxu0 %v210
    %3539 = vmatpush.msra.mxu0 %v206
    %3540 = vmatpush.msra.mxu0 %v202
    %3541 = vmatpush.msra.mxu0 %v198
    %3542 = vmatpush.msra.mxu0 %v194
    %3543 = vmatpush.msra.mxu0 %v190
    %3544 = vmatpush.msra.mxu0 %v186
    %3545 = vmatpush.msra.mxu0 %v182
    %3546 = vmatpush.msra.mxu0 %v178
    %3547 = vmatpush.msra.mxu0 %v174
    %3548 = vmatpush.msra.mxu0 %v170
    %3549 = vmatmul.f32.gmra.mxu0 %v2164
    %v3550 = vpop.f32.mrf.mxu0
    %v3551 = vadd.f32 %v3531, %v3550
    %3552 = vdwg.mxu0
    %3553 = vmatpush.msra.mxu0 %v294
    %3554 = vmatpush.msra.mxu0 %v290
    %3555 = vmatpush.msra.mxu0 %v286
    %3556 = vmatpush.msra.mxu0 %v282
    %3557 = vmatpush.msra.mxu0 %v278
    %3558 = vmatpush.msra.mxu0 %v274
    %3559 = vmatpush.msra.mxu0 %v270
    %3560 = vmatpush.msra.mxu0 %v266
    %3561 = vmatpush.msra.mxu0 %v262
    %3562 = vmatpush.msra.mxu0 %v258
    %3563 = vmatpush.msra.mxu0 %v254
    %3564 = vmatpush.msra.mxu0 %v250
    %3565 = vmatpush.msra.mxu0 %v246
    %3566 = vmatpush.msra.mxu0 %v242
    %3567 = vmatpush.msra.mxu0 %v238
    %3568 = vmatpush.msra.mxu0 %v234
    %3569 = vmatmul.f32.gmra.mxu0 %v2165
    %v3570 = vpop.f32.mrf.mxu0
    %v3571 = vadd.f32 %v3551, %v3570
    %3572 = vdwg.mxu0
    %3573 = vmatpush.msra.mxu0 %v358
    %3574 = vmatpush.msra.mxu0 %v354
    %3575 = vmatpush.msra.mxu0 %v350
    %3576 = vmatpush.msra.mxu0 %v346
    %3577 = vmatpush.msra.mxu0 %v342
    %3578 = vmatpush.msra.mxu0 %v338
    %3579 = vmatpush.msra.mxu0 %v334
    %3580 = vmatpush.msra.mxu0 %v330
    %3581 = vmatpush.msra.mxu0 %v326
    %3582 = vmatpush.msra.mxu0 %v322
    %3583 = vmatpush.msra.mxu0 %v318
    %3584 = vmatpush.msra.mxu0 %v314
    %3585 = vmatpush.msra.mxu0 %v310
    %3586 = vmatpush.msra.mxu0 %v306
    %3587 = vmatpush.msra.mxu0 %v302
    %3588 = vmatpush.msra.mxu0 %v298
    %3589 = vmatmul.f32.gmra.mxu0 %v2166
    %v3590 = vpop.f32.mrf.mxu0
    %v3591 = vadd.f32 %v3571, %v3590
    %3592 = vdwg.mxu0
    %3593 = vmatpush.msra.mxu0 %v422
    %3594 = vmatpush.msra.mxu0 %v418
    %3595 = vmatpush.msra.mxu0 %v414
    %3596 = vmatpush.msra.mxu0 %v410
    %3597 = vmatpush.msra.mxu0 %v406
    %3598 = vmatpush.msra.mxu0 %v402
    %3599 = vmatpush.msra.mxu0 %v398
    %3600 = vmatpush.msra.mxu0 %v394
    %3601 = vmatpush.msra.mxu0 %v390
    %3602 = vmatpush.msra.mxu0 %v386
    %3603 = vmatpush.msra.mxu0 %v382
    %3604 = vmatpush.msra.mxu0 %v378
    %3605 = vmatpush.msra.mxu0 %v374
    %3606 = vmatpush.msra.mxu0 %v370
    %3607 = vmatpush.msra.mxu0 %v366
    %3608 = vmatpush.msra.mxu0 %v362
    %3609 = vmatmul.f32.gmra.mxu0 %v2167
    %v3610 = vpop.f32.mrf.mxu0
    %v3611 = vadd.f32 %v3591, %v3610
    %3612 = vdwg.mxu0
    %3613 = vmatpush.msra.mxu0 %v486
    %3614 = vmatpush.msra.mxu0 %v482
    %3615 = vmatpush.msra.mxu0 %v478
    %3616 = vmatpush.msra.mxu0 %v474
    %3617 = vmatpush.msra.mxu0 %v470
    %3618 = vmatpush.msra.mxu0 %v466
    %3619 = vmatpush.msra.mxu0 %v462
    %3620 = vmatpush.msra.mxu0 %v458
    %3621 = vmatpush.msra.mxu0 %v454
    %3622 = vmatpush.msra.mxu0 %v450
    %3623 = vmatpush.msra.mxu0 %v446
    %3624 = vmatpush.msra.mxu0 %v442
    %3625 = vmatpush.msra.mxu0 %v438
    %3626 = vmatpush.msra.mxu0 %v434
    %3627 = vmatpush.msra.mxu0 %v430
    %3628 = vmatpush.msra.mxu0 %v426
    %3629 = vmatmul.f32.gmra.mxu0 %v2168
    %v3630 = vpop.f32.mrf.mxu0
    %v3631 = vadd.f32 %v3611, %v3630
    %3632 = vdwg.mxu0
    %3633 = vmatpush.msra.mxu0 %v550
    %3634 = vmatpush.msra.mxu0 %v546
    %3635 = vmatpush.msra.mxu0 %v542
    %3636 = vmatpush.msra.mxu0 %v538
    %3637 = vmatpush.msra.mxu0 %v534
    %3638 = vmatpush.msra.mxu0 %v530
    %3639 = vmatpush.msra.mxu0 %v526
    %3640 = vmatpush.msra.mxu0 %v522
    %3641 = vmatpush.msra.mxu0 %v518
    %3642 = vmatpush.msra.mxu0 %v514
    %3643 = vmatpush.msra.mxu0 %v510
    %3644 = vmatpush.msra.mxu0 %v506
    %3645 = vmatpush.msra.mxu0 %v502
    %3646 = vmatpush.msra.mxu0 %v498
    %3647 = vmatpush.msra.mxu0 %v494
    %3648 = vmatpush.msra.mxu0 %v490
    %3649 = vmatmul.f32.gmra.mxu0 %v2169
    %v3650 = vpop.f32.mrf.mxu0
    %v3651 = vadd.f32 %v3631, %v3650
    %3652 = vdwg.mxu0
    %3653 = vmatpush.msra.mxu0 %v614
    %3654 = vmatpush.msra.mxu0 %v610
    %3655 = vmatpush.msra.mxu0 %v606
    %3656 = vmatpush.msra.mxu0 %v602
    %3657 = vmatpush.msra.mxu0 %v598
    %3658 = vmatpush.msra.mxu0 %v594
    %3659 = vmatpush.msra.mxu0 %v590
    %3660 = vmatpush.msra.mxu0 %v586
    %3661 = vmatpush.msra.mxu0 %v582
    %3662 = vmatpush.msra.mxu0 %v578
    %3663 = vmatpush.msra.mxu0 %v574
    %3664 = vmatpush.msra.mxu0 %v570
    %3665 = vmatpush.msra.mxu0 %v566
    %3666 = vmatpush.msra.mxu0 %v562
    %3667 = vmatpush.msra.mxu0 %v558
    %3668 = vmatpush.msra.mxu0 %v554
    %3669 = vmatmul.f32.gmra.mxu0 %v2170
    %v3670 = vpop.f32.mrf.mxu0
    %v3671 = vadd.f32 %v3651, %v3670
    %3672 = vdwg.mxu0
    %3673 = vmatpush.msra.mxu0 %v678
    %3674 = vmatpush.msra.mxu0 %v674
    %3675 = vmatpush.msra.mxu0 %v670
    %3676 = vmatpush.msra.mxu0 %v666
    %3677 = vmatpush.msra.mxu0 %v662
    %3678 = vmatpush.msra.mxu0 %v658
    %3679 = vmatpush.msra.mxu0 %v654
    %3680 = vmatpush.msra.mxu0 %v650
    %3681 = vmatpush.msra.mxu0 %v646
    %3682 = vmatpush.msra.mxu0 %v642
    %3683 = vmatpush.msra.mxu0 %v638
    %3684 = vmatpush.msra.mxu0 %v634
    %3685 = vmatpush.msra.mxu0 %v630
    %3686 = vmatpush.msra.mxu0 %v626
    %3687 = vmatpush.msra.mxu0 %v622
    %3688 = vmatpush.msra.mxu0 %v618
    %3689 = vmatmul.f32.gmra.mxu0 %v2173
    %v3690 = vpop.f32.mrf.mxu0
    %v3691 = vadd.f32 %v3671, %v3690
    %3692 = vdwg.mxu0
    %3693 = vmatpush.msra.mxu0 %v742
    %3694 = vmatpush.msra.mxu0 %v738
    %3695 = vmatpush.msra.mxu0 %v734
    %3696 = vmatpush.msra.mxu0 %v730
    %3697 = vmatpush.msra.mxu0 %v726
    %3698 = vmatpush.msra.mxu0 %v722
    %3699 = vmatpush.msra.mxu0 %v718
    %3700 = vmatpush.msra.mxu0 %v714
    %3701 = vmatpush.msra.mxu0 %v710
    %3702 = vmatpush.msra.mxu0 %v706
    %3703 = vmatpush.msra.mxu0 %v702
    %3704 = vmatpush.msra.mxu0 %v698
    %3705 = vmatpush.msra.mxu0 %v694
    %3706 = vmatpush.msra.mxu0 %v690
    %3707 = vmatpush.msra.mxu0 %v686
    %3708 = vmatpush.msra.mxu0 %v682
    %3709 = vmatmul.f32.gmra.mxu0 %v2174
    %v3710 = vpop.f32.mrf.mxu0
    %v3711 = vadd.f32 %v3691, %v3710
    %3712 = vdwg.mxu0
    %3713 = vmatpush.msra.mxu0 %v806
    %3714 = vmatpush.msra.mxu0 %v802
    %3715 = vmatpush.msra.mxu0 %v798
    %3716 = vmatpush.msra.mxu0 %v794
    %3717 = vmatpush.msra.mxu0 %v790
    %3718 = vmatpush.msra.mxu0 %v786
    %3719 = vmatpush.msra.mxu0 %v782
    %3720 = vmatpush.msra.mxu0 %v778
    %3721 = vmatpush.msra.mxu0 %v774
    %3722 = vmatpush.msra.mxu0 %v770
    %3723 = vmatpush.msra.mxu0 %v766
    %3724 = vmatpush.msra.mxu0 %v762
    %3725 = vmatpush.msra.mxu0 %v758
    %3726 = vmatpush.msra.mxu0 %v754
    %3727 = vmatpush.msra.mxu0 %v750
    %3728 = vmatpush.msra.mxu0 %v746
    %3729 = vmatmul.f32.gmra.mxu0 %v2175
    %v3730 = vpop.f32.mrf.mxu0
    %v3731 = vadd.f32 %v3711, %v3730
    %3732 = vdwg.mxu0
    %3733 = vmatpush.msra.mxu0 %v870
    %3734 = vmatpush.msra.mxu0 %v866
    %3735 = vmatpush.msra.mxu0 %v862
    %3736 = vmatpush.msra.mxu0 %v858
    %3737 = vmatpush.msra.mxu0 %v854
    %3738 = vmatpush.msra.mxu0 %v850
    %3739 = vmatpush.msra.mxu0 %v846
    %3740 = vmatpush.msra.mxu0 %v842
    %3741 = vmatpush.msra.mxu0 %v838
    %3742 = vmatpush.msra.mxu0 %v834
    %3743 = vmatpush.msra.mxu0 %v830
    %3744 = vmatpush.msra.mxu0 %v826
    %3745 = vmatpush.msra.mxu0 %v822
    %3746 = vmatpush.msra.mxu0 %v818
    %3747 = vmatpush.msra.mxu0 %v814
    %3748 = vmatpush.msra.mxu0 %v810
    %3749 = vmatmul.f32.gmra.mxu0 %v2176
    %v3750 = vpop.f32.mrf.mxu0
    %v3751 = vadd.f32 %v3731, %v3750
    %3752 = vdwg.mxu0
    %3753 = vmatpush.msra.mxu0 %v934
    %3754 = vmatpush.msra.mxu0 %v930
    %3755 = vmatpush.msra.mxu0 %v926
    %3756 = vmatpush.msra.mxu0 %v922
    %3757 = vmatpush.msra.mxu0 %v918
    %3758 = vmatpush.msra.mxu0 %v914
    %3759 = vmatpush.msra.mxu0 %v910
    %3760 = vmatpush.msra.mxu0 %v906
    %3761 = vmatpush.msra.mxu0 %v902
    %3762 = vmatpush.msra.mxu0 %v898
    %3763 = vmatpush.msra.mxu0 %v894
    %3764 = vmatpush.msra.mxu0 %v890
    %3765 = vmatpush.msra.mxu0 %v886
    %3766 = vmatpush.msra.mxu0 %v882
    %3767 = vmatpush.msra.mxu0 %v878
    %3768 = vmatpush.msra.mxu0 %v874
    %3769 = vmatmul.f32.gmra.mxu0 %v2177
    %v3770 = vpop.f32.mrf.mxu0
    %v3771 = vadd.f32 %v3751, %v3770
    %3772 = vdwg.mxu0
    %3773 = vmatpush.msra.mxu0 %v998
    %3774 = vmatpush.msra.mxu0 %v994
    %3775 = vmatpush.msra.mxu0 %v990
    %3776 = vmatpush.msra.mxu0 %v986
    %3777 = vmatpush.msra.mxu0 %v982
    %3778 = vmatpush.msra.mxu0 %v978
    %3779 = vmatpush.msra.mxu0 %v974
    %3780 = vmatpush.msra.mxu0 %v970
    %3781 = vmatpush.msra.mxu0 %v966
    %3782 = vmatpush.msra.mxu0 %v962
    %3783 = vmatpush.msra.mxu0 %v958
    %3784 = vmatpush.msra.mxu0 %v954
    %3785 = vmatpush.msra.mxu0 %v950
    %3786 = vmatpush.msra.mxu0 %v946
    %3787 = vmatpush.msra.mxu0 %v942
    %3788 = vmatpush.msra.mxu0 %v938
    %3789 = vmatmul.f32.gmra.mxu0 %v2178
    %v3790 = vpop.f32.mrf.mxu0
    %v3791 = vadd.f32 %v3771, %v3790
    %3792 = vdwg.mxu0
    %3793 = vmatpush.msra.mxu0 %v1062
    %3794 = vmatpush.msra.mxu0 %v1058
    %3795 = vmatpush.msra.mxu0 %v1054
    %3796 = vmatpush.msra.mxu0 %v1050
    %3797 = vmatpush.msra.mxu0 %v1046
    %3798 = vmatpush.msra.mxu0 %v1042
    %3799 = vmatpush.msra.mxu0 %v1038
    %3800 = vmatpush.msra.mxu0 %v1034
    %3801 = vmatpush.msra.mxu0 %v1030
    %3802 = vmatpush.msra.mxu0 %v1026
    %3803 = vmatpush.msra.mxu0 %v1022
    %3804 = vmatpush.msra.mxu0 %v1018
    %3805 = vmatpush.msra.mxu0 %v1014
    %3806 = vmatpush.msra.mxu0 %v1010
    %3807 = vmatpush.msra.mxu0 %v1006
    %3808 = vmatpush.msra.mxu0 %v1002
    %3809 = vmatmul.f32.gmra.mxu0 %v2179
    %v3810 = vpop.f32.mrf.mxu0
    %v3811 = vadd.f32 %v3791, %v3810
    %3812 = vdwg.mxu0
    %3813 = vmatpush.msra.mxu0 %v1126
    %3814 = vmatpush.msra.mxu0 %v1122
    %3815 = vmatpush.msra.mxu0 %v1118
    %3816 = vmatpush.msra.mxu0 %v1114
    %3817 = vmatpush.msra.mxu0 %v1110
    %3818 = vmatpush.msra.mxu0 %v1106
    %3819 = vmatpush.msra.mxu0 %v1102
    %3820 = vmatpush.msra.mxu0 %v1098
    %3821 = vmatpush.msra.mxu0 %v1094
    %3822 = vmatpush.msra.mxu0 %v1090
    %3823 = vmatpush.msra.mxu0 %v1086
    %3824 = vmatpush.msra.mxu0 %v1082
    %3825 = vmatpush.msra.mxu0 %v1078
    %3826 = vmatpush.msra.mxu0 %v1074
    %3827 = vmatpush.msra.mxu0 %v1070
    %3828 = vmatpush.msra.mxu0 %v1066
    %3829 = vmatmul.f32.gmra.mxu0 %v2180
    %v3830 = vpop.f32.mrf.mxu0
    %v3831 = vadd.f32 %v3811, %v3830
    %3832 = vdwg.mxu0
    %3833 = vmatpush.msra.mxu0 %v1190
    %3834 = vmatpush.msra.mxu0 %v1186
    %3835 = vmatpush.msra.mxu0 %v1182
    %3836 = vmatpush.msra.mxu0 %v1178
    %3837 = vmatpush.msra.mxu0 %v1174
    %3838 = vmatpush.msra.mxu0 %v1170
    %3839 = vmatpush.msra.mxu0 %v1166
    %3840 = vmatpush.msra.mxu0 %v1162
    %3841 = vmatpush.msra.mxu0 %v1158
    %3842 = vmatpush.msra.mxu0 %v1154
    %3843 = vmatpush.msra.mxu0 %v1150
    %3844 = vmatpush.msra.mxu0 %v1146
    %3845 = vmatpush.msra.mxu0 %v1142
    %3846 = vmatpush.msra.mxu0 %v1138
    %3847 = vmatpush.msra.mxu0 %v1134
    %3848 = vmatpush.msra.mxu0 %v1130
    %3849 = vmatmul.f32.gmra.mxu0 %v2183
    %v3850 = vpop.f32.mrf.mxu0
    %v3851 = vadd.f32 %v3831, %v3850
    %3852 = vdwg.mxu0
    %3853 = vmatpush.msra.mxu0 %v1254
    %3854 = vmatpush.msra.mxu0 %v1250
    %3855 = vmatpush.msra.mxu0 %v1246
    %3856 = vmatpush.msra.mxu0 %v1242
    %3857 = vmatpush.msra.mxu0 %v1238
    %3858 = vmatpush.msra.mxu0 %v1234
    %3859 = vmatpush.msra.mxu0 %v1230
    %3860 = vmatpush.msra.mxu0 %v1226
    %3861 = vmatpush.msra.mxu0 %v1222
    %3862 = vmatpush.msra.mxu0 %v1218
    %3863 = vmatpush.msra.mxu0 %v1214
    %3864 = vmatpush.msra.mxu0 %v1210
    %3865 = vmatpush.msra.mxu0 %v1206
    %3866 = vmatpush.msra.mxu0 %v1202
    %3867 = vmatpush.msra.mxu0 %v1198
    %3868 = vmatpush.msra.mxu0 %v1194
    %3869 = vmatmul.f32.gmra.mxu0 %v2184
    %v3870 = vpop.f32.mrf.mxu0
    %v3871 = vadd.f32 %v3851, %v3870
    %3872 = vdwg.mxu0
    %3873 = vmatpush.msra.mxu0 %v1318
    %3874 = vmatpush.msra.mxu0 %v1314
    %3875 = vmatpush.msra.mxu0 %v1310
    %3876 = vmatpush.msra.mxu0 %v1306
    %3877 = vmatpush.msra.mxu0 %v1302
    %3878 = vmatpush.msra.mxu0 %v1298
    %3879 = vmatpush.msra.mxu0 %v1294
    %3880 = vmatpush.msra.mxu0 %v1290
    %3881 = vmatpush.msra.mxu0 %v1286
    %3882 = vmatpush.msra.mxu0 %v1282
    %3883 = vmatpush.msra.mxu0 %v1278
    %3884 = vmatpush.msra.mxu0 %v1274
    %3885 = vmatpush.msra.mxu0 %v1270
    %3886 = vmatpush.msra.mxu0 %v1266
    %3887 = vmatpush.msra.mxu0 %v1262
    %3888 = vmatpush.msra.mxu0 %v1258
    %3889 = vmatmul.f32.gmra.mxu0 %v2185
    %v3890 = vpop.f32.mrf.mxu0
    %v3891 = vadd.f32 %v3871, %v3890
    %3892 = vdwg.mxu0
    %3893 = vmatpush.msra.mxu0 %v1382
    %3894 = vmatpush.msra.mxu0 %v1378
    %3895 = vmatpush.msra.mxu0 %v1374
    %3896 = vmatpush.msra.mxu0 %v1370
    %3897 = vmatpush.msra.mxu0 %v1366
    %3898 = vmatpush.msra.mxu0 %v1362
    %3899 = vmatpush.msra.mxu0 %v1358
    %3900 = vmatpush.msra.mxu0 %v1354
    %3901 = vmatpush.msra.mxu0 %v1350
    %3902 = vmatpush.msra.mxu0 %v1346
    %3903 = vmatpush.msra.mxu0 %v1342
    %3904 = vmatpush.msra.mxu0 %v1338
    %3905 = vmatpush.msra.mxu0 %v1334
    %3906 = vmatpush.msra.mxu0 %v1330
    %3907 = vmatpush.msra.mxu0 %v1326
    %3908 = vmatpush.msra.mxu0 %v1322
    %3909 = vmatmul.f32.gmra.mxu0 %v2186
    %v3910 = vpop.f32.mrf.mxu0
    %v3911 = vadd.f32 %v3891, %v3910
    %3912 = vdwg.mxu0
    %3913 = vmatpush.msra.mxu0 %v1446
    %3914 = vmatpush.msra.mxu0 %v1442
    %3915 = vmatpush.msra.mxu0 %v1438
    %3916 = vmatpush.msra.mxu0 %v1434
    %3917 = vmatpush.msra.mxu0 %v1430
    %3918 = vmatpush.msra.mxu0 %v1426
    %3919 = vmatpush.msra.mxu0 %v1422
    %3920 = vmatpush.msra.mxu0 %v1418
    %3921 = vmatpush.msra.mxu0 %v1414
    %3922 = vmatpush.msra.mxu0 %v1410
    %3923 = vmatpush.msra.mxu0 %v1406
    %3924 = vmatpush.msra.mxu0 %v1402
    %3925 = vmatpush.msra.mxu0 %v1398
    %3926 = vmatpush.msra.mxu0 %v1394
    %3927 = vmatpush.msra.mxu0 %v1390
    %3928 = vmatpush.msra.mxu0 %v1386
    %3929 = vmatmul.f32.gmra.mxu0 %v2187
    %v3930 = vpop.f32.mrf.mxu0
    %v3931 = vadd.f32 %v3911, %v3930
    %3932 = vdwg.mxu0
    %3933 = vmatpush.msra.mxu0 %v1510
    %3934 = vmatpush.msra.mxu0 %v1506
    %3935 = vmatpush.msra.mxu0 %v1502
    %3936 = vmatpush.msra.mxu0 %v1498
    %3937 = vmatpush.msra.mxu0 %v1494
    %3938 = vmatpush.msra.mxu0 %v1490
    %3939 = vmatpush.msra.mxu0 %v1486
    %3940 = vmatpush.msra.mxu0 %v1482
    %3941 = vmatpush.msra.mxu0 %v1478
    %3942 = vmatpush.msra.mxu0 %v1474
    %3943 = vmatpush.msra.mxu0 %v1470
    %3944 = vmatpush.msra.mxu0 %v1466
    %3945 = vmatpush.msra.mxu0 %v1462
    %3946 = vmatpush.msra.mxu0 %v1458
    %3947 = vmatpush.msra.mxu0 %v1454
    %3948 = vmatpush.msra.mxu0 %v1450
    %3949 = vmatmul.f32.gmra.mxu0 %v2188
    %v3950 = vpop.f32.mrf.mxu0
    %v3951 = vadd.f32 %v3931, %v3950
    %3952 = vdwg.mxu0
    %3953 = vmatpush.msra.mxu0 %v1574
    %3954 = vmatpush.msra.mxu0 %v1570
    %3955 = vmatpush.msra.mxu0 %v1566
    %3956 = vmatpush.msra.mxu0 %v1562
    %3957 = vmatpush.msra.mxu0 %v1558
    %3958 = vmatpush.msra.mxu0 %v1554
    %3959 = vmatpush.msra.mxu0 %v1550
    %3960 = vmatpush.msra.mxu0 %v1546
    %3961 = vmatpush.msra.mxu0 %v1542
    %3962 = vmatpush.msra.mxu0 %v1538
    %3963 = vmatpush.msra.mxu0 %v1534
    %3964 = vmatpush.msra.mxu0 %v1530
    %3965 = vmatpush.msra.mxu0 %v1526
    %3966 = vmatpush.msra.mxu0 %v1522
    %3967 = vmatpush.msra.mxu0 %v1518
    %3968 = vmatpush.msra.mxu0 %v1514
    %3969 = vmatmul.f32.gmra.mxu0 %v2189
    %v3970 = vpop.f32.mrf.mxu0
    %v3971 = vadd.f32 %v3951, %v3970
    %3972 = vdwg.mxu0
    %3973 = vmatpush.msra.mxu0 %v1638
    %3974 = vmatpush.msra.mxu0 %v1634
    %3975 = vmatpush.msra.mxu0 %v1630
    %3976 = vmatpush.msra.mxu0 %v1626
    %3977 = vmatpush.msra.mxu0 %v1622
    %3978 = vmatpush.msra.mxu0 %v1618
    %3979 = vmatpush.msra.mxu0 %v1614
    %3980 = vmatpush.msra.mxu0 %v1610
    %3981 = vmatpush.msra.mxu0 %v1606
    %3982 = vmatpush.msra.mxu0 %v1602
    %3983 = vmatpush.msra.mxu0 %v1598
    %3984 = vmatpush.msra.mxu0 %v1594
    %3985 = vmatpush.msra.mxu0 %v1590
    %3986 = vmatpush.msra.mxu0 %v1586
    %3987 = vmatpush.msra.mxu0 %v1582
    %3988 = vmatpush.msra.mxu0 %v1578
    %3989 = vmatmul.f32.gmra.mxu0 %v2190
    %v3990 = vpop.f32.mrf.mxu0
    %v3991 = vadd.f32 %v3971, %v3990
    %3992 = vdwg.mxu0
    %3993 = vmatpush.msra.mxu0 %v1702
    %3994 = vmatpush.msra.mxu0 %v1698
    %3995 = vmatpush.msra.mxu0 %v1694
    %3996 = vmatpush.msra.mxu0 %v1690
    %3997 = vmatpush.msra.mxu0 %v1686
    %3998 = vmatpush.msra.mxu0 %v1682
    %3999 = vmatpush.msra.mxu0 %v1678
    %4000 = vmatpush.msra.mxu0 %v1674
    %4001 = vmatpush.msra.mxu0 %v1670
    %4002 = vmatpush.msra.mxu0 %v1666
    %4003 = vmatpush.msra.mxu0 %v1662
    %4004 = vmatpush.msra.mxu0 %v1658
    %4005 = vmatpush.msra.mxu0 %v1654
    %4006 = vmatpush.msra.mxu0 %v1650
    %4007 = vmatpush.msra.mxu0 %v1646
    %4008 = vmatpush.msra.mxu0 %v1642
    %4009 = vmatmul.f32.gmra.mxu0 %v2193
    %v4010 = vpop.f32.mrf.mxu0
    %v4011 = vadd.f32 %v3991, %v4010
    %4012 = vdwg.mxu0
    %4013 = vmatpush.msra.mxu0 %v1766
    %4014 = vmatpush.msra.mxu0 %v1762
    %4015 = vmatpush.msra.mxu0 %v1758
    %4016 = vmatpush.msra.mxu0 %v1754
    %4017 = vmatpush.msra.mxu0 %v1750
    %4018 = vmatpush.msra.mxu0 %v1746
    %4019 = vmatpush.msra.mxu0 %v1742
    %4020 = vmatpush.msra.mxu0 %v1738
    %4021 = vmatpush.msra.mxu0 %v1734
    %4022 = vmatpush.msra.mxu0 %v1730
    %4023 = vmatpush.msra.mxu0 %v1726
    %4024 = vmatpush.msra.mxu0 %v1722
    %4025 = vmatpush.msra.mxu0 %v1718
    %4026 = vmatpush.msra.mxu0 %v1714
    %4027 = vmatpush.msra.mxu0 %v1710
    %4028 = vmatpush.msra.mxu0 %v1706
    %4029 = vmatmul.f32.gmra.mxu0 %v2194
    %v4030 = vpop.f32.mrf.mxu0
    %v4031 = vadd.f32 %v4011, %v4030
    %4032 = vdwg.mxu0
    %4033 = vmatpush.msra.mxu0 %v1830
    %4034 = vmatpush.msra.mxu0 %v1826
    %4035 = vmatpush.msra.mxu0 %v1822
    %4036 = vmatpush.msra.mxu0 %v1818
    %4037 = vmatpush.msra.mxu0 %v1814
    %4038 = vmatpush.msra.mxu0 %v1810
    %4039 = vmatpush.msra.mxu0 %v1806
    %4040 = vmatpush.msra.mxu0 %v1802
    %4041 = vmatpush.msra.mxu0 %v1798
    %4042 = vmatpush.msra.mxu0 %v1794
    %4043 = vmatpush.msra.mxu0 %v1790
    %4044 = vmatpush.msra.mxu0 %v1786
    %4045 = vmatpush.msra.mxu0 %v1782
    %4046 = vmatpush.msra.mxu0 %v1778
    %4047 = vmatpush.msra.mxu0 %v1774
    %4048 = vmatpush.msra.mxu0 %v1770
    %4049 = vmatmul.f32.gmra.mxu0 %v2195
    %v4050 = vpop.f32.mrf.mxu0
    %v4051 = vadd.f32 %v4031, %v4050
    %4052 = vdwg.mxu0
    %4053 = vmatpush.msra.mxu0 %v1894
    %4054 = vmatpush.msra.mxu0 %v1890
    %4055 = vmatpush.msra.mxu0 %v1886
    %4056 = vmatpush.msra.mxu0 %v1882
    %4057 = vmatpush.msra.mxu0 %v1878
    %4058 = vmatpush.msra.mxu0 %v1874
    %4059 = vmatpush.msra.mxu0 %v1870
    %4060 = vmatpush.msra.mxu0 %v1866
    %4061 = vmatpush.msra.mxu0 %v1862
    %4062 = vmatpush.msra.mxu0 %v1858
    %4063 = vmatpush.msra.mxu0 %v1854
    %4064 = vmatpush.msra.mxu0 %v1850
    %4065 = vmatpush.msra.mxu0 %v1846
    %4066 = vmatpush.msra.mxu0 %v1842
    %4067 = vmatpush.msra.mxu0 %v1838
    %4068 = vmatpush.msra.mxu0 %v1834
    %4069 = vmatmul.f32.gmra.mxu0 %v2196
    %v4070 = vpop.f32.mrf.mxu0
    %v4071 = vadd.f32 %v4051, %v4070
    %4072 = vdwg.mxu0
    %4073 = vmatpush.msra.mxu0 %v1958
    %4074 = vmatpush.msra.mxu0 %v1954
    %4075 = vmatpush.msra.mxu0 %v1950
    %4076 = vmatpush.msra.mxu0 %v1946
    %4077 = vmatpush.msra.mxu0 %v1942
    %4078 = vmatpush.msra.mxu0 %v1938
    %4079 = vmatpush.msra.mxu0 %v1934
    %4080 = vmatpush.msra.mxu0 %v1930
    %4081 = vmatpush.msra.mxu0 %v1926
    %4082 = vmatpush.msra.mxu0 %v1922
    %4083 = vmatpush.msra.mxu0 %v1918
    %4084 = vmatpush.msra.mxu0 %v1914
    %4085 = vmatpush.msra.mxu0 %v1910
    %4086 = vmatpush.msra.mxu0 %v1906
    %4087 = vmatpush.msra.mxu0 %v1902
    %4088 = vmatpush.msra.mxu0 %v1898
    %4089 = vmatmul.f32.gmra.mxu0 %v2197
    %v4090 = vpop.f32.mrf.mxu0
    %v4091 = vadd.f32 %v4071, %v4090
    %4092 = vdwg.mxu0
    %4093 = vmatpush.msra.mxu0 %v2022
    %4094 = vmatpush.msra.mxu0 %v2018
    %4095 = vmatpush.msra.mxu0 %v2014
    %4096 = vmatpush.msra.mxu0 %v2010
    %4097 = vmatpush.msra.mxu0 %v2006
    %4098 = vmatpush.msra.mxu0 %v2002
    %4099 = vmatpush.msra.mxu0 %v1998
    %4100 = vmatpush.msra.mxu0 %v1994
    %4101 = vmatpush.msra.mxu0 %v1990
    %4102 = vmatpush.msra.mxu0 %v1986
    %4103 = vmatpush.msra.mxu0 %v1982
    %4104 = vmatpush.msra.mxu0 %v1978
    %4105 = vmatpush.msra.mxu0 %v1974
    %4106 = vmatpush.msra.mxu0 %v1970
    %4107 = vmatpush.msra.mxu0 %v1966
    %4108 = vmatpush.msra.mxu0 %v1962
    %4109 = vmatmul.f32.gmra.mxu0 %v2198
    %v4110 = vpop.f32.mrf.mxu0
    %v4111 = vadd.f32 %v4091, %v4110
    %4112 = vdwg.mxu0
    %4113 = vmatpush.msra.mxu0 %v2086
    %4114 = vmatpush.msra.mxu0 %v2082
    %4115 = vmatpush.msra.mxu0 %v2078
    %4116 = vmatpush.msra.mxu0 %v2074
    %4117 = vmatpush.msra.mxu0 %v2070
    %4118 = vmatpush.msra.mxu0 %v2066
    %4119 = vmatpush.msra.mxu0 %v2062
    %4120 = vmatpush.msra.mxu0 %v2058
    %4121 = vmatpush.msra.mxu0 %v2054
    %4122 = vmatpush.msra.mxu0 %v2050
    %4123 = vmatpush.msra.mxu0 %v2046
    %4124 = vmatpush.msra.mxu0 %v2042
    %4125 = vmatpush.msra.mxu0 %v2038
    %4126 = vmatpush.msra.mxu0 %v2034
    %4127 = vmatpush.msra.mxu0 %v2030
    %4128 = vmatpush.msra.mxu0 %v2026
    %4129 = vmatmul.f32.gmra.mxu0 %v2199
    %v4130 = vpop.f32.mrf.mxu0
    %v4131 = vadd.f32 %v4111, %v4130
    %4132 = vdwg.mxu0
    %4133 = vmatpush.msra.mxu0 %v2150
    %4134 = vmatpush.msra.mxu0 %v2146
    %4135 = vmatpush.msra.mxu0 %v2142
    %4136 = vmatpush.msra.mxu0 %v2138
    %4137 = vmatpush.msra.mxu0 %v2134
    %4138 = vmatpush.msra.mxu0 %v2130
    %4139 = vmatpush.msra.mxu0 %v2126
    %4140 = vmatpush.msra.mxu0 %v2122
    %4141 = vmatpush.msra.mxu0 %v2118
    %4142 = vmatpush.msra.mxu0 %v2114
    %4143 = vmatpush.msra.mxu0 %v2110
    %4144 = vmatpush.msra.mxu0 %v2106
    %4145 = vmatpush.msra.mxu0 %v2102
    %4146 = vmatpush.msra.mxu0 %v2098
    %4147 = vmatpush.msra.mxu0 %v2094
    %4148 = vmatpush.msra.mxu0 %v2090
    %4149 = vmatmul.f32.gmra.mxu0 %v2200
    %v4150 = vpop.f32.mrf.mxu0
    %v4151 = vadd.f32 %v4131, %v4150
    %4152 = vdwg.mxu0
    %4153 = vmatpush.msra.mxu0 %v167
    %4154 = vmatpush.msra.mxu0 %v163
    %4155 = vmatpush.msra.mxu0 %v159
    %4156 = vmatpush.msra.mxu0 %v155
    %4157 = vmatpush.msra.mxu0 %v151
    %4158 = vmatpush.msra.mxu0 %v147
    %4159 = vmatpush.msra.mxu0 %v143
    %4160 = vmatpush.msra.mxu0 %v139
    %4161 = vmatpush.msra.mxu0 %v135
    %4162 = vmatpush.msra.mxu0 %v131
    %4163 = vmatpush.msra.mxu0 %v127
    %4164 = vmatpush.msra.mxu0 %v123
    %4165 = vmatpush.msra.mxu0 %v119
    %4166 = vmatpush.msra.mxu0 %v115
    %4167 = vmatpush.msra.mxu0 %v111
    %4168 = vmatpush.msra.mxu0 %v107
    %4169 = vmatmul.f32.gmra.mxu0 %v2163
    %v4170 = vpop.f32.mrf.mxu0
    %v4171 = vadd.f32 0.0, %v4170
    %4172 = vdwg.mxu0
    %4173 = vmatpush.msra.mxu0 %v231
    %4174 = vmatpush.msra.mxu0 %v227
    %4175 = vmatpush.msra.mxu0 %v223
    %4176 = vmatpush.msra.mxu0 %v219
    %4177 = vmatpush.msra.mxu0 %v215
    %4178 = vmatpush.msra.mxu0 %v211
    %4179 = vmatpush.msra.mxu0 %v207
    %4180 = vmatpush.msra.mxu0 %v203
    %4181 = vmatpush.msra.mxu0 %v199
    %4182 = vmatpush.msra.mxu0 %v195
    %4183 = vmatpush.msra.mxu0 %v191
    %4184 = vmatpush.msra.mxu0 %v187
    %4185 = vmatpush.msra.mxu0 %v183
    %4186 = vmatpush.msra.mxu0 %v179
    %4187 = vmatpush.msra.mxu0 %v175
    %4188 = vmatpush.msra.mxu0 %v171
    %4189 = vmatmul.f32.gmra.mxu0 %v2164
    %v4190 = vpop.f32.mrf.mxu0
    %v4191 = vadd.f32 %v4171, %v4190
    %4192 = vdwg.mxu0
    %4193 = vmatpush.msra.mxu0 %v295
    %4194 = vmatpush.msra.mxu0 %v291
    %4195 = vmatpush.msra.mxu0 %v287
    %4196 = vmatpush.msra.mxu0 %v283
    %4197 = vmatpush.msra.mxu0 %v279
    %4198 = vmatpush.msra.mxu0 %v275
    %4199 = vmatpush.msra.mxu0 %v271
    %4200 = vmatpush.msra.mxu0 %v267
    %4201 = vmatpush.msra.mxu0 %v263
    %4202 = vmatpush.msra.mxu0 %v259
    %4203 = vmatpush.msra.mxu0 %v255
    %4204 = vmatpush.msra.mxu0 %v251
    %4205 = vmatpush.msra.mxu0 %v247
    %4206 = vmatpush.msra.mxu0 %v243
    %4207 = vmatpush.msra.mxu0 %v239
    %4208 = vmatpush.msra.mxu0 %v235
    %4209 = vmatmul.f32.gmra.mxu0 %v2165
    %v4210 = vpop.f32.mrf.mxu0
    %v4211 = vadd.f32 %v4191, %v4210
    %4212 = vdwg.mxu0
    %4213 = vmatpush.msra.mxu0 %v359
    %4214 = vmatpush.msra.mxu0 %v355
    %4215 = vmatpush.msra.mxu0 %v351
    %4216 = vmatpush.msra.mxu0 %v347
    %4217 = vmatpush.msra.mxu0 %v343
    %4218 = vmatpush.msra.mxu0 %v339
    %4219 = vmatpush.msra.mxu0 %v335
    %4220 = vmatpush.msra.mxu0 %v331
    %4221 = vmatpush.msra.mxu0 %v327
    %4222 = vmatpush.msra.mxu0 %v323
    %4223 = vmatpush.msra.mxu0 %v319
    %4224 = vmatpush.msra.mxu0 %v315
    %4225 = vmatpush.msra.mxu0 %v311
    %4226 = vmatpush.msra.mxu0 %v307
    %4227 = vmatpush.msra.mxu0 %v303
    %4228 = vmatpush.msra.mxu0 %v299
    %4229 = vmatmul.f32.gmra.mxu0 %v2166
    %v4230 = vpop.f32.mrf.mxu0
    %v4231 = vadd.f32 %v4211, %v4230
    %4232 = vdwg.mxu0
    %4233 = vmatpush.msra.mxu0 %v423
    %4234 = vmatpush.msra.mxu0 %v419
    %4235 = vmatpush.msra.mxu0 %v415
    %4236 = vmatpush.msra.mxu0 %v411
    %4237 = vmatpush.msra.mxu0 %v407
    %4238 = vmatpush.msra.mxu0 %v403
    %4239 = vmatpush.msra.mxu0 %v399
    %4240 = vmatpush.msra.mxu0 %v395
    %4241 = vmatpush.msra.mxu0 %v391
    %4242 = vmatpush.msra.mxu0 %v387
    %4243 = vmatpush.msra.mxu0 %v383
    %4244 = vmatpush.msra.mxu0 %v379
    %4245 = vmatpush.msra.mxu0 %v375
    %4246 = vmatpush.msra.mxu0 %v371
    %4247 = vmatpush.msra.mxu0 %v367
    %4248 = vmatpush.msra.mxu0 %v363
    %4249 = vmatmul.f32.gmra.mxu0 %v2167
    %v4250 = vpop.f32.mrf.mxu0
    %v4251 = vadd.f32 %v4231, %v4250
    %4252 = vdwg.mxu0
    %4253 = vmatpush.msra.mxu0 %v487
    %4254 = vmatpush.msra.mxu0 %v483
    %4255 = vmatpush.msra.mxu0 %v479
    %4256 = vmatpush.msra.mxu0 %v475
    %4257 = vmatpush.msra.mxu0 %v471
    %4258 = vmatpush.msra.mxu0 %v467
    %4259 = vmatpush.msra.mxu0 %v463
    %4260 = vmatpush.msra.mxu0 %v459
    %4261 = vmatpush.msra.mxu0 %v455
    %4262 = vmatpush.msra.mxu0 %v451
    %4263 = vmatpush.msra.mxu0 %v447
    %4264 = vmatpush.msra.mxu0 %v443
    %4265 = vmatpush.msra.mxu0 %v439
    %4266 = vmatpush.msra.mxu0 %v435
    %4267 = vmatpush.msra.mxu0 %v431
    %4268 = vmatpush.msra.mxu0 %v427
    %4269 = vmatmul.f32.gmra.mxu0 %v2168
    %v4270 = vpop.f32.mrf.mxu0
    %v4271 = vadd.f32 %v4251, %v4270
    %4272 = vdwg.mxu0
    %4273 = vmatpush.msra.mxu0 %v551
    %4274 = vmatpush.msra.mxu0 %v547
    %4275 = vmatpush.msra.mxu0 %v543
    %4276 = vmatpush.msra.mxu0 %v539
    %4277 = vmatpush.msra.mxu0 %v535
    %4278 = vmatpush.msra.mxu0 %v531
    %4279 = vmatpush.msra.mxu0 %v527
    %4280 = vmatpush.msra.mxu0 %v523
    %4281 = vmatpush.msra.mxu0 %v519
    %4282 = vmatpush.msra.mxu0 %v515
    %4283 = vmatpush.msra.mxu0 %v511
    %4284 = vmatpush.msra.mxu0 %v507
    %4285 = vmatpush.msra.mxu0 %v503
    %4286 = vmatpush.msra.mxu0 %v499
    %4287 = vmatpush.msra.mxu0 %v495
    %4288 = vmatpush.msra.mxu0 %v491
    %4289 = vmatmul.f32.gmra.mxu0 %v2169
    %v4290 = vpop.f32.mrf.mxu0
    %v4291 = vadd.f32 %v4271, %v4290
    %4292 = vdwg.mxu0
    %4293 = vmatpush.msra.mxu0 %v615
    %4294 = vmatpush.msra.mxu0 %v611
    %4295 = vmatpush.msra.mxu0 %v607
    %4296 = vmatpush.msra.mxu0 %v603
    %4297 = vmatpush.msra.mxu0 %v599
    %4298 = vmatpush.msra.mxu0 %v595
    %4299 = vmatpush.msra.mxu0 %v591
    %4300 = vmatpush.msra.mxu0 %v587
    %4301 = vmatpush.msra.mxu0 %v583
    %4302 = vmatpush.msra.mxu0 %v579
    %4303 = vmatpush.msra.mxu0 %v575
    %4304 = vmatpush.msra.mxu0 %v571
    %4305 = vmatpush.msra.mxu0 %v567
    %4306 = vmatpush.msra.mxu0 %v563
    %4307 = vmatpush.msra.mxu0 %v559
    %4308 = vmatpush.msra.mxu0 %v555
    %4309 = vmatmul.f32.gmra.mxu0 %v2170
    %v4310 = vpop.f32.mrf.mxu0
    %v4311 = vadd.f32 %v4291, %v4310
    %4312 = vdwg.mxu0
    %4313 = vmatpush.msra.mxu0 %v679
    %4314 = vmatpush.msra.mxu0 %v675
    %4315 = vmatpush.msra.mxu0 %v671
    %4316 = vmatpush.msra.mxu0 %v667
    %4317 = vmatpush.msra.mxu0 %v663
    %4318 = vmatpush.msra.mxu0 %v659
    %4319 = vmatpush.msra.mxu0 %v655
    %4320 = vmatpush.msra.mxu0 %v651
    %4321 = vmatpush.msra.mxu0 %v647
    %4322 = vmatpush.msra.mxu0 %v643
    %4323 = vmatpush.msra.mxu0 %v639
    %4324 = vmatpush.msra.mxu0 %v635
    %4325 = vmatpush.msra.mxu0 %v631
    %4326 = vmatpush.msra.mxu0 %v627
    %4327 = vmatpush.msra.mxu0 %v623
    %4328 = vmatpush.msra.mxu0 %v619
    %4329 = vmatmul.f32.gmra.mxu0 %v2173
    %v4330 = vpop.f32.mrf.mxu0
    %v4331 = vadd.f32 %v4311, %v4330
    %4332 = vdwg.mxu0
    %4333 = vmatpush.msra.mxu0 %v743
    %4334 = vmatpush.msra.mxu0 %v739
    %4335 = vmatpush.msra.mxu0 %v735
    %4336 = vmatpush.msra.mxu0 %v731
    %4337 = vmatpush.msra.mxu0 %v727
    %4338 = vmatpush.msra.mxu0 %v723
    %4339 = vmatpush.msra.mxu0 %v719
    %4340 = vmatpush.msra.mxu0 %v715
    %4341 = vmatpush.msra.mxu0 %v711
    %4342 = vmatpush.msra.mxu0 %v707
    %4343 = vmatpush.msra.mxu0 %v703
    %4344 = vmatpush.msra.mxu0 %v699
    %4345 = vmatpush.msra.mxu0 %v695
    %4346 = vmatpush.msra.mxu0 %v691
    %4347 = vmatpush.msra.mxu0 %v687
    %4348 = vmatpush.msra.mxu0 %v683
    %4349 = vmatmul.f32.gmra.mxu0 %v2174
    %v4350 = vpop.f32.mrf.mxu0
    %v4351 = vadd.f32 %v4331, %v4350
    %4352 = vdwg.mxu0
    %4353 = vmatpush.msra.mxu0 %v807
    %4354 = vmatpush.msra.mxu0 %v803
    %4355 = vmatpush.msra.mxu0 %v799
    %4356 = vmatpush.msra.mxu0 %v795
    %4357 = vmatpush.msra.mxu0 %v791
    %4358 = vmatpush.msra.mxu0 %v787
    %4359 = vmatpush.msra.mxu0 %v783
    %4360 = vmatpush.msra.mxu0 %v779
    %4361 = vmatpush.msra.mxu0 %v775
    %4362 = vmatpush.msra.mxu0 %v771
    %4363 = vmatpush.msra.mxu0 %v767
    %4364 = vmatpush.msra.mxu0 %v763
    %4365 = vmatpush.msra.mxu0 %v759
    %4366 = vmatpush.msra.mxu0 %v755
    %4367 = vmatpush.msra.mxu0 %v751
    %4368 = vmatpush.msra.mxu0 %v747
    %4369 = vmatmul.f32.gmra.mxu0 %v2175
    %v4370 = vpop.f32.mrf.mxu0
    %v4371 = vadd.f32 %v4351, %v4370
    %4372 = vdwg.mxu0
    %4373 = vmatpush.msra.mxu0 %v871
    %4374 = vmatpush.msra.mxu0 %v867
    %4375 = vmatpush.msra.mxu0 %v863
    %4376 = vmatpush.msra.mxu0 %v859
    %4377 = vmatpush.msra.mxu0 %v855
    %4378 = vmatpush.msra.mxu0 %v851
    %4379 = vmatpush.msra.mxu0 %v847
    %4380 = vmatpush.msra.mxu0 %v843
    %4381 = vmatpush.msra.mxu0 %v839
    %4382 = vmatpush.msra.mxu0 %v835
    %4383 = vmatpush.msra.mxu0 %v831
    %4384 = vmatpush.msra.mxu0 %v827
    %4385 = vmatpush.msra.mxu0 %v823
    %4386 = vmatpush.msra.mxu0 %v819
    %4387 = vmatpush.msra.mxu0 %v815
    %4388 = vmatpush.msra.mxu0 %v811
    %4389 = vmatmul.f32.gmra.mxu0 %v2176
    %v4390 = vpop.f32.mrf.mxu0
    %v4391 = vadd.f32 %v4371, %v4390
    %4392 = vdwg.mxu0
    %4393 = vmatpush.msra.mxu0 %v935
    %4394 = vmatpush.msra.mxu0 %v931
    %4395 = vmatpush.msra.mxu0 %v927
    %4396 = vmatpush.msra.mxu0 %v923
    %4397 = vmatpush.msra.mxu0 %v919
    %4398 = vmatpush.msra.mxu0 %v915
    %4399 = vmatpush.msra.mxu0 %v911
    %4400 = vmatpush.msra.mxu0 %v907
    %4401 = vmatpush.msra.mxu0 %v903
    %4402 = vmatpush.msra.mxu0 %v899
    %4403 = vmatpush.msra.mxu0 %v895
    %4404 = vmatpush.msra.mxu0 %v891
    %4405 = vmatpush.msra.mxu0 %v887
    %4406 = vmatpush.msra.mxu0 %v883
    %4407 = vmatpush.msra.mxu0 %v879
    %4408 = vmatpush.msra.mxu0 %v875
    %4409 = vmatmul.f32.gmra.mxu0 %v2177
    %v4410 = vpop.f32.mrf.mxu0
    %v4411 = vadd.f32 %v4391, %v4410
    %4412 = vdwg.mxu0
    %4413 = vmatpush.msra.mxu0 %v999
    %4414 = vmatpush.msra.mxu0 %v995
    %4415 = vmatpush.msra.mxu0 %v991
    %4416 = vmatpush.msra.mxu0 %v987
    %4417 = vmatpush.msra.mxu0 %v983
    %4418 = vmatpush.msra.mxu0 %v979
    %4419 = vmatpush.msra.mxu0 %v975
    %4420 = vmatpush.msra.mxu0 %v971
    %4421 = vmatpush.msra.mxu0 %v967
    %4422 = vmatpush.msra.mxu0 %v963
    %4423 = vmatpush.msra.mxu0 %v959
    %4424 = vmatpush.msra.mxu0 %v955
    %4425 = vmatpush.msra.mxu0 %v951
    %4426 = vmatpush.msra.mxu0 %v947
    %4427 = vmatpush.msra.mxu0 %v943
    %4428 = vmatpush.msra.mxu0 %v939
    %4429 = vmatmul.f32.gmra.mxu0 %v2178
    %v4430 = vpop.f32.mrf.mxu0
    %v4431 = vadd.f32 %v4411, %v4430
    %4432 = vdwg.mxu0
    %4433 = vmatpush.msra.mxu0 %v1063
    %4434 = vmatpush.msra.mxu0 %v1059
    %4435 = vmatpush.msra.mxu0 %v1055
    %4436 = vmatpush.msra.mxu0 %v1051
    %4437 = vmatpush.msra.mxu0 %v1047
    %4438 = vmatpush.msra.mxu0 %v1043
    %4439 = vmatpush.msra.mxu0 %v1039
    %4440 = vmatpush.msra.mxu0 %v1035
    %4441 = vmatpush.msra.mxu0 %v1031
    %4442 = vmatpush.msra.mxu0 %v1027
    %4443 = vmatpush.msra.mxu0 %v1023
    %4444 = vmatpush.msra.mxu0 %v1019
    %4445 = vmatpush.msra.mxu0 %v1015
    %4446 = vmatpush.msra.mxu0 %v1011
    %4447 = vmatpush.msra.mxu0 %v1007
    %4448 = vmatpush.msra.mxu0 %v1003
    %4449 = vmatmul.f32.gmra.mxu0 %v2179
    %v4450 = vpop.f32.mrf.mxu0
    %v4451 = vadd.f32 %v4431, %v4450
    %4452 = vdwg.mxu0
    %4453 = vmatpush.msra.mxu0 %v1127
    %4454 = vmatpush.msra.mxu0 %v1123
    %4455 = vmatpush.msra.mxu0 %v1119
    %4456 = vmatpush.msra.mxu0 %v1115
    %4457 = vmatpush.msra.mxu0 %v1111
    %4458 = vmatpush.msra.mxu0 %v1107
    %4459 = vmatpush.msra.mxu0 %v1103
    %4460 = vmatpush.msra.mxu0 %v1099
    %4461 = vmatpush.msra.mxu0 %v1095
    %4462 = vmatpush.msra.mxu0 %v1091
    %4463 = vmatpush.msra.mxu0 %v1087
    %4464 = vmatpush.msra.mxu0 %v1083
    %4465 = vmatpush.msra.mxu0 %v1079
    %4466 = vmatpush.msra.mxu0 %v1075
    %4467 = vmatpush.msra.mxu0 %v1071
    %4468 = vmatpush.msra.mxu0 %v1067
    %4469 = vmatmul.f32.gmra.mxu0 %v2180
    %v4470 = vpop.f32.mrf.mxu0
    %v4471 = vadd.f32 %v4451, %v4470
    %4472 = vdwg.mxu0
    %4473 = vmatpush.msra.mxu0 %v1191
    %4474 = vmatpush.msra.mxu0 %v1187
    %4475 = vmatpush.msra.mxu0 %v1183
    %4476 = vmatpush.msra.mxu0 %v1179
    %4477 = vmatpush.msra.mxu0 %v1175
    %4478 = vmatpush.msra.mxu0 %v1171
    %4479 = vmatpush.msra.mxu0 %v1167
    %4480 = vmatpush.msra.mxu0 %v1163
    %4481 = vmatpush.msra.mxu0 %v1159
    %4482 = vmatpush.msra.mxu0 %v1155
    %4483 = vmatpush.msra.mxu0 %v1151
    %4484 = vmatpush.msra.mxu0 %v1147
    %4485 = vmatpush.msra.mxu0 %v1143
    %4486 = vmatpush.msra.mxu0 %v1139
    %4487 = vmatpush.msra.mxu0 %v1135
    %4488 = vmatpush.msra.mxu0 %v1131
    %4489 = vmatmul.f32.gmra.mxu0 %v2183
    %v4490 = vpop.f32.mrf.mxu0
    %v4491 = vadd.f32 %v4471, %v4490
    %4492 = vdwg.mxu0
    %4493 = vmatpush.msra.mxu0 %v1255
    %4494 = vmatpush.msra.mxu0 %v1251
    %4495 = vmatpush.msra.mxu0 %v1247
    %4496 = vmatpush.msra.mxu0 %v1243
    %4497 = vmatpush.msra.mxu0 %v1239
    %4498 = vmatpush.msra.mxu0 %v1235
    %4499 = vmatpush.msra.mxu0 %v1231
    %4500 = vmatpush.msra.mxu0 %v1227
    %4501 = vmatpush.msra.mxu0 %v1223
    %4502 = vmatpush.msra.mxu0 %v1219
    %4503 = vmatpush.msra.mxu0 %v1215
    %4504 = vmatpush.msra.mxu0 %v1211
    %4505 = vmatpush.msra.mxu0 %v1207
    %4506 = vmatpush.msra.mxu0 %v1203
    %4507 = vmatpush.msra.mxu0 %v1199
    %4508 = vmatpush.msra.mxu0 %v1195
    %4509 = vmatmul.f32.gmra.mxu0 %v2184
    %v4510 = vpop.f32.mrf.mxu0
    %v4511 = vadd.f32 %v4491, %v4510
    %4512 = vdwg.mxu0
    %4513 = vmatpush.msra.mxu0 %v1319
    %4514 = vmatpush.msra.mxu0 %v1315
    %4515 = vmatpush.msra.mxu0 %v1311
    %4516 = vmatpush.msra.mxu0 %v1307
    %4517 = vmatpush.msra.mxu0 %v1303
    %4518 = vmatpush.msra.mxu0 %v1299
    %4519 = vmatpush.msra.mxu0 %v1295
    %4520 = vmatpush.msra.mxu0 %v1291
    %4521 = vmatpush.msra.mxu0 %v1287
    %4522 = vmatpush.msra.mxu0 %v1283
    %4523 = vmatpush.msra.mxu0 %v1279
    %4524 = vmatpush.msra.mxu0 %v1275
    %4525 = vmatpush.msra.mxu0 %v1271
    %4526 = vmatpush.msra.mxu0 %v1267
    %4527 = vmatpush.msra.mxu0 %v1263
    %4528 = vmatpush.msra.mxu0 %v1259
    %4529 = vmatmul.f32.gmra.mxu0 %v2185
    %v4530 = vpop.f32.mrf.mxu0
    %v4531 = vadd.f32 %v4511, %v4530
    %4532 = vdwg.mxu0
    %4533 = vmatpush.msra.mxu0 %v1383
    %4534 = vmatpush.msra.mxu0 %v1379
    %4535 = vmatpush.msra.mxu0 %v1375
    %4536 = vmatpush.msra.mxu0 %v1371
    %4537 = vmatpush.msra.mxu0 %v1367
    %4538 = vmatpush.msra.mxu0 %v1363
    %4539 = vmatpush.msra.mxu0 %v1359
    %4540 = vmatpush.msra.mxu0 %v1355
    %4541 = vmatpush.msra.mxu0 %v1351
    %4542 = vmatpush.msra.mxu0 %v1347
    %4543 = vmatpush.msra.mxu0 %v1343
    %4544 = vmatpush.msra.mxu0 %v1339
    %4545 = vmatpush.msra.mxu0 %v1335
    %4546 = vmatpush.msra.mxu0 %v1331
    %4547 = vmatpush.msra.mxu0 %v1327
    %4548 = vmatpush.msra.mxu0 %v1323
    %4549 = vmatmul.f32.gmra.mxu0 %v2186
    %v4550 = vpop.f32.mrf.mxu0
    %v4551 = vadd.f32 %v4531, %v4550
    %4552 = vdwg.mxu0
    %4553 = vmatpush.msra.mxu0 %v1447
    %4554 = vmatpush.msra.mxu0 %v1443
    %4555 = vmatpush.msra.mxu0 %v1439
    %4556 = vmatpush.msra.mxu0 %v1435
    %4557 = vmatpush.msra.mxu0 %v1431
    %4558 = vmatpush.msra.mxu0 %v1427
    %4559 = vmatpush.msra.mxu0 %v1423
    %4560 = vmatpush.msra.mxu0 %v1419
    %4561 = vmatpush.msra.mxu0 %v1415
    %4562 = vmatpush.msra.mxu0 %v1411
    %4563 = vmatpush.msra.mxu0 %v1407
    %4564 = vmatpush.msra.mxu0 %v1403
    %4565 = vmatpush.msra.mxu0 %v1399
    %4566 = vmatpush.msra.mxu0 %v1395
    %4567 = vmatpush.msra.mxu0 %v1391
    %4568 = vmatpush.msra.mxu0 %v1387
    %4569 = vmatmul.f32.gmra.mxu0 %v2187
    %v4570 = vpop.f32.mrf.mxu0
    %v4571 = vadd.f32 %v4551, %v4570
    %4572 = vdwg.mxu0
    %4573 = vmatpush.msra.mxu0 %v1511
    %4574 = vmatpush.msra.mxu0 %v1507
    %4575 = vmatpush.msra.mxu0 %v1503
    %4576 = vmatpush.msra.mxu0 %v1499
    %4577 = vmatpush.msra.mxu0 %v1495
    %4578 = vmatpush.msra.mxu0 %v1491
    %4579 = vmatpush.msra.mxu0 %v1487
    %4580 = vmatpush.msra.mxu0 %v1483
    %4581 = vmatpush.msra.mxu0 %v1479
    %4582 = vmatpush.msra.mxu0 %v1475
    %4583 = vmatpush.msra.mxu0 %v1471
    %4584 = vmatpush.msra.mxu0 %v1467
    %4585 = vmatpush.msra.mxu0 %v1463
    %4586 = vmatpush.msra.mxu0 %v1459
    %4587 = vmatpush.msra.mxu0 %v1455
    %4588 = vmatpush.msra.mxu0 %v1451
    %4589 = vmatmul.f32.gmra.mxu0 %v2188
    %v4590 = vpop.f32.mrf.mxu0
    %v4591 = vadd.f32 %v4571, %v4590
    %4592 = vdwg.mxu0
    %4593 = vmatpush.msra.mxu0 %v1575
    %4594 = vmatpush.msra.mxu0 %v1571
    %4595 = vmatpush.msra.mxu0 %v1567
    %4596 = vmatpush.msra.mxu0 %v1563
    %4597 = vmatpush.msra.mxu0 %v1559
    %4598 = vmatpush.msra.mxu0 %v1555
    %4599 = vmatpush.msra.mxu0 %v1551
    %4600 = vmatpush.msra.mxu0 %v1547
    %4601 = vmatpush.msra.mxu0 %v1543
    %4602 = vmatpush.msra.mxu0 %v1539
    %4603 = vmatpush.msra.mxu0 %v1535
    %4604 = vmatpush.msra.mxu0 %v1531
    %4605 = vmatpush.msra.mxu0 %v1527
    %4606 = vmatpush.msra.mxu0 %v1523
    %4607 = vmatpush.msra.mxu0 %v1519
    %4608 = vmatpush.msra.mxu0 %v1515
    %4609 = vmatmul.f32.gmra.mxu0 %v2189
    %v4610 = vpop.f32.mrf.mxu0
    %v4611 = vadd.f32 %v4591, %v4610
    %4612 = vdwg.mxu0
    %4613 = vmatpush.msra.mxu0 %v1639
    %4614 = vmatpush.msra.mxu0 %v1635
    %4615 = vmatpush.msra.mxu0 %v1631
    %4616 = vmatpush.msra.mxu0 %v1627
    %4617 = vmatpush.msra.mxu0 %v1623
    %4618 = vmatpush.msra.mxu0 %v1619
    %4619 = vmatpush.msra.mxu0 %v1615
    %4620 = vmatpush.msra.mxu0 %v1611
    %4621 = vmatpush.msra.mxu0 %v1607
    %4622 = vmatpush.msra.mxu0 %v1603
    %4623 = vmatpush.msra.mxu0 %v1599
    %4624 = vmatpush.msra.mxu0 %v1595
    %4625 = vmatpush.msra.mxu0 %v1591
    %4626 = vmatpush.msra.mxu0 %v1587
    %4627 = vmatpush.msra.mxu0 %v1583
    %4628 = vmatpush.msra.mxu0 %v1579
    %4629 = vmatmul.f32.gmra.mxu0 %v2190
    %v4630 = vpop.f32.mrf.mxu0
    %v4631 = vadd.f32 %v4611, %v4630
    %4632 = vdwg.mxu0
    %4633 = vmatpush.msra.mxu0 %v1703
    %4634 = vmatpush.msra.mxu0 %v1699
    %4635 = vmatpush.msra.mxu0 %v1695
    %4636 = vmatpush.msra.mxu0 %v1691
    %4637 = vmatpush.msra.mxu0 %v1687
    %4638 = vmatpush.msra.mxu0 %v1683
    %4639 = vmatpush.msra.mxu0 %v1679
    %4640 = vmatpush.msra.mxu0 %v1675
    %4641 = vmatpush.msra.mxu0 %v1671
    %4642 = vmatpush.msra.mxu0 %v1667
    %4643 = vmatpush.msra.mxu0 %v1663
    %4644 = vmatpush.msra.mxu0 %v1659
    %4645 = vmatpush.msra.mxu0 %v1655
    %4646 = vmatpush.msra.mxu0 %v1651
    %4647 = vmatpush.msra.mxu0 %v1647
    %4648 = vmatpush.msra.mxu0 %v1643
    %4649 = vmatmul.f32.gmra.mxu0 %v2193
    %v4650 = vpop.f32.mrf.mxu0
    %v4651 = vadd.f32 %v4631, %v4650
    %4652 = vdwg.mxu0
    %4653 = vmatpush.msra.mxu0 %v1767
    %4654 = vmatpush.msra.mxu0 %v1763
    %4655 = vmatpush.msra.mxu0 %v1759
    %4656 = vmatpush.msra.mxu0 %v1755
    %4657 = vmatpush.msra.mxu0 %v1751
    %4658 = vmatpush.msra.mxu0 %v1747
    %4659 = vmatpush.msra.mxu0 %v1743
    %4660 = vmatpush.msra.mxu0 %v1739
    %4661 = vmatpush.msra.mxu0 %v1735
    %4662 = vmatpush.msra.mxu0 %v1731
    %4663 = vmatpush.msra.mxu0 %v1727
    %4664 = vmatpush.msra.mxu0 %v1723
    %4665 = vmatpush.msra.mxu0 %v1719
    %4666 = vmatpush.msra.mxu0 %v1715
    %4667 = vmatpush.msra.mxu0 %v1711
    %4668 = vmatpush.msra.mxu0 %v1707
    %4669 = vmatmul.f32.gmra.mxu0 %v2194
    %v4670 = vpop.f32.mrf.mxu0
    %v4671 = vadd.f32 %v4651, %v4670
    %4672 = vdwg.mxu0
    %4673 = vmatpush.msra.mxu0 %v1831
    %4674 = vmatpush.msra.mxu0 %v1827
    %4675 = vmatpush.msra.mxu0 %v1823
    %4676 = vmatpush.msra.mxu0 %v1819
    %4677 = vmatpush.msra.mxu0 %v1815
    %4678 = vmatpush.msra.mxu0 %v1811
    %4679 = vmatpush.msra.mxu0 %v1807
    %4680 = vmatpush.msra.mxu0 %v1803
    %4681 = vmatpush.msra.mxu0 %v1799
    %4682 = vmatpush.msra.mxu0 %v1795
    %4683 = vmatpush.msra.mxu0 %v1791
    %4684 = vmatpush.msra.mxu0 %v1787
    %4685 = vmatpush.msra.mxu0 %v1783
    %4686 = vmatpush.msra.mxu0 %v1779
    %4687 = vmatpush.msra.mxu0 %v1775
    %4688 = vmatpush.msra.mxu0 %v1771
    %4689 = vmatmul.f32.gmra.mxu0 %v2195
    %v4690 = vpop.f32.mrf.mxu0
    %v4691 = vadd.f32 %v4671, %v4690
    %4692 = vdwg.mxu0
    %4693 = vmatpush.msra.mxu0 %v1895
    %4694 = vmatpush.msra.mxu0 %v1891
    %4695 = vmatpush.msra.mxu0 %v1887
    %4696 = vmatpush.msra.mxu0 %v1883
    %4697 = vmatpush.msra.mxu0 %v1879
    %4698 = vmatpush.msra.mxu0 %v1875
    %4699 = vmatpush.msra.mxu0 %v1871
    %4700 = vmatpush.msra.mxu0 %v1867
    %4701 = vmatpush.msra.mxu0 %v1863
    %4702 = vmatpush.msra.mxu0 %v1859
    %4703 = vmatpush.msra.mxu0 %v1855
    %4704 = vmatpush.msra.mxu0 %v1851
    %4705 = vmatpush.msra.mxu0 %v1847
    %4706 = vmatpush.msra.mxu0 %v1843
    %4707 = vmatpush.msra.mxu0 %v1839
    %4708 = vmatpush.msra.mxu0 %v1835
    %4709 = vmatmul.f32.gmra.mxu0 %v2196
    %v4710 = vpop.f32.mrf.mxu0
    %v4711 = vadd.f32 %v4691, %v4710
    %4712 = vdwg.mxu0
    %4713 = vmatpush.msra.mxu0 %v1959
    %4714 = vmatpush.msra.mxu0 %v1955
    %4715 = vmatpush.msra.mxu0 %v1951
    %4716 = vmatpush.msra.mxu0 %v1947
    %4717 = vmatpush.msra.mxu0 %v1943
    %4718 = vmatpush.msra.mxu0 %v1939
    %4719 = vmatpush.msra.mxu0 %v1935
    %4720 = vmatpush.msra.mxu0 %v1931
    %4721 = vmatpush.msra.mxu0 %v1927
    %4722 = vmatpush.msra.mxu0 %v1923
    %4723 = vmatpush.msra.mxu0 %v1919
    %4724 = vmatpush.msra.mxu0 %v1915
    %4725 = vmatpush.msra.mxu0 %v1911
    %4726 = vmatpush.msra.mxu0 %v1907
    %4727 = vmatpush.msra.mxu0 %v1903
    %4728 = vmatpush.msra.mxu0 %v1899
    %4729 = vmatmul.f32.gmra.mxu0 %v2197
    %v4730 = vpop.f32.mrf.mxu0
    %v4731 = vadd.f32 %v4711, %v4730
    %4732 = vdwg.mxu0
    %4733 = vmatpush.msra.mxu0 %v2023
    %4734 = vmatpush.msra.mxu0 %v2019
    %4735 = vmatpush.msra.mxu0 %v2015
    %4736 = vmatpush.msra.mxu0 %v2011
    %4737 = vmatpush.msra.mxu0 %v2007
    %4738 = vmatpush.msra.mxu0 %v2003
    %4739 = vmatpush.msra.mxu0 %v1999
    %4740 = vmatpush.msra.mxu0 %v1995
    %4741 = vmatpush.msra.mxu0 %v1991
    %4742 = vmatpush.msra.mxu0 %v1987
    %4743 = vmatpush.msra.mxu0 %v1983
    %4744 = vmatpush.msra.mxu0 %v1979
    %4745 = vmatpush.msra.mxu0 %v1975
    %4746 = vmatpush.msra.mxu0 %v1971
    %4747 = vmatpush.msra.mxu0 %v1967
    %4748 = vmatpush.msra.mxu0 %v1963
    %4749 = vmatmul.f32.gmra.mxu0 %v2198
    %v4750 = vpop.f32.mrf.mxu0
    %v4751 = vadd.f32 %v4731, %v4750
    %4752 = vdwg.mxu0
    %4753 = vmatpush.msra.mxu0 %v2087
    %4754 = vmatpush.msra.mxu0 %v2083
    %4755 = vmatpush.msra.mxu0 %v2079
    %4756 = vmatpush.msra.mxu0 %v2075
    %4757 = vmatpush.msra.mxu0 %v2071
    %4758 = vmatpush.msra.mxu0 %v2067
    %4759 = vmatpush.msra.mxu0 %v2063
    %4760 = vmatpush.msra.mxu0 %v2059
    %4761 = vmatpush.msra.mxu0 %v2055
    %4762 = vmatpush.msra.mxu0 %v2051
    %4763 = vmatpush.msra.mxu0 %v2047
    %4764 = vmatpush.msra.mxu0 %v2043
    %4765 = vmatpush.msra.mxu0 %v2039
    %4766 = vmatpush.msra.mxu0 %v2035
    %4767 = vmatpush.msra.mxu0 %v2031
    %4768 = vmatpush.msra.mxu0 %v2027
    %4769 = vmatmul.f32.gmra.mxu0 %v2199
    %v4770 = vpop.f32.mrf.mxu0
    %v4771 = vadd.f32 %v4751, %v4770
    %4772 = vdwg.mxu0
    %4773 = vmatpush.msra.mxu0 %v2151
    %4774 = vmatpush.msra.mxu0 %v2147
    %4775 = vmatpush.msra.mxu0 %v2143
    %4776 = vmatpush.msra.mxu0 %v2139
    %4777 = vmatpush.msra.mxu0 %v2135
    %4778 = vmatpush.msra.mxu0 %v2131
    %4779 = vmatpush.msra.mxu0 %v2127
    %4780 = vmatpush.msra.mxu0 %v2123
    %4781 = vmatpush.msra.mxu0 %v2119
    %4782 = vmatpush.msra.mxu0 %v2115
    %4783 = vmatpush.msra.mxu0 %v2111
    %4784 = vmatpush.msra.mxu0 %v2107
    %4785 = vmatpush.msra.mxu0 %v2103
    %4786 = vmatpush.msra.mxu0 %v2099
    %4787 = vmatpush.msra.mxu0 %v2095
    %4788 = vmatpush.msra.mxu0 %v2091
    %4789 = vmatmul.f32.gmra.mxu0 %v2200
    %v4790 = vpop.f32.mrf.mxu0
    %v4791 = vadd.f32 %v4771, %v4790
    %4792 = vdwg.mxu0
    %v4793 = vmul.f32 %v2871, 0.125
    %v4794 = vmul.f32 %v3511, 0.125
    %v4795 = vmul.f32 %v4151, 0.125
    %v4796 = vmul.f32 %v4791, 0.125
    %v4797 = vld [vmem:[%s2] sm:$0xff]
    %v4798 = vld [vmem:[%s2 + $0x8] sm:$0xff]
    %v4799 = vld [vmem:[%s2 + $0x10] sm:$0xff]
    %v4800 = vld [vmem:[%s2 + $0x18] sm:$0xff]
    %v4801 = vld [vmem:[%s2 + $0x20] sm:$0xff]
    %v4802 = vld [vmem:[%s2 + $0x28] sm:$0xff]
    %v4803 = vld [vmem:[%s2 + $0x30] sm:$0xff]
    %v4804 = vld [vmem:[%s2 + $0x38] sm:$0xff]
    %v4805 = vld [vmem:[%s2 + $0x40] sm:$0xff]
    %v4806 = vld [vmem:[%s2 + $0x48] sm:$0xff]
    %v4807 = vld [vmem:[%s2 + $0x50] sm:$0xff]
    %v4808 = vld [vmem:[%s2 + $0x58] sm:$0xff]
    %v4809 = vld [vmem:[%s2 + $0x60] sm:$0xff]
    %v4810 = vld [vmem:[%s2 + $0x68] sm:$0xff]
    %v4811 = vld [vmem:[%s2 + $0x70] sm:$0xff]
    %v4812 = vld [vmem:[%s2 + $0x78] sm:$0xff]
    %v4813 = vld [vmem:[%s2 + $0x80] sm:$0xff]
    %v4814 = vld [vmem:[%s2 + $0x88] sm:$0xff]
    %v4815 = vld [vmem:[%s2 + $0x90] sm:$0xff]
    %v4816 = vld [vmem:[%s2 + $0x98] sm:$0xff]
    %v4817 = vld [vmem:[%s2 + $0xa0] sm:$0xff]
    %v4818 = vld [vmem:[%s2 + $0xa8] sm:$0xff]
    %v4819 = vld [vmem:[%s2 + $0xb0] sm:$0xff]
    %v4820 = vld [vmem:[%s2 + $0xb8] sm:$0xff]
    %v4821 = vld [vmem:[%s2 + $0xc0] sm:$0xff]
    %v4822 = vld [vmem:[%s2 + $0xc8] sm:$0xff]
    %v4823 = vld [vmem:[%s2 + $0xd0] sm:$0xff]
    %v4824 = vld [vmem:[%s2 + $0xd8] sm:$0xff]
    %v4825 = vld [vmem:[%s2 + $0xe0] sm:$0xff]
    %v4826 = vld [vmem:[%s2 + $0xe8] sm:$0xff]
    %v4827 = vld [vmem:[%s2 + $0xf0] sm:$0xff]
    %v4828 = vld [vmem:[%s2 + $0xf8] sm:$0xff]
    %v4829 = vld [vmem:[%s2 + $0x100] sm:$0xff]
    %v4830 = vld [vmem:[%s2 + $0x108] sm:$0xff]
    %v4831 = vld [vmem:[%s2 + $0x110] sm:$0xff]
    %v4832 = vld [vmem:[%s2 + $0x118] sm:$0xff]
    %v4833 = vld [vmem:[%s2 + $0x120] sm:$0xff]
    %v4834 = vld [vmem:[%s2 + $0x128] sm:$0xff]
    %v4835 = vld [vmem:[%s2 + $0x130] sm:$0xff]
    %v4836 = vld [vmem:[%s2 + $0x138] sm:$0xff]
    %v4837 = vld [vmem:[%s2 + $0x140] sm:$0xff]
    %v4838 = vld [vmem:[%s2 + $0x148] sm:$0xff]
    %v4839 = vld [vmem:[%s2 + $0x150] sm:$0xff]
    %v4840 = vld [vmem:[%s2 + $0x158] sm:$0xff]
    %v4841 = vld [vmem:[%s2 + $0x160] sm:$0xff]
    %v4842 = vld [vmem:[%s2 + $0x168] sm:$0xff]
    %v4843 = vld [vmem:[%s2 + $0x170] sm:$0xff]
    %v4844 = vld [vmem:[%s2 + $0x178] sm:$0xff]
    %v4845 = vld [vmem:[%s2 + $0x180] sm:$0xff]
    %v4846 = vld [vmem:[%s2 + $0x188] sm:$0xff]
    %v4847 = vld [vmem:[%s2 + $0x190] sm:$0xff]
    %v4848 = vld [vmem:[%s2 + $0x198] sm:$0xff]
    %v4849 = vld [vmem:[%s2 + $0x1a0] sm:$0xff]
    %v4850 = vld [vmem:[%s2 + $0x1a8] sm:$0xff]
    %v4851 = vld [vmem:[%s2 + $0x1b0] sm:$0xff]
    %v4852 = vld [vmem:[%s2 + $0x1b8] sm:$0xff]
    %v4853 = vld [vmem:[%s2 + $0x1c0] sm:$0xff]
    %v4854 = vld [vmem:[%s2 + $0x1c8] sm:$0xff]
    %v4855 = vld [vmem:[%s2 + $0x1d0] sm:$0xff]
    %v4856 = vld [vmem:[%s2 + $0x1d8] sm:$0xff]
    %v4857 = vld [vmem:[%s2 + $0x1e0] sm:$0xff]
    %v4858 = vld [vmem:[%s2 + $0x1e8] sm:$0xff]
    %v4859 = vld [vmem:[%s2 + $0x1f0] sm:$0xff]
    %v4860 = vld [vmem:[%s2 + $0x1f8] sm:$0xff]
    %v4861 = vld [vmem:[#allocation7] sm:$0x1]
    %v4863 = vperm.slane %v4861, 0
    %4865 = vmatpush.msra.mxu0 %v4812
    %4866 = vmatpush.msra.mxu0 %v4811
    %4867 = vmatpush.msra.mxu0 %v4810
    %4868 = vmatpush.msra.mxu0 %v4809
    %4869 = vmatpush.msra.mxu0 %v4808
    %4870 = vmatpush.msra.mxu0 %v4807
    %4871 = vmatpush.msra.mxu0 %v4806
    %4872 = vmatpush.msra.mxu0 %v4805
    %4873 = vmatpush.msra.mxu0 %v4804
    %4874 = vmatpush.msra.mxu0 %v4803
    %4875 = vmatpush.msra.mxu0 %v4802
    %4876 = vmatpush.msra.mxu0 %v4801
    %4877 = vmatpush.msra.mxu0 %v4800
    %4878 = vmatpush.msra.mxu0 %v4799
    %4879 = vmatpush.msra.mxu0 %v4798
    %4880 = vmatpush.msra.mxu0 %v4797
    %4881 = vmatmul.f32.gmra.mxu0 %v4793
    %v4882 = vpop.f32.mrf.mxu0
    %v4883 = vadd.f32 %v4863, %v4882
    %4884 = vdwg.mxu0
    %4885 = vmatpush.msra.mxu0 %v4828
    %4886 = vmatpush.msra.mxu0 %v4827
    %4887 = vmatpush.msra.mxu0 %v4826
    %4888 = vmatpush.msra.mxu0 %v4825
    %4889 = vmatpush.msra.mxu0 %v4824
    %4890 = vmatpush.msra.mxu0 %v4823
    %4891 = vmatpush.msra.mxu0 %v4822
    %4892 = vmatpush.msra.mxu0 %v4821
    %4893 = vmatpush.msra.mxu0 %v4820
    %4894 = vmatpush.msra.mxu0 %v4819
    %4895 = vmatpush.msra.mxu0 %v4818
    %4896 = vmatpush.msra.mxu0 %v4817
    %4897 = vmatpush.msra.mxu0 %v4816
    %4898 = vmatpush.msra.mxu0 %v4815
    %4899 = vmatpush.msra.mxu0 %v4814
    %4900 = vmatpush.msra.mxu0 %v4813
    %4901 = vmatmul.f32.gmra.mxu0 %v4794
    %v4902 = vpop.f32.mrf.mxu0
    %v4903 = vadd.f32 %v4883, %v4902
    %4904 = vdwg.mxu0
    %4905 = vmatpush.msra.mxu0 %v4844
    %4906 = vmatpush.msra.mxu0 %v4843
    %4907 = vmatpush.msra.mxu0 %v4842
    %4908 = vmatpush.msra.mxu0 %v4841
    %4909 = vmatpush.msra.mxu0 %v4840
    %4910 = vmatpush.msra.mxu0 %v4839
    %4911 = vmatpush.msra.mxu0 %v4838
    %4912 = vmatpush.msra.mxu0 %v4837
    %4913 = vmatpush.msra.mxu0 %v4836
    %4914 = vmatpush.msra.mxu0 %v4835
    %4915 = vmatpush.msra.mxu0 %v4834
    %4916 = vmatpush.msra.mxu0 %v4833
    %4917 = vmatpush.msra.mxu0 %v4832
    %4918 = vmatpush.msra.mxu0 %v4831
    %4919 = vmatpush.msra.mxu0 %v4830
    %4920 = vmatpush.msra.mxu0 %v4829
    %4921 = vmatmul.f32.gmra.mxu0 %v4795
    %v4922 = vpop.f32.mrf.mxu0
    %v4923 = vadd.f32 %v4903, %v4922
    %4924 = vdwg.mxu0
    %4925 = vmatpush.msra.mxu0 %v4860
    %4926 = vmatpush.msra.mxu0 %v4859
    %4927 = vmatpush.msra.mxu0 %v4858
    %4928 = vmatpush.msra.mxu0 %v4857
    %4929 = vmatpush.msra.mxu0 %v4856
    %4930 = vmatpush.msra.mxu0 %v4855
    %4931 = vmatpush.msra.mxu0 %v4854
    %4932 = vmatpush.msra.mxu0 %v4853
    %4933 = vmatpush.msra.mxu0 %v4852
    %4934 = vmatpush.msra.mxu0 %v4851
    %4935 = vmatpush.msra.mxu0 %v4850
    %4936 = vmatpush.msra.mxu0 %v4849
    %4937 = vmatpush.msra.mxu0 %v4848
    %4938 = vmatpush.msra.mxu0 %v4847
    %4939 = vmatpush.msra.mxu0 %v4846
    %4940 = vmatpush.msra.mxu0 %v4845
    %4941 = vmatmul.f32.gmra.mxu0 %v4796
    %v4942 = vpop.f32.mrf.mxu0
    %v4943 = vadd.f32 %v4923, %v4942
    %4944 = vdwg.mxu0
    %v4945 = vmax.f32 %v4943, 0.0
    %v4946 = vld [vmem:[#allocation8] sm:$0xff]
    %v4947 = vld [vmem:[#allocation8 + $0x8] sm:$0xff]
    %v4948 = vld [vmem:[#allocation8 + $0x10] sm:$0xff]
    %v4949 = vld [vmem:[#allocation8 + $0x18] sm:$0xff]
    %v4950 = vld [vmem:[#allocation8 + $0x20] sm:$0xff]
    %v4951 = vld [vmem:[#allocation8 + $0x28] sm:$0xff]
    %v4952 = vld [vmem:[#allocation8 + $0x30] sm:$0xff]
    %v4953 = vld [vmem:[#allocation8 + $0x38] sm:$0xff]
    %v4954 = vld [vmem:[#allocation8 + $0x40] sm:$0xff]
    %v4955 = vld [vmem:[#allocation8 + $0x48] sm:$0xff]
    %v4956 = vld [vmem:[#allocation8 + $0x50] sm:$0xff]
    %v4957 = vld [vmem:[#allocation8 + $0x58] sm:$0xff]
    %v4958 = vld [vmem:[#allocation8 + $0x60] sm:$0xff]
    %v4959 = vld [vmem:[#allocation8 + $0x68] sm:$0xff]
    %v4960 = vld [vmem:[#allocation8 + $0x70] sm:$0xff]
    %v4961 = vld [vmem:[#allocation8 + $0x78] sm:$0xff]
    %v4962 = vld [vmem:[#allocation10] sm:$0xf]
    %v4964 = vperm.slane %v4962, 0
    %v4965 = vperm.slane %v4962, 1
    %v4966 = vperm.slane %v4962, 2
    %v4967 = vperm.slane %v4962, 3
    %vm4972 = vcmask 261120
    %v4974 = vsel %vm4972, %v4945, 0
    %4976 = vmatpush.msra.mxu0 0.0
    %4977 = vmatpush.msra.mxu0 0.0
    %4978 = vmatpush.msra.mxu0 0.0
    %4979 = vmatpush.msra.mxu0 0.0
    %4980 = vmatpush.msra.mxu0 0.0
    %4981 = vmatpush.msra.mxu0 0.0
    %4982 = vmatpush.msra.mxu0 0.0
    %4983 = vmatpush.msra.mxu0 0.0
    %4984 = vmatpush.msra.mxu0 0.0
    %4985 = vmatpush.msra.mxu0 0.0
    %4986 = vmatpush.msra.mxu0 0.0
    %4987 = vmatpush.msra.mxu0 0.0
    %4988 = vmatpush.msra.mxu0 %v4958
    %4989 = vmatpush.msra.mxu0 %v4954
    %4990 = vmatpush.msra.mxu0 %v4950
    %4991 = vmatpush.msra.mxu0 %v4946
    %4992 = vmatmul.f32.gmra.mxu0 %v4974
    %v4993 = vpop.f32.mrf.mxu0
    %v4994 = vadd.f32 %v4964, %v4993
    %4995 = vdwg.mxu0
    %4996 = vmatpush.msra.mxu0 0.0
    %4997 = vmatpush.msra.mxu0 0.0
    %4998 = vmatpush.msra.mxu0 0.0
    %4999 = vmatpush.msra.mxu0 0.0
    %5000 = vmatpush.msra.mxu0 0.0
    %5001 = vmatpush.msra.mxu0 0.0
    %5002 = vmatpush.msra.mxu0 0.0
    %5003 = vmatpush.msra.mxu0 0.0
    %5004 = vmatpush.msra.mxu0 0.0
    %5005 = vmatpush.msra.mxu0 0.0
    %5006 = vmatpush.msra.mxu0 0.0
    %5007 = vmatpush.msra.mxu0 0.0
    %5008 = vmatpush.msra.mxu0 %v4959
    %5009 = vmatpush.msra.mxu0 %v4955
    %5010 = vmatpush.msra.mxu0 %v4951
    %5011 = vmatpush.msra.mxu0 %v4947
    %5012 = vmatmul.f32.gmra.mxu0 %v4974
    %v5013 = vpop.f32.mrf.mxu0
    %v5014 = vadd.f32 %v4965, %v5013
    %5015 = vdwg.mxu0
    %5016 = vmatpush.msra.mxu0 0.0
    %5017 = vmatpush.msra.mxu0 0.0
    %5018 = vmatpush.msra.mxu0 0.0
    %5019 = vmatpush.msra.mxu0 0.0
    %5020 = vmatpush.msra.mxu0 0.0
    %5021 = vmatpush.msra.mxu0 0.0
    %5022 = vmatpush.msra.mxu0 0.0
    %5023 = vmatpush.msra.mxu0 0.0
    %5024 = vmatpush.msra.mxu0 0.0
    %5025 = vmatpush.msra.mxu0 0.0
    %5026 = vmatpush.msra.mxu0 0.0
    %5027 = vmatpush.msra.mxu0 0.0
    %5028 = vmatpush.msra.mxu0 %v4960
    %5029 = vmatpush.msra.mxu0 %v4956
    %5030 = vmatpush.msra.mxu0 %v4952
    %5031 = vmatpush.msra.mxu0 %v4948
    %5032 = vmatmul.f32.gmra.mxu0 %v4974
    %v5033 = vpop.f32.mrf.mxu0
    %v5034 = vadd.f32 %v4966, %v5033
    %5035 = vdwg.mxu0
    %5036 = vmatpush.msra.mxu0 0.0
    %5037 = vmatpush.msra.mxu0 0.0
    %5038 = vmatpush.msra.mxu0 0.0
    %5039 = vmatpush.msra.mxu0 0.0
    %5040 = vmatpush.msra.mxu0 0.0
    %5041 = vmatpush.msra.mxu0 0.0
    %5042 = vmatpush.msra.mxu0 0.0
    %5043 = vmatpush.msra.mxu0 0.0
    %5044 = vmatpush.msra.mxu0 0.0
    %5045 = vmatpush.msra.mxu0 0.0
    %5046 = vmatpush.msra.mxu0 0.0
    %5047 = vmatpush.msra.mxu0 0.0
    %5048 = vmatpush.msra.mxu0 %v4961
    %5049 = vmatpush.msra.mxu0 %v4957
    %5050 = vmatpush.msra.mxu0 %v4953
    %5051 = vmatpush.msra.mxu0 %v4949
    %5052 = vmatmul.f32.gmra.mxu0 %v4974
    %v5053 = vpop.f32.mrf.mxu0
    %v5054 = vadd.f32 %v4967, %v5053
    %5055 = vdwg.mxu0
    %v5056 = vxor.u32 %v4994, 2147483648
    %v5057 = vxor.u32 %v5014, 2147483648
    %v5058 = vxor.u32 %v5034, 2147483648
    %v5059 = vxor.u32 %v5054, 2147483648
    %v5060 = vmul.f32 %v5056, 1.442695
    %v5061 = vpow.pop %v5060
    %v5062 = vmul.f32 %v5057, 1.442695
    %v5063 = vpow.pop %v5062
    %v5064 = vmul.f32 %v5058, 1.442695
    %v5065 = vpow.pop %v5064
    %v5066 = vmul.f32 %v5059, 1.442695
    %v5067 = vpow.pop %v5066
    %v5068 = vadd.f32 %v5061, 1.0
    %v5069 = vadd.f32 %v5063, 1.0
    %v5070 = vadd.f32 %v5065, 1.0
    %v5071 = vadd.f32 %v5067, 1.0
    %v5072 = vrcp.pop %v5068
    %v5073 = vmul.f32 %v5068, %v5072
    %v5074 = vsub.f32 1.0, %v5073
    %v5075 = vmul.f32 %v5072, %v5074
    %v5076 = vadd.f32 %v5072, %v5075
    %vm5077 = vweird.f32 %v5068
    %vm5078 = vweird.f32 %v5072
    %vm5079 = vmor %vm5077, %vm5078
    %v5080 = vsel %vm5079, %v5072, %v5076
    %v5081 = vand.u32 2147483647, %v5068
    %vm5082 = vcmp.eq.f32.partialorder %v5081, 8.507059e+37
    %v5083 = vand.u32 %v5068, 2147483648
    %v5084 = vor.u32 1.1754944e-38, %v5083
    %v5085 = vsel %vm5082, %v5084, %v5080
    %v5086 = vmul.f32 1.0, %v5085
    %v5087 = vrcp.pop %v5069
    %v5088 = vmul.f32 %v5069, %v5087
    %v5089 = vsub.f32 1.0, %v5088
    %v5090 = vmul.f32 %v5087, %v5089
    %v5091 = vadd.f32 %v5087, %v5090
    %vm5092 = vweird.f32 %v5069
    %vm5093 = vweird.f32 %v5087
    %vm5094 = vmor %vm5092, %vm5093
    %v5095 = vsel %vm5094, %v5087, %v5091
    %v5096 = vand.u32 2147483647, %v5069
    %vm5097 = vcmp.eq.f32.partialorder %v5096, 8.507059e+37
    %v5098 = vand.u32 %v5069, 2147483648
    %v5099 = vor.u32 1.1754944e-38, %v5098
    %v5100 = vsel %vm5097, %v5099, %v5095
    %v5101 = vmul.f32 1.0, %v5100
    %v5102 = vrcp.pop %v5070
    %v5103 = vmul.f32 %v5070, %v5102
    %v5104 = vsub.f32 1.0, %v5103
    %v5105 = vmul.f32 %v5102, %v5104
    %v5106 = vadd.f32 %v5102, %v5105
    %vm5107 = vweird.f32 %v5070
    %vm5108 = vweird.f32 %v5102
    %vm5109 = vmor %vm5107, %vm5108
    %v5110 = vsel %vm5109, %v5102, %v5106
    %v5111 = vand.u32 2147483647, %v5070
    %vm5112 = vcmp.eq.f32.partialorder %v5111, 8.507059e+37
    %v5113 = vand.u32 %v5070, 2147483648
    %v5114 = vor.u32 1.1754944e-38, %v5113
    %v5115 = vsel %vm5112, %v5114, %v5110
    %v5116 = vmul.f32 1.0, %v5115
    %v5117 = vrcp.pop %v5071
    %v5118 = vmul.f32 %v5071, %v5117
    %v5119 = vsub.f32 1.0, %v5118
    %v5120 = vmul.f32 %v5117, %v5119
    %v5121 = vadd.f32 %v5117, %v5120
    %vm5122 = vweird.f32 %v5071
    %vm5123 = vweird.f32 %v5117
    %vm5124 = vmor %vm5122, %vm5123
    %v5125 = vsel %vm5124, %v5117, %v5121
    %v5126 = vand.u32 2147483647, %v5071
    %vm5127 = vcmp.eq.f32.partialorder %v5126, 8.507059e+37
    %v5128 = vand.u32 %v5071, 2147483648
    %v5129 = vor.u32 1.1754944e-38, %v5128
    %v5130 = vsel %vm5127, %v5129, %v5125
    %v5131 = vmul.f32 1.0, %v5130
    %5132 = vmatpush.xpose.msra.mxu0 %v164
    %5133 = vmatpush.xpose.msra.mxu0 %v160
    %5134 = vmatpush.xpose.msra.mxu0 %v156
    %5135 = vmatpush.xpose.msra.mxu0 %v152
    %5136 = vmatpush.xpose.msra.mxu0 %v148
    %5137 = vmatpush.xpose.msra.mxu0 %v144
    %5138 = vmatpush.xpose.msra.mxu0 %v140
    %5139 = vmatpush.xpose.msra.mxu0 %v136
    %5140 = vmatpush.xpose.msra.mxu0 %v132
    %5141 = vmatpush.xpose.msra.mxu0 %v128
    %5142 = vmatpush.xpose.msra.mxu0 %v124
    %5143 = vmatpush.xpose.msra.mxu0 %v120
    %5144 = vmatpush.xpose.msra.mxu0 %v116
    %5145 = vmatpush.xpose.msra.mxu0 %v112
    %5146 = vmatpush.xpose.msra.mxu0 %v108
    %5147 = vmatpush.xpose.msra.mxu0 %v104
    %5148 = vmatmul.f32.gmra.mxu0 %v5086
    %v5149 = vpop.f32.mrf.mxu0
    %v5150 = vadd.f32 0.0, %v5149
    %5151 = vdwg.mxu0
    %5152 = vmatpush.xpose.msra.mxu0 %v165
    %5153 = vmatpush.xpose.msra.mxu0 %v161
    %5154 = vmatpush.xpose.msra.mxu0 %v157
    %5155 = vmatpush.xpose.msra.mxu0 %v153
    %5156 = vmatpush.xpose.msra.mxu0 %v149
    %5157 = vmatpush.xpose.msra.mxu0 %v145
    %5158 = vmatpush.xpose.msra.mxu0 %v141
    %5159 = vmatpush.xpose.msra.mxu0 %v137
    %5160 = vmatpush.xpose.msra.mxu0 %v133
    %5161 = vmatpush.xpose.msra.mxu0 %v129
    %5162 = vmatpush.xpose.msra.mxu0 %v125
    %5163 = vmatpush.xpose.msra.mxu0 %v121
    %5164 = vmatpush.xpose.msra.mxu0 %v117
    %5165 = vmatpush.xpose.msra.mxu0 %v113
    %5166 = vmatpush.xpose.msra.mxu0 %v109
    %5167 = vmatpush.xpose.msra.mxu0 %v105
    %5168 = vmatmul.f32.gmra.mxu0 %v5101
    %v5169 = vpop.f32.mrf.mxu0
    %v5170 = vadd.f32 %v5150, %v5169
    %5171 = vdwg.mxu0
    %5172 = vmatpush.xpose.msra.mxu0 %v166
    %5173 = vmatpush.xpose.msra.mxu0 %v162
    %5174 = vmatpush.xpose.msra.mxu0 %v158
    %5175 = vmatpush.xpose.msra.mxu0 %v154
    %5176 = vmatpush.xpose.msra.mxu0 %v150
    %5177 = vmatpush.xpose.msra.mxu0 %v146
    %5178 = vmatpush.xpose.msra.mxu0 %v142
    %5179 = vmatpush.xpose.msra.mxu0 %v138
    %5180 = vmatpush.xpose.msra.mxu0 %v134
    %5181 = vmatpush.xpose.msra.mxu0 %v130
    %5182 = vmatpush.xpose.msra.mxu0 %v126
    %5183 = vmatpush.xpose.msra.mxu0 %v122
    %5184 = vmatpush.xpose.msra.mxu0 %v118
    %5185 = vmatpush.xpose.msra.mxu0 %v114
    %5186 = vmatpush.xpose.msra.mxu0 %v110
    %5187 = vmatpush.xpose.msra.mxu0 %v106
    %5188 = vmatmul.f32.gmra.mxu0 %v5116
    %v5189 = vpop.f32.mrf.mxu0
    %v5190 = vadd.f32 %v5170, %v5189
    %5191 = vdwg.mxu0
    %5192 = vmatpush.xpose.msra.mxu0 %v167
    %5193 = vmatpush.xpose.msra.mxu0 %v163
    %5194 = vmatpush.xpose.msra.mxu0 %v159
    %5195 = vmatpush.xpose.msra.mxu0 %v155
    %5196 = vmatpush.xpose.msra.mxu0 %v151
    %5197 = vmatpush.xpose.msra.mxu0 %v147
    %5198 = vmatpush.xpose.msra.mxu0 %v143
    %5199 = vmatpush.xpose.msra.mxu0 %v139
    %5200 = vmatpush.xpose.msra.mxu0 %v135
    %5201 = vmatpush.xpose.msra.mxu0 %v131
    %5202 = vmatpush.xpose.msra.mxu0 %v127
    %5203 = vmatpush.xpose.msra.mxu0 %v123
    %5204 = vmatpush.xpose.msra.mxu0 %v119
    %5205 = vmatpush.xpose.msra.mxu0 %v115
    %5206 = vmatpush.xpose.msra.mxu0 %v111
    %5207 = vmatpush.xpose.msra.mxu0 %v107
    %5208 = vmatmul.f32.gmra.mxu0 %v5131
    %v5209 = vpop.f32.mrf.mxu0
    %v5210 = vadd.f32 %v5190, %v5209
    %5211 = vdwg.mxu0
    %5212 = vmatpush.xpose.msra.mxu0 %v228
    %5213 = vmatpush.xpose.msra.mxu0 %v224
    %5214 = vmatpush.xpose.msra.mxu0 %v220
    %5215 = vmatpush.xpose.msra.mxu0 %v216
    %5216 = vmatpush.xpose.msra.mxu0 %v212
    %5217 = vmatpush.xpose.msra.mxu0 %v208
    %5218 = vmatpush.xpose.msra.mxu0 %v204
    %5219 = vmatpush.xpose.msra.mxu0 %v200
    %5220 = vmatpush.xpose.msra.mxu0 %v196
    %5221 = vmatpush.xpose.msra.mxu0 %v192
    %5222 = vmatpush.xpose.msra.mxu0 %v188
    %5223 = vmatpush.xpose.msra.mxu0 %v184
    %5224 = vmatpush.xpose.msra.mxu0 %v180
    %5225 = vmatpush.xpose.msra.mxu0 %v176
    %5226 = vmatpush.xpose.msra.mxu0 %v172
    %5227 = vmatpush.xpose.msra.mxu0 %v168
    %5228 = vmatmul.f32.gmra.mxu0 %v5086
    %v5229 = vpop.f32.mrf.mxu0
    %v5230 = vadd.f32 0.0, %v5229
    %5231 = vdwg.mxu0
    %5232 = vmatpush.xpose.msra.mxu0 %v229
    %5233 = vmatpush.xpose.msra.mxu0 %v225
    %5234 = vmatpush.xpose.msra.mxu0 %v221
    %5235 = vmatpush.xpose.msra.mxu0 %v217
    %5236 = vmatpush.xpose.msra.mxu0 %v213
    %5237 = vmatpush.xpose.msra.mxu0 %v209
    %5238 = vmatpush.xpose.msra.mxu0 %v205
    %5239 = vmatpush.xpose.msra.mxu0 %v201
    %5240 = vmatpush.xpose.msra.mxu0 %v197
    %5241 = vmatpush.xpose.msra.mxu0 %v193
    %5242 = vmatpush.xpose.msra.mxu0 %v189
    %5243 = vmatpush.xpose.msra.mxu0 %v185
    %5244 = vmatpush.xpose.msra.mxu0 %v181
    %5245 = vmatpush.xpose.msra.mxu0 %v177
    %5246 = vmatpush.xpose.msra.mxu0 %v173
    %5247 = vmatpush.xpose.msra.mxu0 %v169
    %5248 = vmatmul.f32.gmra.mxu0 %v5101
    %v5249 = vpop.f32.mrf.mxu0
    %v5250 = vadd.f32 %v5230, %v5249
    %5251 = vdwg.mxu0
    %5252 = vmatpush.xpose.msra.mxu0 %v230
    %5253 = vmatpush.xpose.msra.mxu0 %v226
    %5254 = vmatpush.xpose.msra.mxu0 %v222
    %5255 = vmatpush.xpose.msra.mxu0 %v218
    %5256 = vmatpush.xpose.msra.mxu0 %v214
    %5257 = vmatpush.xpose.msra.mxu0 %v210
    %5258 = vmatpush.xpose.msra.mxu0 %v206
    %5259 = vmatpush.xpose.msra.mxu0 %v202
    %5260 = vmatpush.xpose.msra.mxu0 %v198
    %5261 = vmatpush.xpose.msra.mxu0 %v194
    %5262 = vmatpush.xpose.msra.mxu0 %v190
    %5263 = vmatpush.xpose.msra.mxu0 %v186
    %5264 = vmatpush.xpose.msra.mxu0 %v182
    %5265 = vmatpush.xpose.msra.mxu0 %v178
    %5266 = vmatpush.xpose.msra.mxu0 %v174
    %5267 = vmatpush.xpose.msra.mxu0 %v170
    %5268 = vmatmul.f32.gmra.mxu0 %v5116
    %v5269 = vpop.f32.mrf.mxu0
    %v5270 = vadd.f32 %v5250, %v5269
    %5271 = vdwg.mxu0
    %5272 = vmatpush.xpose.msra.mxu0 %v231
    %5273 = vmatpush.xpose.msra.mxu0 %v227
    %5274 = vmatpush.xpose.msra.mxu0 %v223
    %5275 = vmatpush.xpose.msra.mxu0 %v219
    %5276 = vmatpush.xpose.msra.mxu0 %v215
    %5277 = vmatpush.xpose.msra.mxu0 %v211
    %5278 = vmatpush.xpose.msra.mxu0 %v207
    %5279 = vmatpush.xpose.msra.mxu0 %v203
    %5280 = vmatpush.xpose.msra.mxu0 %v199
    %5281 = vmatpush.xpose.msra.mxu0 %v195
    %5282 = vmatpush.xpose.msra.mxu0 %v191
    %5283 = vmatpush.xpose.msra.mxu0 %v187
    %5284 = vmatpush.xpose.msra.mxu0 %v183
    %5285 = vmatpush.xpose.msra.mxu0 %v179
    %5286 = vmatpush.xpose.msra.mxu0 %v175
    %5287 = vmatpush.xpose.msra.mxu0 %v171
    %5288 = vmatmul.f32.gmra.mxu0 %v5131
    %v5289 = vpop.f32.mrf.mxu0
    %v5290 = vadd.f32 %v5270, %v5289
    %5291 = vdwg.mxu0
    %5292 = vmatpush.xpose.msra.mxu0 %v292
    %5293 = vmatpush.xpose.msra.mxu0 %v288
    %5294 = vmatpush.xpose.msra.mxu0 %v284
    %5295 = vmatpush.xpose.msra.mxu0 %v280
    %5296 = vmatpush.xpose.msra.mxu0 %v276
    %5297 = vmatpush.xpose.msra.mxu0 %v272
    %5298 = vmatpush.xpose.msra.mxu0 %v268
    %5299 = vmatpush.xpose.msra.mxu0 %v264
    %5300 = vmatpush.xpose.msra.mxu0 %v260
    %5301 = vmatpush.xpose.msra.mxu0 %v256
    %5302 = vmatpush.xpose.msra.mxu0 %v252
    %5303 = vmatpush.xpose.msra.mxu0 %v248
    %5304 = vmatpush.xpose.msra.mxu0 %v244
    %5305 = vmatpush.xpose.msra.mxu0 %v240
    %5306 = vmatpush.xpose.msra.mxu0 %v236
    %5307 = vmatpush.xpose.msra.mxu0 %v232
    %5308 = vmatmul.f32.gmra.mxu0 %v5086
    %v5309 = vpop.f32.mrf.mxu0
    %v5310 = vadd.f32 0.0, %v5309
    %5311 = vdwg.mxu0
    %5312 = vmatpush.xpose.msra.mxu0 %v293
    %5313 = vmatpush.xpose.msra.mxu0 %v289
    %5314 = vmatpush.xpose.msra.mxu0 %v285
    %5315 = vmatpush.xpose.msra.mxu0 %v281
    %5316 = vmatpush.xpose.msra.mxu0 %v277
    %5317 = vmatpush.xpose.msra.mxu0 %v273
    %5318 = vmatpush.xpose.msra.mxu0 %v269
    %5319 = vmatpush.xpose.msra.mxu0 %v265
    %5320 = vmatpush.xpose.msra.mxu0 %v261
    %5321 = vmatpush.xpose.msra.mxu0 %v257
    %5322 = vmatpush.xpose.msra.mxu0 %v253
    %5323 = vmatpush.xpose.msra.mxu0 %v249
    %5324 = vmatpush.xpose.msra.mxu0 %v245
    %5325 = vmatpush.xpose.msra.mxu0 %v241
    %5326 = vmatpush.xpose.msra.mxu0 %v237
    %5327 = vmatpush.xpose.msra.mxu0 %v233
    %5328 = vmatmul.f32.gmra.mxu0 %v5101
    %v5329 = vpop.f32.mrf.mxu0
    %v5330 = vadd.f32 %v5310, %v5329
    %5331 = vdwg.mxu0
    %5332 = vmatpush.xpose.msra.mxu0 %v294
    %5333 = vmatpush.xpose.msra.mxu0 %v290
    %5334 = vmatpush.xpose.msra.mxu0 %v286
    %5335 = vmatpush.xpose.msra.mxu0 %v282
    %5336 = vmatpush.xpose.msra.mxu0 %v278
    %5337 = vmatpush.xpose.msra.mxu0 %v274
    %5338 = vmatpush.xpose.msra.mxu0 %v270
    %5339 = vmatpush.xpose.msra.mxu0 %v266
    %5340 = vmatpush.xpose.msra.mxu0 %v262
    %5341 = vmatpush.xpose.msra.mxu0 %v258
    %5342 = vmatpush.xpose.msra.mxu0 %v254
    %5343 = vmatpush.xpose.msra.mxu0 %v250
    %5344 = vmatpush.xpose.msra.mxu0 %v246
    %5345 = vmatpush.xpose.msra.mxu0 %v242
    %5346 = vmatpush.xpose.msra.mxu0 %v238
    %5347 = vmatpush.xpose.msra.mxu0 %v234
    %5348 = vmatmul.f32.gmra.mxu0 %v5116
    %v5349 = vpop.f32.mrf.mxu0
    %v5350 = vadd.f32 %v5330, %v5349
    %5351 = vdwg.mxu0
    %5352 = vmatpush.xpose.msra.mxu0 %v295
    %5353 = vmatpush.xpose.msra.mxu0 %v291
    %5354 = vmatpush.xpose.msra.mxu0 %v287
    %5355 = vmatpush.xpose.msra.mxu0 %v283
    %5356 = vmatpush.xpose.msra.mxu0 %v279
    %5357 = vmatpush.xpose.msra.mxu0 %v275
    %5358 = vmatpush.xpose.msra.mxu0 %v271
    %5359 = vmatpush.xpose.msra.mxu0 %v267
    %5360 = vmatpush.xpose.msra.mxu0 %v263
    %5361 = vmatpush.xpose.msra.mxu0 %v259
    %5362 = vmatpush.xpose.msra.mxu0 %v255
    %5363 = vmatpush.xpose.msra.mxu0 %v251
    %5364 = vmatpush.xpose.msra.mxu0 %v247
    %5365 = vmatpush.xpose.msra.mxu0 %v243
    %5366 = vmatpush.xpose.msra.mxu0 %v239
    %5367 = vmatpush.xpose.msra.mxu0 %v235
    %5368 = vmatmul.f32.gmra.mxu0 %v5131
    %v5369 = vpop.f32.mrf.mxu0
    %v5370 = vadd.f32 %v5350, %v5369
    %5371 = vdwg.mxu0
    %5372 = vmatpush.xpose.msra.mxu0 %v356
    %5373 = vmatpush.xpose.msra.mxu0 %v352
    %5374 = vmatpush.xpose.msra.mxu0 %v348
    %5375 = vmatpush.xpose.msra.mxu0 %v344
    %5376 = vmatpush.xpose.msra.mxu0 %v340
    %5377 = vmatpush.xpose.msra.mxu0 %v336
    %5378 = vmatpush.xpose.msra.mxu0 %v332
    %5379 = vmatpush.xpose.msra.mxu0 %v328
    %5380 = vmatpush.xpose.msra.mxu0 %v324
    %5381 = vmatpush.xpose.msra.mxu0 %v320
    %5382 = vmatpush.xpose.msra.mxu0 %v316
    %5383 = vmatpush.xpose.msra.mxu0 %v312
    %5384 = vmatpush.xpose.msra.mxu0 %v308
    %5385 = vmatpush.xpose.msra.mxu0 %v304
    %5386 = vmatpush.xpose.msra.mxu0 %v300
    %5387 = vmatpush.xpose.msra.mxu0 %v296
    %5388 = vmatmul.f32.gmra.mxu0 %v5086
    %v5389 = vpop.f32.mrf.mxu0
    %v5390 = vadd.f32 0.0, %v5389
    %5391 = vdwg.mxu0
    %5392 = vmatpush.xpose.msra.mxu0 %v357
    %5393 = vmatpush.xpose.msra.mxu0 %v353
    %5394 = vmatpush.xpose.msra.mxu0 %v349
    %5395 = vmatpush.xpose.msra.mxu0 %v345
    %5396 = vmatpush.xpose.msra.mxu0 %v341
    %5397 = vmatpush.xpose.msra.mxu0 %v337
    %5398 = vmatpush.xpose.msra.mxu0 %v333
    %5399 = vmatpush.xpose.msra.mxu0 %v329
    %5400 = vmatpush.xpose.msra.mxu0 %v325
    %5401 = vmatpush.xpose.msra.mxu0 %v321
    %5402 = vmatpush.xpose.msra.mxu0 %v317
    %5403 = vmatpush.xpose.msra.mxu0 %v313
    %5404 = vmatpush.xpose.msra.mxu0 %v309
    %5405 = vmatpush.xpose.msra.mxu0 %v305
    %5406 = vmatpush.xpose.msra.mxu0 %v301
    %5407 = vmatpush.xpose.msra.mxu0 %v297
    %5408 = vmatmul.f32.gmra.mxu0 %v5101
    %v5409 = vpop.f32.mrf.mxu0
    %v5410 = vadd.f32 %v5390, %v5409
    %5411 = vdwg.mxu0
    %5412 = vmatpush.xpose.msra.mxu0 %v358
    %5413 = vmatpush.xpose.msra.mxu0 %v354
    %5414 = vmatpush.xpose.msra.mxu0 %v350
    %5415 = vmatpush.xpose.msra.mxu0 %v346
    %5416 = vmatpush.xpose.msra.mxu0 %v342
    %5417 = vmatpush.xpose.msra.mxu0 %v338
    %5418 = vmatpush.xpose.msra.mxu0 %v334
    %5419 = vmatpush.xpose.msra.mxu0 %v330
    %5420 = vmatpush.xpose.msra.mxu0 %v326
    %5421 = vmatpush.xpose.msra.mxu0 %v322
    %5422 = vmatpush.xpose.msra.mxu0 %v318
    %5423 = vmatpush.xpose.msra.mxu0 %v314
    %5424 = vmatpush.xpose.msra.mxu0 %v310
    %5425 = vmatpush.xpose.msra.mxu0 %v306
    %5426 = vmatpush.xpose.msra.mxu0 %v302
    %5427 = vmatpush.xpose.msra.mxu0 %v298
    %5428 = vmatmul.f32.gmra.mxu0 %v5116
    %v5429 = vpop.f32.mrf.mxu0
    %v5430 = vadd.f32 %v5410, %v5429
    %5431 = vdwg.mxu0
    %5432 = vmatpush.xpose.msra.mxu0 %v359
    %5433 = vmatpush.xpose.msra.mxu0 %v355
    %5434 = vmatpush.xpose.msra.mxu0 %v351
    %5435 = vmatpush.xpose.msra.mxu0 %v347
    %5436 = vmatpush.xpose.msra.mxu0 %v343
    %5437 = vmatpush.xpose.msra.mxu0 %v339
    %5438 = vmatpush.xpose.msra.mxu0 %v335
    %5439 = vmatpush.xpose.msra.mxu0 %v331
    %5440 = vmatpush.xpose.msra.mxu0 %v327
    %5441 = vmatpush.xpose.msra.mxu0 %v323
    %5442 = vmatpush.xpose.msra.mxu0 %v319
    %5443 = vmatpush.xpose.msra.mxu0 %v315
    %5444 = vmatpush.xpose.msra.mxu0 %v311
    %5445 = vmatpush.xpose.msra.mxu0 %v307
    %5446 = vmatpush.xpose.msra.mxu0 %v303
    %5447 = vmatpush.xpose.msra.mxu0 %v299
    %5448 = vmatmul.f32.gmra.mxu0 %v5131
    %v5449 = vpop.f32.mrf.mxu0
    %v5450 = vadd.f32 %v5430, %v5449
    %5451 = vdwg.mxu0
    %5452 = vmatpush.xpose.msra.mxu0 %v420
    %5453 = vmatpush.xpose.msra.mxu0 %v416
    %5454 = vmatpush.xpose.msra.mxu0 %v412
    %5455 = vmatpush.xpose.msra.mxu0 %v408
    %5456 = vmatpush.xpose.msra.mxu0 %v404
    %5457 = vmatpush.xpose.msra.mxu0 %v400
    %5458 = vmatpush.xpose.msra.mxu0 %v396
    %5459 = vmatpush.xpose.msra.mxu0 %v392
    %5460 = vmatpush.xpose.msra.mxu0 %v388
    %5461 = vmatpush.xpose.msra.mxu0 %v384
    %5462 = vmatpush.xpose.msra.mxu0 %v380
    %5463 = vmatpush.xpose.msra.mxu0 %v376
    %5464 = vmatpush.xpose.msra.mxu0 %v372
    %5465 = vmatpush.xpose.msra.mxu0 %v368
    %5466 = vmatpush.xpose.msra.mxu0 %v364
    %5467 = vmatpush.xpose.msra.mxu0 %v360
    %5468 = vmatmul.f32.gmra.mxu0 %v5086
    %v5469 = vpop.f32.mrf.mxu0
    %v5470 = vadd.f32 0.0, %v5469
    %5471 = vdwg.mxu0
    %5472 = vmatpush.xpose.msra.mxu0 %v421
    %5473 = vmatpush.xpose.msra.mxu0 %v417
    %5474 = vmatpush.xpose.msra.mxu0 %v413
    %5475 = vmatpush.xpose.msra.mxu0 %v409
    %5476 = vmatpush.xpose.msra.mxu0 %v405
    %5477 = vmatpush.xpose.msra.mxu0 %v401
    %5478 = vmatpush.xpose.msra.mxu0 %v397
    %5479 = vmatpush.xpose.msra.mxu0 %v393
    %5480 = vmatpush.xpose.msra.mxu0 %v389
    %5481 = vmatpush.xpose.msra.mxu0 %v385
    %5482 = vmatpush.xpose.msra.mxu0 %v381
    %5483 = vmatpush.xpose.msra.mxu0 %v377
    %5484 = vmatpush.xpose.msra.mxu0 %v373
    %5485 = vmatpush.xpose.msra.mxu0 %v369
    %5486 = vmatpush.xpose.msra.mxu0 %v365
    %5487 = vmatpush.xpose.msra.mxu0 %v361
    %5488 = vmatmul.f32.gmra.mxu0 %v5101
    %v5489 = vpop.f32.mrf.mxu0
    %v5490 = vadd.f32 %v5470, %v5489
    %5491 = vdwg.mxu0
    %5492 = vmatpush.xpose.msra.mxu0 %v422
    %5493 = vmatpush.xpose.msra.mxu0 %v418
    %5494 = vmatpush.xpose.msra.mxu0 %v414
    %5495 = vmatpush.xpose.msra.mxu0 %v410
    %5496 = vmatpush.xpose.msra.mxu0 %v406
    %5497 = vmatpush.xpose.msra.mxu0 %v402
    %5498 = vmatpush.xpose.msra.mxu0 %v398
    %5499 = vmatpush.xpose.msra.mxu0 %v394
    %5500 = vmatpush.xpose.msra.mxu0 %v390
    %5501 = vmatpush.xpose.msra.mxu0 %v386
    %5502 = vmatpush.xpose.msra.mxu0 %v382
    %5503 = vmatpush.xpose.msra.mxu0 %v378
    %5504 = vmatpush.xpose.msra.mxu0 %v374
    %5505 = vmatpush.xpose.msra.mxu0 %v370
    %5506 = vmatpush.xpose.msra.mxu0 %v366
    %5507 = vmatpush.xpose.msra.mxu0 %v362
    %5508 = vmatmul.f32.gmra.mxu0 %v5116
    %v5509 = vpop.f32.mrf.mxu0
    %v5510 = vadd.f32 %v5490, %v5509
    %5511 = vdwg.mxu0
    %5512 = vmatpush.xpose.msra.mxu0 %v423
    %5513 = vmatpush.xpose.msra.mxu0 %v419
    %5514 = vmatpush.xpose.msra.mxu0 %v415
    %5515 = vmatpush.xpose.msra.mxu0 %v411
    %5516 = vmatpush.xpose.msra.mxu0 %v407
    %5517 = vmatpush.xpose.msra.mxu0 %v403
    %5518 = vmatpush.xpose.msra.mxu0 %v399
    %5519 = vmatpush.xpose.msra.mxu0 %v395
    %5520 = vmatpush.xpose.msra.mxu0 %v391
    %5521 = vmatpush.xpose.msra.mxu0 %v387
    %5522 = vmatpush.xpose.msra.mxu0 %v383
    %5523 = vmatpush.xpose.msra.mxu0 %v379
    %5524 = vmatpush.xpose.msra.mxu0 %v375
    %5525 = vmatpush.xpose.msra.mxu0 %v371
    %5526 = vmatpush.xpose.msra.mxu0 %v367
    %5527 = vmatpush.xpose.msra.mxu0 %v363
    %5528 = vmatmul.f32.gmra.mxu0 %v5131
    %v5529 = vpop.f32.mrf.mxu0
    %v5530 = vadd.f32 %v5510, %v5529
    %5531 = vdwg.mxu0
    %5532 = vmatpush.xpose.msra.mxu0 %v484
    %5533 = vmatpush.xpose.msra.mxu0 %v480
    %5534 = vmatpush.xpose.msra.mxu0 %v476
    %5535 = vmatpush.xpose.msra.mxu0 %v472
    %5536 = vmatpush.xpose.msra.mxu0 %v468
    %5537 = vmatpush.xpose.msra.mxu0 %v464
    %5538 = vmatpush.xpose.msra.mxu0 %v460
    %5539 = vmatpush.xpose.msra.mxu0 %v456
    %5540 = vmatpush.xpose.msra.mxu0 %v452
    %5541 = vmatpush.xpose.msra.mxu0 %v448
    %5542 = vmatpush.xpose.msra.mxu0 %v444
    %5543 = vmatpush.xpose.msra.mxu0 %v440
    %5544 = vmatpush.xpose.msra.mxu0 %v436
    %5545 = vmatpush.xpose.msra.mxu0 %v432
    %5546 = vmatpush.xpose.msra.mxu0 %v428
    %5547 = vmatpush.xpose.msra.mxu0 %v424
    %5548 = vmatmul.f32.gmra.mxu0 %v5086
    %v5549 = vpop.f32.mrf.mxu0
    %v5550 = vadd.f32 0.0, %v5549
    %5551 = vdwg.mxu0
    %5552 = vmatpush.xpose.msra.mxu0 %v485
    %5553 = vmatpush.xpose.msra.mxu0 %v481
    %5554 = vmatpush.xpose.msra.mxu0 %v477
    %5555 = vmatpush.xpose.msra.mxu0 %v473
    %5556 = vmatpush.xpose.msra.mxu0 %v469
    %5557 = vmatpush.xpose.msra.mxu0 %v465
    %5558 = vmatpush.xpose.msra.mxu0 %v461
    %5559 = vmatpush.xpose.msra.mxu0 %v457
    %5560 = vmatpush.xpose.msra.mxu0 %v453
    %5561 = vmatpush.xpose.msra.mxu0 %v449
    %5562 = vmatpush.xpose.msra.mxu0 %v445
    %5563 = vmatpush.xpose.msra.mxu0 %v441
    %5564 = vmatpush.xpose.msra.mxu0 %v437
    %5565 = vmatpush.xpose.msra.mxu0 %v433
    %5566 = vmatpush.xpose.msra.mxu0 %v429
    %5567 = vmatpush.xpose.msra.mxu0 %v425
    %5568 = vmatmul.f32.gmra.mxu0 %v5101
    %v5569 = vpop.f32.mrf.mxu0
    %v5570 = vadd.f32 %v5550, %v5569
    %5571 = vdwg.mxu0
    %5572 = vmatpush.xpose.msra.mxu0 %v486
    %5573 = vmatpush.xpose.msra.mxu0 %v482
    %5574 = vmatpush.xpose.msra.mxu0 %v478
    %5575 = vmatpush.xpose.msra.mxu0 %v474
    %5576 = vmatpush.xpose.msra.mxu0 %v470
    %5577 = vmatpush.xpose.msra.mxu0 %v466
    %5578 = vmatpush.xpose.msra.mxu0 %v462
    %5579 = vmatpush.xpose.msra.mxu0 %v458
    %5580 = vmatpush.xpose.msra.mxu0 %v454
    %5581 = vmatpush.xpose.msra.mxu0 %v450
    %5582 = vmatpush.xpose.msra.mxu0 %v446
    %5583 = vmatpush.xpose.msra.mxu0 %v442
    %5584 = vmatpush.xpose.msra.mxu0 %v438
    %5585 = vmatpush.xpose.msra.mxu0 %v434
    %5586 = vmatpush.xpose.msra.mxu0 %v430
    %5587 = vmatpush.xpose.msra.mxu0 %v426
    %5588 = vmatmul.f32.gmra.mxu0 %v5116
    %v5589 = vpop.f32.mrf.mxu0
    %v5590 = vadd.f32 %v5570, %v5589
    %5591 = vdwg.mxu0
    %5592 = vmatpush.xpose.msra.mxu0 %v487
    %5593 = vmatpush.xpose.msra.mxu0 %v483
    %5594 = vmatpush.xpose.msra.mxu0 %v479
    %5595 = vmatpush.xpose.msra.mxu0 %v475
    %5596 = vmatpush.xpose.msra.mxu0 %v471
    %5597 = vmatpush.xpose.msra.mxu0 %v467
    %5598 = vmatpush.xpose.msra.mxu0 %v463
    %5599 = vmatpush.xpose.msra.mxu0 %v459
    %5600 = vmatpush.xpose.msra.mxu0 %v455
    %5601 = vmatpush.xpose.msra.mxu0 %v451
    %5602 = vmatpush.xpose.msra.mxu0 %v447
    %5603 = vmatpush.xpose.msra.mxu0 %v443
    %5604 = vmatpush.xpose.msra.mxu0 %v439
    %5605 = vmatpush.xpose.msra.mxu0 %v435
    %5606 = vmatpush.xpose.msra.mxu0 %v431
    %5607 = vmatpush.xpose.msra.mxu0 %v427
    %5608 = vmatmul.f32.gmra.mxu0 %v5131
    %v5609 = vpop.f32.mrf.mxu0
    %v5610 = vadd.f32 %v5590, %v5609
    %5611 = vdwg.mxu0
    %5612 = vmatpush.xpose.msra.mxu0 %v548
    %5613 = vmatpush.xpose.msra.mxu0 %v544
    %5614 = vmatpush.xpose.msra.mxu0 %v540
    %5615 = vmatpush.xpose.msra.mxu0 %v536
    %5616 = vmatpush.xpose.msra.mxu0 %v532
    %5617 = vmatpush.xpose.msra.mxu0 %v528
    %5618 = vmatpush.xpose.msra.mxu0 %v524
    %5619 = vmatpush.xpose.msra.mxu0 %v520
    %5620 = vmatpush.xpose.msra.mxu0 %v516
    %5621 = vmatpush.xpose.msra.mxu0 %v512
    %5622 = vmatpush.xpose.msra.mxu0 %v508
    %5623 = vmatpush.xpose.msra.mxu0 %v504
    %5624 = vmatpush.xpose.msra.mxu0 %v500
    %5625 = vmatpush.xpose.msra.mxu0 %v496
    %5626 = vmatpush.xpose.msra.mxu0 %v492
    %5627 = vmatpush.xpose.msra.mxu0 %v488
    %5628 = vmatmul.f32.gmra.mxu0 %v5086
    %v5629 = vpop.f32.mrf.mxu0
    %v5630 = vadd.f32 0.0, %v5629
    %5631 = vdwg.mxu0
    %5632 = vmatpush.xpose.msra.mxu0 %v549
    %5633 = vmatpush.xpose.msra.mxu0 %v545
    %5634 = vmatpush.xpose.msra.mxu0 %v541
    %5635 = vmatpush.xpose.msra.mxu0 %v537
    %5636 = vmatpush.xpose.msra.mxu0 %v533
    %5637 = vmatpush.xpose.msra.mxu0 %v529
    %5638 = vmatpush.xpose.msra.mxu0 %v525
    %5639 = vmatpush.xpose.msra.mxu0 %v521
    %5640 = vmatpush.xpose.msra.mxu0 %v517
    %5641 = vmatpush.xpose.msra.mxu0 %v513
    %5642 = vmatpush.xpose.msra.mxu0 %v509
    %5643 = vmatpush.xpose.msra.mxu0 %v505
    %5644 = vmatpush.xpose.msra.mxu0 %v501
    %5645 = vmatpush.xpose.msra.mxu0 %v497
    %5646 = vmatpush.xpose.msra.mxu0 %v493
    %5647 = vmatpush.xpose.msra.mxu0 %v489
    %5648 = vmatmul.f32.gmra.mxu0 %v5101
    %v5649 = vpop.f32.mrf.mxu0
    %v5650 = vadd.f32 %v5630, %v5649
    %5651 = vdwg.mxu0
    %5652 = vmatpush.xpose.msra.mxu0 %v550
    %5653 = vmatpush.xpose.msra.mxu0 %v546
    %5654 = vmatpush.xpose.msra.mxu0 %v542
    %5655 = vmatpush.xpose.msra.mxu0 %v538
    %5656 = vmatpush.xpose.msra.mxu0 %v534
    %5657 = vmatpush.xpose.msra.mxu0 %v530
    %5658 = vmatpush.xpose.msra.mxu0 %v526
    %5659 = vmatpush.xpose.msra.mxu0 %v522
    %5660 = vmatpush.xpose.msra.mxu0 %v518
    %5661 = vmatpush.xpose.msra.mxu0 %v514
    %5662 = vmatpush.xpose.msra.mxu0 %v510
    %5663 = vmatpush.xpose.msra.mxu0 %v506
    %5664 = vmatpush.xpose.msra.mxu0 %v502
    %5665 = vmatpush.xpose.msra.mxu0 %v498
    %5666 = vmatpush.xpose.msra.mxu0 %v494
    %5667 = vmatpush.xpose.msra.mxu0 %v490
    %5668 = vmatmul.f32.gmra.mxu0 %v5116
    %v5669 = vpop.f32.mrf.mxu0
    %v5670 = vadd.f32 %v5650, %v5669
    %5671 = vdwg.mxu0
    %5672 = vmatpush.xpose.msra.mxu0 %v551
    %5673 = vmatpush.xpose.msra.mxu0 %v547
    %5674 = vmatpush.xpose.msra.mxu0 %v543
    %5675 = vmatpush.xpose.msra.mxu0 %v539
    %5676 = vmatpush.xpose.msra.mxu0 %v535
    %5677 = vmatpush.xpose.msra.mxu0 %v531
    %5678 = vmatpush.xpose.msra.mxu0 %v527
    %5679 = vmatpush.xpose.msra.mxu0 %v523
    %5680 = vmatpush.xpose.msra.mxu0 %v519
    %5681 = vmatpush.xpose.msra.mxu0 %v515
    %5682 = vmatpush.xpose.msra.mxu0 %v511
    %5683 = vmatpush.xpose.msra.mxu0 %v507
    %5684 = vmatpush.xpose.msra.mxu0 %v503
    %5685 = vmatpush.xpose.msra.mxu0 %v499
    %5686 = vmatpush.xpose.msra.mxu0 %v495
    %5687 = vmatpush.xpose.msra.mxu0 %v491
    %5688 = vmatmul.f32.gmra.mxu0 %v5131
    %v5689 = vpop.f32.mrf.mxu0
    %v5690 = vadd.f32 %v5670, %v5689
    %5691 = vdwg.mxu0
    %5692 = vmatpush.xpose.msra.mxu0 %v612
    %5693 = vmatpush.xpose.msra.mxu0 %v608
    %5694 = vmatpush.xpose.msra.mxu0 %v604
    %5695 = vmatpush.xpose.msra.mxu0 %v600
    %5696 = vmatpush.xpose.msra.mxu0 %v596
    %5697 = vmatpush.xpose.msra.mxu0 %v592
    %5698 = vmatpush.xpose.msra.mxu0 %v588
    %5699 = vmatpush.xpose.msra.mxu0 %v584
    %5700 = vmatpush.xpose.msra.mxu0 %v580
    %5701 = vmatpush.xpose.msra.mxu0 %v576
    %5702 = vmatpush.xpose.msra.mxu0 %v572
    %5703 = vmatpush.xpose.msra.mxu0 %v568
    %5704 = vmatpush.xpose.msra.mxu0 %v564
    %5705 = vmatpush.xpose.msra.mxu0 %v560
    %5706 = vmatpush.xpose.msra.mxu0 %v556
    %5707 = vmatpush.xpose.msra.mxu0 %v552
    %5708 = vmatmul.f32.gmra.mxu0 %v5086
    %v5709 = vpop.f32.mrf.mxu0
    %v5710 = vadd.f32 0.0, %v5709
    %5711 = vdwg.mxu0
    %5712 = vmatpush.xpose.msra.mxu0 %v613
    %5713 = vmatpush.xpose.msra.mxu0 %v609
    %5714 = vmatpush.xpose.msra.mxu0 %v605
    %5715 = vmatpush.xpose.msra.mxu0 %v601
    %5716 = vmatpush.xpose.msra.mxu0 %v597
    %5717 = vmatpush.xpose.msra.mxu0 %v593
    %5718 = vmatpush.xpose.msra.mxu0 %v589
    %5719 = vmatpush.xpose.msra.mxu0 %v585
    %5720 = vmatpush.xpose.msra.mxu0 %v581
    %5721 = vmatpush.xpose.msra.mxu0 %v577
    %5722 = vmatpush.xpose.msra.mxu0 %v573
    %5723 = vmatpush.xpose.msra.mxu0 %v569
    %5724 = vmatpush.xpose.msra.mxu0 %v565
    %5725 = vmatpush.xpose.msra.mxu0 %v561
    %5726 = vmatpush.xpose.msra.mxu0 %v557
    %5727 = vmatpush.xpose.msra.mxu0 %v553
    %5728 = vmatmul.f32.gmra.mxu0 %v5101
    %v5729 = vpop.f32.mrf.mxu0
    %v5730 = vadd.f32 %v5710, %v5729
    %5731 = vdwg.mxu0
    %5732 = vmatpush.xpose.msra.mxu0 %v614
    %5733 = vmatpush.xpose.msra.mxu0 %v610
    %5734 = vmatpush.xpose.msra.mxu0 %v606
    %5735 = vmatpush.xpose.msra.mxu0 %v602
    %5736 = vmatpush.xpose.msra.mxu0 %v598
    %5737 = vmatpush.xpose.msra.mxu0 %v594
    %5738 = vmatpush.xpose.msra.mxu0 %v590
    %5739 = vmatpush.xpose.msra.mxu0 %v586
    %5740 = vmatpush.xpose.msra.mxu0 %v582
    %5741 = vmatpush.xpose.msra.mxu0 %v578
    %5742 = vmatpush.xpose.msra.mxu0 %v574
    %5743 = vmatpush.xpose.msra.mxu0 %v570
    %5744 = vmatpush.xpose.msra.mxu0 %v566
    %5745 = vmatpush.xpose.msra.mxu0 %v562
    %5746 = vmatpush.xpose.msra.mxu0 %v558
    %5747 = vmatpush.xpose.msra.mxu0 %v554
    %5748 = vmatmul.f32.gmra.mxu0 %v5116
    %v5749 = vpop.f32.mrf.mxu0
    %v5750 = vadd.f32 %v5730, %v5749
    %5751 = vdwg.mxu0
    %5752 = vmatpush.xpose.msra.mxu0 %v615
    %5753 = vmatpush.xpose.msra.mxu0 %v611
    %5754 = vmatpush.xpose.msra.mxu0 %v607
    %5755 = vmatpush.xpose.msra.mxu0 %v603
    %5756 = vmatpush.xpose.msra.mxu0 %v599
    %5757 = vmatpush.xpose.msra.mxu0 %v595
    %5758 = vmatpush.xpose.msra.mxu0 %v591
    %5759 = vmatpush.xpose.msra.mxu0 %v587
    %5760 = vmatpush.xpose.msra.mxu0 %v583
    %5761 = vmatpush.xpose.msra.mxu0 %v579
    %5762 = vmatpush.xpose.msra.mxu0 %v575
    %5763 = vmatpush.xpose.msra.mxu0 %v571
    %5764 = vmatpush.xpose.msra.mxu0 %v567
    %5765 = vmatpush.xpose.msra.mxu0 %v563
    %5766 = vmatpush.xpose.msra.mxu0 %v559
    %5767 = vmatpush.xpose.msra.mxu0 %v555
    %5768 = vmatmul.f32.gmra.mxu0 %v5131
    %v5769 = vpop.f32.mrf.mxu0
    %v5770 = vadd.f32 %v5750, %v5769
    %5771 = vdwg.mxu0
    %5772 = vmatpush.xpose.msra.mxu0 %v676
    %5773 = vmatpush.xpose.msra.mxu0 %v672
    %5774 = vmatpush.xpose.msra.mxu0 %v668
    %5775 = vmatpush.xpose.msra.mxu0 %v664
    %5776 = vmatpush.xpose.msra.mxu0 %v660
    %5777 = vmatpush.xpose.msra.mxu0 %v656
    %5778 = vmatpush.xpose.msra.mxu0 %v652
    %5779 = vmatpush.xpose.msra.mxu0 %v648
    %5780 = vmatpush.xpose.msra.mxu0 %v644
    %5781 = vmatpush.xpose.msra.mxu0 %v640
    %5782 = vmatpush.xpose.msra.mxu0 %v636
    %5783 = vmatpush.xpose.msra.mxu0 %v632
    %5784 = vmatpush.xpose.msra.mxu0 %v628
    %5785 = vmatpush.xpose.msra.mxu0 %v624
    %5786 = vmatpush.xpose.msra.mxu0 %v620
    %5787 = vmatpush.xpose.msra.mxu0 %v616
    %5788 = vmatmul.f32.gmra.mxu0 %v5086
    %v5789 = vpop.f32.mrf.mxu0
    %v5790 = vadd.f32 0.0, %v5789
    %5791 = vdwg.mxu0
    %5792 = vmatpush.xpose.msra.mxu0 %v677
    %5793 = vmatpush.xpose.msra.mxu0 %v673
    %5794 = vmatpush.xpose.msra.mxu0 %v669
    %5795 = vmatpush.xpose.msra.mxu0 %v665
    %5796 = vmatpush.xpose.msra.mxu0 %v661
    %5797 = vmatpush.xpose.msra.mxu0 %v657
    %5798 = vmatpush.xpose.msra.mxu0 %v653
    %5799 = vmatpush.xpose.msra.mxu0 %v649
    %5800 = vmatpush.xpose.msra.mxu0 %v645
    %5801 = vmatpush.xpose.msra.mxu0 %v641
    %5802 = vmatpush.xpose.msra.mxu0 %v637
    %5803 = vmatpush.xpose.msra.mxu0 %v633
    %5804 = vmatpush.xpose.msra.mxu0 %v629
    %5805 = vmatpush.xpose.msra.mxu0 %v625
    %5806 = vmatpush.xpose.msra.mxu0 %v621
    %5807 = vmatpush.xpose.msra.mxu0 %v617
    %5808 = vmatmul.f32.gmra.mxu0 %v5101
    %v5809 = vpop.f32.mrf.mxu0
    %v5810 = vadd.f32 %v5790, %v5809
    %5811 = vdwg.mxu0
    %5812 = vmatpush.xpose.msra.mxu0 %v678
    %5813 = vmatpush.xpose.msra.mxu0 %v674
    %5814 = vmatpush.xpose.msra.mxu0 %v670
    %5815 = vmatpush.xpose.msra.mxu0 %v666
    %5816 = vmatpush.xpose.msra.mxu0 %v662
    %5817 = vmatpush.xpose.msra.mxu0 %v658
    %5818 = vmatpush.xpose.msra.mxu0 %v654
    %5819 = vmatpush.xpose.msra.mxu0 %v650
    %5820 = vmatpush.xpose.msra.mxu0 %v646
    %5821 = vmatpush.xpose.msra.mxu0 %v642
    %5822 = vmatpush.xpose.msra.mxu0 %v638
    %5823 = vmatpush.xpose.msra.mxu0 %v634
    %5824 = vmatpush.xpose.msra.mxu0 %v630
    %5825 = vmatpush.xpose.msra.mxu0 %v626
    %5826 = vmatpush.xpose.msra.mxu0 %v622
    %5827 = vmatpush.xpose.msra.mxu0 %v618
    %5828 = vmatmul.f32.gmra.mxu0 %v5116
    %v5829 = vpop.f32.mrf.mxu0
    %v5830 = vadd.f32 %v5810, %v5829
    %5831 = vdwg.mxu0
    %5832 = vmatpush.xpose.msra.mxu0 %v679
    %5833 = vmatpush.xpose.msra.mxu0 %v675
    %5834 = vmatpush.xpose.msra.mxu0 %v671
    %5835 = vmatpush.xpose.msra.mxu0 %v667
    %5836 = vmatpush.xpose.msra.mxu0 %v663
    %5837 = vmatpush.xpose.msra.mxu0 %v659
    %5838 = vmatpush.xpose.msra.mxu0 %v655
    %5839 = vmatpush.xpose.msra.mxu0 %v651
    %5840 = vmatpush.xpose.msra.mxu0 %v647
    %5841 = vmatpush.xpose.msra.mxu0 %v643
    %5842 = vmatpush.xpose.msra.mxu0 %v639
    %5843 = vmatpush.xpose.msra.mxu0 %v635
    %5844 = vmatpush.xpose.msra.mxu0 %v631
    %5845 = vmatpush.xpose.msra.mxu0 %v627
    %5846 = vmatpush.xpose.msra.mxu0 %v623
    %5847 = vmatpush.xpose.msra.mxu0 %v619
    %5848 = vmatmul.f32.gmra.mxu0 %v5131
    %v5849 = vpop.f32.mrf.mxu0
    %v5850 = vadd.f32 %v5830, %v5849
    %5851 = vdwg.mxu0
    %5852 = vmatpush.xpose.msra.mxu0 %v740
    %5853 = vmatpush.xpose.msra.mxu0 %v736
    %5854 = vmatpush.xpose.msra.mxu0 %v732
    %5855 = vmatpush.xpose.msra.mxu0 %v728
    %5856 = vmatpush.xpose.msra.mxu0 %v724
    %5857 = vmatpush.xpose.msra.mxu0 %v720
    %5858 = vmatpush.xpose.msra.mxu0 %v716
    %5859 = vmatpush.xpose.msra.mxu0 %v712
    %5860 = vmatpush.xpose.msra.mxu0 %v708
    %5861 = vmatpush.xpose.msra.mxu0 %v704
    %5862 = vmatpush.xpose.msra.mxu0 %v700
    %5863 = vmatpush.xpose.msra.mxu0 %v696
    %5864 = vmatpush.xpose.msra.mxu0 %v692
    %5865 = vmatpush.xpose.msra.mxu0 %v688
    %5866 = vmatpush.xpose.msra.mxu0 %v684
    %5867 = vmatpush.xpose.msra.mxu0 %v680
    %5868 = vmatmul.f32.gmra.mxu0 %v5086
    %v5869 = vpop.f32.mrf.mxu0
    %v5870 = vadd.f32 0.0, %v5869
    %5871 = vdwg.mxu0
    %5872 = vmatpush.xpose.msra.mxu0 %v741
    %5873 = vmatpush.xpose.msra.mxu0 %v737
    %5874 = vmatpush.xpose.msra.mxu0 %v733
    %5875 = vmatpush.xpose.msra.mxu0 %v729
    %5876 = vmatpush.xpose.msra.mxu0 %v725
    %5877 = vmatpush.xpose.msra.mxu0 %v721
    %5878 = vmatpush.xpose.msra.mxu0 %v717
    %5879 = vmatpush.xpose.msra.mxu0 %v713
    %5880 = vmatpush.xpose.msra.mxu0 %v709
    %5881 = vmatpush.xpose.msra.mxu0 %v705
    %5882 = vmatpush.xpose.msra.mxu0 %v701
    %5883 = vmatpush.xpose.msra.mxu0 %v697
    %5884 = vmatpush.xpose.msra.mxu0 %v693
    %5885 = vmatpush.xpose.msra.mxu0 %v689
    %5886 = vmatpush.xpose.msra.mxu0 %v685
    %5887 = vmatpush.xpose.msra.mxu0 %v681
    %5888 = vmatmul.f32.gmra.mxu0 %v5101
    %v5889 = vpop.f32.mrf.mxu0
    %v5890 = vadd.f32 %v5870, %v5889
    %5891 = vdwg.mxu0
    %5892 = vmatpush.xpose.msra.mxu0 %v742
    %5893 = vmatpush.xpose.msra.mxu0 %v738
    %5894 = vmatpush.xpose.msra.mxu0 %v734
    %5895 = vmatpush.xpose.msra.mxu0 %v730
    %5896 = vmatpush.xpose.msra.mxu0 %v726
    %5897 = vmatpush.xpose.msra.mxu0 %v722
    %5898 = vmatpush.xpose.msra.mxu0 %v718
    %5899 = vmatpush.xpose.msra.mxu0 %v714
    %5900 = vmatpush.xpose.msra.mxu0 %v710
    %5901 = vmatpush.xpose.msra.mxu0 %v706
    %5902 = vmatpush.xpose.msra.mxu0 %v702
    %5903 = vmatpush.xpose.msra.mxu0 %v698
    %5904 = vmatpush.xpose.msra.mxu0 %v694
    %5905 = vmatpush.xpose.msra.mxu0 %v690
    %5906 = vmatpush.xpose.msra.mxu0 %v686
    %5907 = vmatpush.xpose.msra.mxu0 %v682
    %5908 = vmatmul.f32.gmra.mxu0 %v5116
    %v5909 = vpop.f32.mrf.mxu0
    %v5910 = vadd.f32 %v5890, %v5909
    %5911 = vdwg.mxu0
    %5912 = vmatpush.xpose.msra.mxu0 %v743
    %5913 = vmatpush.xpose.msra.mxu0 %v739
    %5914 = vmatpush.xpose.msra.mxu0 %v735
    %5915 = vmatpush.xpose.msra.mxu0 %v731
    %5916 = vmatpush.xpose.msra.mxu0 %v727
    %5917 = vmatpush.xpose.msra.mxu0 %v723
    %5918 = vmatpush.xpose.msra.mxu0 %v719
    %5919 = vmatpush.xpose.msra.mxu0 %v715
    %5920 = vmatpush.xpose.msra.mxu0 %v711
    %5921 = vmatpush.xpose.msra.mxu0 %v707
    %5922 = vmatpush.xpose.msra.mxu0 %v703
    %5923 = vmatpush.xpose.msra.mxu0 %v699
    %5924 = vmatpush.xpose.msra.mxu0 %v695
    %5925 = vmatpush.xpose.msra.mxu0 %v691
    %5926 = vmatpush.xpose.msra.mxu0 %v687
    %5927 = vmatpush.xpose.msra.mxu0 %v683
    %5928 = vmatmul.f32.gmra.mxu0 %v5131
    %v5929 = vpop.f32.mrf.mxu0
    %v5930 = vadd.f32 %v5910, %v5929
    %5931 = vdwg.mxu0
    %5932 = vmatpush.xpose.msra.mxu0 %v804
    %5933 = vmatpush.xpose.msra.mxu0 %v800
    %5934 = vmatpush.xpose.msra.mxu0 %v796
    %5935 = vmatpush.xpose.msra.mxu0 %v792
    %5936 = vmatpush.xpose.msra.mxu0 %v788
    %5937 = vmatpush.xpose.msra.mxu0 %v784
    %5938 = vmatpush.xpose.msra.mxu0 %v780
    %5939 = vmatpush.xpose.msra.mxu0 %v776
    %5940 = vmatpush.xpose.msra.mxu0 %v772
    %5941 = vmatpush.xpose.msra.mxu0 %v768
    %5942 = vmatpush.xpose.msra.mxu0 %v764
    %5943 = vmatpush.xpose.msra.mxu0 %v760
    %5944 = vmatpush.xpose.msra.mxu0 %v756
    %5945 = vmatpush.xpose.msra.mxu0 %v752
    %5946 = vmatpush.xpose.msra.mxu0 %v748
    %5947 = vmatpush.xpose.msra.mxu0 %v744
    %5948 = vmatmul.f32.gmra.mxu0 %v5086
    %v5949 = vpop.f32.mrf.mxu0
    %v5950 = vadd.f32 0.0, %v5949
    %5951 = vdwg.mxu0
    %5952 = vmatpush.xpose.msra.mxu0 %v805
    %5953 = vmatpush.xpose.msra.mxu0 %v801
    %5954 = vmatpush.xpose.msra.mxu0 %v797
    %5955 = vmatpush.xpose.msra.mxu0 %v793
    %5956 = vmatpush.xpose.msra.mxu0 %v789
    %5957 = vmatpush.xpose.msra.mxu0 %v785
    %5958 = vmatpush.xpose.msra.mxu0 %v781
    %5959 = vmatpush.xpose.msra.mxu0 %v777
    %5960 = vmatpush.xpose.msra.mxu0 %v773
    %5961 = vmatpush.xpose.msra.mxu0 %v769
    %5962 = vmatpush.xpose.msra.mxu0 %v765
    %5963 = vmatpush.xpose.msra.mxu0 %v761
    %5964 = vmatpush.xpose.msra.mxu0 %v757
    %5965 = vmatpush.xpose.msra.mxu0 %v753
    %5966 = vmatpush.xpose.msra.mxu0 %v749
    %5967 = vmatpush.xpose.msra.mxu0 %v745
    %5968 = vmatmul.f32.gmra.mxu0 %v5101
    %v5969 = vpop.f32.mrf.mxu0
    %v5970 = vadd.f32 %v5950, %v5969
    %5971 = vdwg.mxu0
    %5972 = vmatpush.xpose.msra.mxu0 %v806
    %5973 = vmatpush.xpose.msra.mxu0 %v802
    %5974 = vmatpush.xpose.msra.mxu0 %v798
    %5975 = vmatpush.xpose.msra.mxu0 %v794
    %5976 = vmatpush.xpose.msra.mxu0 %v790
    %5977 = vmatpush.xpose.msra.mxu0 %v786
    %5978 = vmatpush.xpose.msra.mxu0 %v782
    %5979 = vmatpush.xpose.msra.mxu0 %v778
    %5980 = vmatpush.xpose.msra.mxu0 %v774
    %5981 = vmatpush.xpose.msra.mxu0 %v770
    %5982 = vmatpush.xpose.msra.mxu0 %v766
    %5983 = vmatpush.xpose.msra.mxu0 %v762
    %5984 = vmatpush.xpose.msra.mxu0 %v758
    %5985 = vmatpush.xpose.msra.mxu0 %v754
    %5986 = vmatpush.xpose.msra.mxu0 %v750
    %5987 = vmatpush.xpose.msra.mxu0 %v746
    %5988 = vmatmul.f32.gmra.mxu0 %v5116
    %v5989 = vpop.f32.mrf.mxu0
    %v5990 = vadd.f32 %v5970, %v5989
    %5991 = vdwg.mxu0
    %5992 = vmatpush.xpose.msra.mxu0 %v807
    %5993 = vmatpush.xpose.msra.mxu0 %v803
    %5994 = vmatpush.xpose.msra.mxu0 %v799
    %5995 = vmatpush.xpose.msra.mxu0 %v795
    %5996 = vmatpush.xpose.msra.mxu0 %v791
    %5997 = vmatpush.xpose.msra.mxu0 %v787
    %5998 = vmatpush.xpose.msra.mxu0 %v783
    %5999 = vmatpush.xpose.msra.mxu0 %v779
    %6000 = vmatpush.xpose.msra.mxu0 %v775
    %6001 = vmatpush.xpose.msra.mxu0 %v771
    %6002 = vmatpush.xpose.msra.mxu0 %v767
    %6003 = vmatpush.xpose.msra.mxu0 %v763
    %6004 = vmatpush.xpose.msra.mxu0 %v759
    %6005 = vmatpush.xpose.msra.mxu0 %v755
    %6006 = vmatpush.xpose.msra.mxu0 %v751
    %6007 = vmatpush.xpose.msra.mxu0 %v747
    %6008 = vmatmul.f32.gmra.mxu0 %v5131
    %v6009 = vpop.f32.mrf.mxu0
    %v6010 = vadd.f32 %v5990, %v6009
    %6011 = vdwg.mxu0
    %6012 = vmatpush.xpose.msra.mxu0 %v868
    %6013 = vmatpush.xpose.msra.mxu0 %v864
    %6014 = vmatpush.xpose.msra.mxu0 %v860
    %6015 = vmatpush.xpose.msra.mxu0 %v856
    %6016 = vmatpush.xpose.msra.mxu0 %v852
    %6017 = vmatpush.xpose.msra.mxu0 %v848
    %6018 = vmatpush.xpose.msra.mxu0 %v844
    %6019 = vmatpush.xpose.msra.mxu0 %v840
    %6020 = vmatpush.xpose.msra.mxu0 %v836
    %6021 = vmatpush.xpose.msra.mxu0 %v832
    %6022 = vmatpush.xpose.msra.mxu0 %v828
    %6023 = vmatpush.xpose.msra.mxu0 %v824
    %6024 = vmatpush.xpose.msra.mxu0 %v820
    %6025 = vmatpush.xpose.msra.mxu0 %v816
    %6026 = vmatpush.xpose.msra.mxu0 %v812
    %6027 = vmatpush.xpose.msra.mxu0 %v808
    %6028 = vmatmul.f32.gmra.mxu0 %v5086
    %v6029 = vpop.f32.mrf.mxu0
    %v6030 = vadd.f32 0.0, %v6029
    %6031 = vdwg.mxu0
    %6032 = vmatpush.xpose.msra.mxu0 %v869
    %6033 = vmatpush.xpose.msra.mxu0 %v865
    %6034 = vmatpush.xpose.msra.mxu0 %v861
    %6035 = vmatpush.xpose.msra.mxu0 %v857
    %6036 = vmatpush.xpose.msra.mxu0 %v853
    %6037 = vmatpush.xpose.msra.mxu0 %v849
    %6038 = vmatpush.xpose.msra.mxu0 %v845
    %6039 = vmatpush.xpose.msra.mxu0 %v841
    %6040 = vmatpush.xpose.msra.mxu0 %v837
    %6041 = vmatpush.xpose.msra.mxu0 %v833
    %6042 = vmatpush.xpose.msra.mxu0 %v829
    %6043 = vmatpush.xpose.msra.mxu0 %v825
    %6044 = vmatpush.xpose.msra.mxu0 %v821
    %6045 = vmatpush.xpose.msra.mxu0 %v817
    %6046 = vmatpush.xpose.msra.mxu0 %v813
    %6047 = vmatpush.xpose.msra.mxu0 %v809
    %6048 = vmatmul.f32.gmra.mxu0 %v5101
    %v6049 = vpop.f32.mrf.mxu0
    %v6050 = vadd.f32 %v6030, %v6049
    %6051 = vdwg.mxu0
    %6052 = vmatpush.xpose.msra.mxu0 %v870
    %6053 = vmatpush.xpose.msra.mxu0 %v866
    %6054 = vmatpush.xpose.msra.mxu0 %v862
    %6055 = vmatpush.xpose.msra.mxu0 %v858
    %6056 = vmatpush.xpose.msra.mxu0 %v854
    %6057 = vmatpush.xpose.msra.mxu0 %v850
    %6058 = vmatpush.xpose.msra.mxu0 %v846
    %6059 = vmatpush.xpose.msra.mxu0 %v842
    %6060 = vmatpush.xpose.msra.mxu0 %v838
    %6061 = vmatpush.xpose.msra.mxu0 %v834
    %6062 = vmatpush.xpose.msra.mxu0 %v830
    %6063 = vmatpush.xpose.msra.mxu0 %v826
    %6064 = vmatpush.xpose.msra.mxu0 %v822
    %6065 = vmatpush.xpose.msra.mxu0 %v818
    %6066 = vmatpush.xpose.msra.mxu0 %v814
    %6067 = vmatpush.xpose.msra.mxu0 %v810
    %6068 = vmatmul.f32.gmra.mxu0 %v5116
    %v6069 = vpop.f32.mrf.mxu0
    %v6070 = vadd.f32 %v6050, %v6069
    %6071 = vdwg.mxu0
    %6072 = vmatpush.xpose.msra.mxu0 %v871
    %6073 = vmatpush.xpose.msra.mxu0 %v867
    %6074 = vmatpush.xpose.msra.mxu0 %v863
    %6075 = vmatpush.xpose.msra.mxu0 %v859
    %6076 = vmatpush.xpose.msra.mxu0 %v855
    %6077 = vmatpush.xpose.msra.mxu0 %v851
    %6078 = vmatpush.xpose.msra.mxu0 %v847
    %6079 = vmatpush.xpose.msra.mxu0 %v843
    %6080 = vmatpush.xpose.msra.mxu0 %v839
    %6081 = vmatpush.xpose.msra.mxu0 %v835
    %6082 = vmatpush.xpose.msra.mxu0 %v831
    %6083 = vmatpush.xpose.msra.mxu0 %v827
    %6084 = vmatpush.xpose.msra.mxu0 %v823
    %6085 = vmatpush.xpose.msra.mxu0 %v819
    %6086 = vmatpush.xpose.msra.mxu0 %v815
    %6087 = vmatpush.xpose.msra.mxu0 %v811
    %6088 = vmatmul.f32.gmra.mxu0 %v5131
    %v6089 = vpop.f32.mrf.mxu0
    %v6090 = vadd.f32 %v6070, %v6089
    %6091 = vdwg.mxu0
    %6092 = vmatpush.xpose.msra.mxu0 %v932
    %6093 = vmatpush.xpose.msra.mxu0 %v928
    %6094 = vmatpush.xpose.msra.mxu0 %v924
    %6095 = vmatpush.xpose.msra.mxu0 %v920
    %6096 = vmatpush.xpose.msra.mxu0 %v916
    %6097 = vmatpush.xpose.msra.mxu0 %v912
    %6098 = vmatpush.xpose.msra.mxu0 %v908
    %6099 = vmatpush.xpose.msra.mxu0 %v904
    %6100 = vmatpush.xpose.msra.mxu0 %v900
    %6101 = vmatpush.xpose.msra.mxu0 %v896
    %6102 = vmatpush.xpose.msra.mxu0 %v892
    %6103 = vmatpush.xpose.msra.mxu0 %v888
    %6104 = vmatpush.xpose.msra.mxu0 %v884
    %6105 = vmatpush.xpose.msra.mxu0 %v880
    %6106 = vmatpush.xpose.msra.mxu0 %v876
    %6107 = vmatpush.xpose.msra.mxu0 %v872
    %6108 = vmatmul.f32.gmra.mxu0 %v5086
    %v6109 = vpop.f32.mrf.mxu0
    %v6110 = vadd.f32 0.0, %v6109
    %6111 = vdwg.mxu0
    %6112 = vmatpush.xpose.msra.mxu0 %v933
    %6113 = vmatpush.xpose.msra.mxu0 %v929
    %6114 = vmatpush.xpose.msra.mxu0 %v925
    %6115 = vmatpush.xpose.msra.mxu0 %v921
    %6116 = vmatpush.xpose.msra.mxu0 %v917
    %6117 = vmatpush.xpose.msra.mxu0 %v913
    %6118 = vmatpush.xpose.msra.mxu0 %v909
    %6119 = vmatpush.xpose.msra.mxu0 %v905
    %6120 = vmatpush.xpose.msra.mxu0 %v901
    %6121 = vmatpush.xpose.msra.mxu0 %v897
    %6122 = vmatpush.xpose.msra.mxu0 %v893
    %6123 = vmatpush.xpose.msra.mxu0 %v889
    %6124 = vmatpush.xpose.msra.mxu0 %v885
    %6125 = vmatpush.xpose.msra.mxu0 %v881
    %6126 = vmatpush.xpose.msra.mxu0 %v877
    %6127 = vmatpush.xpose.msra.mxu0 %v873
    %6128 = vmatmul.f32.gmra.mxu0 %v5101
    %v6129 = vpop.f32.mrf.mxu0
    %v6130 = vadd.f32 %v6110, %v6129
    %6131 = vdwg.mxu0
    %6132 = vmatpush.xpose.msra.mxu0 %v934
    %6133 = vmatpush.xpose.msra.mxu0 %v930
    %6134 = vmatpush.xpose.msra.mxu0 %v926
    %6135 = vmatpush.xpose.msra.mxu0 %v922
    %6136 = vmatpush.xpose.msra.mxu0 %v918
    %6137 = vmatpush.xpose.msra.mxu0 %v914
    %6138 = vmatpush.xpose.msra.mxu0 %v910
    %6139 = vmatpush.xpose.msra.mxu0 %v906
    %6140 = vmatpush.xpose.msra.mxu0 %v902
    %6141 = vmatpush.xpose.msra.mxu0 %v898
    %6142 = vmatpush.xpose.msra.mxu0 %v894
    %6143 = vmatpush.xpose.msra.mxu0 %v890
    %6144 = vmatpush.xpose.msra.mxu0 %v886
    %6145 = vmatpush.xpose.msra.mxu0 %v882
    %6146 = vmatpush.xpose.msra.mxu0 %v878
    %6147 = vmatpush.xpose.msra.mxu0 %v874
    %6148 = vmatmul.f32.gmra.mxu0 %v5116
    %v6149 = vpop.f32.mrf.mxu0
    %v6150 = vadd.f32 %v6130, %v6149
    %6151 = vdwg.mxu0
    %6152 = vmatpush.xpose.msra.mxu0 %v935
    %6153 = vmatpush.xpose.msra.mxu0 %v931
    %6154 = vmatpush.xpose.msra.mxu0 %v927
    %6155 = vmatpush.xpose.msra.mxu0 %v923
    %6156 = vmatpush.xpose.msra.mxu0 %v919
    %6157 = vmatpush.xpose.msra.mxu0 %v915
    %6158 = vmatpush.xpose.msra.mxu0 %v911
    %6159 = vmatpush.xpose.msra.mxu0 %v907
    %6160 = vmatpush.xpose.msra.mxu0 %v903
    %6161 = vmatpush.xpose.msra.mxu0 %v899
    %6162 = vmatpush.xpose.msra.mxu0 %v895
    %6163 = vmatpush.xpose.msra.mxu0 %v891
    %6164 = vmatpush.xpose.msra.mxu0 %v887
    %6165 = vmatpush.xpose.msra.mxu0 %v883
    %6166 = vmatpush.xpose.msra.mxu0 %v879
    %6167 = vmatpush.xpose.msra.mxu0 %v875
    %6168 = vmatmul.f32.gmra.mxu0 %v5131
    %v6169 = vpop.f32.mrf.mxu0
    %v6170 = vadd.f32 %v6150, %v6169
    %6171 = vdwg.mxu0
    %6172 = vmatpush.xpose.msra.mxu0 %v996
    %6173 = vmatpush.xpose.msra.mxu0 %v992
    %6174 = vmatpush.xpose.msra.mxu0 %v988
    %6175 = vmatpush.xpose.msra.mxu0 %v984
    %6176 = vmatpush.xpose.msra.mxu0 %v980
    %6177 = vmatpush.xpose.msra.mxu0 %v976
    %6178 = vmatpush.xpose.msra.mxu0 %v972
    %6179 = vmatpush.xpose.msra.mxu0 %v968
    %6180 = vmatpush.xpose.msra.mxu0 %v964
    %6181 = vmatpush.xpose.msra.mxu0 %v960
    %6182 = vmatpush.xpose.msra.mxu0 %v956
    %6183 = vmatpush.xpose.msra.mxu0 %v952
    %6184 = vmatpush.xpose.msra.mxu0 %v948
    %6185 = vmatpush.xpose.msra.mxu0 %v944
    %6186 = vmatpush.xpose.msra.mxu0 %v940
    %6187 = vmatpush.xpose.msra.mxu0 %v936
    %6188 = vmatmul.f32.gmra.mxu0 %v5086
    %v6189 = vpop.f32.mrf.mxu0
    %v6190 = vadd.f32 0.0, %v6189
    %6191 = vdwg.mxu0
    %6192 = vmatpush.xpose.msra.mxu0 %v997
    %6193 = vmatpush.xpose.msra.mxu0 %v993
    %6194 = vmatpush.xpose.msra.mxu0 %v989
    %6195 = vmatpush.xpose.msra.mxu0 %v985
    %6196 = vmatpush.xpose.msra.mxu0 %v981
    %6197 = vmatpush.xpose.msra.mxu0 %v977
    %6198 = vmatpush.xpose.msra.mxu0 %v973
    %6199 = vmatpush.xpose.msra.mxu0 %v969
    %6200 = vmatpush.xpose.msra.mxu0 %v965
    %6201 = vmatpush.xpose.msra.mxu0 %v961
    %6202 = vmatpush.xpose.msra.mxu0 %v957
    %6203 = vmatpush.xpose.msra.mxu0 %v953
    %6204 = vmatpush.xpose.msra.mxu0 %v949
    %6205 = vmatpush.xpose.msra.mxu0 %v945
    %6206 = vmatpush.xpose.msra.mxu0 %v941
    %6207 = vmatpush.xpose.msra.mxu0 %v937
    %6208 = vmatmul.f32.gmra.mxu0 %v5101
    %v6209 = vpop.f32.mrf.mxu0
    %v6210 = vadd.f32 %v6190, %v6209
    %6211 = vdwg.mxu0
    %6212 = vmatpush.xpose.msra.mxu0 %v998
    %6213 = vmatpush.xpose.msra.mxu0 %v994
    %6214 = vmatpush.xpose.msra.mxu0 %v990
    %6215 = vmatpush.xpose.msra.mxu0 %v986
    %6216 = vmatpush.xpose.msra.mxu0 %v982
    %6217 = vmatpush.xpose.msra.mxu0 %v978
    %6218 = vmatpush.xpose.msra.mxu0 %v974
    %6219 = vmatpush.xpose.msra.mxu0 %v970
    %6220 = vmatpush.xpose.msra.mxu0 %v966
    %6221 = vmatpush.xpose.msra.mxu0 %v962
    %6222 = vmatpush.xpose.msra.mxu0 %v958
    %6223 = vmatpush.xpose.msra.mxu0 %v954
    %6224 = vmatpush.xpose.msra.mxu0 %v950
    %6225 = vmatpush.xpose.msra.mxu0 %v946
    %6226 = vmatpush.xpose.msra.mxu0 %v942
    %6227 = vmatpush.xpose.msra.mxu0 %v938
    %6228 = vmatmul.f32.gmra.mxu0 %v5116
    %v6229 = vpop.f32.mrf.mxu0
    %v6230 = vadd.f32 %v6210, %v6229
    %6231 = vdwg.mxu0
    %6232 = vmatpush.xpose.msra.mxu0 %v999
    %6233 = vmatpush.xpose.msra.mxu0 %v995
    %6234 = vmatpush.xpose.msra.mxu0 %v991
    %6235 = vmatpush.xpose.msra.mxu0 %v987
    %6236 = vmatpush.xpose.msra.mxu0 %v983
    %6237 = vmatpush.xpose.msra.mxu0 %v979
    %6238 = vmatpush.xpose.msra.mxu0 %v975
    %6239 = vmatpush.xpose.msra.mxu0 %v971
    %6240 = vmatpush.xpose.msra.mxu0 %v967
    %6241 = vmatpush.xpose.msra.mxu0 %v963
    %6242 = vmatpush.xpose.msra.mxu0 %v959
    %6243 = vmatpush.xpose.msra.mxu0 %v955
    %6244 = vmatpush.xpose.msra.mxu0 %v951
    %6245 = vmatpush.xpose.msra.mxu0 %v947
    %6246 = vmatpush.xpose.msra.mxu0 %v943
    %6247 = vmatpush.xpose.msra.mxu0 %v939
    %6248 = vmatmul.f32.gmra.mxu0 %v5131
    %v6249 = vpop.f32.mrf.mxu0
    %v6250 = vadd.f32 %v6230, %v6249
    %6251 = vdwg.mxu0
    %6252 = vmatpush.xpose.msra.mxu0 %v1060
    %6253 = vmatpush.xpose.msra.mxu0 %v1056
    %6254 = vmatpush.xpose.msra.mxu0 %v1052
    %6255 = vmatpush.xpose.msra.mxu0 %v1048
    %6256 = vmatpush.xpose.msra.mxu0 %v1044
    %6257 = vmatpush.xpose.msra.mxu0 %v1040
    %6258 = vmatpush.xpose.msra.mxu0 %v1036
    %6259 = vmatpush.xpose.msra.mxu0 %v1032
    %6260 = vmatpush.xpose.msra.mxu0 %v1028
    %6261 = vmatpush.xpose.msra.mxu0 %v1024
    %6262 = vmatpush.xpose.msra.mxu0 %v1020
    %6263 = vmatpush.xpose.msra.mxu0 %v1016
    %6264 = vmatpush.xpose.msra.mxu0 %v1012
    %6265 = vmatpush.xpose.msra.mxu0 %v1008
    %6266 = vmatpush.xpose.msra.mxu0 %v1004
    %6267 = vmatpush.xpose.msra.mxu0 %v1000
    %6268 = vmatmul.f32.gmra.mxu0 %v5086
    %v6269 = vpop.f32.mrf.mxu0
    %v6270 = vadd.f32 0.0, %v6269
    %6271 = vdwg.mxu0
    %6272 = vmatpush.xpose.msra.mxu0 %v1061
    %6273 = vmatpush.xpose.msra.mxu0 %v1057
    %6274 = vmatpush.xpose.msra.mxu0 %v1053
    %6275 = vmatpush.xpose.msra.mxu0 %v1049
    %6276 = vmatpush.xpose.msra.mxu0 %v1045
    %6277 = vmatpush.xpose.msra.mxu0 %v1041
    %6278 = vmatpush.xpose.msra.mxu0 %v1037
    %6279 = vmatpush.xpose.msra.mxu0 %v1033
    %6280 = vmatpush.xpose.msra.mxu0 %v1029
    %6281 = vmatpush.xpose.msra.mxu0 %v1025
    %6282 = vmatpush.xpose.msra.mxu0 %v1021
    %6283 = vmatpush.xpose.msra.mxu0 %v1017
    %6284 = vmatpush.xpose.msra.mxu0 %v1013
    %6285 = vmatpush.xpose.msra.mxu0 %v1009
    %6286 = vmatpush.xpose.msra.mxu0 %v1005
    %6287 = vmatpush.xpose.msra.mxu0 %v1001
    %6288 = vmatmul.f32.gmra.mxu0 %v5101
    %v6289 = vpop.f32.mrf.mxu0
    %v6290 = vadd.f32 %v6270, %v6289
    %6291 = vdwg.mxu0
    %6292 = vmatpush.xpose.msra.mxu0 %v1062
    %6293 = vmatpush.xpose.msra.mxu0 %v1058
    %6294 = vmatpush.xpose.msra.mxu0 %v1054
    %6295 = vmatpush.xpose.msra.mxu0 %v1050
    %6296 = vmatpush.xpose.msra.mxu0 %v1046
    %6297 = vmatpush.xpose.msra.mxu0 %v1042
    %6298 = vmatpush.xpose.msra.mxu0 %v1038
    %6299 = vmatpush.xpose.msra.mxu0 %v1034
    %6300 = vmatpush.xpose.msra.mxu0 %v1030
    %6301 = vmatpush.xpose.msra.mxu0 %v1026
    %6302 = vmatpush.xpose.msra.mxu0 %v1022
    %6303 = vmatpush.xpose.msra.mxu0 %v1018
    %6304 = vmatpush.xpose.msra.mxu0 %v1014
    %6305 = vmatpush.xpose.msra.mxu0 %v1010
    %6306 = vmatpush.xpose.msra.mxu0 %v1006
    %6307 = vmatpush.xpose.msra.mxu0 %v1002
    %6308 = vmatmul.f32.gmra.mxu0 %v5116
    %v6309 = vpop.f32.mrf.mxu0
    %v6310 = vadd.f32 %v6290, %v6309
    %6311 = vdwg.mxu0
    %6312 = vmatpush.xpose.msra.mxu0 %v1063
    %6313 = vmatpush.xpose.msra.mxu0 %v1059
    %6314 = vmatpush.xpose.msra.mxu0 %v1055
    %6315 = vmatpush.xpose.msra.mxu0 %v1051
    %6316 = vmatpush.xpose.msra.mxu0 %v1047
    %6317 = vmatpush.xpose.msra.mxu0 %v1043
    %6318 = vmatpush.xpose.msra.mxu0 %v1039
    %6319 = vmatpush.xpose.msra.mxu0 %v1035
    %6320 = vmatpush.xpose.msra.mxu0 %v1031
    %6321 = vmatpush.xpose.msra.mxu0 %v1027
    %6322 = vmatpush.xpose.msra.mxu0 %v1023
    %6323 = vmatpush.xpose.msra.mxu0 %v1019
    %6324 = vmatpush.xpose.msra.mxu0 %v1015
    %6325 = vmatpush.xpose.msra.mxu0 %v1011
    %6326 = vmatpush.xpose.msra.mxu0 %v1007
    %6327 = vmatpush.xpose.msra.mxu0 %v1003
    %6328 = vmatmul.f32.gmra.mxu0 %v5131
    %v6329 = vpop.f32.mrf.mxu0
    %v6330 = vadd.f32 %v6310, %v6329
    %6331 = vdwg.mxu0
    %6332 = vmatpush.xpose.msra.mxu0 %v1124
    %6333 = vmatpush.xpose.msra.mxu0 %v1120
    %6334 = vmatpush.xpose.msra.mxu0 %v1116
    %6335 = vmatpush.xpose.msra.mxu0 %v1112
    %6336 = vmatpush.xpose.msra.mxu0 %v1108
    %6337 = vmatpush.xpose.msra.mxu0 %v1104
    %6338 = vmatpush.xpose.msra.mxu0 %v1100
    %6339 = vmatpush.xpose.msra.mxu0 %v1096
    %6340 = vmatpush.xpose.msra.mxu0 %v1092
    %6341 = vmatpush.xpose.msra.mxu0 %v1088
    %6342 = vmatpush.xpose.msra.mxu0 %v1084
    %6343 = vmatpush.xpose.msra.mxu0 %v1080
    %6344 = vmatpush.xpose.msra.mxu0 %v1076
    %6345 = vmatpush.xpose.msra.mxu0 %v1072
    %6346 = vmatpush.xpose.msra.mxu0 %v1068
    %6347 = vmatpush.xpose.msra.mxu0 %v1064
    %6348 = vmatmul.f32.gmra.mxu0 %v5086
    %v6349 = vpop.f32.mrf.mxu0
    %v6350 = vadd.f32 0.0, %v6349
    %6351 = vdwg.mxu0
    %6352 = vmatpush.xpose.msra.mxu0 %v1125
    %6353 = vmatpush.xpose.msra.mxu0 %v1121
    %6354 = vmatpush.xpose.msra.mxu0 %v1117
    %6355 = vmatpush.xpose.msra.mxu0 %v1113
    %6356 = vmatpush.xpose.msra.mxu0 %v1109
    %6357 = vmatpush.xpose.msra.mxu0 %v1105
    %6358 = vmatpush.xpose.msra.mxu0 %v1101
    %6359 = vmatpush.xpose.msra.mxu0 %v1097
    %6360 = vmatpush.xpose.msra.mxu0 %v1093
    %6361 = vmatpush.xpose.msra.mxu0 %v1089
    %6362 = vmatpush.xpose.msra.mxu0 %v1085
    %6363 = vmatpush.xpose.msra.mxu0 %v1081
    %6364 = vmatpush.xpose.msra.mxu0 %v1077
    %6365 = vmatpush.xpose.msra.mxu0 %v1073
    %6366 = vmatpush.xpose.msra.mxu0 %v1069
    %6367 = vmatpush.xpose.msra.mxu0 %v1065
    %6368 = vmatmul.f32.gmra.mxu0 %v5101
    %v6369 = vpop.f32.mrf.mxu0
    %v6370 = vadd.f32 %v6350, %v6369
    %6371 = vdwg.mxu0
    %6372 = vmatpush.xpose.msra.mxu0 %v1126
    %6373 = vmatpush.xpose.msra.mxu0 %v1122
    %6374 = vmatpush.xpose.msra.mxu0 %v1118
    %6375 = vmatpush.xpose.msra.mxu0 %v1114
    %6376 = vmatpush.xpose.msra.mxu0 %v1110
    %6377 = vmatpush.xpose.msra.mxu0 %v1106
    %6378 = vmatpush.xpose.msra.mxu0 %v1102
    %6379 = vmatpush.xpose.msra.mxu0 %v1098
    %6380 = vmatpush.xpose.msra.mxu0 %v1094
    %6381 = vmatpush.xpose.msra.mxu0 %v1090
    %6382 = vmatpush.xpose.msra.mxu0 %v1086
    %6383 = vmatpush.xpose.msra.mxu0 %v1082
    %6384 = vmatpush.xpose.msra.mxu0 %v1078
    %6385 = vmatpush.xpose.msra.mxu0 %v1074
    %6386 = vmatpush.xpose.msra.mxu0 %v1070
    %6387 = vmatpush.xpose.msra.mxu0 %v1066
    %6388 = vmatmul.f32.gmra.mxu0 %v5116
    %v6389 = vpop.f32.mrf.mxu0
    %v6390 = vadd.f32 %v6370, %v6389
    %6391 = vdwg.mxu0
    %6392 = vmatpush.xpose.msra.mxu0 %v1127
    %6393 = vmatpush.xpose.msra.mxu0 %v1123
    %6394 = vmatpush.xpose.msra.mxu0 %v1119
    %6395 = vmatpush.xpose.msra.mxu0 %v1115
    %6396 = vmatpush.xpose.msra.mxu0 %v1111
    %6397 = vmatpush.xpose.msra.mxu0 %v1107
    %6398 = vmatpush.xpose.msra.mxu0 %v1103
    %6399 = vmatpush.xpose.msra.mxu0 %v1099
    %6400 = vmatpush.xpose.msra.mxu0 %v1095
    %6401 = vmatpush.xpose.msra.mxu0 %v1091
    %6402 = vmatpush.xpose.msra.mxu0 %v1087
    %6403 = vmatpush.xpose.msra.mxu0 %v1083
    %6404 = vmatpush.xpose.msra.mxu0 %v1079
    %6405 = vmatpush.xpose.msra.mxu0 %v1075
    %6406 = vmatpush.xpose.msra.mxu0 %v1071
    %6407 = vmatpush.xpose.msra.mxu0 %v1067
    %6408 = vmatmul.f32.gmra.mxu0 %v5131
    %v6409 = vpop.f32.mrf.mxu0
    %v6410 = vadd.f32 %v6390, %v6409
    %6411 = vdwg.mxu0
    %6412 = vmatpush.xpose.msra.mxu0 %v1188
    %6413 = vmatpush.xpose.msra.mxu0 %v1184
    %6414 = vmatpush.xpose.msra.mxu0 %v1180
    %6415 = vmatpush.xpose.msra.mxu0 %v1176
    %6416 = vmatpush.xpose.msra.mxu0 %v1172
    %6417 = vmatpush.xpose.msra.mxu0 %v1168
    %6418 = vmatpush.xpose.msra.mxu0 %v1164
    %6419 = vmatpush.xpose.msra.mxu0 %v1160
    %6420 = vmatpush.xpose.msra.mxu0 %v1156
    %6421 = vmatpush.xpose.msra.mxu0 %v1152
    %6422 = vmatpush.xpose.msra.mxu0 %v1148
    %6423 = vmatpush.xpose.msra.mxu0 %v1144
    %6424 = vmatpush.xpose.msra.mxu0 %v1140
    %6425 = vmatpush.xpose.msra.mxu0 %v1136
    %6426 = vmatpush.xpose.msra.mxu0 %v1132
    %6427 = vmatpush.xpose.msra.mxu0 %v1128
    %6428 = vmatmul.f32.gmra.mxu0 %v5086
    %v6429 = vpop.f32.mrf.mxu0
    %v6430 = vadd.f32 0.0, %v6429
    %6431 = vdwg.mxu0
    %6432 = vmatpush.xpose.msra.mxu0 %v1189
    %6433 = vmatpush.xpose.msra.mxu0 %v1185
    %6434 = vmatpush.xpose.msra.mxu0 %v1181
    %6435 = vmatpush.xpose.msra.mxu0 %v1177
    %6436 = vmatpush.xpose.msra.mxu0 %v1173
    %6437 = vmatpush.xpose.msra.mxu0 %v1169
    %6438 = vmatpush.xpose.msra.mxu0 %v1165
    %6439 = vmatpush.xpose.msra.mxu0 %v1161
    %6440 = vmatpush.xpose.msra.mxu0 %v1157
    %6441 = vmatpush.xpose.msra.mxu0 %v1153
    %6442 = vmatpush.xpose.msra.mxu0 %v1149
    %6443 = vmatpush.xpose.msra.mxu0 %v1145
    %6444 = vmatpush.xpose.msra.mxu0 %v1141
    %6445 = vmatpush.xpose.msra.mxu0 %v1137
    %6446 = vmatpush.xpose.msra.mxu0 %v1133
    %6447 = vmatpush.xpose.msra.mxu0 %v1129
    %6448 = vmatmul.f32.gmra.mxu0 %v5101
    %v6449 = vpop.f32.mrf.mxu0
    %v6450 = vadd.f32 %v6430, %v6449
    %6451 = vdwg.mxu0
    %6452 = vmatpush.xpose.msra.mxu0 %v1190
    %6453 = vmatpush.xpose.msra.mxu0 %v1186
    %6454 = vmatpush.xpose.msra.mxu0 %v1182
    %6455 = vmatpush.xpose.msra.mxu0 %v1178
    %6456 = vmatpush.xpose.msra.mxu0 %v1174
    %6457 = vmatpush.xpose.msra.mxu0 %v1170
    %6458 = vmatpush.xpose.msra.mxu0 %v1166
    %6459 = vmatpush.xpose.msra.mxu0 %v1162
    %6460 = vmatpush.xpose.msra.mxu0 %v1158
    %6461 = vmatpush.xpose.msra.mxu0 %v1154
    %6462 = vmatpush.xpose.msra.mxu0 %v1150
    %6463 = vmatpush.xpose.msra.mxu0 %v1146
    %6464 = vmatpush.xpose.msra.mxu0 %v1142
    %6465 = vmatpush.xpose.msra.mxu0 %v1138
    %6466 = vmatpush.xpose.msra.mxu0 %v1134
    %6467 = vmatpush.xpose.msra.mxu0 %v1130
    %6468 = vmatmul.f32.gmra.mxu0 %v5116
    %v6469 = vpop.f32.mrf.mxu0
    %v6470 = vadd.f32 %v6450, %v6469
    %6471 = vdwg.mxu0
    %6472 = vmatpush.xpose.msra.mxu0 %v1191
    %6473 = vmatpush.xpose.msra.mxu0 %v1187
    %6474 = vmatpush.xpose.msra.mxu0 %v1183
    %6475 = vmatpush.xpose.msra.mxu0 %v1179
    %6476 = vmatpush.xpose.msra.mxu0 %v1175
    %6477 = vmatpush.xpose.msra.mxu0 %v1171
    %6478 = vmatpush.xpose.msra.mxu0 %v1167
    %6479 = vmatpush.xpose.msra.mxu0 %v1163
    %6480 = vmatpush.xpose.msra.mxu0 %v1159
    %6481 = vmatpush.xpose.msra.mxu0 %v1155
    %6482 = vmatpush.xpose.msra.mxu0 %v1151
    %6483 = vmatpush.xpose.msra.mxu0 %v1147
    %6484 = vmatpush.xpose.msra.mxu0 %v1143
    %6485 = vmatpush.xpose.msra.mxu0 %v1139
    %6486 = vmatpush.xpose.msra.mxu0 %v1135
    %6487 = vmatpush.xpose.msra.mxu0 %v1131
    %6488 = vmatmul.f32.gmra.mxu0 %v5131
    %v6489 = vpop.f32.mrf.mxu0
    %v6490 = vadd.f32 %v6470, %v6489
    %6491 = vdwg.mxu0
    %6492 = vmatpush.xpose.msra.mxu0 %v1252
    %6493 = vmatpush.xpose.msra.mxu0 %v1248
    %6494 = vmatpush.xpose.msra.mxu0 %v1244
    %6495 = vmatpush.xpose.msra.mxu0 %v1240
    %6496 = vmatpush.xpose.msra.mxu0 %v1236
    %6497 = vmatpush.xpose.msra.mxu0 %v1232
    %6498 = vmatpush.xpose.msra.mxu0 %v1228
    %6499 = vmatpush.xpose.msra.mxu0 %v1224
    %6500 = vmatpush.xpose.msra.mxu0 %v1220
    %6501 = vmatpush.xpose.msra.mxu0 %v1216
    %6502 = vmatpush.xpose.msra.mxu0 %v1212
    %6503 = vmatpush.xpose.msra.mxu0 %v1208
    %6504 = vmatpush.xpose.msra.mxu0 %v1204
    %6505 = vmatpush.xpose.msra.mxu0 %v1200
    %6506 = vmatpush.xpose.msra.mxu0 %v1196
    %6507 = vmatpush.xpose.msra.mxu0 %v1192
    %6508 = vmatmul.f32.gmra.mxu0 %v5086
    %v6509 = vpop.f32.mrf.mxu0
    %v6510 = vadd.f32 0.0, %v6509
    %6511 = vdwg.mxu0
    %6512 = vmatpush.xpose.msra.mxu0 %v1253
    %6513 = vmatpush.xpose.msra.mxu0 %v1249
    %6514 = vmatpush.xpose.msra.mxu0 %v1245
    %6515 = vmatpush.xpose.msra.mxu0 %v1241
    %6516 = vmatpush.xpose.msra.mxu0 %v1237
    %6517 = vmatpush.xpose.msra.mxu0 %v1233
    %6518 = vmatpush.xpose.msra.mxu0 %v1229
    %6519 = vmatpush.xpose.msra.mxu0 %v1225
    %6520 = vmatpush.xpose.msra.mxu0 %v1221
    %6521 = vmatpush.xpose.msra.mxu0 %v1217
    %6522 = vmatpush.xpose.msra.mxu0 %v1213
    %6523 = vmatpush.xpose.msra.mxu0 %v1209
    %6524 = vmatpush.xpose.msra.mxu0 %v1205
    %6525 = vmatpush.xpose.msra.mxu0 %v1201
    %6526 = vmatpush.xpose.msra.mxu0 %v1197
    %6527 = vmatpush.xpose.msra.mxu0 %v1193
    %6528 = vmatmul.f32.gmra.mxu0 %v5101
    %v6529 = vpop.f32.mrf.mxu0
    %v6530 = vadd.f32 %v6510, %v6529
    %6531 = vdwg.mxu0
    %6532 = vmatpush.xpose.msra.mxu0 %v1254
    %6533 = vmatpush.xpose.msra.mxu0 %v1250
    %6534 = vmatpush.xpose.msra.mxu0 %v1246
    %6535 = vmatpush.xpose.msra.mxu0 %v1242
    %6536 = vmatpush.xpose.msra.mxu0 %v1238
    %6537 = vmatpush.xpose.msra.mxu0 %v1234
    %6538 = vmatpush.xpose.msra.mxu0 %v1230
    %6539 = vmatpush.xpose.msra.mxu0 %v1226
    %6540 = vmatpush.xpose.msra.mxu0 %v1222
    %6541 = vmatpush.xpose.msra.mxu0 %v1218
    %6542 = vmatpush.xpose.msra.mxu0 %v1214
    %6543 = vmatpush.xpose.msra.mxu0 %v1210
    %6544 = vmatpush.xpose.msra.mxu0 %v1206
    %6545 = vmatpush.xpose.msra.mxu0 %v1202
    %6546 = vmatpush.xpose.msra.mxu0 %v1198
    %6547 = vmatpush.xpose.msra.mxu0 %v1194
    %6548 = vmatmul.f32.gmra.mxu0 %v5116
    %v6549 = vpop.f32.mrf.mxu0
    %v6550 = vadd.f32 %v6530, %v6549
    %6551 = vdwg.mxu0
    %6552 = vmatpush.xpose.msra.mxu0 %v1255
    %6553 = vmatpush.xpose.msra.mxu0 %v1251
    %6554 = vmatpush.xpose.msra.mxu0 %v1247
    %6555 = vmatpush.xpose.msra.mxu0 %v1243
    %6556 = vmatpush.xpose.msra.mxu0 %v1239
    %6557 = vmatpush.xpose.msra.mxu0 %v1235
    %6558 = vmatpush.xpose.msra.mxu0 %v1231
    %6559 = vmatpush.xpose.msra.mxu0 %v1227
    %6560 = vmatpush.xpose.msra.mxu0 %v1223
    %6561 = vmatpush.xpose.msra.mxu0 %v1219
    %6562 = vmatpush.xpose.msra.mxu0 %v1215
    %6563 = vmatpush.xpose.msra.mxu0 %v1211
    %6564 = vmatpush.xpose.msra.mxu0 %v1207
    %6565 = vmatpush.xpose.msra.mxu0 %v1203
    %6566 = vmatpush.xpose.msra.mxu0 %v1199
    %6567 = vmatpush.xpose.msra.mxu0 %v1195
    %6568 = vmatmul.f32.gmra.mxu0 %v5131
    %v6569 = vpop.f32.mrf.mxu0
    %v6570 = vadd.f32 %v6550, %v6569
    %6571 = vdwg.mxu0
    %6572 = vmatpush.xpose.msra.mxu0 %v1316
    %6573 = vmatpush.xpose.msra.mxu0 %v1312
    %6574 = vmatpush.xpose.msra.mxu0 %v1308
    %6575 = vmatpush.xpose.msra.mxu0 %v1304
    %6576 = vmatpush.xpose.msra.mxu0 %v1300
    %6577 = vmatpush.xpose.msra.mxu0 %v1296
    %6578 = vmatpush.xpose.msra.mxu0 %v1292
    %6579 = vmatpush.xpose.msra.mxu0 %v1288
    %6580 = vmatpush.xpose.msra.mxu0 %v1284
    %6581 = vmatpush.xpose.msra.mxu0 %v1280
    %6582 = vmatpush.xpose.msra.mxu0 %v1276
    %6583 = vmatpush.xpose.msra.mxu0 %v1272
    %6584 = vmatpush.xpose.msra.mxu0 %v1268
    %6585 = vmatpush.xpose.msra.mxu0 %v1264
    %6586 = vmatpush.xpose.msra.mxu0 %v1260
    %6587 = vmatpush.xpose.msra.mxu0 %v1256
    %6588 = vmatmul.f32.gmra.mxu0 %v5086
    %v6589 = vpop.f32.mrf.mxu0
    %v6590 = vadd.f32 0.0, %v6589
    %6591 = vdwg.mxu0
    %6592 = vmatpush.xpose.msra.mxu0 %v1317
    %6593 = vmatpush.xpose.msra.mxu0 %v1313
    %6594 = vmatpush.xpose.msra.mxu0 %v1309
    %6595 = vmatpush.xpose.msra.mxu0 %v1305
    %6596 = vmatpush.xpose.msra.mxu0 %v1301
    %6597 = vmatpush.xpose.msra.mxu0 %v1297
    %6598 = vmatpush.xpose.msra.mxu0 %v1293
    %6599 = vmatpush.xpose.msra.mxu0 %v1289
    %6600 = vmatpush.xpose.msra.mxu0 %v1285
    %6601 = vmatpush.xpose.msra.mxu0 %v1281
    %6602 = vmatpush.xpose.msra.mxu0 %v1277
    %6603 = vmatpush.xpose.msra.mxu0 %v1273
    %6604 = vmatpush.xpose.msra.mxu0 %v1269
    %6605 = vmatpush.xpose.msra.mxu0 %v1265
    %6606 = vmatpush.xpose.msra.mxu0 %v1261
    %6607 = vmatpush.xpose.msra.mxu0 %v1257
    %6608 = vmatmul.f32.gmra.mxu0 %v5101
    %v6609 = vpop.f32.mrf.mxu0
    %v6610 = vadd.f32 %v6590, %v6609
    %6611 = vdwg.mxu0
    %6612 = vmatpush.xpose.msra.mxu0 %v1318
    %6613 = vmatpush.xpose.msra.mxu0 %v1314
    %6614 = vmatpush.xpose.msra.mxu0 %v1310
    %6615 = vmatpush.xpose.msra.mxu0 %v1306
    %6616 = vmatpush.xpose.msra.mxu0 %v1302
    %6617 = vmatpush.xpose.msra.mxu0 %v1298
    %6618 = vmatpush.xpose.msra.mxu0 %v1294
    %6619 = vmatpush.xpose.msra.mxu0 %v1290
    %6620 = vmatpush.xpose.msra.mxu0 %v1286
    %6621 = vmatpush.xpose.msra.mxu0 %v1282
    %6622 = vmatpush.xpose.msra.mxu0 %v1278
    %6623 = vmatpush.xpose.msra.mxu0 %v1274
    %6624 = vmatpush.xpose.msra.mxu0 %v1270
    %6625 = vmatpush.xpose.msra.mxu0 %v1266
    %6626 = vmatpush.xpose.msra.mxu0 %v1262
    %6627 = vmatpush.xpose.msra.mxu0 %v1258
    %6628 = vmatmul.f32.gmra.mxu0 %v5116
    %v6629 = vpop.f32.mrf.mxu0
    %v6630 = vadd.f32 %v6610, %v6629
    %6631 = vdwg.mxu0
    %6632 = vmatpush.xpose.msra.mxu0 %v1319
    %6633 = vmatpush.xpose.msra.mxu0 %v1315
    %6634 = vmatpush.xpose.msra.mxu0 %v1311
    %6635 = vmatpush.xpose.msra.mxu0 %v1307
    %6636 = vmatpush.xpose.msra.mxu0 %v1303
    %6637 = vmatpush.xpose.msra.mxu0 %v1299
    %6638 = vmatpush.xpose.msra.mxu0 %v1295
    %6639 = vmatpush.xpose.msra.mxu0 %v1291
    %6640 = vmatpush.xpose.msra.mxu0 %v1287
    %6641 = vmatpush.xpose.msra.mxu0 %v1283
    %6642 = vmatpush.xpose.msra.mxu0 %v1279
    %6643 = vmatpush.xpose.msra.mxu0 %v1275
    %6644 = vmatpush.xpose.msra.mxu0 %v1271
    %6645 = vmatpush.xpose.msra.mxu0 %v1267
    %6646 = vmatpush.xpose.msra.mxu0 %v1263
    %6647 = vmatpush.xpose.msra.mxu0 %v1259
    %6648 = vmatmul.f32.gmra.mxu0 %v5131
    %v6649 = vpop.f32.mrf.mxu0
    %v6650 = vadd.f32 %v6630, %v6649
    %6651 = vdwg.mxu0
    %6652 = vmatpush.xpose.msra.mxu0 %v1380
    %6653 = vmatpush.xpose.msra.mxu0 %v1376
    %6654 = vmatpush.xpose.msra.mxu0 %v1372
    %6655 = vmatpush.xpose.msra.mxu0 %v1368
    %6656 = vmatpush.xpose.msra.mxu0 %v1364
    %6657 = vmatpush.xpose.msra.mxu0 %v1360
    %6658 = vmatpush.xpose.msra.mxu0 %v1356
    %6659 = vmatpush.xpose.msra.mxu0 %v1352
    %6660 = vmatpush.xpose.msra.mxu0 %v1348
    %6661 = vmatpush.xpose.msra.mxu0 %v1344
    %6662 = vmatpush.xpose.msra.mxu0 %v1340
    %6663 = vmatpush.xpose.msra.mxu0 %v1336
    %6664 = vmatpush.xpose.msra.mxu0 %v1332
    %6665 = vmatpush.xpose.msra.mxu0 %v1328
    %6666 = vmatpush.xpose.msra.mxu0 %v1324
    %6667 = vmatpush.xpose.msra.mxu0 %v1320
    %6668 = vmatmul.f32.gmra.mxu0 %v5086
    %v6669 = vpop.f32.mrf.mxu0
    %v6670 = vadd.f32 0.0, %v6669
    %6671 = vdwg.mxu0
    %6672 = vmatpush.xpose.msra.mxu0 %v1381
    %6673 = vmatpush.xpose.msra.mxu0 %v1377
    %6674 = vmatpush.xpose.msra.mxu0 %v1373
    %6675 = vmatpush.xpose.msra.mxu0 %v1369
    %6676 = vmatpush.xpose.msra.mxu0 %v1365
    %6677 = vmatpush.xpose.msra.mxu0 %v1361
    %6678 = vmatpush.xpose.msra.mxu0 %v1357
    %6679 = vmatpush.xpose.msra.mxu0 %v1353
    %6680 = vmatpush.xpose.msra.mxu0 %v1349
    %6681 = vmatpush.xpose.msra.mxu0 %v1345
    %6682 = vmatpush.xpose.msra.mxu0 %v1341
    %6683 = vmatpush.xpose.msra.mxu0 %v1337
    %6684 = vmatpush.xpose.msra.mxu0 %v1333
    %6685 = vmatpush.xpose.msra.mxu0 %v1329
    %6686 = vmatpush.xpose.msra.mxu0 %v1325
    %6687 = vmatpush.xpose.msra.mxu0 %v1321
    %6688 = vmatmul.f32.gmra.mxu0 %v5101
    %v6689 = vpop.f32.mrf.mxu0
    %v6690 = vadd.f32 %v6670, %v6689
    %6691 = vdwg.mxu0
    %6692 = vmatpush.xpose.msra.mxu0 %v1382
    %6693 = vmatpush.xpose.msra.mxu0 %v1378
    %6694 = vmatpush.xpose.msra.mxu0 %v1374
    %6695 = vmatpush.xpose.msra.mxu0 %v1370
    %6696 = vmatpush.xpose.msra.mxu0 %v1366
    %6697 = vmatpush.xpose.msra.mxu0 %v1362
    %6698 = vmatpush.xpose.msra.mxu0 %v1358
    %6699 = vmatpush.xpose.msra.mxu0 %v1354
    %6700 = vmatpush.xpose.msra.mxu0 %v1350
    %6701 = vmatpush.xpose.msra.mxu0 %v1346
    %6702 = vmatpush.xpose.msra.mxu0 %v1342
    %6703 = vmatpush.xpose.msra.mxu0 %v1338
    %6704 = vmatpush.xpose.msra.mxu0 %v1334
    %6705 = vmatpush.xpose.msra.mxu0 %v1330
    %6706 = vmatpush.xpose.msra.mxu0 %v1326
    %6707 = vmatpush.xpose.msra.mxu0 %v1322
    %6708 = vmatmul.f32.gmra.mxu0 %v5116
    %v6709 = vpop.f32.mrf.mxu0
    %v6710 = vadd.f32 %v6690, %v6709
    %6711 = vdwg.mxu0
    %6712 = vmatpush.xpose.msra.mxu0 %v1383
    %6713 = vmatpush.xpose.msra.mxu0 %v1379
    %6714 = vmatpush.xpose.msra.mxu0 %v1375
    %6715 = vmatpush.xpose.msra.mxu0 %v1371
    %6716 = vmatpush.xpose.msra.mxu0 %v1367
    %6717 = vmatpush.xpose.msra.mxu0 %v1363
    %6718 = vmatpush.xpose.msra.mxu0 %v1359
    %6719 = vmatpush.xpose.msra.mxu0 %v1355
    %6720 = vmatpush.xpose.msra.mxu0 %v1351
    %6721 = vmatpush.xpose.msra.mxu0 %v1347
    %6722 = vmatpush.xpose.msra.mxu0 %v1343
    %6723 = vmatpush.xpose.msra.mxu0 %v1339
    %6724 = vmatpush.xpose.msra.mxu0 %v1335
    %6725 = vmatpush.xpose.msra.mxu0 %v1331
    %6726 = vmatpush.xpose.msra.mxu0 %v1327
    %6727 = vmatpush.xpose.msra.mxu0 %v1323
    %6728 = vmatmul.f32.gmra.mxu0 %v5131
    %v6729 = vpop.f32.mrf.mxu0
    %v6730 = vadd.f32 %v6710, %v6729
    %6731 = vdwg.mxu0
    %6732 = vmatpush.xpose.msra.mxu0 %v1444
    %6733 = vmatpush.xpose.msra.mxu0 %v1440
    %6734 = vmatpush.xpose.msra.mxu0 %v1436
    %6735 = vmatpush.xpose.msra.mxu0 %v1432
    %6736 = vmatpush.xpose.msra.mxu0 %v1428
    %6737 = vmatpush.xpose.msra.mxu0 %v1424
    %6738 = vmatpush.xpose.msra.mxu0 %v1420
    %6739 = vmatpush.xpose.msra.mxu0 %v1416
    %6740 = vmatpush.xpose.msra.mxu0 %v1412
    %6741 = vmatpush.xpose.msra.mxu0 %v1408
    %6742 = vmatpush.xpose.msra.mxu0 %v1404
    %6743 = vmatpush.xpose.msra.mxu0 %v1400
    %6744 = vmatpush.xpose.msra.mxu0 %v1396
    %6745 = vmatpush.xpose.msra.mxu0 %v1392
    %6746 = vmatpush.xpose.msra.mxu0 %v1388
    %6747 = vmatpush.xpose.msra.mxu0 %v1384
    %6748 = vmatmul.f32.gmra.mxu0 %v5086
    %v6749 = vpop.f32.mrf.mxu0
    %v6750 = vadd.f32 0.0, %v6749
    %6751 = vdwg.mxu0
    %6752 = vmatpush.xpose.msra.mxu0 %v1445
    %6753 = vmatpush.xpose.msra.mxu0 %v1441
    %6754 = vmatpush.xpose.msra.mxu0 %v1437
    %6755 = vmatpush.xpose.msra.mxu0 %v1433
    %6756 = vmatpush.xpose.msra.mxu0 %v1429
    %6757 = vmatpush.xpose.msra.mxu0 %v1425
    %6758 = vmatpush.xpose.msra.mxu0 %v1421
    %6759 = vmatpush.xpose.msra.mxu0 %v1417
    %6760 = vmatpush.xpose.msra.mxu0 %v1413
    %6761 = vmatpush.xpose.msra.mxu0 %v1409
    %6762 = vmatpush.xpose.msra.mxu0 %v1405
    %6763 = vmatpush.xpose.msra.mxu0 %v1401
    %6764 = vmatpush.xpose.msra.mxu0 %v1397
    %6765 = vmatpush.xpose.msra.mxu0 %v1393
    %6766 = vmatpush.xpose.msra.mxu0 %v1389
    %6767 = vmatpush.xpose.msra.mxu0 %v1385
    %6768 = vmatmul.f32.gmra.mxu0 %v5101
    %v6769 = vpop.f32.mrf.mxu0
    %v6770 = vadd.f32 %v6750, %v6769
    %6771 = vdwg.mxu0
    %6772 = vmatpush.xpose.msra.mxu0 %v1446
    %6773 = vmatpush.xpose.msra.mxu0 %v1442
    %6774 = vmatpush.xpose.msra.mxu0 %v1438
    %6775 = vmatpush.xpose.msra.mxu0 %v1434
    %6776 = vmatpush.xpose.msra.mxu0 %v1430
    %6777 = vmatpush.xpose.msra.mxu0 %v1426
    %6778 = vmatpush.xpose.msra.mxu0 %v1422
    %6779 = vmatpush.xpose.msra.mxu0 %v1418
    %6780 = vmatpush.xpose.msra.mxu0 %v1414
    %6781 = vmatpush.xpose.msra.mxu0 %v1410
    %6782 = vmatpush.xpose.msra.mxu0 %v1406
    %6783 = vmatpush.xpose.msra.mxu0 %v1402
    %6784 = vmatpush.xpose.msra.mxu0 %v1398
    %6785 = vmatpush.xpose.msra.mxu0 %v1394
    %6786 = vmatpush.xpose.msra.mxu0 %v1390
    %6787 = vmatpush.xpose.msra.mxu0 %v1386
    %6788 = vmatmul.f32.gmra.mxu0 %v5116
    %v6789 = vpop.f32.mrf.mxu0
    %v6790 = vadd.f32 %v6770, %v6789
    %6791 = vdwg.mxu0
    %6792 = vmatpush.xpose.msra.mxu0 %v1447
    %6793 = vmatpush.xpose.msra.mxu0 %v1443
    %6794 = vmatpush.xpose.msra.mxu0 %v1439
    %6795 = vmatpush.xpose.msra.mxu0 %v1435
    %6796 = vmatpush.xpose.msra.mxu0 %v1431
    %6797 = vmatpush.xpose.msra.mxu0 %v1427
    %6798 = vmatpush.xpose.msra.mxu0 %v1423
    %6799 = vmatpush.xpose.msra.mxu0 %v1419
    %6800 = vmatpush.xpose.msra.mxu0 %v1415
    %6801 = vmatpush.xpose.msra.mxu0 %v1411
    %6802 = vmatpush.xpose.msra.mxu0 %v1407
    %6803 = vmatpush.xpose.msra.mxu0 %v1403
    %6804 = vmatpush.xpose.msra.mxu0 %v1399
    %6805 = vmatpush.xpose.msra.mxu0 %v1395
    %6806 = vmatpush.xpose.msra.mxu0 %v1391
    %6807 = vmatpush.xpose.msra.mxu0 %v1387
    %6808 = vmatmul.f32.gmra.mxu0 %v5131
    %v6809 = vpop.f32.mrf.mxu0
    %v6810 = vadd.f32 %v6790, %v6809
    %6811 = vdwg.mxu0
    %6812 = vmatpush.xpose.msra.mxu0 %v1508
    %6813 = vmatpush.xpose.msra.mxu0 %v1504
    %6814 = vmatpush.xpose.msra.mxu0 %v1500
    %6815 = vmatpush.xpose.msra.mxu0 %v1496
    %6816 = vmatpush.xpose.msra.mxu0 %v1492
    %6817 = vmatpush.xpose.msra.mxu0 %v1488
    %6818 = vmatpush.xpose.msra.mxu0 %v1484
    %6819 = vmatpush.xpose.msra.mxu0 %v1480
    %6820 = vmatpush.xpose.msra.mxu0 %v1476
    %6821 = vmatpush.xpose.msra.mxu0 %v1472
    %6822 = vmatpush.xpose.msra.mxu0 %v1468
    %6823 = vmatpush.xpose.msra.mxu0 %v1464
    %6824 = vmatpush.xpose.msra.mxu0 %v1460
    %6825 = vmatpush.xpose.msra.mxu0 %v1456
    %6826 = vmatpush.xpose.msra.mxu0 %v1452
    %6827 = vmatpush.xpose.msra.mxu0 %v1448
    %6828 = vmatmul.f32.gmra.mxu0 %v5086
    %v6829 = vpop.f32.mrf.mxu0
    %v6830 = vadd.f32 0.0, %v6829
    %6831 = vdwg.mxu0
    %6832 = vmatpush.xpose.msra.mxu0 %v1509
    %6833 = vmatpush.xpose.msra.mxu0 %v1505
    %6834 = vmatpush.xpose.msra.mxu0 %v1501
    %6835 = vmatpush.xpose.msra.mxu0 %v1497
    %6836 = vmatpush.xpose.msra.mxu0 %v1493
    %6837 = vmatpush.xpose.msra.mxu0 %v1489
    %6838 = vmatpush.xpose.msra.mxu0 %v1485
    %6839 = vmatpush.xpose.msra.mxu0 %v1481
    %6840 = vmatpush.xpose.msra.mxu0 %v1477
    %6841 = vmatpush.xpose.msra.mxu0 %v1473
    %6842 = vmatpush.xpose.msra.mxu0 %v1469
    %6843 = vmatpush.xpose.msra.mxu0 %v1465
    %6844 = vmatpush.xpose.msra.mxu0 %v1461
    %6845 = vmatpush.xpose.msra.mxu0 %v1457
    %6846 = vmatpush.xpose.msra.mxu0 %v1453
    %6847 = vmatpush.xpose.msra.mxu0 %v1449
    %6848 = vmatmul.f32.gmra.mxu0 %v5101
    %v6849 = vpop.f32.mrf.mxu0
    %v6850 = vadd.f32 %v6830, %v6849
    %6851 = vdwg.mxu0
    %6852 = vmatpush.xpose.msra.mxu0 %v1510
    %6853 = vmatpush.xpose.msra.mxu0 %v1506
    %6854 = vmatpush.xpose.msra.mxu0 %v1502
    %6855 = vmatpush.xpose.msra.mxu0 %v1498
    %6856 = vmatpush.xpose.msra.mxu0 %v1494
    %6857 = vmatpush.xpose.msra.mxu0 %v1490
    %6858 = vmatpush.xpose.msra.mxu0 %v1486
    %6859 = vmatpush.xpose.msra.mxu0 %v1482
    %6860 = vmatpush.xpose.msra.mxu0 %v1478
    %6861 = vmatpush.xpose.msra.mxu0 %v1474
    %6862 = vmatpush.xpose.msra.mxu0 %v1470
    %6863 = vmatpush.xpose.msra.mxu0 %v1466
    %6864 = vmatpush.xpose.msra.mxu0 %v1462
    %6865 = vmatpush.xpose.msra.mxu0 %v1458
    %6866 = vmatpush.xpose.msra.mxu0 %v1454
    %6867 = vmatpush.xpose.msra.mxu0 %v1450
    %6868 = vmatmul.f32.gmra.mxu0 %v5116
    %v6869 = vpop.f32.mrf.mxu0
    %v6870 = vadd.f32 %v6850, %v6869
    %6871 = vdwg.mxu0
    %6872 = vmatpush.xpose.msra.mxu0 %v1511
    %6873 = vmatpush.xpose.msra.mxu0 %v1507
    %6874 = vmatpush.xpose.msra.mxu0 %v1503
    %6875 = vmatpush.xpose.msra.mxu0 %v1499
    %6876 = vmatpush.xpose.msra.mxu0 %v1495
    %6877 = vmatpush.xpose.msra.mxu0 %v1491
    %6878 = vmatpush.xpose.msra.mxu0 %v1487
    %6879 = vmatpush.xpose.msra.mxu0 %v1483
    %6880 = vmatpush.xpose.msra.mxu0 %v1479
    %6881 = vmatpush.xpose.msra.mxu0 %v1475
    %6882 = vmatpush.xpose.msra.mxu0 %v1471
    %6883 = vmatpush.xpose.msra.mxu0 %v1467
    %6884 = vmatpush.xpose.msra.mxu0 %v1463
    %6885 = vmatpush.xpose.msra.mxu0 %v1459
    %6886 = vmatpush.xpose.msra.mxu0 %v1455
    %6887 = vmatpush.xpose.msra.mxu0 %v1451
    %6888 = vmatmul.f32.gmra.mxu0 %v5131
    %v6889 = vpop.f32.mrf.mxu0
    %v6890 = vadd.f32 %v6870, %v6889
    %6891 = vdwg.mxu0
    %6892 = vmatpush.xpose.msra.mxu0 %v1572
    %6893 = vmatpush.xpose.msra.mxu0 %v1568
    %6894 = vmatpush.xpose.msra.mxu0 %v1564
    %6895 = vmatpush.xpose.msra.mxu0 %v1560
    %6896 = vmatpush.xpose.msra.mxu0 %v1556
    %6897 = vmatpush.xpose.msra.mxu0 %v1552
    %6898 = vmatpush.xpose.msra.mxu0 %v1548
    %6899 = vmatpush.xpose.msra.mxu0 %v1544
    %6900 = vmatpush.xpose.msra.mxu0 %v1540
    %6901 = vmatpush.xpose.msra.mxu0 %v1536
    %6902 = vmatpush.xpose.msra.mxu0 %v1532
    %6903 = vmatpush.xpose.msra.mxu0 %v1528
    %6904 = vmatpush.xpose.msra.mxu0 %v1524
    %6905 = vmatpush.xpose.msra.mxu0 %v1520
    %6906 = vmatpush.xpose.msra.mxu0 %v1516
    %6907 = vmatpush.xpose.msra.mxu0 %v1512
    %6908 = vmatmul.f32.gmra.mxu0 %v5086
    %v6909 = vpop.f32.mrf.mxu0
    %v6910 = vadd.f32 0.0, %v6909
    %6911 = vdwg.mxu0
    %6912 = vmatpush.xpose.msra.mxu0 %v1573
    %6913 = vmatpush.xpose.msra.mxu0 %v1569
    %6914 = vmatpush.xpose.msra.mxu0 %v1565
    %6915 = vmatpush.xpose.msra.mxu0 %v1561
    %6916 = vmatpush.xpose.msra.mxu0 %v1557
    %6917 = vmatpush.xpose.msra.mxu0 %v1553
    %6918 = vmatpush.xpose.msra.mxu0 %v1549
    %6919 = vmatpush.xpose.msra.mxu0 %v1545
    %6920 = vmatpush.xpose.msra.mxu0 %v1541
    %6921 = vmatpush.xpose.msra.mxu0 %v1537
    %6922 = vmatpush.xpose.msra.mxu0 %v1533
    %6923 = vmatpush.xpose.msra.mxu0 %v1529
    %6924 = vmatpush.xpose.msra.mxu0 %v1525
    %6925 = vmatpush.xpose.msra.mxu0 %v1521
    %6926 = vmatpush.xpose.msra.mxu0 %v1517
    %6927 = vmatpush.xpose.msra.mxu0 %v1513
    %6928 = vmatmul.f32.gmra.mxu0 %v5101
    %v6929 = vpop.f32.mrf.mxu0
    %v6930 = vadd.f32 %v6910, %v6929
    %6931 = vdwg.mxu0
    %6932 = vmatpush.xpose.msra.mxu0 %v1574
    %6933 = vmatpush.xpose.msra.mxu0 %v1570
    %6934 = vmatpush.xpose.msra.mxu0 %v1566
    %6935 = vmatpush.xpose.msra.mxu0 %v1562
    %6936 = vmatpush.xpose.msra.mxu0 %v1558
    %6937 = vmatpush.xpose.msra.mxu0 %v1554
    %6938 = vmatpush.xpose.msra.mxu0 %v1550
    %6939 = vmatpush.xpose.msra.mxu0 %v1546
    %6940 = vmatpush.xpose.msra.mxu0 %v1542
    %6941 = vmatpush.xpose.msra.mxu0 %v1538
    %6942 = vmatpush.xpose.msra.mxu0 %v1534
    %6943 = vmatpush.xpose.msra.mxu0 %v1530
    %6944 = vmatpush.xpose.msra.mxu0 %v1526
    %6945 = vmatpush.xpose.msra.mxu0 %v1522
    %6946 = vmatpush.xpose.msra.mxu0 %v1518
    %6947 = vmatpush.xpose.msra.mxu0 %v1514
    %6948 = vmatmul.f32.gmra.mxu0 %v5116
    %v6949 = vpop.f32.mrf.mxu0
    %v6950 = vadd.f32 %v6930, %v6949
    %6951 = vdwg.mxu0
    %6952 = vmatpush.xpose.msra.mxu0 %v1575
    %6953 = vmatpush.xpose.msra.mxu0 %v1571
    %6954 = vmatpush.xpose.msra.mxu0 %v1567
    %6955 = vmatpush.xpose.msra.mxu0 %v1563
    %6956 = vmatpush.xpose.msra.mxu0 %v1559
    %6957 = vmatpush.xpose.msra.mxu0 %v1555
    %6958 = vmatpush.xpose.msra.mxu0 %v1551
    %6959 = vmatpush.xpose.msra.mxu0 %v1547
    %6960 = vmatpush.xpose.msra.mxu0 %v1543
    %6961 = vmatpush.xpose.msra.mxu0 %v1539
    %6962 = vmatpush.xpose.msra.mxu0 %v1535
    %6963 = vmatpush.xpose.msra.mxu0 %v1531
    %6964 = vmatpush.xpose.msra.mxu0 %v1527
    %6965 = vmatpush.xpose.msra.mxu0 %v1523
    %6966 = vmatpush.xpose.msra.mxu0 %v1519
    %6967 = vmatpush.xpose.msra.mxu0 %v1515
    %6968 = vmatmul.f32.gmra.mxu0 %v5131
    %v6969 = vpop.f32.mrf.mxu0
    %v6970 = vadd.f32 %v6950, %v6969
    %6971 = vdwg.mxu0
    %6972 = vmatpush.xpose.msra.mxu0 %v1636
    %6973 = vmatpush.xpose.msra.mxu0 %v1632
    %6974 = vmatpush.xpose.msra.mxu0 %v1628
    %6975 = vmatpush.xpose.msra.mxu0 %v1624
    %6976 = vmatpush.xpose.msra.mxu0 %v1620
    %6977 = vmatpush.xpose.msra.mxu0 %v1616
    %6978 = vmatpush.xpose.msra.mxu0 %v1612
    %6979 = vmatpush.xpose.msra.mxu0 %v1608
    %6980 = vmatpush.xpose.msra.mxu0 %v1604
    %6981 = vmatpush.xpose.msra.mxu0 %v1600
    %6982 = vmatpush.xpose.msra.mxu0 %v1596
    %6983 = vmatpush.xpose.msra.mxu0 %v1592
    %6984 = vmatpush.xpose.msra.mxu0 %v1588
    %6985 = vmatpush.xpose.msra.mxu0 %v1584
    %6986 = vmatpush.xpose.msra.mxu0 %v1580
    %6987 = vmatpush.xpose.msra.mxu0 %v1576
    %6988 = vmatmul.f32.gmra.mxu0 %v5086
    %v6989 = vpop.f32.mrf.mxu0
    %v6990 = vadd.f32 0.0, %v6989
    %6991 = vdwg.mxu0
    %6992 = vmatpush.xpose.msra.mxu0 %v1637
    %6993 = vmatpush.xpose.msra.mxu0 %v1633
    %6994 = vmatpush.xpose.msra.mxu0 %v1629
    %6995 = vmatpush.xpose.msra.mxu0 %v1625
    %6996 = vmatpush.xpose.msra.mxu0 %v1621
    %6997 = vmatpush.xpose.msra.mxu0 %v1617
    %6998 = vmatpush.xpose.msra.mxu0 %v1613
    %6999 = vmatpush.xpose.msra.mxu0 %v1609
    %7000 = vmatpush.xpose.msra.mxu0 %v1605
    %7001 = vmatpush.xpose.msra.mxu0 %v1601
    %7002 = vmatpush.xpose.msra.mxu0 %v1597
    %7003 = vmatpush.xpose.msra.mxu0 %v1593
    %7004 = vmatpush.xpose.msra.mxu0 %v1589
    %7005 = vmatpush.xpose.msra.mxu0 %v1585
    %7006 = vmatpush.xpose.msra.mxu0 %v1581
    %7007 = vmatpush.xpose.msra.mxu0 %v1577
    %7008 = vmatmul.f32.gmra.mxu0 %v5101
    %v7009 = vpop.f32.mrf.mxu0
    %v7010 = vadd.f32 %v6990, %v7009
    %7011 = vdwg.mxu0
    %7012 = vmatpush.xpose.msra.mxu0 %v1638
    %7013 = vmatpush.xpose.msra.mxu0 %v1634
    %7014 = vmatpush.xpose.msra.mxu0 %v1630
    %7015 = vmatpush.xpose.msra.mxu0 %v1626
    %7016 = vmatpush.xpose.msra.mxu0 %v1622
    %7017 = vmatpush.xpose.msra.mxu0 %v1618
    %7018 = vmatpush.xpose.msra.mxu0 %v1614
    %7019 = vmatpush.xpose.msra.mxu0 %v1610
    %7020 = vmatpush.xpose.msra.mxu0 %v1606
    %7021 = vmatpush.xpose.msra.mxu0 %v1602
    %7022 = vmatpush.xpose.msra.mxu0 %v1598
    %7023 = vmatpush.xpose.msra.mxu0 %v1594
    %7024 = vmatpush.xpose.msra.mxu0 %v1590
    %7025 = vmatpush.xpose.msra.mxu0 %v1586
    %7026 = vmatpush.xpose.msra.mxu0 %v1582
    %7027 = vmatpush.xpose.msra.mxu0 %v1578
    %7028 = vmatmul.f32.gmra.mxu0 %v5116
    %v7029 = vpop.f32.mrf.mxu0
    %v7030 = vadd.f32 %v7010, %v7029
    %7031 = vdwg.mxu0
    %7032 = vmatpush.xpose.msra.mxu0 %v1639
    %7033 = vmatpush.xpose.msra.mxu0 %v1635
    %7034 = vmatpush.xpose.msra.mxu0 %v1631
    %7035 = vmatpush.xpose.msra.mxu0 %v1627
    %7036 = vmatpush.xpose.msra.mxu0 %v1623
    %7037 = vmatpush.xpose.msra.mxu0 %v1619
    %7038 = vmatpush.xpose.msra.mxu0 %v1615
    %7039 = vmatpush.xpose.msra.mxu0 %v1611
    %7040 = vmatpush.xpose.msra.mxu0 %v1607
    %7041 = vmatpush.xpose.msra.mxu0 %v1603
    %7042 = vmatpush.xpose.msra.mxu0 %v1599
    %7043 = vmatpush.xpose.msra.mxu0 %v1595
    %7044 = vmatpush.xpose.msra.mxu0 %v1591
    %7045 = vmatpush.xpose.msra.mxu0 %v1587
    %7046 = vmatpush.xpose.msra.mxu0 %v1583
    %7047 = vmatpush.xpose.msra.mxu0 %v1579
    %7048 = vmatmul.f32.gmra.mxu0 %v5131
    %v7049 = vpop.f32.mrf.mxu0
    %v7050 = vadd.f32 %v7030, %v7049
    %7051 = vdwg.mxu0
    %7052 = vmatpush.xpose.msra.mxu0 %v1700
    %7053 = vmatpush.xpose.msra.mxu0 %v1696
    %7054 = vmatpush.xpose.msra.mxu0 %v1692
    %7055 = vmatpush.xpose.msra.mxu0 %v1688
    %7056 = vmatpush.xpose.msra.mxu0 %v1684
    %7057 = vmatpush.xpose.msra.mxu0 %v1680
    %7058 = vmatpush.xpose.msra.mxu0 %v1676
    %7059 = vmatpush.xpose.msra.mxu0 %v1672
    %7060 = vmatpush.xpose.msra.mxu0 %v1668
    %7061 = vmatpush.xpose.msra.mxu0 %v1664
    %7062 = vmatpush.xpose.msra.mxu0 %v1660
    %7063 = vmatpush.xpose.msra.mxu0 %v1656
    %7064 = vmatpush.xpose.msra.mxu0 %v1652
    %7065 = vmatpush.xpose.msra.mxu0 %v1648
    %7066 = vmatpush.xpose.msra.mxu0 %v1644
    %7067 = vmatpush.xpose.msra.mxu0 %v1640
    %7068 = vmatmul.f32.gmra.mxu0 %v5086
    %v7069 = vpop.f32.mrf.mxu0
    %v7070 = vadd.f32 0.0, %v7069
    %7071 = vdwg.mxu0
    %7072 = vmatpush.xpose.msra.mxu0 %v1701
    %7073 = vmatpush.xpose.msra.mxu0 %v1697
    %7074 = vmatpush.xpose.msra.mxu0 %v1693
    %7075 = vmatpush.xpose.msra.mxu0 %v1689
    %7076 = vmatpush.xpose.msra.mxu0 %v1685
    %7077 = vmatpush.xpose.msra.mxu0 %v1681
    %7078 = vmatpush.xpose.msra.mxu0 %v1677
    %7079 = vmatpush.xpose.msra.mxu0 %v1673
    %7080 = vmatpush.xpose.msra.mxu0 %v1669
    %7081 = vmatpush.xpose.msra.mxu0 %v1665
    %7082 = vmatpush.xpose.msra.mxu0 %v1661
    %7083 = vmatpush.xpose.msra.mxu0 %v1657
    %7084 = vmatpush.xpose.msra.mxu0 %v1653
    %7085 = vmatpush.xpose.msra.mxu0 %v1649
    %7086 = vmatpush.xpose.msra.mxu0 %v1645
    %7087 = vmatpush.xpose.msra.mxu0 %v1641
    %7088 = vmatmul.f32.gmra.mxu0 %v5101
    %v7089 = vpop.f32.mrf.mxu0
    %v7090 = vadd.f32 %v7070, %v7089
    %7091 = vdwg.mxu0
    %7092 = vmatpush.xpose.msra.mxu0 %v1702
    %7093 = vmatpush.xpose.msra.mxu0 %v1698
    %7094 = vmatpush.xpose.msra.mxu0 %v1694
    %7095 = vmatpush.xpose.msra.mxu0 %v1690
    %7096 = vmatpush.xpose.msra.mxu0 %v1686
    %7097 = vmatpush.xpose.msra.mxu0 %v1682
    %7098 = vmatpush.xpose.msra.mxu0 %v1678
    %7099 = vmatpush.xpose.msra.mxu0 %v1674
    %7100 = vmatpush.xpose.msra.mxu0 %v1670
    %7101 = vmatpush.xpose.msra.mxu0 %v1666
    %7102 = vmatpush.xpose.msra.mxu0 %v1662
    %7103 = vmatpush.xpose.msra.mxu0 %v1658
    %7104 = vmatpush.xpose.msra.mxu0 %v1654
    %7105 = vmatpush.xpose.msra.mxu0 %v1650
    %7106 = vmatpush.xpose.msra.mxu0 %v1646
    %7107 = vmatpush.xpose.msra.mxu0 %v1642
    %7108 = vmatmul.f32.gmra.mxu0 %v5116
    %v7109 = vpop.f32.mrf.mxu0
    %v7110 = vadd.f32 %v7090, %v7109
    %7111 = vdwg.mxu0
    %7112 = vmatpush.xpose.msra.mxu0 %v1703
    %7113 = vmatpush.xpose.msra.mxu0 %v1699
    %7114 = vmatpush.xpose.msra.mxu0 %v1695
    %7115 = vmatpush.xpose.msra.mxu0 %v1691
    %7116 = vmatpush.xpose.msra.mxu0 %v1687
    %7117 = vmatpush.xpose.msra.mxu0 %v1683
    %7118 = vmatpush.xpose.msra.mxu0 %v1679
    %7119 = vmatpush.xpose.msra.mxu0 %v1675
    %7120 = vmatpush.xpose.msra.mxu0 %v1671
    %7121 = vmatpush.xpose.msra.mxu0 %v1667
    %7122 = vmatpush.xpose.msra.mxu0 %v1663
    %7123 = vmatpush.xpose.msra.mxu0 %v1659
    %7124 = vmatpush.xpose.msra.mxu0 %v1655
    %7125 = vmatpush.xpose.msra.mxu0 %v1651
    %7126 = vmatpush.xpose.msra.mxu0 %v1647
    %7127 = vmatpush.xpose.msra.mxu0 %v1643
    %7128 = vmatmul.f32.gmra.mxu0 %v5131
    %v7129 = vpop.f32.mrf.mxu0
    %v7130 = vadd.f32 %v7110, %v7129
    %7131 = vdwg.mxu0
    %7132 = vmatpush.xpose.msra.mxu0 %v1764
    %7133 = vmatpush.xpose.msra.mxu0 %v1760
    %7134 = vmatpush.xpose.msra.mxu0 %v1756
    %7135 = vmatpush.xpose.msra.mxu0 %v1752
    %7136 = vmatpush.xpose.msra.mxu0 %v1748
    %7137 = vmatpush.xpose.msra.mxu0 %v1744
    %7138 = vmatpush.xpose.msra.mxu0 %v1740
    %7139 = vmatpush.xpose.msra.mxu0 %v1736
    %7140 = vmatpush.xpose.msra.mxu0 %v1732
    %7141 = vmatpush.xpose.msra.mxu0 %v1728
    %7142 = vmatpush.xpose.msra.mxu0 %v1724
    %7143 = vmatpush.xpose.msra.mxu0 %v1720
    %7144 = vmatpush.xpose.msra.mxu0 %v1716
    %7145 = vmatpush.xpose.msra.mxu0 %v1712
    %7146 = vmatpush.xpose.msra.mxu0 %v1708
    %7147 = vmatpush.xpose.msra.mxu0 %v1704
    %7148 = vmatmul.f32.gmra.mxu0 %v5086
    %v7149 = vpop.f32.mrf.mxu0
    %v7150 = vadd.f32 0.0, %v7149
    %7151 = vdwg.mxu0
    %7152 = vmatpush.xpose.msra.mxu0 %v1765
    %7153 = vmatpush.xpose.msra.mxu0 %v1761
    %7154 = vmatpush.xpose.msra.mxu0 %v1757
    %7155 = vmatpush.xpose.msra.mxu0 %v1753
    %7156 = vmatpush.xpose.msra.mxu0 %v1749
    %7157 = vmatpush.xpose.msra.mxu0 %v1745
    %7158 = vmatpush.xpose.msra.mxu0 %v1741
    %7159 = vmatpush.xpose.msra.mxu0 %v1737
    %7160 = vmatpush.xpose.msra.mxu0 %v1733
    %7161 = vmatpush.xpose.msra.mxu0 %v1729
    %7162 = vmatpush.xpose.msra.mxu0 %v1725
    %7163 = vmatpush.xpose.msra.mxu0 %v1721
    %7164 = vmatpush.xpose.msra.mxu0 %v1717
    %7165 = vmatpush.xpose.msra.mxu0 %v1713
    %7166 = vmatpush.xpose.msra.mxu0 %v1709
    %7167 = vmatpush.xpose.msra.mxu0 %v1705
    %7168 = vmatmul.f32.gmra.mxu0 %v5101
    %v7169 = vpop.f32.mrf.mxu0
    %v7170 = vadd.f32 %v7150, %v7169
    %7171 = vdwg.mxu0
    %7172 = vmatpush.xpose.msra.mxu0 %v1766
    %7173 = vmatpush.xpose.msra.mxu0 %v1762
    %7174 = vmatpush.xpose.msra.mxu0 %v1758
    %7175 = vmatpush.xpose.msra.mxu0 %v1754
    %7176 = vmatpush.xpose.msra.mxu0 %v1750
    %7177 = vmatpush.xpose.msra.mxu0 %v1746
    %7178 = vmatpush.xpose.msra.mxu0 %v1742
    %7179 = vmatpush.xpose.msra.mxu0 %v1738
    %7180 = vmatpush.xpose.msra.mxu0 %v1734
    %7181 = vmatpush.xpose.msra.mxu0 %v1730
    %7182 = vmatpush.xpose.msra.mxu0 %v1726
    %7183 = vmatpush.xpose.msra.mxu0 %v1722
    %7184 = vmatpush.xpose.msra.mxu0 %v1718
    %7185 = vmatpush.xpose.msra.mxu0 %v1714
    %7186 = vmatpush.xpose.msra.mxu0 %v1710
    %7187 = vmatpush.xpose.msra.mxu0 %v1706
    %7188 = vmatmul.f32.gmra.mxu0 %v5116
    %v7189 = vpop.f32.mrf.mxu0
    %v7190 = vadd.f32 %v7170, %v7189
    %7191 = vdwg.mxu0
    %7192 = vmatpush.xpose.msra.mxu0 %v1767
    %7193 = vmatpush.xpose.msra.mxu0 %v1763
    %7194 = vmatpush.xpose.msra.mxu0 %v1759
    %7195 = vmatpush.xpose.msra.mxu0 %v1755
    %7196 = vmatpush.xpose.msra.mxu0 %v1751
    %7197 = vmatpush.xpose.msra.mxu0 %v1747
    %7198 = vmatpush.xpose.msra.mxu0 %v1743
    %7199 = vmatpush.xpose.msra.mxu0 %v1739
    %7200 = vmatpush.xpose.msra.mxu0 %v1735
    %7201 = vmatpush.xpose.msra.mxu0 %v1731
    %7202 = vmatpush.xpose.msra.mxu0 %v1727
    %7203 = vmatpush.xpose.msra.mxu0 %v1723
    %7204 = vmatpush.xpose.msra.mxu0 %v1719
    %7205 = vmatpush.xpose.msra.mxu0 %v1715
    %7206 = vmatpush.xpose.msra.mxu0 %v1711
    %7207 = vmatpush.xpose.msra.mxu0 %v1707
    %7208 = vmatmul.f32.gmra.mxu0 %v5131
    %v7209 = vpop.f32.mrf.mxu0
    %v7210 = vadd.f32 %v7190, %v7209
    %7211 = vdwg.mxu0
    %7212 = vmatpush.xpose.msra.mxu0 %v1828
    %7213 = vmatpush.xpose.msra.mxu0 %v1824
    %7214 = vmatpush.xpose.msra.mxu0 %v1820
    %7215 = vmatpush.xpose.msra.mxu0 %v1816
    %7216 = vmatpush.xpose.msra.mxu0 %v1812
    %7217 = vmatpush.xpose.msra.mxu0 %v1808
    %7218 = vmatpush.xpose.msra.mxu0 %v1804
    %7219 = vmatpush.xpose.msra.mxu0 %v1800
    %7220 = vmatpush.xpose.msra.mxu0 %v1796
    %7221 = vmatpush.xpose.msra.mxu0 %v1792
    %7222 = vmatpush.xpose.msra.mxu0 %v1788
    %7223 = vmatpush.xpose.msra.mxu0 %v1784
    %7224 = vmatpush.xpose.msra.mxu0 %v1780
    %7225 = vmatpush.xpose.msra.mxu0 %v1776
    %7226 = vmatpush.xpose.msra.mxu0 %v1772
    %7227 = vmatpush.xpose.msra.mxu0 %v1768
    %7228 = vmatmul.f32.gmra.mxu0 %v5086
    %v7229 = vpop.f32.mrf.mxu0
    %v7230 = vadd.f32 0.0, %v7229
    %7231 = vdwg.mxu0
    %7232 = vmatpush.xpose.msra.mxu0 %v1829
    %7233 = vmatpush.xpose.msra.mxu0 %v1825
    %7234 = vmatpush.xpose.msra.mxu0 %v1821
    %7235 = vmatpush.xpose.msra.mxu0 %v1817
    %7236 = vmatpush.xpose.msra.mxu0 %v1813
    %7237 = vmatpush.xpose.msra.mxu0 %v1809
    %7238 = vmatpush.xpose.msra.mxu0 %v1805
    %7239 = vmatpush.xpose.msra.mxu0 %v1801
    %7240 = vmatpush.xpose.msra.mxu0 %v1797
    %7241 = vmatpush.xpose.msra.mxu0 %v1793
    %7242 = vmatpush.xpose.msra.mxu0 %v1789
    %7243 = vmatpush.xpose.msra.mxu0 %v1785
    %7244 = vmatpush.xpose.msra.mxu0 %v1781
    %7245 = vmatpush.xpose.msra.mxu0 %v1777
    %7246 = vmatpush.xpose.msra.mxu0 %v1773
    %7247 = vmatpush.xpose.msra.mxu0 %v1769
    %7248 = vmatmul.f32.gmra.mxu0 %v5101
    %v7249 = vpop.f32.mrf.mxu0
    %v7250 = vadd.f32 %v7230, %v7249
    %7251 = vdwg.mxu0
    %7252 = vmatpush.xpose.msra.mxu0 %v1830
    %7253 = vmatpush.xpose.msra.mxu0 %v1826
    %7254 = vmatpush.xpose.msra.mxu0 %v1822
    %7255 = vmatpush.xpose.msra.mxu0 %v1818
    %7256 = vmatpush.xpose.msra.mxu0 %v1814
    %7257 = vmatpush.xpose.msra.mxu0 %v1810
    %7258 = vmatpush.xpose.msra.mxu0 %v1806
    %7259 = vmatpush.xpose.msra.mxu0 %v1802
    %7260 = vmatpush.xpose.msra.mxu0 %v1798
    %7261 = vmatpush.xpose.msra.mxu0 %v1794
    %7262 = vmatpush.xpose.msra.mxu0 %v1790
    %7263 = vmatpush.xpose.msra.mxu0 %v1786
    %7264 = vmatpush.xpose.msra.mxu0 %v1782
    %7265 = vmatpush.xpose.msra.mxu0 %v1778
    %7266 = vmatpush.xpose.msra.mxu0 %v1774
    %7267 = vmatpush.xpose.msra.mxu0 %v1770
    %7268 = vmatmul.f32.gmra.mxu0 %v5116
    %v7269 = vpop.f32.mrf.mxu0
    %v7270 = vadd.f32 %v7250, %v7269
    %7271 = vdwg.mxu0
    %7272 = vmatpush.xpose.msra.mxu0 %v1831
    %7273 = vmatpush.xpose.msra.mxu0 %v1827
    %7274 = vmatpush.xpose.msra.mxu0 %v1823
    %7275 = vmatpush.xpose.msra.mxu0 %v1819
    %7276 = vmatpush.xpose.msra.mxu0 %v1815
    %7277 = vmatpush.xpose.msra.mxu0 %v1811
    %7278 = vmatpush.xpose.msra.mxu0 %v1807
    %7279 = vmatpush.xpose.msra.mxu0 %v1803
    %7280 = vmatpush.xpose.msra.mxu0 %v1799
    %7281 = vmatpush.xpose.msra.mxu0 %v1795
    %7282 = vmatpush.xpose.msra.mxu0 %v1791
    %7283 = vmatpush.xpose.msra.mxu0 %v1787
    %7284 = vmatpush.xpose.msra.mxu0 %v1783
    %7285 = vmatpush.xpose.msra.mxu0 %v1779
    %7286 = vmatpush.xpose.msra.mxu0 %v1775
    %7287 = vmatpush.xpose.msra.mxu0 %v1771
    %7288 = vmatmul.f32.gmra.mxu0 %v5131
    %v7289 = vpop.f32.mrf.mxu0
    %v7290 = vadd.f32 %v7270, %v7289
    %7291 = vdwg.mxu0
    %7292 = vmatpush.xpose.msra.mxu0 %v1892
    %7293 = vmatpush.xpose.msra.mxu0 %v1888
    %7294 = vmatpush.xpose.msra.mxu0 %v1884
    %7295 = vmatpush.xpose.msra.mxu0 %v1880
    %7296 = vmatpush.xpose.msra.mxu0 %v1876
    %7297 = vmatpush.xpose.msra.mxu0 %v1872
    %7298 = vmatpush.xpose.msra.mxu0 %v1868
    %7299 = vmatpush.xpose.msra.mxu0 %v1864
    %7300 = vmatpush.xpose.msra.mxu0 %v1860
    %7301 = vmatpush.xpose.msra.mxu0 %v1856
    %7302 = vmatpush.xpose.msra.mxu0 %v1852
    %7303 = vmatpush.xpose.msra.mxu0 %v1848
    %7304 = vmatpush.xpose.msra.mxu0 %v1844
    %7305 = vmatpush.xpose.msra.mxu0 %v1840
    %7306 = vmatpush.xpose.msra.mxu0 %v1836
    %7307 = vmatpush.xpose.msra.mxu0 %v1832
    %7308 = vmatmul.f32.gmra.mxu0 %v5086
    %v7309 = vpop.f32.mrf.mxu0
    %v7310 = vadd.f32 0.0, %v7309
    %7311 = vdwg.mxu0
    %7312 = vmatpush.xpose.msra.mxu0 %v1893
    %7313 = vmatpush.xpose.msra.mxu0 %v1889
    %7314 = vmatpush.xpose.msra.mxu0 %v1885
    %7315 = vmatpush.xpose.msra.mxu0 %v1881
    %7316 = vmatpush.xpose.msra.mxu0 %v1877
    %7317 = vmatpush.xpose.msra.mxu0 %v1873
    %7318 = vmatpush.xpose.msra.mxu0 %v1869
    %7319 = vmatpush.xpose.msra.mxu0 %v1865
    %7320 = vmatpush.xpose.msra.mxu0 %v1861
    %7321 = vmatpush.xpose.msra.mxu0 %v1857
    %7322 = vmatpush.xpose.msra.mxu0 %v1853
    %7323 = vmatpush.xpose.msra.mxu0 %v1849
    %7324 = vmatpush.xpose.msra.mxu0 %v1845
    %7325 = vmatpush.xpose.msra.mxu0 %v1841
    %7326 = vmatpush.xpose.msra.mxu0 %v1837
    %7327 = vmatpush.xpose.msra.mxu0 %v1833
    %7328 = vmatmul.f32.gmra.mxu0 %v5101
    %v7329 = vpop.f32.mrf.mxu0
    %v7330 = vadd.f32 %v7310, %v7329
    %7331 = vdwg.mxu0
    %7332 = vmatpush.xpose.msra.mxu0 %v1894
    %7333 = vmatpush.xpose.msra.mxu0 %v1890
    %7334 = vmatpush.xpose.msra.mxu0 %v1886
    %7335 = vmatpush.xpose.msra.mxu0 %v1882
    %7336 = vmatpush.xpose.msra.mxu0 %v1878
    %7337 = vmatpush.xpose.msra.mxu0 %v1874
    %7338 = vmatpush.xpose.msra.mxu0 %v1870
    %7339 = vmatpush.xpose.msra.mxu0 %v1866
    %7340 = vmatpush.xpose.msra.mxu0 %v1862
    %7341 = vmatpush.xpose.msra.mxu0 %v1858
    %7342 = vmatpush.xpose.msra.mxu0 %v1854
    %7343 = vmatpush.xpose.msra.mxu0 %v1850
    %7344 = vmatpush.xpose.msra.mxu0 %v1846
    %7345 = vmatpush.xpose.msra.mxu0 %v1842
    %7346 = vmatpush.xpose.msra.mxu0 %v1838
    %7347 = vmatpush.xpose.msra.mxu0 %v1834
    %7348 = vmatmul.f32.gmra.mxu0 %v5116
    %v7349 = vpop.f32.mrf.mxu0
    %v7350 = vadd.f32 %v7330, %v7349
    %7351 = vdwg.mxu0
    %7352 = vmatpush.xpose.msra.mxu0 %v1895
    %7353 = vmatpush.xpose.msra.mxu0 %v1891
    %7354 = vmatpush.xpose.msra.mxu0 %v1887
    %7355 = vmatpush.xpose.msra.mxu0 %v1883
    %7356 = vmatpush.xpose.msra.mxu0 %v1879
    %7357 = vmatpush.xpose.msra.mxu0 %v1875
    %7358 = vmatpush.xpose.msra.mxu0 %v1871
    %7359 = vmatpush.xpose.msra.mxu0 %v1867
    %7360 = vmatpush.xpose.msra.mxu0 %v1863
    %7361 = vmatpush.xpose.msra.mxu0 %v1859
    %7362 = vmatpush.xpose.msra.mxu0 %v1855
    %7363 = vmatpush.xpose.msra.mxu0 %v1851
    %7364 = vmatpush.xpose.msra.mxu0 %v1847
    %7365 = vmatpush.xpose.msra.mxu0 %v1843
    %7366 = vmatpush.xpose.msra.mxu0 %v1839
    %7367 = vmatpush.xpose.msra.mxu0 %v1835
    %7368 = vmatmul.f32.gmra.mxu0 %v5131
    %v7369 = vpop.f32.mrf.mxu0
    %v7370 = vadd.f32 %v7350, %v7369
    %7371 = vdwg.mxu0
    %7372 = vmatpush.xpose.msra.mxu0 %v1956
    %7373 = vmatpush.xpose.msra.mxu0 %v1952
    %7374 = vmatpush.xpose.msra.mxu0 %v1948
    %7375 = vmatpush.xpose.msra.mxu0 %v1944
    %7376 = vmatpush.xpose.msra.mxu0 %v1940
    %7377 = vmatpush.xpose.msra.mxu0 %v1936
    %7378 = vmatpush.xpose.msra.mxu0 %v1932
    %7379 = vmatpush.xpose.msra.mxu0 %v1928
    %7380 = vmatpush.xpose.msra.mxu0 %v1924
    %7381 = vmatpush.xpose.msra.mxu0 %v1920
    %7382 = vmatpush.xpose.msra.mxu0 %v1916
    %7383 = vmatpush.xpose.msra.mxu0 %v1912
    %7384 = vmatpush.xpose.msra.mxu0 %v1908
    %7385 = vmatpush.xpose.msra.mxu0 %v1904
    %7386 = vmatpush.xpose.msra.mxu0 %v1900
    %7387 = vmatpush.xpose.msra.mxu0 %v1896
    %7388 = vmatmul.f32.gmra.mxu0 %v5086
    %v7389 = vpop.f32.mrf.mxu0
    %v7390 = vadd.f32 0.0, %v7389
    %7391 = vdwg.mxu0
    %7392 = vmatpush.xpose.msra.mxu0 %v1957
    %7393 = vmatpush.xpose.msra.mxu0 %v1953
    %7394 = vmatpush.xpose.msra.mxu0 %v1949
    %7395 = vmatpush.xpose.msra.mxu0 %v1945
    %7396 = vmatpush.xpose.msra.mxu0 %v1941
    %7397 = vmatpush.xpose.msra.mxu0 %v1937
    %7398 = vmatpush.xpose.msra.mxu0 %v1933
    %7399 = vmatpush.xpose.msra.mxu0 %v1929
    %7400 = vmatpush.xpose.msra.mxu0 %v1925
    %7401 = vmatpush.xpose.msra.mxu0 %v1921
    %7402 = vmatpush.xpose.msra.mxu0 %v1917
    %7403 = vmatpush.xpose.msra.mxu0 %v1913
    %7404 = vmatpush.xpose.msra.mxu0 %v1909
    %7405 = vmatpush.xpose.msra.mxu0 %v1905
    %7406 = vmatpush.xpose.msra.mxu0 %v1901
    %7407 = vmatpush.xpose.msra.mxu0 %v1897
    %7408 = vmatmul.f32.gmra.mxu0 %v5101
    %v7409 = vpop.f32.mrf.mxu0
    %v7410 = vadd.f32 %v7390, %v7409
    %7411 = vdwg.mxu0
    %7412 = vmatpush.xpose.msra.mxu0 %v1958
    %7413 = vmatpush.xpose.msra.mxu0 %v1954
    %7414 = vmatpush.xpose.msra.mxu0 %v1950
    %7415 = vmatpush.xpose.msra.mxu0 %v1946
    %7416 = vmatpush.xpose.msra.mxu0 %v1942
    %7417 = vmatpush.xpose.msra.mxu0 %v1938
    %7418 = vmatpush.xpose.msra.mxu0 %v1934
    %7419 = vmatpush.xpose.msra.mxu0 %v1930
    %7420 = vmatpush.xpose.msra.mxu0 %v1926
    %7421 = vmatpush.xpose.msra.mxu0 %v1922
    %7422 = vmatpush.xpose.msra.mxu0 %v1918
    %7423 = vmatpush.xpose.msra.mxu0 %v1914
    %7424 = vmatpush.xpose.msra.mxu0 %v1910
    %7425 = vmatpush.xpose.msra.mxu0 %v1906
    %7426 = vmatpush.xpose.msra.mxu0 %v1902
    %7427 = vmatpush.xpose.msra.mxu0 %v1898
    %7428 = vmatmul.f32.gmra.mxu0 %v5116
    %v7429 = vpop.f32.mrf.mxu0
    %v7430 = vadd.f32 %v7410, %v7429
    %7431 = vdwg.mxu0
    %7432 = vmatpush.xpose.msra.mxu0 %v1959
    %7433 = vmatpush.xpose.msra.mxu0 %v1955
    %7434 = vmatpush.xpose.msra.mxu0 %v1951
    %7435 = vmatpush.xpose.msra.mxu0 %v1947
    %7436 = vmatpush.xpose.msra.mxu0 %v1943
    %7437 = vmatpush.xpose.msra.mxu0 %v1939
    %7438 = vmatpush.xpose.msra.mxu0 %v1935
    %7439 = vmatpush.xpose.msra.mxu0 %v1931
    %7440 = vmatpush.xpose.msra.mxu0 %v1927
    %7441 = vmatpush.xpose.msra.mxu0 %v1923
    %7442 = vmatpush.xpose.msra.mxu0 %v1919
    %7443 = vmatpush.xpose.msra.mxu0 %v1915
    %7444 = vmatpush.xpose.msra.mxu0 %v1911
    %7445 = vmatpush.xpose.msra.mxu0 %v1907
    %7446 = vmatpush.xpose.msra.mxu0 %v1903
    %7447 = vmatpush.xpose.msra.mxu0 %v1899
    %7448 = vmatmul.f32.gmra.mxu0 %v5131
    %v7449 = vpop.f32.mrf.mxu0
    %v7450 = vadd.f32 %v7430, %v7449
    %7451 = vdwg.mxu0
    %7452 = vmatpush.xpose.msra.mxu0 %v2020
    %7453 = vmatpush.xpose.msra.mxu0 %v2016
    %7454 = vmatpush.xpose.msra.mxu0 %v2012
    %7455 = vmatpush.xpose.msra.mxu0 %v2008
    %7456 = vmatpush.xpose.msra.mxu0 %v2004
    %7457 = vmatpush.xpose.msra.mxu0 %v2000
    %7458 = vmatpush.xpose.msra.mxu0 %v1996
    %7459 = vmatpush.xpose.msra.mxu0 %v1992
    %7460 = vmatpush.xpose.msra.mxu0 %v1988
    %7461 = vmatpush.xpose.msra.mxu0 %v1984
    %7462 = vmatpush.xpose.msra.mxu0 %v1980
    %7463 = vmatpush.xpose.msra.mxu0 %v1976
    %7464 = vmatpush.xpose.msra.mxu0 %v1972
    %7465 = vmatpush.xpose.msra.mxu0 %v1968
    %7466 = vmatpush.xpose.msra.mxu0 %v1964
    %7467 = vmatpush.xpose.msra.mxu0 %v1960
    %7468 = vmatmul.f32.gmra.mxu0 %v5086
    %v7469 = vpop.f32.mrf.mxu0
    %v7470 = vadd.f32 0.0, %v7469
    %7471 = vdwg.mxu0
    %7472 = vmatpush.xpose.msra.mxu0 %v2021
    %7473 = vmatpush.xpose.msra.mxu0 %v2017
    %7474 = vmatpush.xpose.msra.mxu0 %v2013
    %7475 = vmatpush.xpose.msra.mxu0 %v2009
    %7476 = vmatpush.xpose.msra.mxu0 %v2005
    %7477 = vmatpush.xpose.msra.mxu0 %v2001
    %7478 = vmatpush.xpose.msra.mxu0 %v1997
    %7479 = vmatpush.xpose.msra.mxu0 %v1993
    %7480 = vmatpush.xpose.msra.mxu0 %v1989
    %7481 = vmatpush.xpose.msra.mxu0 %v1985
    %7482 = vmatpush.xpose.msra.mxu0 %v1981
    %7483 = vmatpush.xpose.msra.mxu0 %v1977
    %7484 = vmatpush.xpose.msra.mxu0 %v1973
    %7485 = vmatpush.xpose.msra.mxu0 %v1969
    %7486 = vmatpush.xpose.msra.mxu0 %v1965
    %7487 = vmatpush.xpose.msra.mxu0 %v1961
    %7488 = vmatmul.f32.gmra.mxu0 %v5101
    %v7489 = vpop.f32.mrf.mxu0
    %v7490 = vadd.f32 %v7470, %v7489
    %7491 = vdwg.mxu0
    %7492 = vmatpush.xpose.msra.mxu0 %v2022
    %7493 = vmatpush.xpose.msra.mxu0 %v2018
    %7494 = vmatpush.xpose.msra.mxu0 %v2014
    %7495 = vmatpush.xpose.msra.mxu0 %v2010
    %7496 = vmatpush.xpose.msra.mxu0 %v2006
    %7497 = vmatpush.xpose.msra.mxu0 %v2002
    %7498 = vmatpush.xpose.msra.mxu0 %v1998
    %7499 = vmatpush.xpose.msra.mxu0 %v1994
    %7500 = vmatpush.xpose.msra.mxu0 %v1990
    %7501 = vmatpush.xpose.msra.mxu0 %v1986
    %7502 = vmatpush.xpose.msra.mxu0 %v1982
    %7503 = vmatpush.xpose.msra.mxu0 %v1978
    %7504 = vmatpush.xpose.msra.mxu0 %v1974
    %7505 = vmatpush.xpose.msra.mxu0 %v1970
    %7506 = vmatpush.xpose.msra.mxu0 %v1966
    %7507 = vmatpush.xpose.msra.mxu0 %v1962
    %7508 = vmatmul.f32.gmra.mxu0 %v5116
    %v7509 = vpop.f32.mrf.mxu0
    %v7510 = vadd.f32 %v7490, %v7509
    %7511 = vdwg.mxu0
    %7512 = vmatpush.xpose.msra.mxu0 %v2023
    %7513 = vmatpush.xpose.msra.mxu0 %v2019
    %7514 = vmatpush.xpose.msra.mxu0 %v2015
    %7515 = vmatpush.xpose.msra.mxu0 %v2011
    %7516 = vmatpush.xpose.msra.mxu0 %v2007
    %7517 = vmatpush.xpose.msra.mxu0 %v2003
    %7518 = vmatpush.xpose.msra.mxu0 %v1999
    %7519 = vmatpush.xpose.msra.mxu0 %v1995
    %7520 = vmatpush.xpose.msra.mxu0 %v1991
    %7521 = vmatpush.xpose.msra.mxu0 %v1987
    %7522 = vmatpush.xpose.msra.mxu0 %v1983
    %7523 = vmatpush.xpose.msra.mxu0 %v1979
    %7524 = vmatpush.xpose.msra.mxu0 %v1975
    %7525 = vmatpush.xpose.msra.mxu0 %v1971
    %7526 = vmatpush.xpose.msra.mxu0 %v1967
    %7527 = vmatpush.xpose.msra.mxu0 %v1963
    %7528 = vmatmul.f32.gmra.mxu0 %v5131
    %v7529 = vpop.f32.mrf.mxu0
    %v7530 = vadd.f32 %v7510, %v7529
    %7531 = vdwg.mxu0
    %7532 = vmatpush.xpose.msra.mxu0 %v2084
    %7533 = vmatpush.xpose.msra.mxu0 %v2080
    %7534 = vmatpush.xpose.msra.mxu0 %v2076
    %7535 = vmatpush.xpose.msra.mxu0 %v2072
    %7536 = vmatpush.xpose.msra.mxu0 %v2068
    %7537 = vmatpush.xpose.msra.mxu0 %v2064
    %7538 = vmatpush.xpose.msra.mxu0 %v2060
    %7539 = vmatpush.xpose.msra.mxu0 %v2056
    %7540 = vmatpush.xpose.msra.mxu0 %v2052
    %7541 = vmatpush.xpose.msra.mxu0 %v2048
    %7542 = vmatpush.xpose.msra.mxu0 %v2044
    %7543 = vmatpush.xpose.msra.mxu0 %v2040
    %7544 = vmatpush.xpose.msra.mxu0 %v2036
    %7545 = vmatpush.xpose.msra.mxu0 %v2032
    %7546 = vmatpush.xpose.msra.mxu0 %v2028
    %7547 = vmatpush.xpose.msra.mxu0 %v2024
    %7548 = vmatmul.f32.gmra.mxu0 %v5086
    %v7549 = vpop.f32.mrf.mxu0
    %v7550 = vadd.f32 0.0, %v7549
    %7551 = vdwg.mxu0
    %7552 = vmatpush.xpose.msra.mxu0 %v2085
    %7553 = vmatpush.xpose.msra.mxu0 %v2081
    %7554 = vmatpush.xpose.msra.mxu0 %v2077
    %7555 = vmatpush.xpose.msra.mxu0 %v2073
    %7556 = vmatpush.xpose.msra.mxu0 %v2069
    %7557 = vmatpush.xpose.msra.mxu0 %v2065
    %7558 = vmatpush.xpose.msra.mxu0 %v2061
    %7559 = vmatpush.xpose.msra.mxu0 %v2057
    %7560 = vmatpush.xpose.msra.mxu0 %v2053
    %7561 = vmatpush.xpose.msra.mxu0 %v2049
    %7562 = vmatpush.xpose.msra.mxu0 %v2045
    %7563 = vmatpush.xpose.msra.mxu0 %v2041
    %7564 = vmatpush.xpose.msra.mxu0 %v2037
    %7565 = vmatpush.xpose.msra.mxu0 %v2033
    %7566 = vmatpush.xpose.msra.mxu0 %v2029
    %7567 = vmatpush.xpose.msra.mxu0 %v2025
    %7568 = vmatmul.f32.gmra.mxu0 %v5101
    %v7569 = vpop.f32.mrf.mxu0
    %v7570 = vadd.f32 %v7550, %v7569
    %7571 = vdwg.mxu0
    %7572 = vmatpush.xpose.msra.mxu0 %v2086
    %7573 = vmatpush.xpose.msra.mxu0 %v2082
    %7574 = vmatpush.xpose.msra.mxu0 %v2078
    %7575 = vmatpush.xpose.msra.mxu0 %v2074
    %7576 = vmatpush.xpose.msra.mxu0 %v2070
    %7577 = vmatpush.xpose.msra.mxu0 %v2066
    %7578 = vmatpush.xpose.msra.mxu0 %v2062
    %7579 = vmatpush.xpose.msra.mxu0 %v2058
    %7580 = vmatpush.xpose.msra.mxu0 %v2054
    %7581 = vmatpush.xpose.msra.mxu0 %v2050
    %7582 = vmatpush.xpose.msra.mxu0 %v2046
    %7583 = vmatpush.xpose.msra.mxu0 %v2042
    %7584 = vmatpush.xpose.msra.mxu0 %v2038
    %7585 = vmatpush.xpose.msra.mxu0 %v2034
    %7586 = vmatpush.xpose.msra.mxu0 %v2030
    %7587 = vmatpush.xpose.msra.mxu0 %v2026
    %7588 = vmatmul.f32.gmra.mxu0 %v5116
    %v7589 = vpop.f32.mrf.mxu0
    %v7590 = vadd.f32 %v7570, %v7589
    %7591 = vdwg.mxu0
    %7592 = vmatpush.xpose.msra.mxu0 %v2087
    %7593 = vmatpush.xpose.msra.mxu0 %v2083
    %7594 = vmatpush.xpose.msra.mxu0 %v2079
    %7595 = vmatpush.xpose.msra.mxu0 %v2075
    %7596 = vmatpush.xpose.msra.mxu0 %v2071
    %7597 = vmatpush.xpose.msra.mxu0 %v2067
    %7598 = vmatpush.xpose.msra.mxu0 %v2063
    %7599 = vmatpush.xpose.msra.mxu0 %v2059
    %7600 = vmatpush.xpose.msra.mxu0 %v2055
    %7601 = vmatpush.xpose.msra.mxu0 %v2051
    %7602 = vmatpush.xpose.msra.mxu0 %v2047
    %7603 = vmatpush.xpose.msra.mxu0 %v2043
    %7604 = vmatpush.xpose.msra.mxu0 %v2039
    %7605 = vmatpush.xpose.msra.mxu0 %v2035
    %7606 = vmatpush.xpose.msra.mxu0 %v2031
    %7607 = vmatpush.xpose.msra.mxu0 %v2027
    %7608 = vmatmul.f32.gmra.mxu0 %v5131
    %v7609 = vpop.f32.mrf.mxu0
    %v7610 = vadd.f32 %v7590, %v7609
    %7611 = vdwg.mxu0
    %7612 = vmatpush.xpose.msra.mxu0 %v2148
    %7613 = vmatpush.xpose.msra.mxu0 %v2144
    %7614 = vmatpush.xpose.msra.mxu0 %v2140
    %7615 = vmatpush.xpose.msra.mxu0 %v2136
    %7616 = vmatpush.xpose.msra.mxu0 %v2132
    %7617 = vmatpush.xpose.msra.mxu0 %v2128
    %7618 = vmatpush.xpose.msra.mxu0 %v2124
    %7619 = vmatpush.xpose.msra.mxu0 %v2120
    %7620 = vmatpush.xpose.msra.mxu0 %v2116
    %7621 = vmatpush.xpose.msra.mxu0 %v2112
    %7622 = vmatpush.xpose.msra.mxu0 %v2108
    %7623 = vmatpush.xpose.msra.mxu0 %v2104
    %7624 = vmatpush.xpose.msra.mxu0 %v2100
    %7625 = vmatpush.xpose.msra.mxu0 %v2096
    %7626 = vmatpush.xpose.msra.mxu0 %v2092
    %7627 = vmatpush.xpose.msra.mxu0 %v2088
    %7628 = vmatmul.f32.gmra.mxu0 %v5086
    %v7629 = vpop.f32.mrf.mxu0
    %v7630 = vadd.f32 0.0, %v7629
    %7631 = vdwg.mxu0
    %7632 = vmatpush.xpose.msra.mxu0 %v2149
    %7633 = vmatpush.xpose.msra.mxu0 %v2145
    %7634 = vmatpush.xpose.msra.mxu0 %v2141
    %7635 = vmatpush.xpose.msra.mxu0 %v2137
    %7636 = vmatpush.xpose.msra.mxu0 %v2133
    %7637 = vmatpush.xpose.msra.mxu0 %v2129
    %7638 = vmatpush.xpose.msra.mxu0 %v2125
    %7639 = vmatpush.xpose.msra.mxu0 %v2121
    %7640 = vmatpush.xpose.msra.mxu0 %v2117
    %7641 = vmatpush.xpose.msra.mxu0 %v2113
    %7642 = vmatpush.xpose.msra.mxu0 %v2109
    %7643 = vmatpush.xpose.msra.mxu0 %v2105
    %7644 = vmatpush.xpose.msra.mxu0 %v2101
    %7645 = vmatpush.xpose.msra.mxu0 %v2097
    %7646 = vmatpush.xpose.msra.mxu0 %v2093
    %7647 = vmatpush.xpose.msra.mxu0 %v2089
    %7648 = vmatmul.f32.gmra.mxu0 %v5101
    %v7649 = vpop.f32.mrf.mxu0
    %v7650 = vadd.f32 %v7630, %v7649
    %7651 = vdwg.mxu0
    %7652 = vmatpush.xpose.msra.mxu0 %v2150
    %7653 = vmatpush.xpose.msra.mxu0 %v2146
    %7654 = vmatpush.xpose.msra.mxu0 %v2142
    %7655 = vmatpush.xpose.msra.mxu0 %v2138
    %7656 = vmatpush.xpose.msra.mxu0 %v2134
    %7657 = vmatpush.xpose.msra.mxu0 %v2130
    %7658 = vmatpush.xpose.msra.mxu0 %v2126
    %7659 = vmatpush.xpose.msra.mxu0 %v2122
    %7660 = vmatpush.xpose.msra.mxu0 %v2118
    %7661 = vmatpush.xpose.msra.mxu0 %v2114
    %7662 = vmatpush.xpose.msra.mxu0 %v2110
    %7663 = vmatpush.xpose.msra.mxu0 %v2106
    %7664 = vmatpush.xpose.msra.mxu0 %v2102
    %7665 = vmatpush.xpose.msra.mxu0 %v2098
    %7666 = vmatpush.xpose.msra.mxu0 %v2094
    %7667 = vmatpush.xpose.msra.mxu0 %v2090
    %7668 = vmatmul.f32.gmra.mxu0 %v5116
    %v7669 = vpop.f32.mrf.mxu0
    %v7670 = vadd.f32 %v7650, %v7669
    %7671 = vdwg.mxu0
    %7672 = vmatpush.xpose.msra.mxu0 %v2151
    %7673 = vmatpush.xpose.msra.mxu0 %v2147
    %7674 = vmatpush.xpose.msra.mxu0 %v2143
    %7675 = vmatpush.xpose.msra.mxu0 %v2139
    %7676 = vmatpush.xpose.msra.mxu0 %v2135
    %7677 = vmatpush.xpose.msra.mxu0 %v2131
    %7678 = vmatpush.xpose.msra.mxu0 %v2127
    %7679 = vmatpush.xpose.msra.mxu0 %v2123
    %7680 = vmatpush.xpose.msra.mxu0 %v2119
    %7681 = vmatpush.xpose.msra.mxu0 %v2115
    %7682 = vmatpush.xpose.msra.mxu0 %v2111
    %7683 = vmatpush.xpose.msra.mxu0 %v2107
    %7684 = vmatpush.xpose.msra.mxu0 %v2103
    %7685 = vmatpush.xpose.msra.mxu0 %v2099
    %7686 = vmatpush.xpose.msra.mxu0 %v2095
    %7687 = vmatpush.xpose.msra.mxu0 %v2091
    %7688 = vmatmul.f32.gmra.mxu0 %v5131
    %v7689 = vpop.f32.mrf.mxu0
    %v7690 = vadd.f32 %v7670, %v7689
    %7691 = vdwg.mxu0
    %v7724 = vrot.slane %v5290, 6
    %v7725 = vrot.slane %v5370, 4
    %v7726 = vrot.slane %v5450, 2
    %v7727 = vrot.slane %v5610, 6
    %v7728 = vrot.slane %v5690, 4
    %v7729 = vrot.slane %v5770, 2
    %v7730 = vrot.slane %v5930, 6
    %v7731 = vrot.slane %v6010, 4
    %v7732 = vrot.slane %v6090, 2
    %v7733 = vrot.slane %v6250, 6
    %v7734 = vrot.slane %v6330, 4
    %v7735 = vrot.slane %v6410, 2
    %v7736 = vrot.slane %v6570, 6
    %v7737 = vrot.slane %v6650, 4
    %v7738 = vrot.slane %v6730, 2
    %v7739 = vrot.slane %v6890, 6
    %v7740 = vrot.slane %v6970, 4
    %v7741 = vrot.slane %v7050, 2
    %v7742 = vrot.slane %v7210, 6
    %v7743 = vrot.slane %v7290, 4
    %v7744 = vrot.slane %v7370, 2
    %v7745 = vrot.slane %v7530, 6
    %v7746 = vrot.slane %v7610, 4
    %v7747 = vrot.slane %v7690, 2
    %vm7748 = vcmask 1041408
    %v7749 = vsel %vm7748, %v5210, %v7724
    %vm7750 = vcmask 1045508
    %v7751 = vsel %vm7750, %v7725, %v7726
    %vm7752 = vcmask 1043456
    %v7753 = vsel %vm7752, %v7749, %v7751
    %v7754 = vsel %vm7748, %v5530, %v7727
    %v7755 = vsel %vm7750, %v7728, %v7729
    %v7756 = vsel %vm7752, %v7754, %v7755
    %v7757 = vsel %vm7748, %v5850, %v7730
    %v7758 = vsel %vm7750, %v7731, %v7732
    %v7759 = vsel %vm7752, %v7757, %v7758
    %v7760 = vsel %vm7748, %v6170, %v7733
    %v7761 = vsel %vm7750, %v7734, %v7735
    %v7762 = vsel %vm7752, %v7760, %v7761
    %v7763 = vsel %vm7748, %v6490, %v7736
    %v7764 = vsel %vm7750, %v7737, %v7738
    %v7765 = vsel %vm7752, %v7763, %v7764
    %v7766 = vsel %vm7748, %v6810, %v7739
    %v7767 = vsel %vm7750, %v7740, %v7741
    %v7768 = vsel %vm7752, %v7766, %v7767
    %v7769 = vsel %vm7748, %v7130, %v7742
    %v7770 = vsel %vm7750, %v7743, %v7744
    %v7771 = vsel %vm7752, %v7769, %v7770
    %v7772 = vsel %vm7748, %v7450, %v7745
    %v7773 = vsel %vm7750, %v7746, %v7747
    %v7774 = vsel %vm7752, %v7772, %v7773
    %v7783 = vmul.f32 %v96, %v7753
    %v7784 = vmul.f32 %v97, %v7756
    %v7785 = vmul.f32 %v98, %v7759
    %v7786 = vmul.f32 %v99, %v7762
    %v7787 = vmul.f32 %v100, %v7765
    %v7788 = vmul.f32 %v101, %v7768
    %v7789 = vmul.f32 %v102, %v7771
    %v7790 = vmul.f32 %v103, %v7774
    %7791 = vst [vmem:[#allocation11] sm:$0xff] %v7783
    %7792 = vst [vmem:[#allocation11 + $0x8] sm:$0xff] %v7784
    %7793 = vst [vmem:[#allocation11 + $0x10] sm:$0xff] %v7785
    %7794 = vst [vmem:[#allocation11 + $0x18] sm:$0xff] %v7786
    %7795 = vst [vmem:[#allocation11 + $0x20] sm:$0xff] %v7787
    %7796 = vst [vmem:[#allocation11 + $0x28] sm:$0xff] %v7788
    %7797 = vst [vmem:[#allocation11 + $0x30] sm:$0xff] %v7789
    %7798 = vst [vmem:[#allocation11 + $0x38] sm:$0xff] %v7790
    // Predicated region
    $region46: #{tpu_custom_call.1} parent=1 // pred_check
      _
    $region47: #{tpu_custom_call.1} parent=1 // pred_check_branch
      %7800 = sbr.rel (0) target = $region49
    $region48: #{tpu_custom_call.1} parent=1 // pred_region
      %7802 = vsyncadd [#allocation4], 0
      %s7804 = sshll.u32 [#allocation11], 4
      %s7805 = int_to_ptr.vmem [resolvable:$true] %s7804
      %s7806 = sshll.u32 %s6, 4
      %s7807 = int_to_ptr.hbm [resolvable:$true] %s7806
      %7809 = dma.vmem_to_hbm [thread:$0]  %s7805, 1024, %s7807, [#allocation4]
    $region49: #{tpu_custom_call.1} parent=1 // pred_fallthru
      _
    // Predicated region
    $region50: #{tpu_custom_call.1} parent=1 // pred_check
      _
    $region51: #{tpu_custom_call.1} parent=1 // pred_check_branch
      %7811 = sbr.rel (0) target = $region53
    $region52: #{tpu_custom_call.1} parent=1 // pred_region
      %7813 = dma.done [#allocation4], 1024
    $region53: #{tpu_custom_call.1} parent=1 // pred_fallthru
      _
    %7814 = vsyncpa [#allocation3], 1
    %7815 = vsyncpa [#allocation6], 1
    %7816 = vsyncpa [#allocation9], 1
    %7817 = vsyncpa [#allocation4], 1

</llo_original>
